<compile_context>
chip_gen: v7x
topology: tpu7x:2x2x1
jax: 0.10.0
libtpu: 0.0.40
codegen_flags: <defaults>
</compile_context>

<pallas_src>
import math

import jax
import jax.numpy as jnp
import numpy as np
from jax.experimental import pallas as pl
from jax.experimental.pallas import tpu as pltpu


def _round_up(n, m):
    return ((n + m - 1) // m) * m


# ----------------------------------------------------------------------------
# Pallas kernel
# ----------------------------------------------------------------------------
def _make_kernel(B, F, K, H, NL, O, P, conv_off, layer_offs,
                 fc_w_off, fc_b_off, W, slab_w):
    SEQ = F            # LSTM sequence axis == filter axis (module quirk, reproduced)
    BP = B * P
    G = 4 * H
    HI = jax.lax.Precision.HIGHEST

    def sigmoid_t(z):
        # tanh-form sigmoid: no divide on the serial per-step chain
        return 0.5 * jnp.tanh(0.5 * z) + 0.5

    def matvec_vpu(h, w):
        # exact f32 (rows, H) @ (H, W) on the VPU: H lane-broadcast FMAs with a
        # balanced add tree (no MXU fill/drain on the recurrence critical path).
        terms = [h[:, k:k + 1] * w[k:k + 1, :] for k in range(H)]
        while len(terms) > 1:
            nxt = [terms[i] + terms[i + 1] for i in range(0, len(terms) - 1, 2)]
            if len(terms) % 2:
                nxt.append(terms[-1])
            terms = nxt
        return terms[0]

    def kernel(xc_ref, pp_ref, out_ref, hseq_ref):
        # ---- Conv1d (+ bias via ones-row) + ReLU : one MXU matmul -----------
        # cw is a full-lane (F, W) slice; xc rows beyond C*K+1 are zero.
        xc = xc_ref[...]                                   # (W, K*B*P)
        cw = pp_ref[conv_off:conv_off + F, :]              # (F, W)
        conv = jnp.dot(cw, xc, precision=HI,
                       preferred_element_type=jnp.float32)  # (F, K*B*P)
        conv = jnp.maximum(conv, 0.0)

        # ---- MaxPool1d(K, stride K): K-1 maxes over contiguous lane blocks --
        # im2col column order is (pool-phase kp, batch b, pooled pos p), so
        # each pooling phase is a contiguous lane block of width B*P.
        pooled = conv[:, 0:BP]
        for kp in range(1, K):
            pooled = jnp.maximum(pooled, conv[:, kp * BP:(kp + 1) * BP])
        # pooled: (F, B*P), column = b*P + p

        h = None
        gates0 = None
        gates_in = None
        h_finals = []
        for l in range(NL):
            wih_off, whh_off, b_off, in_l = layer_offs[l]
            wih = pp_ref[wih_off:wih_off + in_l, :]        # (in_l, W) [i|f|o|g|0..]
            whh = pp_ref[whh_off:whh_off + H, :]           # (H, W)
            bias = pp_ref[b_off:b_off + 1, :]              # (1, W)

            # hoisted input projection (MXU, HIGHEST precision), off the recurrence
            if l == 0:
                # per-batch (SEQ, P) x (P, W) — keeps slices static & contiguous
                gates0 = [jnp.dot(pooled[:, b * P:(b + 1) * P], wih, precision=HI,
                                  preferred_element_type=jnp.float32) + bias
                          for b in range(B)]               # each (SEQ, W)
            else:
                # previous layer's h sequence, time-major rows (t*B + b)
                x_seq = hseq_ref[...]                       # (SEQ*B, H)
                gates_in = jnp.dot(x_seq, wih, precision=HI,
                                   preferred_element_type=jnp.float32) + bias  # (SEQ*B, W)

            h = jnp.zeros((B, H), jnp.float32)
            c = jnp.zeros((B, H), jnp.float32)
            for t in range(SEQ):   # fully unrolled recurrence (critical path)
                if l == 0:
                    g_in = jnp.concatenate(
                        [gates0[b][t:t + 1, :] for b in range(B)], axis=0)  # (B, W)
                else:
                    g_in = gates_in[t * B:(t + 1) * B, :]                    # (B, W)
                # recurrence matvec on the VPU, exact f32 (no MXU per step)
                g_all = g_in + matvec_vpu(h, whh)
                sig = sigmoid_t(g_all[:, 0:3 * H])   # i | f | o in one pass
                g_g = jnp.tanh(g_all[:, 3 * H:G])
                i_g = sig[:, 0:H]
                f_g = sig[:, H:2 * H]
                o_g = sig[:, 2 * H:3 * H]
                c = f_g * c + i_g * g_g
                h = o_g * jnp.tanh(c)
                if l < NL - 1:
                    # time-major VMEM scratch: next layer reads it contiguously
                    hseq_ref[t * B:(t + 1) * B, :] = h
            h_finals.append(h)                             # h_n for layer l

        # ---- fc + ReLU on h_n of the last layer -----------------------------
        fcw = pp_ref[fc_w_off:fc_w_off + H, :]             # (H, W)
        fcb = pp_ref[fc_b_off:fc_b_off + 1, :]             # (1, W)
        y = jnp.maximum(
            jnp.dot(h, fcw, precision=HI,
                    preferred_element_type=jnp.float32) + fcb, 0.0)

        # ---- single lane-dense output slab: [out | h_n(0..NL-1) | 0 pad] ----
        pieces = [y[:, 0:O]] + h_finals
        used = O + NL * H
        if slab_w > used:
            pieces.append(jnp.zeros((B, slab_w - used), jnp.float32))
        out_ref[...] = jnp.concatenate(pieces, axis=1)

    return kernel


# ----------------------------------------------------------------------------
# Parameter packing (runs ONCE, in numpy — hoisted out of the per-call jit)
# ----------------------------------------------------------------------------
def _reorder_gates_np(w):
    """Permute PyTorch LSTM gate blocks (rows) [i, f, g, o] -> [i, f, o, g]."""
    Hh = w.shape[0] // 4
    return np.concatenate([w[0:Hh], w[Hh:2 * Hh], w[3 * Hh:4 * Hh], w[2 * Hh:3 * Hh]],
                          axis=0)


def build_eye_tracking_embedder(params):
    """Packs parameters once and returns a jitted forward(x) -> (out, hidden)."""
    conv_w, conv_b, lstm_layers, fc_w, fc_b = params
    conv_w = np.asarray(conv_w, np.float32)
    conv_b = np.asarray(conv_b, np.float32)
    fc_w = np.asarray(fc_w, np.float32)
    fc_b = np.asarray(fc_b, np.float32)
    lstm_np = [tuple(np.asarray(a, np.float32) for a in layer) for layer in lstm_layers]

    F, C, K = conv_w.shape
    NL = len(lstm_np)
    H = lstm_np[0][1].shape[1]              # w_hh is (4H, H)
    O = fc_w.shape[0]                       # fc_w is (O, H)
    CK1 = C * K + 1
    G = 4 * H
    # 128-lane-wide packed block so every in-kernel weight slice is full-lane
    W = max(128, _round_up(max(G, O, CK1), 128))

    blocks, row = [], 0

    def add(a):
        nonlocal row
        off = row
        r, c = a.shape
        rp = _round_up(r, 8)
        blk = np.zeros((rp, W), np.float32)
        blk[:r, :c] = a
        blocks.append(blk)
        row += rp
        return off

    conv_off = add(np.concatenate([conv_w.reshape(F, C * K), conv_b[:, None]],
                                  axis=1))                               # (F, CK1)

    layer_offs = []
    for (w_ih, w_hh, b_ih, b_hh) in lstm_np:
        in_l = w_ih.shape[1]
        wih_off = add(_reorder_gates_np(w_ih).T)                   # (in_l, 4H)
        whh_off = add(_reorder_gates_np(w_hh).T)                   # (H, 4H)
        b_off = add(_reorder_gates_np((b_ih + b_hh)[:, None]).T)   # (1, 4H)
        layer_offs.append((wih_off, whh_off, b_off, in_l))

    fc_w_off = add(fc_w.T)                                         # (H, O)
    fc_b_off = add(fc_b[None, :])                                  # (1, O)
    packed = jnp.asarray(np.concatenate(blocks, axis=0))           # (rows, W)

    slab_w = _round_up(O + NL * H, 128)                            # lane-dense output
    layer_offs = tuple(layer_offs)

    @jax.jit
    def forward(x):
        B, Cx, L = x.shape
        assert Cx == C
        T_out = L - K + 1                   # Conv1d 'valid' output length
        P = T_out // K                      # MaxPool1d(K, stride=K), floor
        assert P == F, "module requires pooled_len == num_filters (PyTorch quirk)"
        KBP = K * B * P

        x32 = x.astype(jnp.float32)
        # ---- im2col, column order (pool-phase kp, batch b, pooled pos p) ----
        # x_col[c*K + kk, kp*B*P + b*P + p] = x[b, c, p*K + kp + kk]
        # TODO(synk): at production L/B move im2col in-kernel (DMA x whole, shifted
        # pl.ds views) to avoid the K-times duplicated HBM traffic (v5e item).
        xw = jnp.stack([x32[:, :, kk:kk + P * K] for kk in range(K)], axis=-1)  # (B,C,P*K,K)
        xw = xw.reshape(B, C, P, K, K)                                           # (B,C,p,kp,kk)
        x_col = xw.transpose(1, 4, 3, 0, 2).reshape(C * K, KBP)
        # bias row + zero rows so the full-lane (F, W) conv-weight slice matches
        x_col = jnp.concatenate(
            [x_col, jnp.ones((1, KBP), jnp.float32),
             jnp.zeros((W - CK1, KBP), jnp.float32)], axis=0)                    # (W, KBP)

        kernel = _make_kernel(B, F, K, H, NL, O, P, conv_off, layer_offs,
                              fc_w_off, fc_b_off, W, slab_w)

        vmem = pl.BlockSpec(memory_space=pltpu.MemorySpace.VMEM)
        # NOTE: grid=() is deliberate at B=2 (whole working set is KB-scale); for
        # production batch sizes add a grid over B with
        # dimension_semantics=("parallel",) so v7x's two TensorCores split the batch.
        slab = pl.pallas_call(
            kernel,
            out_shape=jax.ShapeDtypeStruct((B, slab_w), jnp.float32),
            in_specs=[vmem, vmem],
            out_specs=vmem,
            scratch_shapes=[pltpu.VMEM((F * B, H), jnp.float32)],   # time-major h seq
        )(x_col, packed)

        out = slab[:, 0:O]
        hidden = jnp.stack(
            [slab[:, O + l * H:O + (l + 1) * H] for l in range(NL)], axis=0)
        return out, hidden

    return forward


# ----------------------------------------------------------------------------
# Pure-JAX reference (mirrors PyTorch semantics, HIGHEST precision per-dot)
# ----------------------------------------------------------------------------
def reference(x, params):
    conv_w, conv_b, lstm_layers, fc_w, fc_b = params
    HI = jax.lax.Precision.HIGHEST
    B, C, L = x.shape
    F, _, K = conv_w.shape
    H = lstm_layers[0][1].shape[1]          # w_hh is (4H, H)

    conv = jax.lax.conv_general_dilated(
        x, conv_w, window_strides=(1,), padding="VALID",
        dimension_numbers=("NCH", "OIH", "NCH"), precision=HI)
    conv = jnp.maximum(conv + conv_b[None, :, None], 0.0)        # (B, F, T_out)
    T_out = conv.shape[-1]
    P = T_out // K
    pooled = conv[:, :, :P * K].reshape(B, F, P, K).max(axis=-1)  # (B, F, P)

    seq_in = pooled                                               # seq axis = filters
    hiddens = []
    for (w_ih, w_hh, b_ih, b_hh) in lstm_layers:
        h = jnp.zeros((B, H), jnp.float32)
        c = jnp.zeros((B, H), jnp.float32)
        outs = []
        for t in range(seq_in.shape[1]):
            gates = (jnp.dot(seq_in[:, t, :], w_ih.T, precision=HI)
                     + jnp.dot(h, w_hh.T, precision=HI) + b_ih + b_hh)
            i_g = jax.nn.sigmoid(gates[:, 0 * H:1 * H])
            f_g = jax.nn.sigmoid(gates[:, 1 * H:2 * H])
            g_g = jnp.tanh(gates[:, 2 * H:3 * H])
            o_g = jax.nn.sigmoid(gates[:, 3 * H:4 * H])
            c = f_g * c + i_g * g_g
            h = o_g * jnp.tanh(c)
            outs.append(h)
        seq_in = jnp.stack(outs, axis=1)
        hiddens.append(h)
    hidden = jnp.stack(hiddens, axis=0)                           # (NL, B, H)
    y = jnp.maximum(jnp.dot(hidden[-1], fc_w.T, precision=HI) + fc_b, 0.0)
    return y, hidden


# ----------------------------------------------------------------------------
def init_params(key, input_size, num_filters, kernel_size,
                lstm_hidden_size, lstm_num_layers, output_size):
    def unif(k, shape, bound):
        return jax.random.uniform(k, shape, jnp.float32, -bound, bound)

    keys = jax.random.split(key, 4 + 4 * lstm_num_layers)
    ki = iter(keys)

    cbound = 1.0 / math.sqrt(input_size * kernel_size)
    conv_w = unif(next(ki), (num_filters, input_size, kernel_size), cbound)
    conv_b = unif(next(ki), (num_filters,), cbound)

    lstm_layers = []
    H = lstm_hidden_size
    lbound = 1.0 / math.sqrt(H)
    for l in range(lstm_num_layers):
        in_l = num_filters if l == 0 else H
        w_ih = unif(next(ki), (4 * H, in_l), lbound)
        w_hh = unif(next(ki), (4 * H, H), lbound)
        b_ih = unif(next(ki), (4 * H,), lbound)
        b_hh = unif(next(ki), (4 * H,), lbound)
        lstm_layers.append((w_ih, w_hh, b_ih, b_hh))

    fbound = 1.0 / math.sqrt(H)
    fc_w = unif(next(ki), (output_size, H), fbound)
    fc_b = unif(next(ki), (output_size,), fbound)
    return conv_w, conv_b, lstm_layers, fc_w, fc_b


if __name__ == "__main__":
    # hyperparameters (pooled_len must equal num_filters for the module to run,
    # exactly as in the PyTorch original)
    input_size, num_filters, kernel_size = 4, 8, 3
    lstm_hidden_size, lstm_num_layers, output_size = 16, 2, 32
    B, L = 2, 26        # conv_out = 24, pooled = 24 // 3 = 8 == num_filters

    key = jax.random.PRNGKey(0)
    pkey, xkey = jax.random.split(key)
    params = init_params(pkey, input_size, num_filters, kernel_size,
                         lstm_hidden_size, lstm_num_layers, output_size)
    x = jax.random.normal(xkey, (B, input_size, L), jnp.float32)

    forward = build_eye_tracking_embedder(params)   # packs params once (numpy)
    out, hidden = forward(x)
    jax.block_until_ready((out, hidden))

    ref_out, ref_hidden = reference(x, params)
    np.testing.assert_allclose(np.asarray(out), np.asarray(ref_out),
                               rtol=1e-3, atol=1e-4)
    np.testing.assert_allclose(np.asarray(hidden), np.asarray(ref_hidden),
                               rtol=1e-3, atol=1e-4)
    assert out.shape == (B, output_size)
    assert hidden.shape == (lstm_num_layers, B, lstm_hidden_size)

    print("KERNEL_OK")
</pallas_src>

<mosaic_0001>
module attributes {stable_mosaic.version = 11 : i64} {
  func.func @kernel(%arg0: memref<128x48xf32, #tpu.memory_space<vmem>>, %arg1: memref<104x128xf32, #tpu.memory_space<vmem>>, %arg2: memref<2x128xf32, #tpu.memory_space<vmem>>, %arg3: memref<16x16xf32, #tpu.memory_space<vmem>>) attributes {dimension_semantics = [], scalar_prefetch = 0 : i64, scratch_operands = 1 : i64, tpu.core_type = #tpu.core_type<tc>} {
    %c0 = arith.constant 0 : index
    %c0_0 = arith.constant 0 : index
    %0 = vector.load %arg0[%c0, %c0_0] : memref<128x48xf32, #tpu.memory_space<vmem>>, vector<128x48xf32>
    %c0_1 = arith.constant 0 : index
    %c0_2 = arith.constant 0 : index
    %1 = vector.load %arg1[%c0_1, %c0_2] : memref<104x128xf32, #tpu.memory_space<vmem>>, vector<8x128xf32>
    %cst = arith.constant dense<0.000000e+00> : vector<8x48xf32>
    %2 = tpu.matmul %1, %0, %cst {dimension_numbers = #tpu.dot_dimension_numbers<[1], [0], [0], [1], [0, 0, 1, 1], [], []>, precision = #tpu.contract_precision<fp32>} : vector<8x128xf32>, vector<128x48xf32>, vector<8x48xf32> -> vector<8x48xf32>
    %cst_3 = arith.constant 0.000000e+00 : f32
    %3 = vector.broadcast %cst_3 : f32 to vector<8x48xf32>
    %4 = arith.maximumf %2, %3 : vector<8x48xf32>
    %5 = vector.extract_strided_slice %4 {offsets = [0, 0], sizes = [8, 16], strides = [1, 1]} : vector<8x48xf32> to vector<8x16xf32>
    %6 = vector.extract_strided_slice %4 {offsets = [0, 16], sizes = [8, 16], strides = [1, 1]} : vector<8x48xf32> to vector<8x16xf32>
    %7 = arith.maximumf %5, %6 : vector<8x16xf32>
    %8 = vector.extract_strided_slice %4 {offsets = [0, 32], sizes = [8, 16], strides = [1, 1]} : vector<8x48xf32> to vector<8x16xf32>
    %9 = arith.maximumf %7, %8 : vector<8x16xf32>
    %c8 = arith.constant 8 : index
    %c0_4 = arith.constant 0 : index
    %10 = vector.load %arg1[%c8, %c0_4] : memref<104x128xf32, #tpu.memory_space<vmem>>, vector<8x128xf32>
    %c16 = arith.constant 16 : index
    %c0_5 = arith.constant 0 : index
    %11 = vector.load %arg1[%c16, %c0_5] : memref<104x128xf32, #tpu.memory_space<vmem>>, vector<16x128xf32>
    %c32 = arith.constant 32 : index
    %c0_6 = arith.constant 0 : index
    %12 = vector.load %arg1[%c32, %c0_6] : memref<104x128xf32, #tpu.memory_space<vmem>>, vector<1x128xf32>
    %13 = vector.extract_strided_slice %9 {offsets = [0, 0], sizes = [8, 8], strides = [1, 1]} : vector<8x16xf32> to vector<8x8xf32>
    %cst_7 = arith.constant dense<0.000000e+00> : vector<8x128xf32>
    %14 = tpu.matmul %13, %10, %cst_7 {dimension_numbers = #tpu.dot_dimension_numbers<[1], [0], [0], [1], [0, 0, 1, 1], [], []>, precision = #tpu.contract_precision<fp32>} : vector<8x8xf32>, vector<8x128xf32>, vector<8x128xf32> -> vector<8x128xf32>
    %15 = vector.broadcast %12 : vector<1x128xf32> to vector<8x128xf32>
    %16 = arith.addf %14, %15 : vector<8x128xf32>
    %17 = vector.extract_strided_slice %9 {offsets = [0, 8], sizes = [8, 8], strides = [1, 1]} : vector<8x16xf32> to vector<8x8xf32>
    %cst_8 = arith.constant dense<0.000000e+00> : vector<8x128xf32>
    %18 = tpu.matmul %17, %10, %cst_8 {dimension_numbers = #tpu.dot_dimension_numbers<[1], [0], [0], [1], [0, 0, 1, 1], [], []>, precision = #tpu.contract_precision<fp32>} : vector<8x8xf32>, vector<8x128xf32>, vector<8x128xf32> -> vector<8x128xf32>
    %19 = vector.broadcast %12 : vector<1x128xf32> to vector<8x128xf32>
    %20 = arith.addf %18, %19 : vector<8x128xf32>
    %cst_9 = arith.constant 0.000000e+00 : f32
    %21 = vector.broadcast %cst_9 : f32 to vector<2x16xf32>
    %cst_10 = arith.constant 0.000000e+00 : f32
    %22 = vector.broadcast %cst_10 : f32 to vector<2x16xf32>
    %23 = vector.extract_strided_slice %16 {offsets = [0, 0], sizes = [1, 128], strides = [1, 1]} : vector<8x128xf32> to vector<1x128xf32>
    %24 = vector.extract_strided_slice %20 {offsets = [0, 0], sizes = [1, 128], strides = [1, 1]} : vector<8x128xf32> to vector<1x128xf32>
    %25 = tpu.concatenate %23, %24 in 0 : vector<1x128xf32>, vector<1x128xf32> -> vector<2x128xf32>
    %26 = vector.extract_strided_slice %21 {offsets = [0, 0], sizes = [2, 1], strides = [1, 1]} : vector<2x16xf32> to vector<2x1xf32>
    %27 = vector.extract_strided_slice %11 {offsets = [0, 0], sizes = [1, 128], strides = [1, 1]} : vector<16x128xf32> to vector<1x128xf32>
    %28 = vector.broadcast %26 : vector<2x1xf32> to vector<2x128xf32>
    %29 = vector.broadcast %27 : vector<1x128xf32> to vector<2x128xf32>
    %30 = arith.mulf %28, %29 : vector<2x128xf32>
    %31 = vector.extract_strided_slice %21 {offsets = [0, 1], sizes = [2, 1], strides = [1, 1]} : vector<2x16xf32> to vector<2x1xf32>
    %32 = vector.extract_strided_slice %11 {offsets = [1, 0], sizes = [1, 128], strides = [1, 1]} : vector<16x128xf32> to vector<1x128xf32>
    %33 = vector.broadcast %31 : vector<2x1xf32> to vector<2x128xf32>
    %34 = vector.broadcast %32 : vector<1x128xf32> to vector<2x128xf32>
    %35 = arith.mulf %33, %34 : vector<2x128xf32>
    %36 = vector.extract_strided_slice %21 {offsets = [0, 2], sizes = [2, 1], strides = [1, 1]} : vector<2x16xf32> to vector<2x1xf32>
    %37 = vector.extract_strided_slice %11 {offsets = [2, 0], sizes = [1, 128], strides = [1, 1]} : vector<16x128xf32> to vector<1x128xf32>
    %38 = vector.broadcast %36 : vector<2x1xf32> to vector<2x128xf32>
    %39 = vector.broadcast %37 : vector<1x128xf32> to vector<2x128xf32>
    %40 = arith.mulf %38, %39 : vector<2x128xf32>
    %41 = vector.extract_strided_slice %21 {offsets = [0, 3], sizes = [2, 1], strides = [1, 1]} : vector<2x16xf32> to vector<2x1xf32>
    %42 = vector.extract_strided_slice %11 {offsets = [3, 0], sizes = [1, 128], strides = [1, 1]} : vector<16x128xf32> to vector<1x128xf32>
    %43 = vector.broadcast %41 : vector<2x1xf32> to vector<2x128xf32>
    %44 = vector.broadcast %42 : vector<1x128xf32> to vector<2x128xf32>
    %45 = arith.mulf %43, %44 : vector<2x128xf32>
    %46 = vector.extract_strided_slice %21 {offsets = [0, 4], sizes = [2, 1], strides = [1, 1]} : vector<2x16xf32> to vector<2x1xf32>
    %47 = vector.extract_strided_slice %11 {offsets = [4, 0], sizes = [1, 128], strides = [1, 1]} : vector<16x128xf32> to vector<1x128xf32>
    %48 = vector.broadcast %46 : vector<2x1xf32> to vector<2x128xf32>
    %49 = vector.broadcast %47 : vector<1x128xf32> to vector<2x128xf32>
    %50 = arith.mulf %48, %49 : vector<2x128xf32>
    %51 = vector.extract_strided_slice %21 {offsets = [0, 5], sizes = [2, 1], strides = [1, 1]} : vector<2x16xf32> to vector<2x1xf32>
    %52 = vector.extract_strided_slice %11 {offsets = [5, 0], sizes = [1, 128], strides = [1, 1]} : vector<16x128xf32> to vector<1x128xf32>
    %53 = vector.broadcast %51 : vector<2x1xf32> to vector<2x128xf32>
    %54 = vector.broadcast %52 : vector<1x128xf32> to vector<2x128xf32>
    %55 = arith.mulf %53, %54 : vector<2x128xf32>
    %56 = vector.extract_strided_slice %21 {offsets = [0, 6], sizes = [2, 1], strides = [1, 1]} : vector<2x16xf32> to vector<2x1xf32>
    %57 = vector.extract_strided_slice %11 {offsets = [6, 0], sizes = [1, 128], strides = [1, 1]} : vector<16x128xf32> to vector<1x128xf32>
    %58 = vector.broadcast %56 : vector<2x1xf32> to vector<2x128xf32>
    %59 = vector.broadcast %57 : vector<1x128xf32> to vector<2x128xf32>
    %60 = arith.mulf %58, %59 : vector<2x128xf32>
    %61 = vector.extract_strided_slice %21 {offsets = [0, 7], sizes = [2, 1], strides = [1, 1]} : vector<2x16xf32> to vector<2x1xf32>
    %62 = vector.extract_strided_slice %11 {offsets = [7, 0], sizes = [1, 128], strides = [1, 1]} : vector<16x128xf32> to vector<1x128xf32>
    %63 = vector.broadcast %61 : vector<2x1xf32> to vector<2x128xf32>
    %64 = vector.broadcast %62 : vector<1x128xf32> to vector<2x128xf32>
    %65 = arith.mulf %63, %64 : vector<2x128xf32>
    %66 = vector.extract_strided_slice %21 {offsets = [0, 8], sizes = [2, 1], strides = [1, 1]} : vector<2x16xf32> to vector<2x1xf32>
    %67 = vector.extract_strided_slice %11 {offsets = [8, 0], sizes = [1, 128], strides = [1, 1]} : vector<16x128xf32> to vector<1x128xf32>
    %68 = vector.broadcast %66 : vector<2x1xf32> to vector<2x128xf32>
    %69 = vector.broadcast %67 : vector<1x128xf32> to vector<2x128xf32>
    %70 = arith.mulf %68, %69 : vector<2x128xf32>
    %71 = vector.extract_strided_slice %21 {offsets = [0, 9], sizes = [2, 1], strides = [1, 1]} : vector<2x16xf32> to vector<2x1xf32>
    %72 = vector.extract_strided_slice %11 {offsets = [9, 0], sizes = [1, 128], strides = [1, 1]} : vector<16x128xf32> to vector<1x128xf32>
    %73 = vector.broadcast %71 : vector<2x1xf32> to vector<2x128xf32>
    %74 = vector.broadcast %72 : vector<1x128xf32> to vector<2x128xf32>
    %75 = arith.mulf %73, %74 : vector<2x128xf32>
    %76 = vector.extract_strided_slice %21 {offsets = [0, 10], sizes = [2, 1], strides = [1, 1]} : vector<2x16xf32> to vector<2x1xf32>
    %77 = vector.extract_strided_slice %11 {offsets = [10, 0], sizes = [1, 128], strides = [1, 1]} : vector<16x128xf32> to vector<1x128xf32>
    %78 = vector.broadcast %76 : vector<2x1xf32> to vector<2x128xf32>
    %79 = vector.broadcast %77 : vector<1x128xf32> to vector<2x128xf32>
    %80 = arith.mulf %78, %79 : vector<2x128xf32>
    %81 = vector.extract_strided_slice %21 {offsets = [0, 11], sizes = [2, 1], strides = [1, 1]} : vector<2x16xf32> to vector<2x1xf32>
    %82 = vector.extract_strided_slice %11 {offsets = [11, 0], sizes = [1, 128], strides = [1, 1]} : vector<16x128xf32> to vector<1x128xf32>
    %83 = vector.broadcast %81 : vector<2x1xf32> to vector<2x128xf32>
    %84 = vector.broadcast %82 : vector<1x128xf32> to vector<2x128xf32>
    %85 = arith.mulf %83, %84 : vector<2x128xf32>
    %86 = vector.extract_strided_slice %21 {offsets = [0, 12], sizes = [2, 1], strides = [1, 1]} : vector<2x16xf32> to vector<2x1xf32>
    %87 = vector.extract_strided_slice %11 {offsets = [12, 0], sizes = [1, 128], strides = [1, 1]} : vector<16x128xf32> to vector<1x128xf32>
    %88 = vector.broadcast %86 : vector<2x1xf32> to vector<2x128xf32>
    %89 = vector.broadcast %87 : vector<1x128xf32> to vector<2x128xf32>
    %90 = arith.mulf %88, %89 : vector<2x128xf32>
    %91 = vector.extract_strided_slice %21 {offsets = [0, 13], sizes = [2, 1], strides = [1, 1]} : vector<2x16xf32> to vector<2x1xf32>
    %92 = vector.extract_strided_slice %11 {offsets = [13, 0], sizes = [1, 128], strides = [1, 1]} : vector<16x128xf32> to vector<1x128xf32>
    %93 = vector.broadcast %91 : vector<2x1xf32> to vector<2x128xf32>
    %94 = vector.broadcast %92 : vector<1x128xf32> to vector<2x128xf32>
    %95 = arith.mulf %93, %94 : vector<2x128xf32>
    %96 = vector.extract_strided_slice %21 {offsets = [0, 14], sizes = [2, 1], strides = [1, 1]} : vector<2x16xf32> to vector<2x1xf32>
    %97 = vector.extract_strided_slice %11 {offsets = [14, 0], sizes = [1, 128], strides = [1, 1]} : vector<16x128xf32> to vector<1x128xf32>
    %98 = vector.broadcast %96 : vector<2x1xf32> to vector<2x128xf32>
    %99 = vector.broadcast %97 : vector<1x128xf32> to vector<2x128xf32>
    %100 = arith.mulf %98, %99 : vector<2x128xf32>
    %101 = vector.extract_strided_slice %21 {offsets = [0, 15], sizes = [2, 1], strides = [1, 1]} : vector<2x16xf32> to vector<2x1xf32>
    %102 = vector.extract_strided_slice %11 {offsets = [15, 0], sizes = [1, 128], strides = [1, 1]} : vector<16x128xf32> to vector<1x128xf32>
    %103 = vector.broadcast %101 : vector<2x1xf32> to vector<2x128xf32>
    %104 = vector.broadcast %102 : vector<1x128xf32> to vector<2x128xf32>
    %105 = arith.mulf %103, %104 : vector<2x128xf32>
    %106 = arith.addf %30, %35 : vector<2x128xf32>
    %107 = arith.addf %40, %45 : vector<2x128xf32>
    %108 = arith.addf %50, %55 : vector<2x128xf32>
    %109 = arith.addf %60, %65 : vector<2x128xf32>
    %110 = arith.addf %70, %75 : vector<2x128xf32>
    %111 = arith.addf %80, %85 : vector<2x128xf32>
    %112 = arith.addf %90, %95 : vector<2x128xf32>
    %113 = arith.addf %100, %105 : vector<2x128xf32>
    %114 = arith.addf %106, %107 : vector<2x128xf32>
    %115 = arith.addf %108, %109 : vector<2x128xf32>
    %116 = arith.addf %110, %111 : vector<2x128xf32>
    %117 = arith.addf %112, %113 : vector<2x128xf32>
    %118 = arith.addf %114, %115 : vector<2x128xf32>
    %119 = arith.addf %116, %117 : vector<2x128xf32>
    %120 = arith.addf %118, %119 : vector<2x128xf32>
    %121 = arith.addf %25, %120 : vector<2x128xf32>
    %122 = vector.extract_strided_slice %121 {offsets = [0, 0], sizes = [2, 48], strides = [1, 1]} : vector<2x128xf32> to vector<2x48xf32>
    %cst_11 = arith.constant 5.000000e-01 : f32
    %123 = vector.broadcast %cst_11 : f32 to vector<2x48xf32>
    %124 = arith.mulf %123, %122 : vector<2x48xf32>
    %125 = math.tanh %124 : vector<2x48xf32>
    %cst_12 = arith.constant 5.000000e-01 : f32
    %126 = vector.broadcast %cst_12 : f32 to vector<2x48xf32>
    %127 = arith.mulf %126, %125 : vector<2x48xf32>
    %cst_13 = arith.constant 5.000000e-01 : f32
    %128 = vector.broadcast %cst_13 : f32 to vector<2x48xf32>
    %129 = arith.addf %127, %128 : vector<2x48xf32>
    %130 = vector.extract_strided_slice %121 {offsets = [0, 48], sizes = [2, 16], strides = [1, 1]} : vector<2x128xf32> to vector<2x16xf32>
    %131 = math.tanh %130 : vector<2x16xf32>
    %132 = vector.extract_strided_slice %129 {offsets = [0, 0], sizes = [2, 16], strides = [1, 1]} : vector<2x48xf32> to vector<2x16xf32>
    %133 = vector.extract_strided_slice %129 {offsets = [0, 16], sizes = [2, 16], strides = [1, 1]} : vector<2x48xf32> to vector<2x16xf32>
    %134 = vector.extract_strided_slice %129 {offsets = [0, 32], sizes = [2, 16], strides = [1, 1]} : vector<2x48xf32> to vector<2x16xf32>
    %135 = arith.mulf %133, %22 : vector<2x16xf32>
    %136 = arith.mulf %132, %131 : vector<2x16xf32>
    %137 = arith.addf %135, %136 : vector<2x16xf32>
    %138 = math.tanh %137 : vector<2x16xf32>
    %139 = arith.mulf %134, %138 : vector<2x16xf32>
    %c0_14 = arith.constant 0 : index
    %c0_15 = arith.constant 0 : index
    %140 = vector.load %arg3[%c0_14, %c0_15] : memref<16x16xf32, #tpu.memory_space<vmem>>, vector<2x16xf32>
    tpu.vector_store %arg3[%c0_14, %c0_15], %139 {strides = array<i32>} : memref<16x16xf32, #tpu.memory_space<vmem>>, vector<2x16xf32>,
    %141 = vector.extract_strided_slice %16 {offsets = [1, 0], sizes = [1, 128], strides = [1, 1]} : vector<8x128xf32> to vector<1x128xf32>
    %142 = vector.extract_strided_slice %20 {offsets = [1, 0], sizes = [1, 128], strides = [1, 1]} : vector<8x128xf32> to vector<1x128xf32>
    %143 = tpu.concatenate %141, %142 in 0 : vector<1x128xf32>, vector<1x128xf32> -> vector<2x128xf32>
    %144 = vector.extract_strided_slice %139 {offsets = [0, 0], sizes = [2, 1], strides = [1, 1]} : vector<2x16xf32> to vector<2x1xf32>
    %145 = vector.extract_strided_slice %11 {offsets = [0, 0], sizes = [1, 128], strides = [1, 1]} : vector<16x128xf32> to vector<1x128xf32>
    %146 = vector.broadcast %144 : vector<2x1xf32> to vector<2x128xf32>
    %147 = vector.broadcast %145 : vector<1x128xf32> to vector<2x128xf32>
    %148 = arith.mulf %146, %147 : vector<2x128xf32>
    %149 = vector.extract_strided_slice %139 {offsets = [0, 1], sizes = [2, 1], strides = [1, 1]} : vector<2x16xf32> to vector<2x1xf32>
    %150 = vector.extract_strided_slice %11 {offsets = [1, 0], sizes = [1, 128], strides = [1, 1]} : vector<16x128xf32> to vector<1x128xf32>
    %151 = vector.broadcast %149 : vector<2x1xf32> to vector<2x128xf32>
    %152 = vector.broadcast %150 : vector<1x128xf32> to vector<2x128xf32>
    %153 = arith.mulf %151, %152 : vector<2x128xf32>
    %154 = vector.extract_strided_slice %139 {offsets = [0, 2], sizes = [2, 1], strides = [1, 1]} : vector<2x16xf32> to vector<2x1xf32>
    %155 = vector.extract_strided_slice %11 {offsets = [2, 0], sizes = [1, 128], strides = [1, 1]} : vector<16x128xf32> to vector<1x128xf32>
    %156 = vector.broadcast %154 : vector<2x1xf32> to vector<2x128xf32>
    %157 = vector.broadcast %155 : vector<1x128xf32> to vector<2x128xf32>
    %158 = arith.mulf %156, %157 : vector<2x128xf32>
    %159 = vector.extract_strided_slice %139 {offsets = [0, 3], sizes = [2, 1], strides = [1, 1]} : vector<2x16xf32> to vector<2x1xf32>
    %160 = vector.extract_strided_slice %11 {offsets = [3, 0], sizes = [1, 128], strides = [1, 1]} : vector<16x128xf32> to vector<1x128xf32>
    %161 = vector.broadcast %159 : vector<2x1xf32> to vector<2x128xf32>
    %162 = vector.broadcast %160 : vector<1x128xf32> to vector<2x128xf32>
    %163 = arith.mulf %161, %162 : vector<2x128xf32>
    %164 = vector.extract_strided_slice %139 {offsets = [0, 4], sizes = [2, 1], strides = [1, 1]} : vector<2x16xf32> to vector<2x1xf32>
    %165 = vector.extract_strided_slice %11 {offsets = [4, 0], sizes = [1, 128], strides = [1, 1]} : vector<16x128xf32> to vector<1x128xf32>
    %166 = vector.broadcast %164 : vector<2x1xf32> to vector<2x128xf32>
    %167 = vector.broadcast %165 : vector<1x128xf32> to vector<2x128xf32>
    %168 = arith.mulf %166, %167 : vector<2x128xf32>
    %169 = vector.extract_strided_slice %139 {offsets = [0, 5], sizes = [2, 1], strides = [1, 1]} : vector<2x16xf32> to vector<2x1xf32>
    %170 = vector.extract_strided_slice %11 {offsets = [5, 0], sizes = [1, 128], strides = [1, 1]} : vector<16x128xf32> to vector<1x128xf32>
    %171 = vector.broadcast %169 : vector<2x1xf32> to vector<2x128xf32>
    %172 = vector.broadcast %170 : vector<1x128xf32> to vector<2x128xf32>
    %173 = arith.mulf %171, %172 : vector<2x128xf32>
    %174 = vector.extract_strided_slice %139 {offsets = [0, 6], sizes = [2, 1], strides = [1, 1]} : vector<2x16xf32> to vector<2x1xf32>
    %175 = vector.extract_strided_slice %11 {offsets = [6, 0], sizes = [1, 128], strides = [1, 1]} : vector<16x128xf32> to vector<1x128xf32>
    %176 = vector.broadcast %174 : vector<2x1xf32> to vector<2x128xf32>
    %177 = vector.broadcast %175 : vector<1x128xf32> to vector<2x128xf32>
    %178 = arith.mulf %176, %177 : vector<2x128xf32>
    %179 = vector.extract_strided_slice %139 {offsets = [0, 7], sizes = [2, 1], strides = [1, 1]} : vector<2x16xf32> to vector<2x1xf32>
    %180 = vector.extract_strided_slice %11 {offsets = [7, 0], sizes = [1, 128], strides = [1, 1]} : vector<16x128xf32> to vector<1x128xf32>
    %181 = vector.broadcast %179 : vector<2x1xf32> to vector<2x128xf32>
    %182 = vector.broadcast %180 : vector<1x128xf32> to vector<2x128xf32>
    %183 = arith.mulf %181, %182 : vector<2x128xf32>
    %184 = vector.extract_strided_slice %139 {offsets = [0, 8], sizes = [2, 1], strides = [1, 1]} : vector<2x16xf32> to vector<2x1xf32>
    %185 = vector.extract_strided_slice %11 {offsets = [8, 0], sizes = [1, 128], strides = [1, 1]} : vector<16x128xf32> to vector<1x128xf32>
    %186 = vector.broadcast %184 : vector<2x1xf32> to vector<2x128xf32>
    %187 = vector.broadcast %185 : vector<1x128xf32> to vector<2x128xf32>
    %188 = arith.mulf %186, %187 : vector<2x128xf32>
    %189 = vector.extract_strided_slice %139 {offsets = [0, 9], sizes = [2, 1], strides = [1, 1]} : vector<2x16xf32> to vector<2x1xf32>
    %190 = vector.extract_strided_slice %11 {offsets = [9, 0], sizes = [1, 128], strides = [1, 1]} : vector<16x128xf32> to vector<1x128xf32>
    %191 = vector.broadcast %189 : vector<2x1xf32> to vector<2x128xf32>
    %192 = vector.broadcast %190 : vector<1x128xf32> to vector<2x128xf32>
    %193 = arith.mulf %191, %192 : vector<2x128xf32>
    %194 = vector.extract_strided_slice %139 {offsets = [0, 10], sizes = [2, 1], strides = [1, 1]} : vector<2x16xf32> to vector<2x1xf32>
    %195 = vector.extract_strided_slice %11 {offsets = [10, 0], sizes = [1, 128], strides = [1, 1]} : vector<16x128xf32> to vector<1x128xf32>
    %196 = vector.broadcast %194 : vector<2x1xf32> to vector<2x128xf32>
    %197 = vector.broadcast %195 : vector<1x128xf32> to vector<2x128xf32>
    %198 = arith.mulf %196, %197 : vector<2x128xf32>
    %199 = vector.extract_strided_slice %139 {offsets = [0, 11], sizes = [2, 1], strides = [1, 1]} : vector<2x16xf32> to vector<2x1xf32>
    %200 = vector.extract_strided_slice %11 {offsets = [11, 0], sizes = [1, 128], strides = [1, 1]} : vector<16x128xf32> to vector<1x128xf32>
    %201 = vector.broadcast %199 : vector<2x1xf32> to vector<2x128xf32>
    %202 = vector.broadcast %200 : vector<1x128xf32> to vector<2x128xf32>
    %203 = arith.mulf %201, %202 : vector<2x128xf32>
    %204 = vector.extract_strided_slice %139 {offsets = [0, 12], sizes = [2, 1], strides = [1, 1]} : vector<2x16xf32> to vector<2x1xf32>
    %205 = vector.extract_strided_slice %11 {offsets = [12, 0], sizes = [1, 128], strides = [1, 1]} : vector<16x128xf32> to vector<1x128xf32>
    %206 = vector.broadcast %204 : vector<2x1xf32> to vector<2x128xf32>
    %207 = vector.broadcast %205 : vector<1x128xf32> to vector<2x128xf32>
    %208 = arith.mulf %206, %207 : vector<2x128xf32>
    %209 = vector.extract_strided_slice %139 {offsets = [0, 13], sizes = [2, 1], strides = [1, 1]} : vector<2x16xf32> to vector<2x1xf32>
    %210 = vector.extract_strided_slice %11 {offsets = [13, 0], sizes = [1, 128], strides = [1, 1]} : vector<16x128xf32> to vector<1x128xf32>
    %211 = vector.broadcast %209 : vector<2x1xf32> to vector<2x128xf32>
    %212 = vector.broadcast %210 : vector<1x128xf32> to vector<2x128xf32>
    %213 = arith.mulf %211, %212 : vector<2x128xf32>
    %214 = vector.extract_strided_slice %139 {offsets = [0, 14], sizes = [2, 1], strides = [1, 1]} : vector<2x16xf32> to vector<2x1xf32>
    %215 = vector.extract_strided_slice %11 {offsets = [14, 0], sizes = [1, 128], strides = [1, 1]} : vector<16x128xf32> to vector<1x128xf32>
    %216 = vector.broadcast %214 : vector<2x1xf32> to vector<2x128xf32>
    %217 = vector.broadcast %215 : vector<1x128xf32> to vector<2x128xf32>
    %218 = arith.mulf %216, %217 : vector<2x128xf32>
    %219 = vector.extract_strided_slice %139 {offsets = [0, 15], sizes = [2, 1], strides = [1, 1]} : vector<2x16xf32> to vector<2x1xf32>
    %220 = vector.extract_strided_slice %11 {offsets = [15, 0], sizes = [1, 128], strides = [1, 1]} : vector<16x128xf32> to vector<1x128xf32>
    %221 = vector.broadcast %219 : vector<2x1xf32> to vector<2x128xf32>
    %222 = vector.broadcast %220 : vector<1x128xf32> to vector<2x128xf32>
    %223 = arith.mulf %221, %222 : vector<2x128xf32>
    %224 = arith.addf %148, %153 : vector<2x128xf32>
    %225 = arith.addf %158, %163 : vector<2x128xf32>
    %226 = arith.addf %168, %173 : vector<2x128xf32>
    %227 = arith.addf %178, %183 : vector<2x128xf32>
    %228 = arith.addf %188, %193 : vector<2x128xf32>
    %229 = arith.addf %198, %203 : vector<2x128xf32>
    %230 = arith.addf %208, %213 : vector<2x128xf32>
    %231 = arith.addf %218, %223 : vector<2x128xf32>
    %232 = arith.addf %224, %225 : vector<2x128xf32>
    %233 = arith.addf %226, %227 : vector<2x128xf32>
    %234 = arith.addf %228, %229 : vector<2x128xf32>
    %235 = arith.addf %230, %231 : vector<2x128xf32>
    %236 = arith.addf %232, %233 : vector<2x128xf32>
    %237 = arith.addf %234, %235 : vector<2x128xf32>
    %238 = arith.addf %236, %237 : vector<2x128xf32>
    %239 = arith.addf %143, %238 : vector<2x128xf32>
    %240 = vector.extract_strided_slice %239 {offsets = [0, 0], sizes = [2, 48], strides = [1, 1]} : vector<2x128xf32> to vector<2x48xf32>
    %cst_16 = arith.constant 5.000000e-01 : f32
    %241 = vector.broadcast %cst_16 : f32 to vector<2x48xf32>
    %242 = arith.mulf %241, %240 : vector<2x48xf32>
    %243 = math.tanh %242 : vector<2x48xf32>
    %cst_17 = arith.constant 5.000000e-01 : f32
    %244 = vector.broadcast %cst_17 : f32 to vector<2x48xf32>
    %245 = arith.mulf %244, %243 : vector<2x48xf32>
    %cst_18 = arith.constant 5.000000e-01 : f32
    %246 = vector.broadcast %cst_18 : f32 to vector<2x48xf32>
    %247 = arith.addf %245, %246 : vector<2x48xf32>
    %248 = vector.extract_strided_slice %239 {offsets = [0, 48], sizes = [2, 16], strides = [1, 1]} : vector<2x128xf32> to vector<2x16xf32>
    %249 = math.tanh %248 : vector<2x16xf32>
    %250 = vector.extract_strided_slice %247 {offsets = [0, 0], sizes = [2, 16], strides = [1, 1]} : vector<2x48xf32> to vector<2x16xf32>
    %251 = vector.extract_strided_slice %247 {offsets = [0, 16], sizes = [2, 16], strides = [1, 1]} : vector<2x48xf32> to vector<2x16xf32>
    %252 = vector.extract_strided_slice %247 {offsets = [0, 32], sizes = [2, 16], strides = [1, 1]} : vector<2x48xf32> to vector<2x16xf32>
    %253 = arith.mulf %251, %137 : vector<2x16xf32>
    %254 = arith.mulf %250, %249 : vector<2x16xf32>
    %255 = arith.addf %253, %254 : vector<2x16xf32>
    %256 = math.tanh %255 : vector<2x16xf32>
    %257 = arith.mulf %252, %256 : vector<2x16xf32>
    %c2 = arith.constant 2 : index
    %c0_19 = arith.constant 0 : index
    %258 = vector.load %arg3[%c2, %c0_19] : memref<16x16xf32, #tpu.memory_space<vmem>>, vector<2x16xf32>
    tpu.vector_store %arg3[%c2, %c0_19], %257 {strides = array<i32>} : memref<16x16xf32, #tpu.memory_space<vmem>>, vector<2x16xf32>,
    %259 = vector.extract_strided_slice %16 {offsets = [2, 0], sizes = [1, 128], strides = [1, 1]} : vector<8x128xf32> to vector<1x128xf32>
    %260 = vector.extract_strided_slice %20 {offsets = [2, 0], sizes = [1, 128], strides = [1, 1]} : vector<8x128xf32> to vector<1x128xf32>
    %261 = tpu.concatenate %259, %260 in 0 : vector<1x128xf32>, vector<1x128xf32> -> vector<2x128xf32>
    %262 = vector.extract_strided_slice %257 {offsets = [0, 0], sizes = [2, 1], strides = [1, 1]} : vector<2x16xf32> to vector<2x1xf32>
    %263 = vector.extract_strided_slice %11 {offsets = [0, 0], sizes = [1, 128], strides = [1, 1]} : vector<16x128xf32> to vector<1x128xf32>
    %264 = vector.broadcast %262 : vector<2x1xf32> to vector<2x128xf32>
    %265 = vector.broadcast %263 : vector<1x128xf32> to vector<2x128xf32>
    %266 = arith.mulf %264, %265 : vector<2x128xf32>
    %267 = vector.extract_strided_slice %257 {offsets = [0, 1], sizes = [2, 1], strides = [1, 1]} : vector<2x16xf32> to vector<2x1xf32>
    %268 = vector.extract_strided_slice %11 {offsets = [1, 0], sizes = [1, 128], strides = [1, 1]} : vector<16x128xf32> to vector<1x128xf32>
    %269 = vector.broadcast %267 : vector<2x1xf32> to vector<2x128xf32>
    %270 = vector.broadcast %268 : vector<1x128xf32> to vector<2x128xf32>
    %271 = arith.mulf %269, %270 : vector<2x128xf32>
    %272 = vector.extract_strided_slice %257 {offsets = [0, 2], sizes = [2, 1], strides = [1, 1]} : vector<2x16xf32> to vector<2x1xf32>
    %273 = vector.extract_strided_slice %11 {offsets = [2, 0], sizes = [1, 128], strides = [1, 1]} : vector<16x128xf32> to vector<1x128xf32>
    %274 = vector.broadcast %272 : vector<2x1xf32> to vector<2x128xf32>
    %275 = vector.broadcast %273 : vector<1x128xf32> to vector<2x128xf32>
    %276 = arith.mulf %274, %275 : vector<2x128xf32>
    %277 = vector.extract_strided_slice %257 {offsets = [0, 3], sizes = [2, 1], strides = [1, 1]} : vector<2x16xf32> to vector<2x1xf32>
    %278 = vector.extract_strided_slice %11 {offsets = [3, 0], sizes = [1, 128], strides = [1, 1]} : vector<16x128xf32> to vector<1x128xf32>
    %279 = vector.broadcast %277 : vector<2x1xf32> to vector<2x128xf32>
    %280 = vector.broadcast %278 : vector<1x128xf32> to vector<2x128xf32>
    %281 = arith.mulf %279, %280 : vector<2x128xf32>
    %282 = vector.extract_strided_slice %257 {offsets = [0, 4], sizes = [2, 1], strides = [1, 1]} : vector<2x16xf32> to vector<2x1xf32>
    %283 = vector.extract_strided_slice %11 {offsets = [4, 0], sizes = [1, 128], strides = [1, 1]} : vector<16x128xf32> to vector<1x128xf32>
    %284 = vector.broadcast %282 : vector<2x1xf32> to vector<2x128xf32>
    %285 = vector.broadcast %283 : vector<1x128xf32> to vector<2x128xf32>
    %286 = arith.mulf %284, %285 : vector<2x128xf32>
    %287 = vector.extract_strided_slice %257 {offsets = [0, 5], sizes = [2, 1], strides = [1, 1]} : vector<2x16xf32> to vector<2x1xf32>
    %288 = vector.extract_strided_slice %11 {offsets = [5, 0], sizes = [1, 128], strides = [1, 1]} : vector<16x128xf32> to vector<1x128xf32>
    %289 = vector.broadcast %287 : vector<2x1xf32> to vector<2x128xf32>
    %290 = vector.broadcast %288 : vector<1x128xf32> to vector<2x128xf32>
    %291 = arith.mulf %289, %290 : vector<2x128xf32>
    %292 = vector.extract_strided_slice %257 {offsets = [0, 6], sizes = [2, 1], strides = [1, 1]} : vector<2x16xf32> to vector<2x1xf32>
    %293 = vector.extract_strided_slice %11 {offsets = [6, 0], sizes = [1, 128], strides = [1, 1]} : vector<16x128xf32> to vector<1x128xf32>
    %294 = vector.broadcast %292 : vector<2x1xf32> to vector<2x128xf32>
    %295 = vector.broadcast %293 : vector<1x128xf32> to vector<2x128xf32>
    %296 = arith.mulf %294, %295 : vector<2x128xf32>
    %297 = vector.extract_strided_slice %257 {offsets = [0, 7], sizes = [2, 1], strides = [1, 1]} : vector<2x16xf32> to vector<2x1xf32>
    %298 = vector.extract_strided_slice %11 {offsets = [7, 0], sizes = [1, 128], strides = [1, 1]} : vector<16x128xf32> to vector<1x128xf32>
    %299 = vector.broadcast %297 : vector<2x1xf32> to vector<2x128xf32>
    %300 = vector.broadcast %298 : vector<1x128xf32> to vector<2x128xf32>
    %301 = arith.mulf %299, %300 : vector<2x128xf32>
    %302 = vector.extract_strided_slice %257 {offsets = [0, 8], sizes = [2, 1], strides = [1, 1]} : vector<2x16xf32> to vector<2x1xf32>
    %303 = vector.extract_strided_slice %11 {offsets = [8, 0], sizes = [1, 128], strides = [1, 1]} : vector<16x128xf32> to vector<1x128xf32>
    %304 = vector.broadcast %302 : vector<2x1xf32> to vector<2x128xf32>
    %305 = vector.broadcast %303 : vector<1x128xf32> to vector<2x128xf32>
    %306 = arith.mulf %304, %305 : vector<2x128xf32>
    %307 = vector.extract_strided_slice %257 {offsets = [0, 9], sizes = [2, 1], strides = [1, 1]} : vector<2x16xf32> to vector<2x1xf32>
    %308 = vector.extract_strided_slice %11 {offsets = [9, 0], sizes = [1, 128], strides = [1, 1]} : vector<16x128xf32> to vector<1x128xf32>
    %309 = vector.broadcast %307 : vector<2x1xf32> to vector<2x128xf32>
    %310 = vector.broadcast %308 : vector<1x128xf32> to vector<2x128xf32>
    %311 = arith.mulf %309, %310 : vector<2x128xf32>
    %312 = vector.extract_strided_slice %257 {offsets = [0, 10], sizes = [2, 1], strides = [1, 1]} : vector<2x16xf32> to vector<2x1xf32>
    %313 = vector.extract_strided_slice %11 {offsets = [10, 0], sizes = [1, 128], strides = [1, 1]} : vector<16x128xf32> to vector<1x128xf32>
    %314 = vector.broadcast %312 : vector<2x1xf32> to vector<2x128xf32>
    %315 = vector.broadcast %313 : vector<1x128xf32> to vector<2x128xf32>
    %316 = arith.mulf %314, %315 : vector<2x128xf32>
    %317 = vector.extract_strided_slice %257 {offsets = [0, 11], sizes = [2, 1], strides = [1, 1]} : vector<2x16xf32> to vector<2x1xf32>
    %318 = vector.extract_strided_slice %11 {offsets = [11, 0], sizes = [1, 128], strides = [1, 1]} : vector<16x128xf32> to vector<1x128xf32>
    %319 = vector.broadcast %317 : vector<2x1xf32> to vector<2x128xf32>
    %320 = vector.broadcast %318 : vector<1x128xf32> to vector<2x128xf32>
    %321 = arith.mulf %319, %320 : vector<2x128xf32>
    %322 = vector.extract_strided_slice %257 {offsets = [0, 12], sizes = [2, 1], strides = [1, 1]} : vector<2x16xf32> to vector<2x1xf32>
    %323 = vector.extract_strided_slice %11 {offsets = [12, 0], sizes = [1, 128], strides = [1, 1]} : vector<16x128xf32> to vector<1x128xf32>
    %324 = vector.broadcast %322 : vector<2x1xf32> to vector<2x128xf32>
    %325 = vector.broadcast %323 : vector<1x128xf32> to vector<2x128xf32>
    %326 = arith.mulf %324, %325 : vector<2x128xf32>
    %327 = vector.extract_strided_slice %257 {offsets = [0, 13], sizes = [2, 1], strides = [1, 1]} : vector<2x16xf32> to vector<2x1xf32>
    %328 = vector.extract_strided_slice %11 {offsets = [13, 0], sizes = [1, 128], strides = [1, 1]} : vector<16x128xf32> to vector<1x128xf32>
    %329 = vector.broadcast %327 : vector<2x1xf32> to vector<2x128xf32>
    %330 = vector.broadcast %328 : vector<1x128xf32> to vector<2x128xf32>
    %331 = arith.mulf %329, %330 : vector<2x128xf32>
    %332 = vector.extract_strided_slice %257 {offsets = [0, 14], sizes = [2, 1], strides = [1, 1]} : vector<2x16xf32> to vector<2x1xf32>
    %333 = vector.extract_strided_slice %11 {offsets = [14, 0], sizes = [1, 128], strides = [1, 1]} : vector<16x128xf32> to vector<1x128xf32>
    %334 = vector.broadcast %332 : vector<2x1xf32> to vector<2x128xf32>
    %335 = vector.broadcast %333 : vector<1x128xf32> to vector<2x128xf32>
    %336 = arith.mulf %334, %335 : vector<2x128xf32>
    %337 = vector.extract_strided_slice %257 {offsets = [0, 15], sizes = [2, 1], strides = [1, 1]} : vector<2x16xf32> to vector<2x1xf32>
    %338 = vector.extract_strided_slice %11 {offsets = [15, 0], sizes = [1, 128], strides = [1, 1]} : vector<16x128xf32> to vector<1x128xf32>
    %339 = vector.broadcast %337 : vector<2x1xf32> to vector<2x128xf32>
    %340 = vector.broadcast %338 : vector<1x128xf32> to vector<2x128xf32>
    %341 = arith.mulf %339, %340 : vector<2x128xf32>
    %342 = arith.addf %266, %271 : vector<2x128xf32>
    %343 = arith.addf %276, %281 : vector<2x128xf32>
    %344 = arith.addf %286, %291 : vector<2x128xf32>
    %345 = arith.addf %296, %301 : vector<2x128xf32>
    %346 = arith.addf %306, %311 : vector<2x128xf32>
    %347 = arith.addf %316, %321 : vector<2x128xf32>
    %348 = arith.addf %326, %331 : vector<2x128xf32>
    %349 = arith.addf %336, %341 : vector<2x128xf32>
    %350 = arith.addf %342, %343 : vector<2x128xf32>
    %351 = arith.addf %344, %345 : vector<2x128xf32>
    %352 = arith.addf %346, %347 : vector<2x128xf32>
    %353 = arith.addf %348, %349 : vector<2x128xf32>
    %354 = arith.addf %350, %351 : vector<2x128xf32>
    %355 = arith.addf %352, %353 : vector<2x128xf32>
    %356 = arith.addf %354, %355 : vector<2x128xf32>
    %357 = arith.addf %261, %356 : vector<2x128xf32>
    %358 = vector.extract_strided_slice %357 {offsets = [0, 0], sizes = [2, 48], strides = [1, 1]} : vector<2x128xf32> to vector<2x48xf32>
    %cst_20 = arith.constant 5.000000e-01 : f32
    %359 = vector.broadcast %cst_20 : f32 to vector<2x48xf32>
    %360 = arith.mulf %359, %358 : vector<2x48xf32>
    %361 = math.tanh %360 : vector<2x48xf32>
    %cst_21 = arith.constant 5.000000e-01 : f32
    %362 = vector.broadcast %cst_21 : f32 to vector<2x48xf32>
    %363 = arith.mulf %362, %361 : vector<2x48xf32>
    %cst_22 = arith.constant 5.000000e-01 : f32
    %364 = vector.broadcast %cst_22 : f32 to vector<2x48xf32>
    %365 = arith.addf %363, %364 : vector<2x48xf32>
    %366 = vector.extract_strided_slice %357 {offsets = [0, 48], sizes = [2, 16], strides = [1, 1]} : vector<2x128xf32> to vector<2x16xf32>
    %367 = math.tanh %366 : vector<2x16xf32>
    %368 = vector.extract_strided_slice %365 {offsets = [0, 0], sizes = [2, 16], strides = [1, 1]} : vector<2x48xf32> to vector<2x16xf32>
    %369 = vector.extract_strided_slice %365 {offsets = [0, 16], sizes = [2, 16], strides = [1, 1]} : vector<2x48xf32> to vector<2x16xf32>
    %370 = vector.extract_strided_slice %365 {offsets = [0, 32], sizes = [2, 16], strides = [1, 1]} : vector<2x48xf32> to vector<2x16xf32>
    %371 = arith.mulf %369, %255 : vector<2x16xf32>
    %372 = arith.mulf %368, %367 : vector<2x16xf32>
    %373 = arith.addf %371, %372 : vector<2x16xf32>
    %374 = math.tanh %373 : vector<2x16xf32>
    %375 = arith.mulf %370, %374 : vector<2x16xf32>
    %c4 = arith.constant 4 : index
    %c0_23 = arith.constant 0 : index
    %376 = vector.load %arg3[%c4, %c0_23] : memref<16x16xf32, #tpu.memory_space<vmem>>, vector<2x16xf32>
    tpu.vector_store %arg3[%c4, %c0_23], %375 {strides = array<i32>} : memref<16x16xf32, #tpu.memory_space<vmem>>, vector<2x16xf32>,
    %377 = vector.extract_strided_slice %16 {offsets = [3, 0], sizes = [1, 128], strides = [1, 1]} : vector<8x128xf32> to vector<1x128xf32>
    %378 = vector.extract_strided_slice %20 {offsets = [3, 0], sizes = [1, 128], strides = [1, 1]} : vector<8x128xf32> to vector<1x128xf32>
    %379 = tpu.concatenate %377, %378 in 0 : vector<1x128xf32>, vector<1x128xf32> -> vector<2x128xf32>
    %380 = vector.extract_strided_slice %375 {offsets = [0, 0], sizes = [2, 1], strides = [1, 1]} : vector<2x16xf32> to vector<2x1xf32>
    %381 = vector.extract_strided_slice %11 {offsets = [0, 0], sizes = [1, 128], strides = [1, 1]} : vector<16x128xf32> to vector<1x128xf32>
    %382 = vector.broadcast %380 : vector<2x1xf32> to vector<2x128xf32>
    %383 = vector.broadcast %381 : vector<1x128xf32> to vector<2x128xf32>
    %384 = arith.mulf %382, %383 : vector<2x128xf32>
    %385 = vector.extract_strided_slice %375 {offsets = [0, 1], sizes = [2, 1], strides = [1, 1]} : vector<2x16xf32> to vector<2x1xf32>
    %386 = vector.extract_strided_slice %11 {offsets = [1, 0], sizes = [1, 128], strides = [1, 1]} : vector<16x128xf32> to vector<1x128xf32>
    %387 = vector.broadcast %385 : vector<2x1xf32> to vector<2x128xf32>
    %388 = vector.broadcast %386 : vector<1x128xf32> to vector<2x128xf32>
    %389 = arith.mulf %387, %388 : vector<2x128xf32>
    %390 = vector.extract_strided_slice %375 {offsets = [0, 2], sizes = [2, 1], strides = [1, 1]} : vector<2x16xf32> to vector<2x1xf32>
    %391 = vector.extract_strided_slice %11 {offsets = [2, 0], sizes = [1, 128], strides = [1, 1]} : vector<16x128xf32> to vector<1x128xf32>
    %392 = vector.broadcast %390 : vector<2x1xf32> to vector<2x128xf32>
    %393 = vector.broadcast %391 : vector<1x128xf32> to vector<2x128xf32>
    %394 = arith.mulf %392, %393 : vector<2x128xf32>
    %395 = vector.extract_strided_slice %375 {offsets = [0, 3], sizes = [2, 1], strides = [1, 1]} : vector<2x16xf32> to vector<2x1xf32>
    %396 = vector.extract_strided_slice %11 {offsets = [3, 0], sizes = [1, 128], strides = [1, 1]} : vector<16x128xf32> to vector<1x128xf32>
    %397 = vector.broadcast %395 : vector<2x1xf32> to vector<2x128xf32>
    %398 = vector.broadcast %396 : vector<1x128xf32> to vector<2x128xf32>
    %399 = arith.mulf %397, %398 : vector<2x128xf32>
    %400 = vector.extract_strided_slice %375 {offsets = [0, 4], sizes = [2, 1], strides = [1, 1]} : vector<2x16xf32> to vector<2x1xf32>
    %401 = vector.extract_strided_slice %11 {offsets = [4, 0], sizes = [1, 128], strides = [1, 1]} : vector<16x128xf32> to vector<1x128xf32>
    %402 = vector.broadcast %400 : vector<2x1xf32> to vector<2x128xf32>
    %403 = vector.broadcast %401 : vector<1x128xf32> to vector<2x128xf32>
    %404 = arith.mulf %402, %403 : vector<2x128xf32>
    %405 = vector.extract_strided_slice %375 {offsets = [0, 5], sizes = [2, 1], strides = [1, 1]} : vector<2x16xf32> to vector<2x1xf32>
    %406 = vector.extract_strided_slice %11 {offsets = [5, 0], sizes = [1, 128], strides = [1, 1]} : vector<16x128xf32> to vector<1x128xf32>
    %407 = vector.broadcast %405 : vector<2x1xf32> to vector<2x128xf32>
    %408 = vector.broadcast %406 : vector<1x128xf32> to vector<2x128xf32>
    %409 = arith.mulf %407, %408 : vector<2x128xf32>
    %410 = vector.extract_strided_slice %375 {offsets = [0, 6], sizes = [2, 1], strides = [1, 1]} : vector<2x16xf32> to vector<2x1xf32>
    %411 = vector.extract_strided_slice %11 {offsets = [6, 0], sizes = [1, 128], strides = [1, 1]} : vector<16x128xf32> to vector<1x128xf32>
    %412 = vector.broadcast %410 : vector<2x1xf32> to vector<2x128xf32>
    %413 = vector.broadcast %411 : vector<1x128xf32> to vector<2x128xf32>
    %414 = arith.mulf %412, %413 : vector<2x128xf32>
    %415 = vector.extract_strided_slice %375 {offsets = [0, 7], sizes = [2, 1], strides = [1, 1]} : vector<2x16xf32> to vector<2x1xf32>
    %416 = vector.extract_strided_slice %11 {offsets = [7, 0], sizes = [1, 128], strides = [1, 1]} : vector<16x128xf32> to vector<1x128xf32>
    %417 = vector.broadcast %415 : vector<2x1xf32> to vector<2x128xf32>
    %418 = vector.broadcast %416 : vector<1x128xf32> to vector<2x128xf32>
    %419 = arith.mulf %417, %418 : vector<2x128xf32>
    %420 = vector.extract_strided_slice %375 {offsets = [0, 8], sizes = [2, 1], strides = [1, 1]} : vector<2x16xf32> to vector<2x1xf32>
    %421 = vector.extract_strided_slice %11 {offsets = [8, 0], sizes = [1, 128], strides = [1, 1]} : vector<16x128xf32> to vector<1x128xf32>
    %422 = vector.broadcast %420 : vector<2x1xf32> to vector<2x128xf32>
    %423 = vector.broadcast %421 : vector<1x128xf32> to vector<2x128xf32>
    %424 = arith.mulf %422, %423 : vector<2x128xf32>
    %425 = vector.extract_strided_slice %375 {offsets = [0, 9], sizes = [2, 1], strides = [1, 1]} : vector<2x16xf32> to vector<2x1xf32>
    %426 = vector.extract_strided_slice %11 {offsets = [9, 0], sizes = [1, 128], strides = [1, 1]} : vector<16x128xf32> to vector<1x128xf32>
    %427 = vector.broadcast %425 : vector<2x1xf32> to vector<2x128xf32>
    %428 = vector.broadcast %426 : vector<1x128xf32> to vector<2x128xf32>
    %429 = arith.mulf %427, %428 : vector<2x128xf32>
    %430 = vector.extract_strided_slice %375 {offsets = [0, 10], sizes = [2, 1], strides = [1, 1]} : vector<2x16xf32> to vector<2x1xf32>
    %431 = vector.extract_strided_slice %11 {offsets = [10, 0], sizes = [1, 128], strides = [1, 1]} : vector<16x128xf32> to vector<1x128xf32>
    %432 = vector.broadcast %430 : vector<2x1xf32> to vector<2x128xf32>
    %433 = vector.broadcast %431 : vector<1x128xf32> to vector<2x128xf32>
    %434 = arith.mulf %432, %433 : vector<2x128xf32>
    %435 = vector.extract_strided_slice %375 {offsets = [0, 11], sizes = [2, 1], strides = [1, 1]} : vector<2x16xf32> to vector<2x1xf32>
    %436 = vector.extract_strided_slice %11 {offsets = [11, 0], sizes = [1, 128], strides = [1, 1]} : vector<16x128xf32> to vector<1x128xf32>
    %437 = vector.broadcast %435 : vector<2x1xf32> to vector<2x128xf32>
    %438 = vector.broadcast %436 : vector<1x128xf32> to vector<2x128xf32>
    %439 = arith.mulf %437, %438 : vector<2x128xf32>
    %440 = vector.extract_strided_slice %375 {offsets = [0, 12], sizes = [2, 1], strides = [1, 1]} : vector<2x16xf32> to vector<2x1xf32>
    %441 = vector.extract_strided_slice %11 {offsets = [12, 0], sizes = [1, 128], strides = [1, 1]} : vector<16x128xf32> to vector<1x128xf32>
    %442 = vector.broadcast %440 : vector<2x1xf32> to vector<2x128xf32>
    %443 = vector.broadcast %441 : vector<1x128xf32> to vector<2x128xf32>
    %444 = arith.mulf %442, %443 : vector<2x128xf32>
    %445 = vector.extract_strided_slice %375 {offsets = [0, 13], sizes = [2, 1], strides = [1, 1]} : vector<2x16xf32> to vector<2x1xf32>
    %446 = vector.extract_strided_slice %11 {offsets = [13, 0], sizes = [1, 128], strides = [1, 1]} : vector<16x128xf32> to vector<1x128xf32>
    %447 = vector.broadcast %445 : vector<2x1xf32> to vector<2x128xf32>
    %448 = vector.broadcast %446 : vector<1x128xf32> to vector<2x128xf32>
    %449 = arith.mulf %447, %448 : vector<2x128xf32>
    %450 = vector.extract_strided_slice %375 {offsets = [0, 14], sizes = [2, 1], strides = [1, 1]} : vector<2x16xf32> to vector<2x1xf32>
    %451 = vector.extract_strided_slice %11 {offsets = [14, 0], sizes = [1, 128], strides = [1, 1]} : vector<16x128xf32> to vector<1x128xf32>
    %452 = vector.broadcast %450 : vector<2x1xf32> to vector<2x128xf32>
    %453 = vector.broadcast %451 : vector<1x128xf32> to vector<2x128xf32>
    %454 = arith.mulf %452, %453 : vector<2x128xf32>
    %455 = vector.extract_strided_slice %375 {offsets = [0, 15], sizes = [2, 1], strides = [1, 1]} : vector<2x16xf32> to vector<2x1xf32>
    %456 = vector.extract_strided_slice %11 {offsets = [15, 0], sizes = [1, 128], strides = [1, 1]} : vector<16x128xf32> to vector<1x128xf32>
    %457 = vector.broadcast %455 : vector<2x1xf32> to vector<2x128xf32>
    %458 = vector.broadcast %456 : vector<1x128xf32> to vector<2x128xf32>
    %459 = arith.mulf %457, %458 : vector<2x128xf32>
    %460 = arith.addf %384, %389 : vector<2x128xf32>
    %461 = arith.addf %394, %399 : vector<2x128xf32>
    %462 = arith.addf %404, %409 : vector<2x128xf32>
    %463 = arith.addf %414, %419 : vector<2x128xf32>
    %464 = arith.addf %424, %429 : vector<2x128xf32>
    %465 = arith.addf %434, %439 : vector<2x128xf32>
    %466 = arith.addf %444, %449 : vector<2x128xf32>
    %467 = arith.addf %454, %459 : vector<2x128xf32>
    %468 = arith.addf %460, %461 : vector<2x128xf32>
    %469 = arith.addf %462, %463 : vector<2x128xf32>
    %470 = arith.addf %464, %465 : vector<2x128xf32>
    %471 = arith.addf %466, %467 : vector<2x128xf32>
    %472 = arith.addf %468, %469 : vector<2x128xf32>
    %473 = arith.addf %470, %471 : vector<2x128xf32>
    %474 = arith.addf %472, %473 : vector<2x128xf32>
    %475 = arith.addf %379, %474 : vector<2x128xf32>
    %476 = vector.extract_strided_slice %475 {offsets = [0, 0], sizes = [2, 48], strides = [1, 1]} : vector<2x128xf32> to vector<2x48xf32>
    %cst_24 = arith.constant 5.000000e-01 : f32
    %477 = vector.broadcast %cst_24 : f32 to vector<2x48xf32>
    %478 = arith.mulf %477, %476 : vector<2x48xf32>
    %479 = math.tanh %478 : vector<2x48xf32>
    %cst_25 = arith.constant 5.000000e-01 : f32
    %480 = vector.broadcast %cst_25 : f32 to vector<2x48xf32>
    %481 = arith.mulf %480, %479 : vector<2x48xf32>
    %cst_26 = arith.constant 5.000000e-01 : f32
    %482 = vector.broadcast %cst_26 : f32 to vector<2x48xf32>
    %483 = arith.addf %481, %482 : vector<2x48xf32>
    %484 = vector.extract_strided_slice %475 {offsets = [0, 48], sizes = [2, 16], strides = [1, 1]} : vector<2x128xf32> to vector<2x16xf32>
    %485 = math.tanh %484 : vector<2x16xf32>
    %486 = vector.extract_strided_slice %483 {offsets = [0, 0], sizes = [2, 16], strides = [1, 1]} : vector<2x48xf32> to vector<2x16xf32>
    %487 = vector.extract_strided_slice %483 {offsets = [0, 16], sizes = [2, 16], strides = [1, 1]} : vector<2x48xf32> to vector<2x16xf32>
    %488 = vector.extract_strided_slice %483 {offsets = [0, 32], sizes = [2, 16], strides = [1, 1]} : vector<2x48xf32> to vector<2x16xf32>
    %489 = arith.mulf %487, %373 : vector<2x16xf32>
    %490 = arith.mulf %486, %485 : vector<2x16xf32>
    %491 = arith.addf %489, %490 : vector<2x16xf32>
    %492 = math.tanh %491 : vector<2x16xf32>
    %493 = arith.mulf %488, %492 : vector<2x16xf32>
    %c6 = arith.constant 6 : index
    %c0_27 = arith.constant 0 : index
    %494 = vector.load %arg3[%c6, %c0_27] : memref<16x16xf32, #tpu.memory_space<vmem>>, vector<2x16xf32>
    tpu.vector_store %arg3[%c6, %c0_27], %493 {strides = array<i32>} : memref<16x16xf32, #tpu.memory_space<vmem>>, vector<2x16xf32>,
    %495 = vector.extract_strided_slice %16 {offsets = [4, 0], sizes = [1, 128], strides = [1, 1]} : vector<8x128xf32> to vector<1x128xf32>
    %496 = vector.extract_strided_slice %20 {offsets = [4, 0], sizes = [1, 128], strides = [1, 1]} : vector<8x128xf32> to vector<1x128xf32>
    %497 = tpu.concatenate %495, %496 in 0 : vector<1x128xf32>, vector<1x128xf32> -> vector<2x128xf32>
    %498 = vector.extract_strided_slice %493 {offsets = [0, 0], sizes = [2, 1], strides = [1, 1]} : vector<2x16xf32> to vector<2x1xf32>
    %499 = vector.extract_strided_slice %11 {offsets = [0, 0], sizes = [1, 128], strides = [1, 1]} : vector<16x128xf32> to vector<1x128xf32>
    %500 = vector.broadcast %498 : vector<2x1xf32> to vector<2x128xf32>
    %501 = vector.broadcast %499 : vector<1x128xf32> to vector<2x128xf32>
    %502 = arith.mulf %500, %501 : vector<2x128xf32>
    %503 = vector.extract_strided_slice %493 {offsets = [0, 1], sizes = [2, 1], strides = [1, 1]} : vector<2x16xf32> to vector<2x1xf32>
    %504 = vector.extract_strided_slice %11 {offsets = [1, 0], sizes = [1, 128], strides = [1, 1]} : vector<16x128xf32> to vector<1x128xf32>
    %505 = vector.broadcast %503 : vector<2x1xf32> to vector<2x128xf32>
    %506 = vector.broadcast %504 : vector<1x128xf32> to vector<2x128xf32>
    %507 = arith.mulf %505, %506 : vector<2x128xf32>
    %508 = vector.extract_strided_slice %493 {offsets = [0, 2], sizes = [2, 1], strides = [1, 1]} : vector<2x16xf32> to vector<2x1xf32>
    %509 = vector.extract_strided_slice %11 {offsets = [2, 0], sizes = [1, 128], strides = [1, 1]} : vector<16x128xf32> to vector<1x128xf32>
    %510 = vector.broadcast %508 : vector<2x1xf32> to vector<2x128xf32>
    %511 = vector.broadcast %509 : vector<1x128xf32> to vector<2x128xf32>
    %512 = arith.mulf %510, %511 : vector<2x128xf32>
    %513 = vector.extract_strided_slice %493 {offsets = [0, 3], sizes = [2, 1], strides = [1, 1]} : vector<2x16xf32> to vector<2x1xf32>
    %514 = vector.extract_strided_slice %11 {offsets = [3, 0], sizes = [1, 128], strides = [1, 1]} : vector<16x128xf32> to vector<1x128xf32>
    %515 = vector.broadcast %513 : vector<2x1xf32> to vector<2x128xf32>
    %516 = vector.broadcast %514 : vector<1x128xf32> to vector<2x128xf32>
    %517 = arith.mulf %515, %516 : vector<2x128xf32>
    %518 = vector.extract_strided_slice %493 {offsets = [0, 4], sizes = [2, 1], strides = [1, 1]} : vector<2x16xf32> to vector<2x1xf32>
    %519 = vector.extract_strided_slice %11 {offsets = [4, 0], sizes = [1, 128], strides = [1, 1]} : vector<16x128xf32> to vector<1x128xf32>
    %520 = vector.broadcast %518 : vector<2x1xf32> to vector<2x128xf32>
    %521 = vector.broadcast %519 : vector<1x128xf32> to vector<2x128xf32>
    %522 = arith.mulf %520, %521 : vector<2x128xf32>
    %523 = vector.extract_strided_slice %493 {offsets = [0, 5], sizes = [2, 1], strides = [1, 1]} : vector<2x16xf32> to vector<2x1xf32>
    %524 = vector.extract_strided_slice %11 {offsets = [5, 0], sizes = [1, 128], strides = [1, 1]} : vector<16x128xf32> to vector<1x128xf32>
    %525 = vector.broadcast %523 : vector<2x1xf32> to vector<2x128xf32>
    %526 = vector.broadcast %524 : vector<1x128xf32> to vector<2x128xf32>
    %527 = arith.mulf %525, %526 : vector<2x128xf32>
    %528 = vector.extract_strided_slice %493 {offsets = [0, 6], sizes = [2, 1], strides = [1, 1]} : vector<2x16xf32> to vector<2x1xf32>
    %529 = vector.extract_strided_slice %11 {offsets = [6, 0], sizes = [1, 128], strides = [1, 1]} : vector<16x128xf32> to vector<1x128xf32>
    %530 = vector.broadcast %528 : vector<2x1xf32> to vector<2x128xf32>
    %531 = vector.broadcast %529 : vector<1x128xf32> to vector<2x128xf32>
    %532 = arith.mulf %530, %531 : vector<2x128xf32>
    %533 = vector.extract_strided_slice %493 {offsets = [0, 7], sizes = [2, 1], strides = [1, 1]} : vector<2x16xf32> to vector<2x1xf32>
    %534 = vector.extract_strided_slice %11 {offsets = [7, 0], sizes = [1, 128], strides = [1, 1]} : vector<16x128xf32> to vector<1x128xf32>
    %535 = vector.broadcast %533 : vector<2x1xf32> to vector<2x128xf32>
    %536 = vector.broadcast %534 : vector<1x128xf32> to vector<2x128xf32>
    %537 = arith.mulf %535, %536 : vector<2x128xf32>
    %538 = vector.extract_strided_slice %493 {offsets = [0, 8], sizes = [2, 1], strides = [1, 1]} : vector<2x16xf32> to vector<2x1xf32>
    %539 = vector.extract_strided_slice %11 {offsets = [8, 0], sizes = [1, 128], strides = [1, 1]} : vector<16x128xf32> to vector<1x128xf32>
    %540 = vector.broadcast %538 : vector<2x1xf32> to vector<2x128xf32>
    %541 = vector.broadcast %539 : vector<1x128xf32> to vector<2x128xf32>
    %542 = arith.mulf %540, %541 : vector<2x128xf32>
    %543 = vector.extract_strided_slice %493 {offsets = [0, 9], sizes = [2, 1], strides = [1, 1]} : vector<2x16xf32> to vector<2x1xf32>
    %544 = vector.extract_strided_slice %11 {offsets = [9, 0], sizes = [1, 128], strides = [1, 1]} : vector<16x128xf32> to vector<1x128xf32>
    %545 = vector.broadcast %543 : vector<2x1xf32> to vector<2x128xf32>
    %546 = vector.broadcast %544 : vector<1x128xf32> to vector<2x128xf32>
    %547 = arith.mulf %545, %546 : vector<2x128xf32>
    %548 = vector.extract_strided_slice %493 {offsets = [0, 10], sizes = [2, 1], strides = [1, 1]} : vector<2x16xf32> to vector<2x1xf32>
    %549 = vector.extract_strided_slice %11 {offsets = [10, 0], sizes = [1, 128], strides = [1, 1]} : vector<16x128xf32> to vector<1x128xf32>
    %550 = vector.broadcast %548 : vector<2x1xf32> to vector<2x128xf32>
    %551 = vector.broadcast %549 : vector<1x128xf32> to vector<2x128xf32>
    %552 = arith.mulf %550, %551 : vector<2x128xf32>
    %553 = vector.extract_strided_slice %493 {offsets = [0, 11], sizes = [2, 1], strides = [1, 1]} : vector<2x16xf32> to vector<2x1xf32>
    %554 = vector.extract_strided_slice %11 {offsets = [11, 0], sizes = [1, 128], strides = [1, 1]} : vector<16x128xf32> to vector<1x128xf32>
    %555 = vector.broadcast %553 : vector<2x1xf32> to vector<2x128xf32>
    %556 = vector.broadcast %554 : vector<1x128xf32> to vector<2x128xf32>
    %557 = arith.mulf %555, %556 : vector<2x128xf32>
    %558 = vector.extract_strided_slice %493 {offsets = [0, 12], sizes = [2, 1], strides = [1, 1]} : vector<2x16xf32> to vector<2x1xf32>
    %559 = vector.extract_strided_slice %11 {offsets = [12, 0], sizes = [1, 128], strides = [1, 1]} : vector<16x128xf32> to vector<1x128xf32>
    %560 = vector.broadcast %558 : vector<2x1xf32> to vector<2x128xf32>
    %561 = vector.broadcast %559 : vector<1x128xf32> to vector<2x128xf32>
    %562 = arith.mulf %560, %561 : vector<2x128xf32>
    %563 = vector.extract_strided_slice %493 {offsets = [0, 13], sizes = [2, 1], strides = [1, 1]} : vector<2x16xf32> to vector<2x1xf32>
    %564 = vector.extract_strided_slice %11 {offsets = [13, 0], sizes = [1, 128], strides = [1, 1]} : vector<16x128xf32> to vector<1x128xf32>
    %565 = vector.broadcast %563 : vector<2x1xf32> to vector<2x128xf32>
    %566 = vector.broadcast %564 : vector<1x128xf32> to vector<2x128xf32>
    %567 = arith.mulf %565, %566 : vector<2x128xf32>
    %568 = vector.extract_strided_slice %493 {offsets = [0, 14], sizes = [2, 1], strides = [1, 1]} : vector<2x16xf32> to vector<2x1xf32>
    %569 = vector.extract_strided_slice %11 {offsets = [14, 0], sizes = [1, 128], strides = [1, 1]} : vector<16x128xf32> to vector<1x128xf32>
    %570 = vector.broadcast %568 : vector<2x1xf32> to vector<2x128xf32>
    %571 = vector.broadcast %569 : vector<1x128xf32> to vector<2x128xf32>
    %572 = arith.mulf %570, %571 : vector<2x128xf32>
    %573 = vector.extract_strided_slice %493 {offsets = [0, 15], sizes = [2, 1], strides = [1, 1]} : vector<2x16xf32> to vector<2x1xf32>
    %574 = vector.extract_strided_slice %11 {offsets = [15, 0], sizes = [1, 128], strides = [1, 1]} : vector<16x128xf32> to vector<1x128xf32>
    %575 = vector.broadcast %573 : vector<2x1xf32> to vector<2x128xf32>
    %576 = vector.broadcast %574 : vector<1x128xf32> to vector<2x128xf32>
    %577 = arith.mulf %575, %576 : vector<2x128xf32>
    %578 = arith.addf %502, %507 : vector<2x128xf32>
    %579 = arith.addf %512, %517 : vector<2x128xf32>
    %580 = arith.addf %522, %527 : vector<2x128xf32>
    %581 = arith.addf %532, %537 : vector<2x128xf32>
    %582 = arith.addf %542, %547 : vector<2x128xf32>
    %583 = arith.addf %552, %557 : vector<2x128xf32>
    %584 = arith.addf %562, %567 : vector<2x128xf32>
    %585 = arith.addf %572, %577 : vector<2x128xf32>
    %586 = arith.addf %578, %579 : vector<2x128xf32>
    %587 = arith.addf %580, %581 : vector<2x128xf32>
    %588 = arith.addf %582, %583 : vector<2x128xf32>
    %589 = arith.addf %584, %585 : vector<2x128xf32>
    %590 = arith.addf %586, %587 : vector<2x128xf32>
    %591 = arith.addf %588, %589 : vector<2x128xf32>
    %592 = arith.addf %590, %591 : vector<2x128xf32>
    %593 = arith.addf %497, %592 : vector<2x128xf32>
    %594 = vector.extract_strided_slice %593 {offsets = [0, 0], sizes = [2, 48], strides = [1, 1]} : vector<2x128xf32> to vector<2x48xf32>
    %cst_28 = arith.constant 5.000000e-01 : f32
    %595 = vector.broadcast %cst_28 : f32 to vector<2x48xf32>
    %596 = arith.mulf %595, %594 : vector<2x48xf32>
    %597 = math.tanh %596 : vector<2x48xf32>
    %cst_29 = arith.constant 5.000000e-01 : f32
    %598 = vector.broadcast %cst_29 : f32 to vector<2x48xf32>
    %599 = arith.mulf %598, %597 : vector<2x48xf32>
    %cst_30 = arith.constant 5.000000e-01 : f32
    %600 = vector.broadcast %cst_30 : f32 to vector<2x48xf32>
    %601 = arith.addf %599, %600 : vector<2x48xf32>
    %602 = vector.extract_strided_slice %593 {offsets = [0, 48], sizes = [2, 16], strides = [1, 1]} : vector<2x128xf32> to vector<2x16xf32>
    %603 = math.tanh %602 : vector<2x16xf32>
    %604 = vector.extract_strided_slice %601 {offsets = [0, 0], sizes = [2, 16], strides = [1, 1]} : vector<2x48xf32> to vector<2x16xf32>
    %605 = vector.extract_strided_slice %601 {offsets = [0, 16], sizes = [2, 16], strides = [1, 1]} : vector<2x48xf32> to vector<2x16xf32>
    %606 = vector.extract_strided_slice %601 {offsets = [0, 32], sizes = [2, 16], strides = [1, 1]} : vector<2x48xf32> to vector<2x16xf32>
    %607 = arith.mulf %605, %491 : vector<2x16xf32>
    %608 = arith.mulf %604, %603 : vector<2x16xf32>
    %609 = arith.addf %607, %608 : vector<2x16xf32>
    %610 = math.tanh %609 : vector<2x16xf32>
    %611 = arith.mulf %606, %610 : vector<2x16xf32>
    %c8_31 = arith.constant 8 : index
    %c0_32 = arith.constant 0 : index
    %612 = vector.load %arg3[%c8_31, %c0_32] : memref<16x16xf32, #tpu.memory_space<vmem>>, vector<2x16xf32>
    tpu.vector_store %arg3[%c8_31, %c0_32], %611 {strides = array<i32>} : memref<16x16xf32, #tpu.memory_space<vmem>>, vector<2x16xf32>,
    %613 = vector.extract_strided_slice %16 {offsets = [5, 0], sizes = [1, 128], strides = [1, 1]} : vector<8x128xf32> to vector<1x128xf32>
    %614 = vector.extract_strided_slice %20 {offsets = [5, 0], sizes = [1, 128], strides = [1, 1]} : vector<8x128xf32> to vector<1x128xf32>
    %615 = tpu.concatenate %613, %614 in 0 : vector<1x128xf32>, vector<1x128xf32> -> vector<2x128xf32>
    %616 = vector.extract_strided_slice %611 {offsets = [0, 0], sizes = [2, 1], strides = [1, 1]} : vector<2x16xf32> to vector<2x1xf32>
    %617 = vector.extract_strided_slice %11 {offsets = [0, 0], sizes = [1, 128], strides = [1, 1]} : vector<16x128xf32> to vector<1x128xf32>
    %618 = vector.broadcast %616 : vector<2x1xf32> to vector<2x128xf32>
    %619 = vector.broadcast %617 : vector<1x128xf32> to vector<2x128xf32>
    %620 = arith.mulf %618, %619 : vector<2x128xf32>
    %621 = vector.extract_strided_slice %611 {offsets = [0, 1], sizes = [2, 1], strides = [1, 1]} : vector<2x16xf32> to vector<2x1xf32>
    %622 = vector.extract_strided_slice %11 {offsets = [1, 0], sizes = [1, 128], strides = [1, 1]} : vector<16x128xf32> to vector<1x128xf32>
    %623 = vector.broadcast %621 : vector<2x1xf32> to vector<2x128xf32>
    %624 = vector.broadcast %622 : vector<1x128xf32> to vector<2x128xf32>
    %625 = arith.mulf %623, %624 : vector<2x128xf32>
    %626 = vector.extract_strided_slice %611 {offsets = [0, 2], sizes = [2, 1], strides = [1, 1]} : vector<2x16xf32> to vector<2x1xf32>
    %627 = vector.extract_strided_slice %11 {offsets = [2, 0], sizes = [1, 128], strides = [1, 1]} : vector<16x128xf32> to vector<1x128xf32>
    %628 = vector.broadcast %626 : vector<2x1xf32> to vector<2x128xf32>
    %629 = vector.broadcast %627 : vector<1x128xf32> to vector<2x128xf32>
    %630 = arith.mulf %628, %629 : vector<2x128xf32>
    %631 = vector.extract_strided_slice %611 {offsets = [0, 3], sizes = [2, 1], strides = [1, 1]} : vector<2x16xf32> to vector<2x1xf32>
    %632 = vector.extract_strided_slice %11 {offsets = [3, 0], sizes = [1, 128], strides = [1, 1]} : vector<16x128xf32> to vector<1x128xf32>
    %633 = vector.broadcast %631 : vector<2x1xf32> to vector<2x128xf32>
    %634 = vector.broadcast %632 : vector<1x128xf32> to vector<2x128xf32>
    %635 = arith.mulf %633, %634 : vector<2x128xf32>
    %636 = vector.extract_strided_slice %611 {offsets = [0, 4], sizes = [2, 1], strides = [1, 1]} : vector<2x16xf32> to vector<2x1xf32>
    %637 = vector.extract_strided_slice %11 {offsets = [4, 0], sizes = [1, 128], strides = [1, 1]} : vector<16x128xf32> to vector<1x128xf32>
    %638 = vector.broadcast %636 : vector<2x1xf32> to vector<2x128xf32>
    %639 = vector.broadcast %637 : vector<1x128xf32> to vector<2x128xf32>
    %640 = arith.mulf %638, %639 : vector<2x128xf32>
    %641 = vector.extract_strided_slice %611 {offsets = [0, 5], sizes = [2, 1], strides = [1, 1]} : vector<2x16xf32> to vector<2x1xf32>
    %642 = vector.extract_strided_slice %11 {offsets = [5, 0], sizes = [1, 128], strides = [1, 1]} : vector<16x128xf32> to vector<1x128xf32>
    %643 = vector.broadcast %641 : vector<2x1xf32> to vector<2x128xf32>
    %644 = vector.broadcast %642 : vector<1x128xf32> to vector<2x128xf32>
    %645 = arith.mulf %643, %644 : vector<2x128xf32>
    %646 = vector.extract_strided_slice %611 {offsets = [0, 6], sizes = [2, 1], strides = [1, 1]} : vector<2x16xf32> to vector<2x1xf32>
    %647 = vector.extract_strided_slice %11 {offsets = [6, 0], sizes = [1, 128], strides = [1, 1]} : vector<16x128xf32> to vector<1x128xf32>
    %648 = vector.broadcast %646 : vector<2x1xf32> to vector<2x128xf32>
    %649 = vector.broadcast %647 : vector<1x128xf32> to vector<2x128xf32>
    %650 = arith.mulf %648, %649 : vector<2x128xf32>
    %651 = vector.extract_strided_slice %611 {offsets = [0, 7], sizes = [2, 1], strides = [1, 1]} : vector<2x16xf32> to vector<2x1xf32>
    %652 = vector.extract_strided_slice %11 {offsets = [7, 0], sizes = [1, 128], strides = [1, 1]} : vector<16x128xf32> to vector<1x128xf32>
    %653 = vector.broadcast %651 : vector<2x1xf32> to vector<2x128xf32>
    %654 = vector.broadcast %652 : vector<1x128xf32> to vector<2x128xf32>
    %655 = arith.mulf %653, %654 : vector<2x128xf32>
    %656 = vector.extract_strided_slice %611 {offsets = [0, 8], sizes = [2, 1], strides = [1, 1]} : vector<2x16xf32> to vector<2x1xf32>
    %657 = vector.extract_strided_slice %11 {offsets = [8, 0], sizes = [1, 128], strides = [1, 1]} : vector<16x128xf32> to vector<1x128xf32>
    %658 = vector.broadcast %656 : vector<2x1xf32> to vector<2x128xf32>
    %659 = vector.broadcast %657 : vector<1x128xf32> to vector<2x128xf32>
    %660 = arith.mulf %658, %659 : vector<2x128xf32>
    %661 = vector.extract_strided_slice %611 {offsets = [0, 9], sizes = [2, 1], strides = [1, 1]} : vector<2x16xf32> to vector<2x1xf32>
    %662 = vector.extract_strided_slice %11 {offsets = [9, 0], sizes = [1, 128], strides = [1, 1]} : vector<16x128xf32> to vector<1x128xf32>
    %663 = vector.broadcast %661 : vector<2x1xf32> to vector<2x128xf32>
    %664 = vector.broadcast %662 : vector<1x128xf32> to vector<2x128xf32>
    %665 = arith.mulf %663, %664 : vector<2x128xf32>
    %666 = vector.extract_strided_slice %611 {offsets = [0, 10], sizes = [2, 1], strides = [1, 1]} : vector<2x16xf32> to vector<2x1xf32>
    %667 = vector.extract_strided_slice %11 {offsets = [10, 0], sizes = [1, 128], strides = [1, 1]} : vector<16x128xf32> to vector<1x128xf32>
    %668 = vector.broadcast %666 : vector<2x1xf32> to vector<2x128xf32>
    %669 = vector.broadcast %667 : vector<1x128xf32> to vector<2x128xf32>
    %670 = arith.mulf %668, %669 : vector<2x128xf32>
    %671 = vector.extract_strided_slice %611 {offsets = [0, 11], sizes = [2, 1], strides = [1, 1]} : vector<2x16xf32> to vector<2x1xf32>
    %672 = vector.extract_strided_slice %11 {offsets = [11, 0], sizes = [1, 128], strides = [1, 1]} : vector<16x128xf32> to vector<1x128xf32>
    %673 = vector.broadcast %671 : vector<2x1xf32> to vector<2x128xf32>
    %674 = vector.broadcast %672 : vector<1x128xf32> to vector<2x128xf32>
    %675 = arith.mulf %673, %674 : vector<2x128xf32>
    %676 = vector.extract_strided_slice %611 {offsets = [0, 12], sizes = [2, 1], strides = [1, 1]} : vector<2x16xf32> to vector<2x1xf32>
    %677 = vector.extract_strided_slice %11 {offsets = [12, 0], sizes = [1, 128], strides = [1, 1]} : vector<16x128xf32> to vector<1x128xf32>
    %678 = vector.broadcast %676 : vector<2x1xf32> to vector<2x128xf32>
    %679 = vector.broadcast %677 : vector<1x128xf32> to vector<2x128xf32>
    %680 = arith.mulf %678, %679 : vector<2x128xf32>
    %681 = vector.extract_strided_slice %611 {offsets = [0, 13], sizes = [2, 1], strides = [1, 1]} : vector<2x16xf32> to vector<2x1xf32>
    %682 = vector.extract_strided_slice %11 {offsets = [13, 0], sizes = [1, 128], strides = [1, 1]} : vector<16x128xf32> to vector<1x128xf32>
    %683 = vector.broadcast %681 : vector<2x1xf32> to vector<2x128xf32>
    %684 = vector.broadcast %682 : vector<1x128xf32> to vector<2x128xf32>
    %685 = arith.mulf %683, %684 : vector<2x128xf32>
    %686 = vector.extract_strided_slice %611 {offsets = [0, 14], sizes = [2, 1], strides = [1, 1]} : vector<2x16xf32> to vector<2x1xf32>
    %687 = vector.extract_strided_slice %11 {offsets = [14, 0], sizes = [1, 128], strides = [1, 1]} : vector<16x128xf32> to vector<1x128xf32>
    %688 = vector.broadcast %686 : vector<2x1xf32> to vector<2x128xf32>
    %689 = vector.broadcast %687 : vector<1x128xf32> to vector<2x128xf32>
    %690 = arith.mulf %688, %689 : vector<2x128xf32>
    %691 = vector.extract_strided_slice %611 {offsets = [0, 15], sizes = [2, 1], strides = [1, 1]} : vector<2x16xf32> to vector<2x1xf32>
    %692 = vector.extract_strided_slice %11 {offsets = [15, 0], sizes = [1, 128], strides = [1, 1]} : vector<16x128xf32> to vector<1x128xf32>
    %693 = vector.broadcast %691 : vector<2x1xf32> to vector<2x128xf32>
    %694 = vector.broadcast %692 : vector<1x128xf32> to vector<2x128xf32>
    %695 = arith.mulf %693, %694 : vector<2x128xf32>
    %696 = arith.addf %620, %625 : vector<2x128xf32>
    %697 = arith.addf %630, %635 : vector<2x128xf32>
    %698 = arith.addf %640, %645 : vector<2x128xf32>
    %699 = arith.addf %650, %655 : vector<2x128xf32>
    %700 = arith.addf %660, %665 : vector<2x128xf32>
    %701 = arith.addf %670, %675 : vector<2x128xf32>
    %702 = arith.addf %680, %685 : vector<2x128xf32>
    %703 = arith.addf %690, %695 : vector<2x128xf32>
    %704 = arith.addf %696, %697 : vector<2x128xf32>
    %705 = arith.addf %698, %699 : vector<2x128xf32>
    %706 = arith.addf %700, %701 : vector<2x128xf32>
    %707 = arith.addf %702, %703 : vector<2x128xf32>
    %708 = arith.addf %704, %705 : vector<2x128xf32>
    %709 = arith.addf %706, %707 : vector<2x128xf32>
    %710 = arith.addf %708, %709 : vector<2x128xf32>
    %711 = arith.addf %615, %710 : vector<2x128xf32>
    %712 = vector.extract_strided_slice %711 {offsets = [0, 0], sizes = [2, 48], strides = [1, 1]} : vector<2x128xf32> to vector<2x48xf32>
    %cst_33 = arith.constant 5.000000e-01 : f32
    %713 = vector.broadcast %cst_33 : f32 to vector<2x48xf32>
    %714 = arith.mulf %713, %712 : vector<2x48xf32>
    %715 = math.tanh %714 : vector<2x48xf32>
    %cst_34 = arith.constant 5.000000e-01 : f32
    %716 = vector.broadcast %cst_34 : f32 to vector<2x48xf32>
    %717 = arith.mulf %716, %715 : vector<2x48xf32>
    %cst_35 = arith.constant 5.000000e-01 : f32
    %718 = vector.broadcast %cst_35 : f32 to vector<2x48xf32>
    %719 = arith.addf %717, %718 : vector<2x48xf32>
    %720 = vector.extract_strided_slice %711 {offsets = [0, 48], sizes = [2, 16], strides = [1, 1]} : vector<2x128xf32> to vector<2x16xf32>
    %721 = math.tanh %720 : vector<2x16xf32>
    %722 = vector.extract_strided_slice %719 {offsets = [0, 0], sizes = [2, 16], strides = [1, 1]} : vector<2x48xf32> to vector<2x16xf32>
    %723 = vector.extract_strided_slice %719 {offsets = [0, 16], sizes = [2, 16], strides = [1, 1]} : vector<2x48xf32> to vector<2x16xf32>
    %724 = vector.extract_strided_slice %719 {offsets = [0, 32], sizes = [2, 16], strides = [1, 1]} : vector<2x48xf32> to vector<2x16xf32>
    %725 = arith.mulf %723, %609 : vector<2x16xf32>
    %726 = arith.mulf %722, %721 : vector<2x16xf32>
    %727 = arith.addf %725, %726 : vector<2x16xf32>
    %728 = math.tanh %727 : vector<2x16xf32>
    %729 = arith.mulf %724, %728 : vector<2x16xf32>
    %c10 = arith.constant 10 : index
    %c0_36 = arith.constant 0 : index
    %730 = vector.load %arg3[%c10, %c0_36] : memref<16x16xf32, #tpu.memory_space<vmem>>, vector<2x16xf32>
    tpu.vector_store %arg3[%c10, %c0_36], %729 {strides = array<i32>} : memref<16x16xf32, #tpu.memory_space<vmem>>, vector<2x16xf32>,
    %731 = vector.extract_strided_slice %16 {offsets = [6, 0], sizes = [1, 128], strides = [1, 1]} : vector<8x128xf32> to vector<1x128xf32>
    %732 = vector.extract_strided_slice %20 {offsets = [6, 0], sizes = [1, 128], strides = [1, 1]} : vector<8x128xf32> to vector<1x128xf32>
    %733 = tpu.concatenate %731, %732 in 0 : vector<1x128xf32>, vector<1x128xf32> -> vector<2x128xf32>
    %734 = vector.extract_strided_slice %729 {offsets = [0, 0], sizes = [2, 1], strides = [1, 1]} : vector<2x16xf32> to vector<2x1xf32>
    %735 = vector.extract_strided_slice %11 {offsets = [0, 0], sizes = [1, 128], strides = [1, 1]} : vector<16x128xf32> to vector<1x128xf32>
    %736 = vector.broadcast %734 : vector<2x1xf32> to vector<2x128xf32>
    %737 = vector.broadcast %735 : vector<1x128xf32> to vector<2x128xf32>
    %738 = arith.mulf %736, %737 : vector<2x128xf32>
    %739 = vector.extract_strided_slice %729 {offsets = [0, 1], sizes = [2, 1], strides = [1, 1]} : vector<2x16xf32> to vector<2x1xf32>
    %740 = vector.extract_strided_slice %11 {offsets = [1, 0], sizes = [1, 128], strides = [1, 1]} : vector<16x128xf32> to vector<1x128xf32>
    %741 = vector.broadcast %739 : vector<2x1xf32> to vector<2x128xf32>
    %742 = vector.broadcast %740 : vector<1x128xf32> to vector<2x128xf32>
    %743 = arith.mulf %741, %742 : vector<2x128xf32>
    %744 = vector.extract_strided_slice %729 {offsets = [0, 2], sizes = [2, 1], strides = [1, 1]} : vector<2x16xf32> to vector<2x1xf32>
    %745 = vector.extract_strided_slice %11 {offsets = [2, 0], sizes = [1, 128], strides = [1, 1]} : vector<16x128xf32> to vector<1x128xf32>
    %746 = vector.broadcast %744 : vector<2x1xf32> to vector<2x128xf32>
    %747 = vector.broadcast %745 : vector<1x128xf32> to vector<2x128xf32>
    %748 = arith.mulf %746, %747 : vector<2x128xf32>
    %749 = vector.extract_strided_slice %729 {offsets = [0, 3], sizes = [2, 1], strides = [1, 1]} : vector<2x16xf32> to vector<2x1xf32>
    %750 = vector.extract_strided_slice %11 {offsets = [3, 0], sizes = [1, 128], strides = [1, 1]} : vector<16x128xf32> to vector<1x128xf32>
    %751 = vector.broadcast %749 : vector<2x1xf32> to vector<2x128xf32>
    %752 = vector.broadcast %750 : vector<1x128xf32> to vector<2x128xf32>
    %753 = arith.mulf %751, %752 : vector<2x128xf32>
    %754 = vector.extract_strided_slice %729 {offsets = [0, 4], sizes = [2, 1], strides = [1, 1]} : vector<2x16xf32> to vector<2x1xf32>
    %755 = vector.extract_strided_slice %11 {offsets = [4, 0], sizes = [1, 128], strides = [1, 1]} : vector<16x128xf32> to vector<1x128xf32>
    %756 = vector.broadcast %754 : vector<2x1xf32> to vector<2x128xf32>
    %757 = vector.broadcast %755 : vector<1x128xf32> to vector<2x128xf32>
    %758 = arith.mulf %756, %757 : vector<2x128xf32>
    %759 = vector.extract_strided_slice %729 {offsets = [0, 5], sizes = [2, 1], strides = [1, 1]} : vector<2x16xf32> to vector<2x1xf32>
    %760 = vector.extract_strided_slice %11 {offsets = [5, 0], sizes = [1, 128], strides = [1, 1]} : vector<16x128xf32> to vector<1x128xf32>
    %761 = vector.broadcast %759 : vector<2x1xf32> to vector<2x128xf32>
    %762 = vector.broadcast %760 : vector<1x128xf32> to vector<2x128xf32>
    %763 = arith.mulf %761, %762 : vector<2x128xf32>
    %764 = vector.extract_strided_slice %729 {offsets = [0, 6], sizes = [2, 1], strides = [1, 1]} : vector<2x16xf32> to vector<2x1xf32>
    %765 = vector.extract_strided_slice %11 {offsets = [6, 0], sizes = [1, 128], strides = [1, 1]} : vector<16x128xf32> to vector<1x128xf32>
    %766 = vector.broadcast %764 : vector<2x1xf32> to vector<2x128xf32>
    %767 = vector.broadcast %765 : vector<1x128xf32> to vector<2x128xf32>
    %768 = arith.mulf %766, %767 : vector<2x128xf32>
    %769 = vector.extract_strided_slice %729 {offsets = [0, 7], sizes = [2, 1], strides = [1, 1]} : vector<2x16xf32> to vector<2x1xf32>
    %770 = vector.extract_strided_slice %11 {offsets = [7, 0], sizes = [1, 128], strides = [1, 1]} : vector<16x128xf32> to vector<1x128xf32>
    %771 = vector.broadcast %769 : vector<2x1xf32> to vector<2x128xf32>
    %772 = vector.broadcast %770 : vector<1x128xf32> to vector<2x128xf32>
    %773 = arith.mulf %771, %772 : vector<2x128xf32>
    %774 = vector.extract_strided_slice %729 {offsets = [0, 8], sizes = [2, 1], strides = [1, 1]} : vector<2x16xf32> to vector<2x1xf32>
    %775 = vector.extract_strided_slice %11 {offsets = [8, 0], sizes = [1, 128], strides = [1, 1]} : vector<16x128xf32> to vector<1x128xf32>
    %776 = vector.broadcast %774 : vector<2x1xf32> to vector<2x128xf32>
    %777 = vector.broadcast %775 : vector<1x128xf32> to vector<2x128xf32>
    %778 = arith.mulf %776, %777 : vector<2x128xf32>
    %779 = vector.extract_strided_slice %729 {offsets = [0, 9], sizes = [2, 1], strides = [1, 1]} : vector<2x16xf32> to vector<2x1xf32>
    %780 = vector.extract_strided_slice %11 {offsets = [9, 0], sizes = [1, 128], strides = [1, 1]} : vector<16x128xf32> to vector<1x128xf32>
    %781 = vector.broadcast %779 : vector<2x1xf32> to vector<2x128xf32>
    %782 = vector.broadcast %780 : vector<1x128xf32> to vector<2x128xf32>
    %783 = arith.mulf %781, %782 : vector<2x128xf32>
    %784 = vector.extract_strided_slice %729 {offsets = [0, 10], sizes = [2, 1], strides = [1, 1]} : vector<2x16xf32> to vector<2x1xf32>
    %785 = vector.extract_strided_slice %11 {offsets = [10, 0], sizes = [1, 128], strides = [1, 1]} : vector<16x128xf32> to vector<1x128xf32>
    %786 = vector.broadcast %784 : vector<2x1xf32> to vector<2x128xf32>
    %787 = vector.broadcast %785 : vector<1x128xf32> to vector<2x128xf32>
    %788 = arith.mulf %786, %787 : vector<2x128xf32>
    %789 = vector.extract_strided_slice %729 {offsets = [0, 11], sizes = [2, 1], strides = [1, 1]} : vector<2x16xf32> to vector<2x1xf32>
    %790 = vector.extract_strided_slice %11 {offsets = [11, 0], sizes = [1, 128], strides = [1, 1]} : vector<16x128xf32> to vector<1x128xf32>
    %791 = vector.broadcast %789 : vector<2x1xf32> to vector<2x128xf32>
    %792 = vector.broadcast %790 : vector<1x128xf32> to vector<2x128xf32>
    %793 = arith.mulf %791, %792 : vector<2x128xf32>
    %794 = vector.extract_strided_slice %729 {offsets = [0, 12], sizes = [2, 1], strides = [1, 1]} : vector<2x16xf32> to vector<2x1xf32>
    %795 = vector.extract_strided_slice %11 {offsets = [12, 0], sizes = [1, 128], strides = [1, 1]} : vector<16x128xf32> to vector<1x128xf32>
    %796 = vector.broadcast %794 : vector<2x1xf32> to vector<2x128xf32>
    %797 = vector.broadcast %795 : vector<1x128xf32> to vector<2x128xf32>
    %798 = arith.mulf %796, %797 : vector<2x128xf32>
    %799 = vector.extract_strided_slice %729 {offsets = [0, 13], sizes = [2, 1], strides = [1, 1]} : vector<2x16xf32> to vector<2x1xf32>
    %800 = vector.extract_strided_slice %11 {offsets = [13, 0], sizes = [1, 128], strides = [1, 1]} : vector<16x128xf32> to vector<1x128xf32>
    %801 = vector.broadcast %799 : vector<2x1xf32> to vector<2x128xf32>
    %802 = vector.broadcast %800 : vector<1x128xf32> to vector<2x128xf32>
    %803 = arith.mulf %801, %802 : vector<2x128xf32>
    %804 = vector.extract_strided_slice %729 {offsets = [0, 14], sizes = [2, 1], strides = [1, 1]} : vector<2x16xf32> to vector<2x1xf32>
    %805 = vector.extract_strided_slice %11 {offsets = [14, 0], sizes = [1, 128], strides = [1, 1]} : vector<16x128xf32> to vector<1x128xf32>
    %806 = vector.broadcast %804 : vector<2x1xf32> to vector<2x128xf32>
    %807 = vector.broadcast %805 : vector<1x128xf32> to vector<2x128xf32>
    %808 = arith.mulf %806, %807 : vector<2x128xf32>
    %809 = vector.extract_strided_slice %729 {offsets = [0, 15], sizes = [2, 1], strides = [1, 1]} : vector<2x16xf32> to vector<2x1xf32>
    %810 = vector.extract_strided_slice %11 {offsets = [15, 0], sizes = [1, 128], strides = [1, 1]} : vector<16x128xf32> to vector<1x128xf32>
    %811 = vector.broadcast %809 : vector<2x1xf32> to vector<2x128xf32>
    %812 = vector.broadcast %810 : vector<1x128xf32> to vector<2x128xf32>
    %813 = arith.mulf %811, %812 : vector<2x128xf32>
    %814 = arith.addf %738, %743 : vector<2x128xf32>
    %815 = arith.addf %748, %753 : vector<2x128xf32>
    %816 = arith.addf %758, %763 : vector<2x128xf32>
    %817 = arith.addf %768, %773 : vector<2x128xf32>
    %818 = arith.addf %778, %783 : vector<2x128xf32>
    %819 = arith.addf %788, %793 : vector<2x128xf32>
    %820 = arith.addf %798, %803 : vector<2x128xf32>
    %821 = arith.addf %808, %813 : vector<2x128xf32>
    %822 = arith.addf %814, %815 : vector<2x128xf32>
    %823 = arith.addf %816, %817 : vector<2x128xf32>
    %824 = arith.addf %818, %819 : vector<2x128xf32>
    %825 = arith.addf %820, %821 : vector<2x128xf32>
    %826 = arith.addf %822, %823 : vector<2x128xf32>
    %827 = arith.addf %824, %825 : vector<2x128xf32>
    %828 = arith.addf %826, %827 : vector<2x128xf32>
    %829 = arith.addf %733, %828 : vector<2x128xf32>
    %830 = vector.extract_strided_slice %829 {offsets = [0, 0], sizes = [2, 48], strides = [1, 1]} : vector<2x128xf32> to vector<2x48xf32>
    %cst_37 = arith.constant 5.000000e-01 : f32
    %831 = vector.broadcast %cst_37 : f32 to vector<2x48xf32>
    %832 = arith.mulf %831, %830 : vector<2x48xf32>
    %833 = math.tanh %832 : vector<2x48xf32>
    %cst_38 = arith.constant 5.000000e-01 : f32
    %834 = vector.broadcast %cst_38 : f32 to vector<2x48xf32>
    %835 = arith.mulf %834, %833 : vector<2x48xf32>
    %cst_39 = arith.constant 5.000000e-01 : f32
    %836 = vector.broadcast %cst_39 : f32 to vector<2x48xf32>
    %837 = arith.addf %835, %836 : vector<2x48xf32>
    %838 = vector.extract_strided_slice %829 {offsets = [0, 48], sizes = [2, 16], strides = [1, 1]} : vector<2x128xf32> to vector<2x16xf32>
    %839 = math.tanh %838 : vector<2x16xf32>
    %840 = vector.extract_strided_slice %837 {offsets = [0, 0], sizes = [2, 16], strides = [1, 1]} : vector<2x48xf32> to vector<2x16xf32>
    %841 = vector.extract_strided_slice %837 {offsets = [0, 16], sizes = [2, 16], strides = [1, 1]} : vector<2x48xf32> to vector<2x16xf32>
    %842 = vector.extract_strided_slice %837 {offsets = [0, 32], sizes = [2, 16], strides = [1, 1]} : vector<2x48xf32> to vector<2x16xf32>
    %843 = arith.mulf %841, %727 : vector<2x16xf32>
    %844 = arith.mulf %840, %839 : vector<2x16xf32>
    %845 = arith.addf %843, %844 : vector<2x16xf32>
    %846 = math.tanh %845 : vector<2x16xf32>
    %847 = arith.mulf %842, %846 : vector<2x16xf32>
    %c12 = arith.constant 12 : index
    %c0_40 = arith.constant 0 : index
    %848 = vector.load %arg3[%c12, %c0_40] : memref<16x16xf32, #tpu.memory_space<vmem>>, vector<2x16xf32>
    tpu.vector_store %arg3[%c12, %c0_40], %847 {strides = array<i32>} : memref<16x16xf32, #tpu.memory_space<vmem>>, vector<2x16xf32>,
    %849 = vector.extract_strided_slice %16 {offsets = [7, 0], sizes = [1, 128], strides = [1, 1]} : vector<8x128xf32> to vector<1x128xf32>
    %850 = vector.extract_strided_slice %20 {offsets = [7, 0], sizes = [1, 128], strides = [1, 1]} : vector<8x128xf32> to vector<1x128xf32>
    %851 = tpu.concatenate %849, %850 in 0 : vector<1x128xf32>, vector<1x128xf32> -> vector<2x128xf32>
    %852 = vector.extract_strided_slice %847 {offsets = [0, 0], sizes = [2, 1], strides = [1, 1]} : vector<2x16xf32> to vector<2x1xf32>
    %853 = vector.extract_strided_slice %11 {offsets = [0, 0], sizes = [1, 128], strides = [1, 1]} : vector<16x128xf32> to vector<1x128xf32>
    %854 = vector.broadcast %852 : vector<2x1xf32> to vector<2x128xf32>
    %855 = vector.broadcast %853 : vector<1x128xf32> to vector<2x128xf32>
    %856 = arith.mulf %854, %855 : vector<2x128xf32>
    %857 = vector.extract_strided_slice %847 {offsets = [0, 1], sizes = [2, 1], strides = [1, 1]} : vector<2x16xf32> to vector<2x1xf32>
    %858 = vector.extract_strided_slice %11 {offsets = [1, 0], sizes = [1, 128], strides = [1, 1]} : vector<16x128xf32> to vector<1x128xf32>
    %859 = vector.broadcast %857 : vector<2x1xf32> to vector<2x128xf32>
    %860 = vector.broadcast %858 : vector<1x128xf32> to vector<2x128xf32>
    %861 = arith.mulf %859, %860 : vector<2x128xf32>
    %862 = vector.extract_strided_slice %847 {offsets = [0, 2], sizes = [2, 1], strides = [1, 1]} : vector<2x16xf32> to vector<2x1xf32>
    %863 = vector.extract_strided_slice %11 {offsets = [2, 0], sizes = [1, 128], strides = [1, 1]} : vector<16x128xf32> to vector<1x128xf32>
    %864 = vector.broadcast %862 : vector<2x1xf32> to vector<2x128xf32>
    %865 = vector.broadcast %863 : vector<1x128xf32> to vector<2x128xf32>
    %866 = arith.mulf %864, %865 : vector<2x128xf32>
    %867 = vector.extract_strided_slice %847 {offsets = [0, 3], sizes = [2, 1], strides = [1, 1]} : vector<2x16xf32> to vector<2x1xf32>
    %868 = vector.extract_strided_slice %11 {offsets = [3, 0], sizes = [1, 128], strides = [1, 1]} : vector<16x128xf32> to vector<1x128xf32>
    %869 = vector.broadcast %867 : vector<2x1xf32> to vector<2x128xf32>
    %870 = vector.broadcast %868 : vector<1x128xf32> to vector<2x128xf32>
    %871 = arith.mulf %869, %870 : vector<2x128xf32>
    %872 = vector.extract_strided_slice %847 {offsets = [0, 4], sizes = [2, 1], strides = [1, 1]} : vector<2x16xf32> to vector<2x1xf32>
    %873 = vector.extract_strided_slice %11 {offsets = [4, 0], sizes = [1, 128], strides = [1, 1]} : vector<16x128xf32> to vector<1x128xf32>
    %874 = vector.broadcast %872 : vector<2x1xf32> to vector<2x128xf32>
    %875 = vector.broadcast %873 : vector<1x128xf32> to vector<2x128xf32>
    %876 = arith.mulf %874, %875 : vector<2x128xf32>
    %877 = vector.extract_strided_slice %847 {offsets = [0, 5], sizes = [2, 1], strides = [1, 1]} : vector<2x16xf32> to vector<2x1xf32>
    %878 = vector.extract_strided_slice %11 {offsets = [5, 0], sizes = [1, 128], strides = [1, 1]} : vector<16x128xf32> to vector<1x128xf32>
    %879 = vector.broadcast %877 : vector<2x1xf32> to vector<2x128xf32>
    %880 = vector.broadcast %878 : vector<1x128xf32> to vector<2x128xf32>
    %881 = arith.mulf %879, %880 : vector<2x128xf32>
    %882 = vector.extract_strided_slice %847 {offsets = [0, 6], sizes = [2, 1], strides = [1, 1]} : vector<2x16xf32> to vector<2x1xf32>
    %883 = vector.extract_strided_slice %11 {offsets = [6, 0], sizes = [1, 128], strides = [1, 1]} : vector<16x128xf32> to vector<1x128xf32>
    %884 = vector.broadcast %882 : vector<2x1xf32> to vector<2x128xf32>
    %885 = vector.broadcast %883 : vector<1x128xf32> to vector<2x128xf32>
    %886 = arith.mulf %884, %885 : vector<2x128xf32>
    %887 = vector.extract_strided_slice %847 {offsets = [0, 7], sizes = [2, 1], strides = [1, 1]} : vector<2x16xf32> to vector<2x1xf32>
    %888 = vector.extract_strided_slice %11 {offsets = [7, 0], sizes = [1, 128], strides = [1, 1]} : vector<16x128xf32> to vector<1x128xf32>
    %889 = vector.broadcast %887 : vector<2x1xf32> to vector<2x128xf32>
    %890 = vector.broadcast %888 : vector<1x128xf32> to vector<2x128xf32>
    %891 = arith.mulf %889, %890 : vector<2x128xf32>
    %892 = vector.extract_strided_slice %847 {offsets = [0, 8], sizes = [2, 1], strides = [1, 1]} : vector<2x16xf32> to vector<2x1xf32>
    %893 = vector.extract_strided_slice %11 {offsets = [8, 0], sizes = [1, 128], strides = [1, 1]} : vector<16x128xf32> to vector<1x128xf32>
    %894 = vector.broadcast %892 : vector<2x1xf32> to vector<2x128xf32>
    %895 = vector.broadcast %893 : vector<1x128xf32> to vector<2x128xf32>
    %896 = arith.mulf %894, %895 : vector<2x128xf32>
    %897 = vector.extract_strided_slice %847 {offsets = [0, 9], sizes = [2, 1], strides = [1, 1]} : vector<2x16xf32> to vector<2x1xf32>
    %898 = vector.extract_strided_slice %11 {offsets = [9, 0], sizes = [1, 128], strides = [1, 1]} : vector<16x128xf32> to vector<1x128xf32>
    %899 = vector.broadcast %897 : vector<2x1xf32> to vector<2x128xf32>
    %900 = vector.broadcast %898 : vector<1x128xf32> to vector<2x128xf32>
    %901 = arith.mulf %899, %900 : vector<2x128xf32>
    %902 = vector.extract_strided_slice %847 {offsets = [0, 10], sizes = [2, 1], strides = [1, 1]} : vector<2x16xf32> to vector<2x1xf32>
    %903 = vector.extract_strided_slice %11 {offsets = [10, 0], sizes = [1, 128], strides = [1, 1]} : vector<16x128xf32> to vector<1x128xf32>
    %904 = vector.broadcast %902 : vector<2x1xf32> to vector<2x128xf32>
    %905 = vector.broadcast %903 : vector<1x128xf32> to vector<2x128xf32>
    %906 = arith.mulf %904, %905 : vector<2x128xf32>
    %907 = vector.extract_strided_slice %847 {offsets = [0, 11], sizes = [2, 1], strides = [1, 1]} : vector<2x16xf32> to vector<2x1xf32>
    %908 = vector.extract_strided_slice %11 {offsets = [11, 0], sizes = [1, 128], strides = [1, 1]} : vector<16x128xf32> to vector<1x128xf32>
    %909 = vector.broadcast %907 : vector<2x1xf32> to vector<2x128xf32>
    %910 = vector.broadcast %908 : vector<1x128xf32> to vector<2x128xf32>
    %911 = arith.mulf %909, %910 : vector<2x128xf32>
    %912 = vector.extract_strided_slice %847 {offsets = [0, 12], sizes = [2, 1], strides = [1, 1]} : vector<2x16xf32> to vector<2x1xf32>
    %913 = vector.extract_strided_slice %11 {offsets = [12, 0], sizes = [1, 128], strides = [1, 1]} : vector<16x128xf32> to vector<1x128xf32>
    %914 = vector.broadcast %912 : vector<2x1xf32> to vector<2x128xf32>
    %915 = vector.broadcast %913 : vector<1x128xf32> to vector<2x128xf32>
    %916 = arith.mulf %914, %915 : vector<2x128xf32>
    %917 = vector.extract_strided_slice %847 {offsets = [0, 13], sizes = [2, 1], strides = [1, 1]} : vector<2x16xf32> to vector<2x1xf32>
    %918 = vector.extract_strided_slice %11 {offsets = [13, 0], sizes = [1, 128], strides = [1, 1]} : vector<16x128xf32> to vector<1x128xf32>
    %919 = vector.broadcast %917 : vector<2x1xf32> to vector<2x128xf32>
    %920 = vector.broadcast %918 : vector<1x128xf32> to vector<2x128xf32>
    %921 = arith.mulf %919, %920 : vector<2x128xf32>
    %922 = vector.extract_strided_slice %847 {offsets = [0, 14], sizes = [2, 1], strides = [1, 1]} : vector<2x16xf32> to vector<2x1xf32>
    %923 = vector.extract_strided_slice %11 {offsets = [14, 0], sizes = [1, 128], strides = [1, 1]} : vector<16x128xf32> to vector<1x128xf32>
    %924 = vector.broadcast %922 : vector<2x1xf32> to vector<2x128xf32>
    %925 = vector.broadcast %923 : vector<1x128xf32> to vector<2x128xf32>
    %926 = arith.mulf %924, %925 : vector<2x128xf32>
    %927 = vector.extract_strided_slice %847 {offsets = [0, 15], sizes = [2, 1], strides = [1, 1]} : vector<2x16xf32> to vector<2x1xf32>
    %928 = vector.extract_strided_slice %11 {offsets = [15, 0], sizes = [1, 128], strides = [1, 1]} : vector<16x128xf32> to vector<1x128xf32>
    %929 = vector.broadcast %927 : vector<2x1xf32> to vector<2x128xf32>
    %930 = vector.broadcast %928 : vector<1x128xf32> to vector<2x128xf32>
    %931 = arith.mulf %929, %930 : vector<2x128xf32>
    %932 = arith.addf %856, %861 : vector<2x128xf32>
    %933 = arith.addf %866, %871 : vector<2x128xf32>
    %934 = arith.addf %876, %881 : vector<2x128xf32>
    %935 = arith.addf %886, %891 : vector<2x128xf32>
    %936 = arith.addf %896, %901 : vector<2x128xf32>
    %937 = arith.addf %906, %911 : vector<2x128xf32>
    %938 = arith.addf %916, %921 : vector<2x128xf32>
    %939 = arith.addf %926, %931 : vector<2x128xf32>
    %940 = arith.addf %932, %933 : vector<2x128xf32>
    %941 = arith.addf %934, %935 : vector<2x128xf32>
    %942 = arith.addf %936, %937 : vector<2x128xf32>
    %943 = arith.addf %938, %939 : vector<2x128xf32>
    %944 = arith.addf %940, %941 : vector<2x128xf32>
    %945 = arith.addf %942, %943 : vector<2x128xf32>
    %946 = arith.addf %944, %945 : vector<2x128xf32>
    %947 = arith.addf %851, %946 : vector<2x128xf32>
    %948 = vector.extract_strided_slice %947 {offsets = [0, 0], sizes = [2, 48], strides = [1, 1]} : vector<2x128xf32> to vector<2x48xf32>
    %cst_41 = arith.constant 5.000000e-01 : f32
    %949 = vector.broadcast %cst_41 : f32 to vector<2x48xf32>
    %950 = arith.mulf %949, %948 : vector<2x48xf32>
    %951 = math.tanh %950 : vector<2x48xf32>
    %cst_42 = arith.constant 5.000000e-01 : f32
    %952 = vector.broadcast %cst_42 : f32 to vector<2x48xf32>
    %953 = arith.mulf %952, %951 : vector<2x48xf32>
    %cst_43 = arith.constant 5.000000e-01 : f32
    %954 = vector.broadcast %cst_43 : f32 to vector<2x48xf32>
    %955 = arith.addf %953, %954 : vector<2x48xf32>
    %956 = vector.extract_strided_slice %947 {offsets = [0, 48], sizes = [2, 16], strides = [1, 1]} : vector<2x128xf32> to vector<2x16xf32>
    %957 = math.tanh %956 : vector<2x16xf32>
    %958 = vector.extract_strided_slice %955 {offsets = [0, 0], sizes = [2, 16], strides = [1, 1]} : vector<2x48xf32> to vector<2x16xf32>
    %959 = vector.extract_strided_slice %955 {offsets = [0, 16], sizes = [2, 16], strides = [1, 1]} : vector<2x48xf32> to vector<2x16xf32>
    %960 = vector.extract_strided_slice %955 {offsets = [0, 32], sizes = [2, 16], strides = [1, 1]} : vector<2x48xf32> to vector<2x16xf32>
    %961 = arith.mulf %959, %845 : vector<2x16xf32>
    %962 = arith.mulf %958, %957 : vector<2x16xf32>
    %963 = arith.addf %961, %962 : vector<2x16xf32>
    %964 = math.tanh %963 : vector<2x16xf32>
    %965 = arith.mulf %960, %964 : vector<2x16xf32>
    %c14 = arith.constant 14 : index
    %c0_44 = arith.constant 0 : index
    %966 = vector.load %arg3[%c14, %c0_44] : memref<16x16xf32, #tpu.memory_space<vmem>>, vector<2x16xf32>
    tpu.vector_store %arg3[%c14, %c0_44], %965 {strides = array<i32>} : memref<16x16xf32, #tpu.memory_space<vmem>>, vector<2x16xf32>,
    %c40 = arith.constant 40 : index
    %c0_45 = arith.constant 0 : index
    %967 = vector.load %arg1[%c40, %c0_45] : memref<104x128xf32, #tpu.memory_space<vmem>>, vector<16x128xf32>
    %c56 = arith.constant 56 : index
    %c0_46 = arith.constant 0 : index
    %968 = vector.load %arg1[%c56, %c0_46] : memref<104x128xf32, #tpu.memory_space<vmem>>, vector<16x128xf32>
    %c72 = arith.constant 72 : index
    %c0_47 = arith.constant 0 : index
    %969 = vector.load %arg1[%c72, %c0_47] : memref<104x128xf32, #tpu.memory_space<vmem>>, vector<1x128xf32>
    %c0_48 = arith.constant 0 : index
    %c0_49 = arith.constant 0 : index
    %970 = vector.load %arg3[%c0_48, %c0_49] : memref<16x16xf32, #tpu.memory_space<vmem>>, vector<16x16xf32>
    %cst_50 = arith.constant dense<0.000000e+00> : vector<16x128xf32>
    %971 = tpu.matmul %970, %967, %cst_50 {dimension_numbers = #tpu.dot_dimension_numbers<[1], [0], [0], [1], [0, 0, 1, 1], [], []>, precision = #tpu.contract_precision<fp32>} : vector<16x16xf32>, vector<16x128xf32>, vector<16x128xf32> -> vector<16x128xf32>
    %972 = vector.broadcast %969 : vector<1x128xf32> to vector<16x128xf32>
    %973 = arith.addf %971, %972 : vector<16x128xf32>
    %cst_51 = arith.constant 0.000000e+00 : f32
    %974 = vector.broadcast %cst_51 : f32 to vector<2x16xf32>
    %cst_52 = arith.constant 0.000000e+00 : f32
    %975 = vector.broadcast %cst_52 : f32 to vector<2x16xf32>
    %976 = vector.extract_strided_slice %973 {offsets = [0, 0], sizes = [2, 128], strides = [1, 1]} : vector<16x128xf32> to vector<2x128xf32>
    %977 = vector.extract_strided_slice %974 {offsets = [0, 0], sizes = [2, 1], strides = [1, 1]} : vector<2x16xf32> to vector<2x1xf32>
    %978 = vector.extract_strided_slice %968 {offsets = [0, 0], sizes = [1, 128], strides = [1, 1]} : vector<16x128xf32> to vector<1x128xf32>
    %979 = vector.broadcast %977 : vector<2x1xf32> to vector<2x128xf32>
    %980 = vector.broadcast %978 : vector<1x128xf32> to vector<2x128xf32>
    %981 = arith.mulf %979, %980 : vector<2x128xf32>
    %982 = vector.extract_strided_slice %974 {offsets = [0, 1], sizes = [2, 1], strides = [1, 1]} : vector<2x16xf32> to vector<2x1xf32>
    %983 = vector.extract_strided_slice %968 {offsets = [1, 0], sizes = [1, 128], strides = [1, 1]} : vector<16x128xf32> to vector<1x128xf32>
    %984 = vector.broadcast %982 : vector<2x1xf32> to vector<2x128xf32>
    %985 = vector.broadcast %983 : vector<1x128xf32> to vector<2x128xf32>
    %986 = arith.mulf %984, %985 : vector<2x128xf32>
    %987 = vector.extract_strided_slice %974 {offsets = [0, 2], sizes = [2, 1], strides = [1, 1]} : vector<2x16xf32> to vector<2x1xf32>
    %988 = vector.extract_strided_slice %968 {offsets = [2, 0], sizes = [1, 128], strides = [1, 1]} : vector<16x128xf32> to vector<1x128xf32>
    %989 = vector.broadcast %987 : vector<2x1xf32> to vector<2x128xf32>
    %990 = vector.broadcast %988 : vector<1x128xf32> to vector<2x128xf32>
    %991 = arith.mulf %989, %990 : vector<2x128xf32>
    %992 = vector.extract_strided_slice %974 {offsets = [0, 3], sizes = [2, 1], strides = [1, 1]} : vector<2x16xf32> to vector<2x1xf32>
    %993 = vector.extract_strided_slice %968 {offsets = [3, 0], sizes = [1, 128], strides = [1, 1]} : vector<16x128xf32> to vector<1x128xf32>
    %994 = vector.broadcast %992 : vector<2x1xf32> to vector<2x128xf32>
    %995 = vector.broadcast %993 : vector<1x128xf32> to vector<2x128xf32>
    %996 = arith.mulf %994, %995 : vector<2x128xf32>
    %997 = vector.extract_strided_slice %974 {offsets = [0, 4], sizes = [2, 1], strides = [1, 1]} : vector<2x16xf32> to vector<2x1xf32>
    %998 = vector.extract_strided_slice %968 {offsets = [4, 0], sizes = [1, 128], strides = [1, 1]} : vector<16x128xf32> to vector<1x128xf32>
    %999 = vector.broadcast %997 : vector<2x1xf32> to vector<2x128xf32>
    %1000 = vector.broadcast %998 : vector<1x128xf32> to vector<2x128xf32>
    %1001 = arith.mulf %999, %1000 : vector<2x128xf32>
    %1002 = vector.extract_strided_slice %974 {offsets = [0, 5], sizes = [2, 1], strides = [1, 1]} : vector<2x16xf32> to vector<2x1xf32>
    %1003 = vector.extract_strided_slice %968 {offsets = [5, 0], sizes = [1, 128], strides = [1, 1]} : vector<16x128xf32> to vector<1x128xf32>
    %1004 = vector.broadcast %1002 : vector<2x1xf32> to vector<2x128xf32>
    %1005 = vector.broadcast %1003 : vector<1x128xf32> to vector<2x128xf32>
    %1006 = arith.mulf %1004, %1005 : vector<2x128xf32>
    %1007 = vector.extract_strided_slice %974 {offsets = [0, 6], sizes = [2, 1], strides = [1, 1]} : vector<2x16xf32> to vector<2x1xf32>
    %1008 = vector.extract_strided_slice %968 {offsets = [6, 0], sizes = [1, 128], strides = [1, 1]} : vector<16x128xf32> to vector<1x128xf32>
    %1009 = vector.broadcast %1007 : vector<2x1xf32> to vector<2x128xf32>
    %1010 = vector.broadcast %1008 : vector<1x128xf32> to vector<2x128xf32>
    %1011 = arith.mulf %1009, %1010 : vector<2x128xf32>
    %1012 = vector.extract_strided_slice %974 {offsets = [0, 7], sizes = [2, 1], strides = [1, 1]} : vector<2x16xf32> to vector<2x1xf32>
    %1013 = vector.extract_strided_slice %968 {offsets = [7, 0], sizes = [1, 128], strides = [1, 1]} : vector<16x128xf32> to vector<1x128xf32>
    %1014 = vector.broadcast %1012 : vector<2x1xf32> to vector<2x128xf32>
    %1015 = vector.broadcast %1013 : vector<1x128xf32> to vector<2x128xf32>
    %1016 = arith.mulf %1014, %1015 : vector<2x128xf32>
    %1017 = vector.extract_strided_slice %974 {offsets = [0, 8], sizes = [2, 1], strides = [1, 1]} : vector<2x16xf32> to vector<2x1xf32>
    %1018 = vector.extract_strided_slice %968 {offsets = [8, 0], sizes = [1, 128], strides = [1, 1]} : vector<16x128xf32> to vector<1x128xf32>
    %1019 = vector.broadcast %1017 : vector<2x1xf32> to vector<2x128xf32>
    %1020 = vector.broadcast %1018 : vector<1x128xf32> to vector<2x128xf32>
    %1021 = arith.mulf %1019, %1020 : vector<2x128xf32>
    %1022 = vector.extract_strided_slice %974 {offsets = [0, 9], sizes = [2, 1], strides = [1, 1]} : vector<2x16xf32> to vector<2x1xf32>
    %1023 = vector.extract_strided_slice %968 {offsets = [9, 0], sizes = [1, 128], strides = [1, 1]} : vector<16x128xf32> to vector<1x128xf32>
    %1024 = vector.broadcast %1022 : vector<2x1xf32> to vector<2x128xf32>
    %1025 = vector.broadcast %1023 : vector<1x128xf32> to vector<2x128xf32>
    %1026 = arith.mulf %1024, %1025 : vector<2x128xf32>
    %1027 = vector.extract_strided_slice %974 {offsets = [0, 10], sizes = [2, 1], strides = [1, 1]} : vector<2x16xf32> to vector<2x1xf32>
    %1028 = vector.extract_strided_slice %968 {offsets = [10, 0], sizes = [1, 128], strides = [1, 1]} : vector<16x128xf32> to vector<1x128xf32>
    %1029 = vector.broadcast %1027 : vector<2x1xf32> to vector<2x128xf32>
    %1030 = vector.broadcast %1028 : vector<1x128xf32> to vector<2x128xf32>
    %1031 = arith.mulf %1029, %1030 : vector<2x128xf32>
    %1032 = vector.extract_strided_slice %974 {offsets = [0, 11], sizes = [2, 1], strides = [1, 1]} : vector<2x16xf32> to vector<2x1xf32>
    %1033 = vector.extract_strided_slice %968 {offsets = [11, 0], sizes = [1, 128], strides = [1, 1]} : vector<16x128xf32> to vector<1x128xf32>
    %1034 = vector.broadcast %1032 : vector<2x1xf32> to vector<2x128xf32>
    %1035 = vector.broadcast %1033 : vector<1x128xf32> to vector<2x128xf32>
    %1036 = arith.mulf %1034, %1035 : vector<2x128xf32>
    %1037 = vector.extract_strided_slice %974 {offsets = [0, 12], sizes = [2, 1], strides = [1, 1]} : vector<2x16xf32> to vector<2x1xf32>
    %1038 = vector.extract_strided_slice %968 {offsets = [12, 0], sizes = [1, 128], strides = [1, 1]} : vector<16x128xf32> to vector<1x128xf32>
    %1039 = vector.broadcast %1037 : vector<2x1xf32> to vector<2x128xf32>
    %1040 = vector.broadcast %1038 : vector<1x128xf32> to vector<2x128xf32>
    %1041 = arith.mulf %1039, %1040 : vector<2x128xf32>
    %1042 = vector.extract_strided_slice %974 {offsets = [0, 13], sizes = [2, 1], strides = [1, 1]} : vector<2x16xf32> to vector<2x1xf32>
    %1043 = vector.extract_strided_slice %968 {offsets = [13, 0], sizes = [1, 128], strides = [1, 1]} : vector<16x128xf32> to vector<1x128xf32>
    %1044 = vector.broadcast %1042 : vector<2x1xf32> to vector<2x128xf32>
    %1045 = vector.broadcast %1043 : vector<1x128xf32> to vector<2x128xf32>
    %1046 = arith.mulf %1044, %1045 : vector<2x128xf32>
    %1047 = vector.extract_strided_slice %974 {offsets = [0, 14], sizes = [2, 1], strides = [1, 1]} : vector<2x16xf32> to vector<2x1xf32>
    %1048 = vector.extract_strided_slice %968 {offsets = [14, 0], sizes = [1, 128], strides = [1, 1]} : vector<16x128xf32> to vector<1x128xf32>
    %1049 = vector.broadcast %1047 : vector<2x1xf32> to vector<2x128xf32>
    %1050 = vector.broadcast %1048 : vector<1x128xf32> to vector<2x128xf32>
    %1051 = arith.mulf %1049, %1050 : vector<2x128xf32>
    %1052 = vector.extract_strided_slice %974 {offsets = [0, 15], sizes = [2, 1], strides = [1, 1]} : vector<2x16xf32> to vector<2x1xf32>
    %1053 = vector.extract_strided_slice %968 {offsets = [15, 0], sizes = [1, 128], strides = [1, 1]} : vector<16x128xf32> to vector<1x128xf32>
    %1054 = vector.broadcast %1052 : vector<2x1xf32> to vector<2x128xf32>
    %1055 = vector.broadcast %1053 : vector<1x128xf32> to vector<2x128xf32>
    %1056 = arith.mulf %1054, %1055 : vector<2x128xf32>
    %1057 = arith.addf %981, %986 : vector<2x128xf32>
    %1058 = arith.addf %991, %996 : vector<2x128xf32>
    %1059 = arith.addf %1001, %1006 : vector<2x128xf32>
    %1060 = arith.addf %1011, %1016 : vector<2x128xf32>
    %1061 = arith.addf %1021, %1026 : vector<2x128xf32>
    %1062 = arith.addf %1031, %1036 : vector<2x128xf32>
    %1063 = arith.addf %1041, %1046 : vector<2x128xf32>
    %1064 = arith.addf %1051, %1056 : vector<2x128xf32>
    %1065 = arith.addf %1057, %1058 : vector<2x128xf32>
    %1066 = arith.addf %1059, %1060 : vector<2x128xf32>
    %1067 = arith.addf %1061, %1062 : vector<2x128xf32>
    %1068 = arith.addf %1063, %1064 : vector<2x128xf32>
    %1069 = arith.addf %1065, %1066 : vector<2x128xf32>
    %1070 = arith.addf %1067, %1068 : vector<2x128xf32>
    %1071 = arith.addf %1069, %1070 : vector<2x128xf32>
    %1072 = arith.addf %976, %1071 : vector<2x128xf32>
    %1073 = vector.extract_strided_slice %1072 {offsets = [0, 0], sizes = [2, 48], strides = [1, 1]} : vector<2x128xf32> to vector<2x48xf32>
    %cst_53 = arith.constant 5.000000e-01 : f32
    %1074 = vector.broadcast %cst_53 : f32 to vector<2x48xf32>
    %1075 = arith.mulf %1074, %1073 : vector<2x48xf32>
    %1076 = math.tanh %1075 : vector<2x48xf32>
    %cst_54 = arith.constant 5.000000e-01 : f32
    %1077 = vector.broadcast %cst_54 : f32 to vector<2x48xf32>
    %1078 = arith.mulf %1077, %1076 : vector<2x48xf32>
    %cst_55 = arith.constant 5.000000e-01 : f32
    %1079 = vector.broadcast %cst_55 : f32 to vector<2x48xf32>
    %1080 = arith.addf %1078, %1079 : vector<2x48xf32>
    %1081 = vector.extract_strided_slice %1072 {offsets = [0, 48], sizes = [2, 16], strides = [1, 1]} : vector<2x128xf32> to vector<2x16xf32>
    %1082 = math.tanh %1081 : vector<2x16xf32>
    %1083 = vector.extract_strided_slice %1080 {offsets = [0, 0], sizes = [2, 16], strides = [1, 1]} : vector<2x48xf32> to vector<2x16xf32>
    %1084 = vector.extract_strided_slice %1080 {offsets = [0, 16], sizes = [2, 16], strides = [1, 1]} : vector<2x48xf32> to vector<2x16xf32>
    %1085 = vector.extract_strided_slice %1080 {offsets = [0, 32], sizes = [2, 16], strides = [1, 1]} : vector<2x48xf32> to vector<2x16xf32>
    %1086 = arith.mulf %1084, %975 : vector<2x16xf32>
    %1087 = arith.mulf %1083, %1082 : vector<2x16xf32>
    %1088 = arith.addf %1086, %1087 : vector<2x16xf32>
    %1089 = math.tanh %1088 : vector<2x16xf32>
    %1090 = arith.mulf %1085, %1089 : vector<2x16xf32>
    %1091 = vector.extract_strided_slice %973 {offsets = [2, 0], sizes = [2, 128], strides = [1, 1]} : vector<16x128xf32> to vector<2x128xf32>
    %1092 = vector.extract_strided_slice %1090 {offsets = [0, 0], sizes = [2, 1], strides = [1, 1]} : vector<2x16xf32> to vector<2x1xf32>
    %1093 = vector.extract_strided_slice %968 {offsets = [0, 0], sizes = [1, 128], strides = [1, 1]} : vector<16x128xf32> to vector<1x128xf32>
    %1094 = vector.broadcast %1092 : vector<2x1xf32> to vector<2x128xf32>
    %1095 = vector.broadcast %1093 : vector<1x128xf32> to vector<2x128xf32>
    %1096 = arith.mulf %1094, %1095 : vector<2x128xf32>
    %1097 = vector.extract_strided_slice %1090 {offsets = [0, 1], sizes = [2, 1], strides = [1, 1]} : vector<2x16xf32> to vector<2x1xf32>
    %1098 = vector.extract_strided_slice %968 {offsets = [1, 0], sizes = [1, 128], strides = [1, 1]} : vector<16x128xf32> to vector<1x128xf32>
    %1099 = vector.broadcast %1097 : vector<2x1xf32> to vector<2x128xf32>
    %1100 = vector.broadcast %1098 : vector<1x128xf32> to vector<2x128xf32>
    %1101 = arith.mulf %1099, %1100 : vector<2x128xf32>
    %1102 = vector.extract_strided_slice %1090 {offsets = [0, 2], sizes = [2, 1], strides = [1, 1]} : vector<2x16xf32> to vector<2x1xf32>
    %1103 = vector.extract_strided_slice %968 {offsets = [2, 0], sizes = [1, 128], strides = [1, 1]} : vector<16x128xf32> to vector<1x128xf32>
    %1104 = vector.broadcast %1102 : vector<2x1xf32> to vector<2x128xf32>
    %1105 = vector.broadcast %1103 : vector<1x128xf32> to vector<2x128xf32>
    %1106 = arith.mulf %1104, %1105 : vector<2x128xf32>
    %1107 = vector.extract_strided_slice %1090 {offsets = [0, 3], sizes = [2, 1], strides = [1, 1]} : vector<2x16xf32> to vector<2x1xf32>
    %1108 = vector.extract_strided_slice %968 {offsets = [3, 0], sizes = [1, 128], strides = [1, 1]} : vector<16x128xf32> to vector<1x128xf32>
    %1109 = vector.broadcast %1107 : vector<2x1xf32> to vector<2x128xf32>
    %1110 = vector.broadcast %1108 : vector<1x128xf32> to vector<2x128xf32>
    %1111 = arith.mulf %1109, %1110 : vector<2x128xf32>
    %1112 = vector.extract_strided_slice %1090 {offsets = [0, 4], sizes = [2, 1], strides = [1, 1]} : vector<2x16xf32> to vector<2x1xf32>
    %1113 = vector.extract_strided_slice %968 {offsets = [4, 0], sizes = [1, 128], strides = [1, 1]} : vector<16x128xf32> to vector<1x128xf32>
    %1114 = vector.broadcast %1112 : vector<2x1xf32> to vector<2x128xf32>
    %1115 = vector.broadcast %1113 : vector<1x128xf32> to vector<2x128xf32>
    %1116 = arith.mulf %1114, %1115 : vector<2x128xf32>
    %1117 = vector.extract_strided_slice %1090 {offsets = [0, 5], sizes = [2, 1], strides = [1, 1]} : vector<2x16xf32> to vector<2x1xf32>
    %1118 = vector.extract_strided_slice %968 {offsets = [5, 0], sizes = [1, 128], strides = [1, 1]} : vector<16x128xf32> to vector<1x128xf32>
    %1119 = vector.broadcast %1117 : vector<2x1xf32> to vector<2x128xf32>
    %1120 = vector.broadcast %1118 : vector<1x128xf32> to vector<2x128xf32>
    %1121 = arith.mulf %1119, %1120 : vector<2x128xf32>
    %1122 = vector.extract_strided_slice %1090 {offsets = [0, 6], sizes = [2, 1], strides = [1, 1]} : vector<2x16xf32> to vector<2x1xf32>
    %1123 = vector.extract_strided_slice %968 {offsets = [6, 0], sizes = [1, 128], strides = [1, 1]} : vector<16x128xf32> to vector<1x128xf32>
    %1124 = vector.broadcast %1122 : vector<2x1xf32> to vector<2x128xf32>
    %1125 = vector.broadcast %1123 : vector<1x128xf32> to vector<2x128xf32>
    %1126 = arith.mulf %1124, %1125 : vector<2x128xf32>
    %1127 = vector.extract_strided_slice %1090 {offsets = [0, 7], sizes = [2, 1], strides = [1, 1]} : vector<2x16xf32> to vector<2x1xf32>
    %1128 = vector.extract_strided_slice %968 {offsets = [7, 0], sizes = [1, 128], strides = [1, 1]} : vector<16x128xf32> to vector<1x128xf32>
    %1129 = vector.broadcast %1127 : vector<2x1xf32> to vector<2x128xf32>
    %1130 = vector.broadcast %1128 : vector<1x128xf32> to vector<2x128xf32>
    %1131 = arith.mulf %1129, %1130 : vector<2x128xf32>
    %1132 = vector.extract_strided_slice %1090 {offsets = [0, 8], sizes = [2, 1], strides = [1, 1]} : vector<2x16xf32> to vector<2x1xf32>
    %1133 = vector.extract_strided_slice %968 {offsets = [8, 0], sizes = [1, 128], strides = [1, 1]} : vector<16x128xf32> to vector<1x128xf32>
    %1134 = vector.broadcast %1132 : vector<2x1xf32> to vector<2x128xf32>
    %1135 = vector.broadcast %1133 : vector<1x128xf32> to vector<2x128xf32>
    %1136 = arith.mulf %1134, %1135 : vector<2x128xf32>
    %1137 = vector.extract_strided_slice %1090 {offsets = [0, 9], sizes = [2, 1], strides = [1, 1]} : vector<2x16xf32> to vector<2x1xf32>
    %1138 = vector.extract_strided_slice %968 {offsets = [9, 0], sizes = [1, 128], strides = [1, 1]} : vector<16x128xf32> to vector<1x128xf32>
    %1139 = vector.broadcast %1137 : vector<2x1xf32> to vector<2x128xf32>
    %1140 = vector.broadcast %1138 : vector<1x128xf32> to vector<2x128xf32>
    %1141 = arith.mulf %1139, %1140 : vector<2x128xf32>
    %1142 = vector.extract_strided_slice %1090 {offsets = [0, 10], sizes = [2, 1], strides = [1, 1]} : vector<2x16xf32> to vector<2x1xf32>
    %1143 = vector.extract_strided_slice %968 {offsets = [10, 0], sizes = [1, 128], strides = [1, 1]} : vector<16x128xf32> to vector<1x128xf32>
    %1144 = vector.broadcast %1142 : vector<2x1xf32> to vector<2x128xf32>
    %1145 = vector.broadcast %1143 : vector<1x128xf32> to vector<2x128xf32>
    %1146 = arith.mulf %1144, %1145 : vector<2x128xf32>
    %1147 = vector.extract_strided_slice %1090 {offsets = [0, 11], sizes = [2, 1], strides = [1, 1]} : vector<2x16xf32> to vector<2x1xf32>
    %1148 = vector.extract_strided_slice %968 {offsets = [11, 0], sizes = [1, 128], strides = [1, 1]} : vector<16x128xf32> to vector<1x128xf32>
    %1149 = vector.broadcast %1147 : vector<2x1xf32> to vector<2x128xf32>
    %1150 = vector.broadcast %1148 : vector<1x128xf32> to vector<2x128xf32>
    %1151 = arith.mulf %1149, %1150 : vector<2x128xf32>
    %1152 = vector.extract_strided_slice %1090 {offsets = [0, 12], sizes = [2, 1], strides = [1, 1]} : vector<2x16xf32> to vector<2x1xf32>
    %1153 = vector.extract_strided_slice %968 {offsets = [12, 0], sizes = [1, 128], strides = [1, 1]} : vector<16x128xf32> to vector<1x128xf32>
    %1154 = vector.broadcast %1152 : vector<2x1xf32> to vector<2x128xf32>
    %1155 = vector.broadcast %1153 : vector<1x128xf32> to vector<2x128xf32>
    %1156 = arith.mulf %1154, %1155 : vector<2x128xf32>
    %1157 = vector.extract_strided_slice %1090 {offsets = [0, 13], sizes = [2, 1], strides = [1, 1]} : vector<2x16xf32> to vector<2x1xf32>
    %1158 = vector.extract_strided_slice %968 {offsets = [13, 0], sizes = [1, 128], strides = [1, 1]} : vector<16x128xf32> to vector<1x128xf32>
    %1159 = vector.broadcast %1157 : vector<2x1xf32> to vector<2x128xf32>
    %1160 = vector.broadcast %1158 : vector<1x128xf32> to vector<2x128xf32>
    %1161 = arith.mulf %1159, %1160 : vector<2x128xf32>
    %1162 = vector.extract_strided_slice %1090 {offsets = [0, 14], sizes = [2, 1], strides = [1, 1]} : vector<2x16xf32> to vector<2x1xf32>
    %1163 = vector.extract_strided_slice %968 {offsets = [14, 0], sizes = [1, 128], strides = [1, 1]} : vector<16x128xf32> to vector<1x128xf32>
    %1164 = vector.broadcast %1162 : vector<2x1xf32> to vector<2x128xf32>
    %1165 = vector.broadcast %1163 : vector<1x128xf32> to vector<2x128xf32>
    %1166 = arith.mulf %1164, %1165 : vector<2x128xf32>
    %1167 = vector.extract_strided_slice %1090 {offsets = [0, 15], sizes = [2, 1], strides = [1, 1]} : vector<2x16xf32> to vector<2x1xf32>
    %1168 = vector.extract_strided_slice %968 {offsets = [15, 0], sizes = [1, 128], strides = [1, 1]} : vector<16x128xf32> to vector<1x128xf32>
    %1169 = vector.broadcast %1167 : vector<2x1xf32> to vector<2x128xf32>
    %1170 = vector.broadcast %1168 : vector<1x128xf32> to vector<2x128xf32>
    %1171 = arith.mulf %1169, %1170 : vector<2x128xf32>
    %1172 = arith.addf %1096, %1101 : vector<2x128xf32>
    %1173 = arith.addf %1106, %1111 : vector<2x128xf32>
    %1174 = arith.addf %1116, %1121 : vector<2x128xf32>
    %1175 = arith.addf %1126, %1131 : vector<2x128xf32>
    %1176 = arith.addf %1136, %1141 : vector<2x128xf32>
    %1177 = arith.addf %1146, %1151 : vector<2x128xf32>
    %1178 = arith.addf %1156, %1161 : vector<2x128xf32>
    %1179 = arith.addf %1166, %1171 : vector<2x128xf32>
    %1180 = arith.addf %1172, %1173 : vector<2x128xf32>
    %1181 = arith.addf %1174, %1175 : vector<2x128xf32>
    %1182 = arith.addf %1176, %1177 : vector<2x128xf32>
    %1183 = arith.addf %1178, %1179 : vector<2x128xf32>
    %1184 = arith.addf %1180, %1181 : vector<2x128xf32>
    %1185 = arith.addf %1182, %1183 : vector<2x128xf32>
    %1186 = arith.addf %1184, %1185 : vector<2x128xf32>
    %1187 = arith.addf %1091, %1186 : vector<2x128xf32>
    %1188 = vector.extract_strided_slice %1187 {offsets = [0, 0], sizes = [2, 48], strides = [1, 1]} : vector<2x128xf32> to vector<2x48xf32>
    %cst_56 = arith.constant 5.000000e-01 : f32
    %1189 = vector.broadcast %cst_56 : f32 to vector<2x48xf32>
    %1190 = arith.mulf %1189, %1188 : vector<2x48xf32>
    %1191 = math.tanh %1190 : vector<2x48xf32>
    %cst_57 = arith.constant 5.000000e-01 : f32
    %1192 = vector.broadcast %cst_57 : f32 to vector<2x48xf32>
    %1193 = arith.mulf %1192, %1191 : vector<2x48xf32>
    %cst_58 = arith.constant 5.000000e-01 : f32
    %1194 = vector.broadcast %cst_58 : f32 to vector<2x48xf32>
    %1195 = arith.addf %1193, %1194 : vector<2x48xf32>
    %1196 = vector.extract_strided_slice %1187 {offsets = [0, 48], sizes = [2, 16], strides = [1, 1]} : vector<2x128xf32> to vector<2x16xf32>
    %1197 = math.tanh %1196 : vector<2x16xf32>
    %1198 = vector.extract_strided_slice %1195 {offsets = [0, 0], sizes = [2, 16], strides = [1, 1]} : vector<2x48xf32> to vector<2x16xf32>
    %1199 = vector.extract_strided_slice %1195 {offsets = [0, 16], sizes = [2, 16], strides = [1, 1]} : vector<2x48xf32> to vector<2x16xf32>
    %1200 = vector.extract_strided_slice %1195 {offsets = [0, 32], sizes = [2, 16], strides = [1, 1]} : vector<2x48xf32> to vector<2x16xf32>
    %1201 = arith.mulf %1199, %1088 : vector<2x16xf32>
    %1202 = arith.mulf %1198, %1197 : vector<2x16xf32>
    %1203 = arith.addf %1201, %1202 : vector<2x16xf32>
    %1204 = math.tanh %1203 : vector<2x16xf32>
    %1205 = arith.mulf %1200, %1204 : vector<2x16xf32>
    %1206 = vector.extract_strided_slice %973 {offsets = [4, 0], sizes = [2, 128], strides = [1, 1]} : vector<16x128xf32> to vector<2x128xf32>
    %1207 = vector.extract_strided_slice %1205 {offsets = [0, 0], sizes = [2, 1], strides = [1, 1]} : vector<2x16xf32> to vector<2x1xf32>
    %1208 = vector.extract_strided_slice %968 {offsets = [0, 0], sizes = [1, 128], strides = [1, 1]} : vector<16x128xf32> to vector<1x128xf32>
    %1209 = vector.broadcast %1207 : vector<2x1xf32> to vector<2x128xf32>
    %1210 = vector.broadcast %1208 : vector<1x128xf32> to vector<2x128xf32>
    %1211 = arith.mulf %1209, %1210 : vector<2x128xf32>
    %1212 = vector.extract_strided_slice %1205 {offsets = [0, 1], sizes = [2, 1], strides = [1, 1]} : vector<2x16xf32> to vector<2x1xf32>
    %1213 = vector.extract_strided_slice %968 {offsets = [1, 0], sizes = [1, 128], strides = [1, 1]} : vector<16x128xf32> to vector<1x128xf32>
    %1214 = vector.broadcast %1212 : vector<2x1xf32> to vector<2x128xf32>
    %1215 = vector.broadcast %1213 : vector<1x128xf32> to vector<2x128xf32>
    %1216 = arith.mulf %1214, %1215 : vector<2x128xf32>
    %1217 = vector.extract_strided_slice %1205 {offsets = [0, 2], sizes = [2, 1], strides = [1, 1]} : vector<2x16xf32> to vector<2x1xf32>
    %1218 = vector.extract_strided_slice %968 {offsets = [2, 0], sizes = [1, 128], strides = [1, 1]} : vector<16x128xf32> to vector<1x128xf32>
    %1219 = vector.broadcast %1217 : vector<2x1xf32> to vector<2x128xf32>
    %1220 = vector.broadcast %1218 : vector<1x128xf32> to vector<2x128xf32>
    %1221 = arith.mulf %1219, %1220 : vector<2x128xf32>
    %1222 = vector.extract_strided_slice %1205 {offsets = [0, 3], sizes = [2, 1], strides = [1, 1]} : vector<2x16xf32> to vector<2x1xf32>
    %1223 = vector.extract_strided_slice %968 {offsets = [3, 0], sizes = [1, 128], strides = [1, 1]} : vector<16x128xf32> to vector<1x128xf32>
    %1224 = vector.broadcast %1222 : vector<2x1xf32> to vector<2x128xf32>
    %1225 = vector.broadcast %1223 : vector<1x128xf32> to vector<2x128xf32>
    %1226 = arith.mulf %1224, %1225 : vector<2x128xf32>
    %1227 = vector.extract_strided_slice %1205 {offsets = [0, 4], sizes = [2, 1], strides = [1, 1]} : vector<2x16xf32> to vector<2x1xf32>
    %1228 = vector.extract_strided_slice %968 {offsets = [4, 0], sizes = [1, 128], strides = [1, 1]} : vector<16x128xf32> to vector<1x128xf32>
    %1229 = vector.broadcast %1227 : vector<2x1xf32> to vector<2x128xf32>
    %1230 = vector.broadcast %1228 : vector<1x128xf32> to vector<2x128xf32>
    %1231 = arith.mulf %1229, %1230 : vector<2x128xf32>
    %1232 = vector.extract_strided_slice %1205 {offsets = [0, 5], sizes = [2, 1], strides = [1, 1]} : vector<2x16xf32> to vector<2x1xf32>
    %1233 = vector.extract_strided_slice %968 {offsets = [5, 0], sizes = [1, 128], strides = [1, 1]} : vector<16x128xf32> to vector<1x128xf32>
    %1234 = vector.broadcast %1232 : vector<2x1xf32> to vector<2x128xf32>
    %1235 = vector.broadcast %1233 : vector<1x128xf32> to vector<2x128xf32>
    %1236 = arith.mulf %1234, %1235 : vector<2x128xf32>
    %1237 = vector.extract_strided_slice %1205 {offsets = [0, 6], sizes = [2, 1], strides = [1, 1]} : vector<2x16xf32> to vector<2x1xf32>
    %1238 = vector.extract_strided_slice %968 {offsets = [6, 0], sizes = [1, 128], strides = [1, 1]} : vector<16x128xf32> to vector<1x128xf32>
    %1239 = vector.broadcast %1237 : vector<2x1xf32> to vector<2x128xf32>
    %1240 = vector.broadcast %1238 : vector<1x128xf32> to vector<2x128xf32>
    %1241 = arith.mulf %1239, %1240 : vector<2x128xf32>
    %1242 = vector.extract_strided_slice %1205 {offsets = [0, 7], sizes = [2, 1], strides = [1, 1]} : vector<2x16xf32> to vector<2x1xf32>
    %1243 = vector.extract_strided_slice %968 {offsets = [7, 0], sizes = [1, 128], strides = [1, 1]} : vector<16x128xf32> to vector<1x128xf32>
    %1244 = vector.broadcast %1242 : vector<2x1xf32> to vector<2x128xf32>
    %1245 = vector.broadcast %1243 : vector<1x128xf32> to vector<2x128xf32>
    %1246 = arith.mulf %1244, %1245 : vector<2x128xf32>
    %1247 = vector.extract_strided_slice %1205 {offsets = [0, 8], sizes = [2, 1], strides = [1, 1]} : vector<2x16xf32> to vector<2x1xf32>
    %1248 = vector.extract_strided_slice %968 {offsets = [8, 0], sizes = [1, 128], strides = [1, 1]} : vector<16x128xf32> to vector<1x128xf32>
    %1249 = vector.broadcast %1247 : vector<2x1xf32> to vector<2x128xf32>
    %1250 = vector.broadcast %1248 : vector<1x128xf32> to vector<2x128xf32>
    %1251 = arith.mulf %1249, %1250 : vector<2x128xf32>
    %1252 = vector.extract_strided_slice %1205 {offsets = [0, 9], sizes = [2, 1], strides = [1, 1]} : vector<2x16xf32> to vector<2x1xf32>
    %1253 = vector.extract_strided_slice %968 {offsets = [9, 0], sizes = [1, 128], strides = [1, 1]} : vector<16x128xf32> to vector<1x128xf32>
    %1254 = vector.broadcast %1252 : vector<2x1xf32> to vector<2x128xf32>
    %1255 = vector.broadcast %1253 : vector<1x128xf32> to vector<2x128xf32>
    %1256 = arith.mulf %1254, %1255 : vector<2x128xf32>
    %1257 = vector.extract_strided_slice %1205 {offsets = [0, 10], sizes = [2, 1], strides = [1, 1]} : vector<2x16xf32> to vector<2x1xf32>
    %1258 = vector.extract_strided_slice %968 {offsets = [10, 0], sizes = [1, 128], strides = [1, 1]} : vector<16x128xf32> to vector<1x128xf32>
    %1259 = vector.broadcast %1257 : vector<2x1xf32> to vector<2x128xf32>
    %1260 = vector.broadcast %1258 : vector<1x128xf32> to vector<2x128xf32>
    %1261 = arith.mulf %1259, %1260 : vector<2x128xf32>
    %1262 = vector.extract_strided_slice %1205 {offsets = [0, 11], sizes = [2, 1], strides = [1, 1]} : vector<2x16xf32> to vector<2x1xf32>
    %1263 = vector.extract_strided_slice %968 {offsets = [11, 0], sizes = [1, 128], strides = [1, 1]} : vector<16x128xf32> to vector<1x128xf32>
    %1264 = vector.broadcast %1262 : vector<2x1xf32> to vector<2x128xf32>
    %1265 = vector.broadcast %1263 : vector<1x128xf32> to vector<2x128xf32>
    %1266 = arith.mulf %1264, %1265 : vector<2x128xf32>
    %1267 = vector.extract_strided_slice %1205 {offsets = [0, 12], sizes = [2, 1], strides = [1, 1]} : vector<2x16xf32> to vector<2x1xf32>
    %1268 = vector.extract_strided_slice %968 {offsets = [12, 0], sizes = [1, 128], strides = [1, 1]} : vector<16x128xf32> to vector<1x128xf32>
    %1269 = vector.broadcast %1267 : vector<2x1xf32> to vector<2x128xf32>
    %1270 = vector.broadcast %1268 : vector<1x128xf32> to vector<2x128xf32>
    %1271 = arith.mulf %1269, %1270 : vector<2x128xf32>
    %1272 = vector.extract_strided_slice %1205 {offsets = [0, 13], sizes = [2, 1], strides = [1, 1]} : vector<2x16xf32> to vector<2x1xf32>
    %1273 = vector.extract_strided_slice %968 {offsets = [13, 0], sizes = [1, 128], strides = [1, 1]} : vector<16x128xf32> to vector<1x128xf32>
    %1274 = vector.broadcast %1272 : vector<2x1xf32> to vector<2x128xf32>
    %1275 = vector.broadcast %1273 : vector<1x128xf32> to vector<2x128xf32>
    %1276 = arith.mulf %1274, %1275 : vector<2x128xf32>
    %1277 = vector.extract_strided_slice %1205 {offsets = [0, 14], sizes = [2, 1], strides = [1, 1]} : vector<2x16xf32> to vector<2x1xf32>
    %1278 = vector.extract_strided_slice %968 {offsets = [14, 0], sizes = [1, 128], strides = [1, 1]} : vector<16x128xf32> to vector<1x128xf32>
    %1279 = vector.broadcast %1277 : vector<2x1xf32> to vector<2x128xf32>
    %1280 = vector.broadcast %1278 : vector<1x128xf32> to vector<2x128xf32>
    %1281 = arith.mulf %1279, %1280 : vector<2x128xf32>
    %1282 = vector.extract_strided_slice %1205 {offsets = [0, 15], sizes = [2, 1], strides = [1, 1]} : vector<2x16xf32> to vector<2x1xf32>
    %1283 = vector.extract_strided_slice %968 {offsets = [15, 0], sizes = [1, 128], strides = [1, 1]} : vector<16x128xf32> to vector<1x128xf32>
    %1284 = vector.broadcast %1282 : vector<2x1xf32> to vector<2x128xf32>
    %1285 = vector.broadcast %1283 : vector<1x128xf32> to vector<2x128xf32>
    %1286 = arith.mulf %1284, %1285 : vector<2x128xf32>
    %1287 = arith.addf %1211, %1216 : vector<2x128xf32>
    %1288 = arith.addf %1221, %1226 : vector<2x128xf32>
    %1289 = arith.addf %1231, %1236 : vector<2x128xf32>
    %1290 = arith.addf %1241, %1246 : vector<2x128xf32>
    %1291 = arith.addf %1251, %1256 : vector<2x128xf32>
    %1292 = arith.addf %1261, %1266 : vector<2x128xf32>
    %1293 = arith.addf %1271, %1276 : vector<2x128xf32>
    %1294 = arith.addf %1281, %1286 : vector<2x128xf32>
    %1295 = arith.addf %1287, %1288 : vector<2x128xf32>
    %1296 = arith.addf %1289, %1290 : vector<2x128xf32>
    %1297 = arith.addf %1291, %1292 : vector<2x128xf32>
    %1298 = arith.addf %1293, %1294 : vector<2x128xf32>
    %1299 = arith.addf %1295, %1296 : vector<2x128xf32>
    %1300 = arith.addf %1297, %1298 : vector<2x128xf32>
    %1301 = arith.addf %1299, %1300 : vector<2x128xf32>
    %1302 = arith.addf %1206, %1301 : vector<2x128xf32>
    %1303 = vector.extract_strided_slice %1302 {offsets = [0, 0], sizes = [2, 48], strides = [1, 1]} : vector<2x128xf32> to vector<2x48xf32>
    %cst_59 = arith.constant 5.000000e-01 : f32
    %1304 = vector.broadcast %cst_59 : f32 to vector<2x48xf32>
    %1305 = arith.mulf %1304, %1303 : vector<2x48xf32>
    %1306 = math.tanh %1305 : vector<2x48xf32>
    %cst_60 = arith.constant 5.000000e-01 : f32
    %1307 = vector.broadcast %cst_60 : f32 to vector<2x48xf32>
    %1308 = arith.mulf %1307, %1306 : vector<2x48xf32>
    %cst_61 = arith.constant 5.000000e-01 : f32
    %1309 = vector.broadcast %cst_61 : f32 to vector<2x48xf32>
    %1310 = arith.addf %1308, %1309 : vector<2x48xf32>
    %1311 = vector.extract_strided_slice %1302 {offsets = [0, 48], sizes = [2, 16], strides = [1, 1]} : vector<2x128xf32> to vector<2x16xf32>
    %1312 = math.tanh %1311 : vector<2x16xf32>
    %1313 = vector.extract_strided_slice %1310 {offsets = [0, 0], sizes = [2, 16], strides = [1, 1]} : vector<2x48xf32> to vector<2x16xf32>
    %1314 = vector.extract_strided_slice %1310 {offsets = [0, 16], sizes = [2, 16], strides = [1, 1]} : vector<2x48xf32> to vector<2x16xf32>
    %1315 = vector.extract_strided_slice %1310 {offsets = [0, 32], sizes = [2, 16], strides = [1, 1]} : vector<2x48xf32> to vector<2x16xf32>
    %1316 = arith.mulf %1314, %1203 : vector<2x16xf32>
    %1317 = arith.mulf %1313, %1312 : vector<2x16xf32>
    %1318 = arith.addf %1316, %1317 : vector<2x16xf32>
    %1319 = math.tanh %1318 : vector<2x16xf32>
    %1320 = arith.mulf %1315, %1319 : vector<2x16xf32>
    %1321 = vector.extract_strided_slice %973 {offsets = [6, 0], sizes = [2, 128], strides = [1, 1]} : vector<16x128xf32> to vector<2x128xf32>
    %1322 = vector.extract_strided_slice %1320 {offsets = [0, 0], sizes = [2, 1], strides = [1, 1]} : vector<2x16xf32> to vector<2x1xf32>
    %1323 = vector.extract_strided_slice %968 {offsets = [0, 0], sizes = [1, 128], strides = [1, 1]} : vector<16x128xf32> to vector<1x128xf32>
    %1324 = vector.broadcast %1322 : vector<2x1xf32> to vector<2x128xf32>
    %1325 = vector.broadcast %1323 : vector<1x128xf32> to vector<2x128xf32>
    %1326 = arith.mulf %1324, %1325 : vector<2x128xf32>
    %1327 = vector.extract_strided_slice %1320 {offsets = [0, 1], sizes = [2, 1], strides = [1, 1]} : vector<2x16xf32> to vector<2x1xf32>
    %1328 = vector.extract_strided_slice %968 {offsets = [1, 0], sizes = [1, 128], strides = [1, 1]} : vector<16x128xf32> to vector<1x128xf32>
    %1329 = vector.broadcast %1327 : vector<2x1xf32> to vector<2x128xf32>
    %1330 = vector.broadcast %1328 : vector<1x128xf32> to vector<2x128xf32>
    %1331 = arith.mulf %1329, %1330 : vector<2x128xf32>
    %1332 = vector.extract_strided_slice %1320 {offsets = [0, 2], sizes = [2, 1], strides = [1, 1]} : vector<2x16xf32> to vector<2x1xf32>
    %1333 = vector.extract_strided_slice %968 {offsets = [2, 0], sizes = [1, 128], strides = [1, 1]} : vector<16x128xf32> to vector<1x128xf32>
    %1334 = vector.broadcast %1332 : vector<2x1xf32> to vector<2x128xf32>
    %1335 = vector.broadcast %1333 : vector<1x128xf32> to vector<2x128xf32>
    %1336 = arith.mulf %1334, %1335 : vector<2x128xf32>
    %1337 = vector.extract_strided_slice %1320 {offsets = [0, 3], sizes = [2, 1], strides = [1, 1]} : vector<2x16xf32> to vector<2x1xf32>
    %1338 = vector.extract_strided_slice %968 {offsets = [3, 0], sizes = [1, 128], strides = [1, 1]} : vector<16x128xf32> to vector<1x128xf32>
    %1339 = vector.broadcast %1337 : vector<2x1xf32> to vector<2x128xf32>
    %1340 = vector.broadcast %1338 : vector<1x128xf32> to vector<2x128xf32>
    %1341 = arith.mulf %1339, %1340 : vector<2x128xf32>
    %1342 = vector.extract_strided_slice %1320 {offsets = [0, 4], sizes = [2, 1], strides = [1, 1]} : vector<2x16xf32> to vector<2x1xf32>
    %1343 = vector.extract_strided_slice %968 {offsets = [4, 0], sizes = [1, 128], strides = [1, 1]} : vector<16x128xf32> to vector<1x128xf32>
    %1344 = vector.broadcast %1342 : vector<2x1xf32> to vector<2x128xf32>
    %1345 = vector.broadcast %1343 : vector<1x128xf32> to vector<2x128xf32>
    %1346 = arith.mulf %1344, %1345 : vector<2x128xf32>
    %1347 = vector.extract_strided_slice %1320 {offsets = [0, 5], sizes = [2, 1], strides = [1, 1]} : vector<2x16xf32> to vector<2x1xf32>
    %1348 = vector.extract_strided_slice %968 {offsets = [5, 0], sizes = [1, 128], strides = [1, 1]} : vector<16x128xf32> to vector<1x128xf32>
    %1349 = vector.broadcast %1347 : vector<2x1xf32> to vector<2x128xf32>
    %1350 = vector.broadcast %1348 : vector<1x128xf32> to vector<2x128xf32>
    %1351 = arith.mulf %1349, %1350 : vector<2x128xf32>
    %1352 = vector.extract_strided_slice %1320 {offsets = [0, 6], sizes = [2, 1], strides = [1, 1]} : vector<2x16xf32> to vector<2x1xf32>
    %1353 = vector.extract_strided_slice %968 {offsets = [6, 0], sizes = [1, 128], strides = [1, 1]} : vector<16x128xf32> to vector<1x128xf32>
    %1354 = vector.broadcast %1352 : vector<2x1xf32> to vector<2x128xf32>
    %1355 = vector.broadcast %1353 : vector<1x128xf32> to vector<2x128xf32>
    %1356 = arith.mulf %1354, %1355 : vector<2x128xf32>
    %1357 = vector.extract_strided_slice %1320 {offsets = [0, 7], sizes = [2, 1], strides = [1, 1]} : vector<2x16xf32> to vector<2x1xf32>
    %1358 = vector.extract_strided_slice %968 {offsets = [7, 0], sizes = [1, 128], strides = [1, 1]} : vector<16x128xf32> to vector<1x128xf32>
    %1359 = vector.broadcast %1357 : vector<2x1xf32> to vector<2x128xf32>
    %1360 = vector.broadcast %1358 : vector<1x128xf32> to vector<2x128xf32>
    %1361 = arith.mulf %1359, %1360 : vector<2x128xf32>
    %1362 = vector.extract_strided_slice %1320 {offsets = [0, 8], sizes = [2, 1], strides = [1, 1]} : vector<2x16xf32> to vector<2x1xf32>
    %1363 = vector.extract_strided_slice %968 {offsets = [8, 0], sizes = [1, 128], strides = [1, 1]} : vector<16x128xf32> to vector<1x128xf32>
    %1364 = vector.broadcast %1362 : vector<2x1xf32> to vector<2x128xf32>
    %1365 = vector.broadcast %1363 : vector<1x128xf32> to vector<2x128xf32>
    %1366 = arith.mulf %1364, %1365 : vector<2x128xf32>
    %1367 = vector.extract_strided_slice %1320 {offsets = [0, 9], sizes = [2, 1], strides = [1, 1]} : vector<2x16xf32> to vector<2x1xf32>
    %1368 = vector.extract_strided_slice %968 {offsets = [9, 0], sizes = [1, 128], strides = [1, 1]} : vector<16x128xf32> to vector<1x128xf32>
    %1369 = vector.broadcast %1367 : vector<2x1xf32> to vector<2x128xf32>
    %1370 = vector.broadcast %1368 : vector<1x128xf32> to vector<2x128xf32>
    %1371 = arith.mulf %1369, %1370 : vector<2x128xf32>
    %1372 = vector.extract_strided_slice %1320 {offsets = [0, 10], sizes = [2, 1], strides = [1, 1]} : vector<2x16xf32> to vector<2x1xf32>
    %1373 = vector.extract_strided_slice %968 {offsets = [10, 0], sizes = [1, 128], strides = [1, 1]} : vector<16x128xf32> to vector<1x128xf32>
    %1374 = vector.broadcast %1372 : vector<2x1xf32> to vector<2x128xf32>
    %1375 = vector.broadcast %1373 : vector<1x128xf32> to vector<2x128xf32>
    %1376 = arith.mulf %1374, %1375 : vector<2x128xf32>
    %1377 = vector.extract_strided_slice %1320 {offsets = [0, 11], sizes = [2, 1], strides = [1, 1]} : vector<2x16xf32> to vector<2x1xf32>
    %1378 = vector.extract_strided_slice %968 {offsets = [11, 0], sizes = [1, 128], strides = [1, 1]} : vector<16x128xf32> to vector<1x128xf32>
    %1379 = vector.broadcast %1377 : vector<2x1xf32> to vector<2x128xf32>
    %1380 = vector.broadcast %1378 : vector<1x128xf32> to vector<2x128xf32>
    %1381 = arith.mulf %1379, %1380 : vector<2x128xf32>
    %1382 = vector.extract_strided_slice %1320 {offsets = [0, 12], sizes = [2, 1], strides = [1, 1]} : vector<2x16xf32> to vector<2x1xf32>
    %1383 = vector.extract_strided_slice %968 {offsets = [12, 0], sizes = [1, 128], strides = [1, 1]} : vector<16x128xf32> to vector<1x128xf32>
    %1384 = vector.broadcast %1382 : vector<2x1xf32> to vector<2x128xf32>
    %1385 = vector.broadcast %1383 : vector<1x128xf32> to vector<2x128xf32>
    %1386 = arith.mulf %1384, %1385 : vector<2x128xf32>
    %1387 = vector.extract_strided_slice %1320 {offsets = [0, 13], sizes = [2, 1], strides = [1, 1]} : vector<2x16xf32> to vector<2x1xf32>
    %1388 = vector.extract_strided_slice %968 {offsets = [13, 0], sizes = [1, 128], strides = [1, 1]} : vector<16x128xf32> to vector<1x128xf32>
    %1389 = vector.broadcast %1387 : vector<2x1xf32> to vector<2x128xf32>
    %1390 = vector.broadcast %1388 : vector<1x128xf32> to vector<2x128xf32>
    %1391 = arith.mulf %1389, %1390 : vector<2x128xf32>
    %1392 = vector.extract_strided_slice %1320 {offsets = [0, 14], sizes = [2, 1], strides = [1, 1]} : vector<2x16xf32> to vector<2x1xf32>
    %1393 = vector.extract_strided_slice %968 {offsets = [14, 0], sizes = [1, 128], strides = [1, 1]} : vector<16x128xf32> to vector<1x128xf32>
    %1394 = vector.broadcast %1392 : vector<2x1xf32> to vector<2x128xf32>
    %1395 = vector.broadcast %1393 : vector<1x128xf32> to vector<2x128xf32>
    %1396 = arith.mulf %1394, %1395 : vector<2x128xf32>
    %1397 = vector.extract_strided_slice %1320 {offsets = [0, 15], sizes = [2, 1], strides = [1, 1]} : vector<2x16xf32> to vector<2x1xf32>
    %1398 = vector.extract_strided_slice %968 {offsets = [15, 0], sizes = [1, 128], strides = [1, 1]} : vector<16x128xf32> to vector<1x128xf32>
    %1399 = vector.broadcast %1397 : vector<2x1xf32> to vector<2x128xf32>
    %1400 = vector.broadcast %1398 : vector<1x128xf32> to vector<2x128xf32>
    %1401 = arith.mulf %1399, %1400 : vector<2x128xf32>
    %1402 = arith.addf %1326, %1331 : vector<2x128xf32>
    %1403 = arith.addf %1336, %1341 : vector<2x128xf32>
    %1404 = arith.addf %1346, %1351 : vector<2x128xf32>
    %1405 = arith.addf %1356, %1361 : vector<2x128xf32>
    %1406 = arith.addf %1366, %1371 : vector<2x128xf32>
    %1407 = arith.addf %1376, %1381 : vector<2x128xf32>
    %1408 = arith.addf %1386, %1391 : vector<2x128xf32>
    %1409 = arith.addf %1396, %1401 : vector<2x128xf32>
    %1410 = arith.addf %1402, %1403 : vector<2x128xf32>
    %1411 = arith.addf %1404, %1405 : vector<2x128xf32>
    %1412 = arith.addf %1406, %1407 : vector<2x128xf32>
    %1413 = arith.addf %1408, %1409 : vector<2x128xf32>
    %1414 = arith.addf %1410, %1411 : vector<2x128xf32>
    %1415 = arith.addf %1412, %1413 : vector<2x128xf32>
    %1416 = arith.addf %1414, %1415 : vector<2x128xf32>
    %1417 = arith.addf %1321, %1416 : vector<2x128xf32>
    %1418 = vector.extract_strided_slice %1417 {offsets = [0, 0], sizes = [2, 48], strides = [1, 1]} : vector<2x128xf32> to vector<2x48xf32>
    %cst_62 = arith.constant 5.000000e-01 : f32
    %1419 = vector.broadcast %cst_62 : f32 to vector<2x48xf32>
    %1420 = arith.mulf %1419, %1418 : vector<2x48xf32>
    %1421 = math.tanh %1420 : vector<2x48xf32>
    %cst_63 = arith.constant 5.000000e-01 : f32
    %1422 = vector.broadcast %cst_63 : f32 to vector<2x48xf32>
    %1423 = arith.mulf %1422, %1421 : vector<2x48xf32>
    %cst_64 = arith.constant 5.000000e-01 : f32
    %1424 = vector.broadcast %cst_64 : f32 to vector<2x48xf32>
    %1425 = arith.addf %1423, %1424 : vector<2x48xf32>
    %1426 = vector.extract_strided_slice %1417 {offsets = [0, 48], sizes = [2, 16], strides = [1, 1]} : vector<2x128xf32> to vector<2x16xf32>
    %1427 = math.tanh %1426 : vector<2x16xf32>
    %1428 = vector.extract_strided_slice %1425 {offsets = [0, 0], sizes = [2, 16], strides = [1, 1]} : vector<2x48xf32> to vector<2x16xf32>
    %1429 = vector.extract_strided_slice %1425 {offsets = [0, 16], sizes = [2, 16], strides = [1, 1]} : vector<2x48xf32> to vector<2x16xf32>
    %1430 = vector.extract_strided_slice %1425 {offsets = [0, 32], sizes = [2, 16], strides = [1, 1]} : vector<2x48xf32> to vector<2x16xf32>
    %1431 = arith.mulf %1429, %1318 : vector<2x16xf32>
    %1432 = arith.mulf %1428, %1427 : vector<2x16xf32>
    %1433 = arith.addf %1431, %1432 : vector<2x16xf32>
    %1434 = math.tanh %1433 : vector<2x16xf32>
    %1435 = arith.mulf %1430, %1434 : vector<2x16xf32>
    %1436 = vector.extract_strided_slice %973 {offsets = [8, 0], sizes = [2, 128], strides = [1, 1]} : vector<16x128xf32> to vector<2x128xf32>
    %1437 = vector.extract_strided_slice %1435 {offsets = [0, 0], sizes = [2, 1], strides = [1, 1]} : vector<2x16xf32> to vector<2x1xf32>
    %1438 = vector.extract_strided_slice %968 {offsets = [0, 0], sizes = [1, 128], strides = [1, 1]} : vector<16x128xf32> to vector<1x128xf32>
    %1439 = vector.broadcast %1437 : vector<2x1xf32> to vector<2x128xf32>
    %1440 = vector.broadcast %1438 : vector<1x128xf32> to vector<2x128xf32>
    %1441 = arith.mulf %1439, %1440 : vector<2x128xf32>
    %1442 = vector.extract_strided_slice %1435 {offsets = [0, 1], sizes = [2, 1], strides = [1, 1]} : vector<2x16xf32> to vector<2x1xf32>
    %1443 = vector.extract_strided_slice %968 {offsets = [1, 0], sizes = [1, 128], strides = [1, 1]} : vector<16x128xf32> to vector<1x128xf32>
    %1444 = vector.broadcast %1442 : vector<2x1xf32> to vector<2x128xf32>
    %1445 = vector.broadcast %1443 : vector<1x128xf32> to vector<2x128xf32>
    %1446 = arith.mulf %1444, %1445 : vector<2x128xf32>
    %1447 = vector.extract_strided_slice %1435 {offsets = [0, 2], sizes = [2, 1], strides = [1, 1]} : vector<2x16xf32> to vector<2x1xf32>
    %1448 = vector.extract_strided_slice %968 {offsets = [2, 0], sizes = [1, 128], strides = [1, 1]} : vector<16x128xf32> to vector<1x128xf32>
    %1449 = vector.broadcast %1447 : vector<2x1xf32> to vector<2x128xf32>
    %1450 = vector.broadcast %1448 : vector<1x128xf32> to vector<2x128xf32>
    %1451 = arith.mulf %1449, %1450 : vector<2x128xf32>
    %1452 = vector.extract_strided_slice %1435 {offsets = [0, 3], sizes = [2, 1], strides = [1, 1]} : vector<2x16xf32> to vector<2x1xf32>
    %1453 = vector.extract_strided_slice %968 {offsets = [3, 0], sizes = [1, 128], strides = [1, 1]} : vector<16x128xf32> to vector<1x128xf32>
    %1454 = vector.broadcast %1452 : vector<2x1xf32> to vector<2x128xf32>
    %1455 = vector.broadcast %1453 : vector<1x128xf32> to vector<2x128xf32>
    %1456 = arith.mulf %1454, %1455 : vector<2x128xf32>
    %1457 = vector.extract_strided_slice %1435 {offsets = [0, 4], sizes = [2, 1], strides = [1, 1]} : vector<2x16xf32> to vector<2x1xf32>
    %1458 = vector.extract_strided_slice %968 {offsets = [4, 0], sizes = [1, 128], strides = [1, 1]} : vector<16x128xf32> to vector<1x128xf32>
    %1459 = vector.broadcast %1457 : vector<2x1xf32> to vector<2x128xf32>
    %1460 = vector.broadcast %1458 : vector<1x128xf32> to vector<2x128xf32>
    %1461 = arith.mulf %1459, %1460 : vector<2x128xf32>
    %1462 = vector.extract_strided_slice %1435 {offsets = [0, 5], sizes = [2, 1], strides = [1, 1]} : vector<2x16xf32> to vector<2x1xf32>
    %1463 = vector.extract_strided_slice %968 {offsets = [5, 0], sizes = [1, 128], strides = [1, 1]} : vector<16x128xf32> to vector<1x128xf32>
    %1464 = vector.broadcast %1462 : vector<2x1xf32> to vector<2x128xf32>
    %1465 = vector.broadcast %1463 : vector<1x128xf32> to vector<2x128xf32>
    %1466 = arith.mulf %1464, %1465 : vector<2x128xf32>
    %1467 = vector.extract_strided_slice %1435 {offsets = [0, 6], sizes = [2, 1], strides = [1, 1]} : vector<2x16xf32> to vector<2x1xf32>
    %1468 = vector.extract_strided_slice %968 {offsets = [6, 0], sizes = [1, 128], strides = [1, 1]} : vector<16x128xf32> to vector<1x128xf32>
    %1469 = vector.broadcast %1467 : vector<2x1xf32> to vector<2x128xf32>
    %1470 = vector.broadcast %1468 : vector<1x128xf32> to vector<2x128xf32>
    %1471 = arith.mulf %1469, %1470 : vector<2x128xf32>
    %1472 = vector.extract_strided_slice %1435 {offsets = [0, 7], sizes = [2, 1], strides = [1, 1]} : vector<2x16xf32> to vector<2x1xf32>
    %1473 = vector.extract_strided_slice %968 {offsets = [7, 0], sizes = [1, 128], strides = [1, 1]} : vector<16x128xf32> to vector<1x128xf32>
    %1474 = vector.broadcast %1472 : vector<2x1xf32> to vector<2x128xf32>
    %1475 = vector.broadcast %1473 : vector<1x128xf32> to vector<2x128xf32>
    %1476 = arith.mulf %1474, %1475 : vector<2x128xf32>
    %1477 = vector.extract_strided_slice %1435 {offsets = [0, 8], sizes = [2, 1], strides = [1, 1]} : vector<2x16xf32> to vector<2x1xf32>
    %1478 = vector.extract_strided_slice %968 {offsets = [8, 0], sizes = [1, 128], strides = [1, 1]} : vector<16x128xf32> to vector<1x128xf32>
    %1479 = vector.broadcast %1477 : vector<2x1xf32> to vector<2x128xf32>
    %1480 = vector.broadcast %1478 : vector<1x128xf32> to vector<2x128xf32>
    %1481 = arith.mulf %1479, %1480 : vector<2x128xf32>
    %1482 = vector.extract_strided_slice %1435 {offsets = [0, 9], sizes = [2, 1], strides = [1, 1]} : vector<2x16xf32> to vector<2x1xf32>
    %1483 = vector.extract_strided_slice %968 {offsets = [9, 0], sizes = [1, 128], strides = [1, 1]} : vector<16x128xf32> to vector<1x128xf32>
    %1484 = vector.broadcast %1482 : vector<2x1xf32> to vector<2x128xf32>
    %1485 = vector.broadcast %1483 : vector<1x128xf32> to vector<2x128xf32>
    %1486 = arith.mulf %1484, %1485 : vector<2x128xf32>
    %1487 = vector.extract_strided_slice %1435 {offsets = [0, 10], sizes = [2, 1], strides = [1, 1]} : vector<2x16xf32> to vector<2x1xf32>
    %1488 = vector.extract_strided_slice %968 {offsets = [10, 0], sizes = [1, 128], strides = [1, 1]} : vector<16x128xf32> to vector<1x128xf32>
    %1489 = vector.broadcast %1487 : vector<2x1xf32> to vector<2x128xf32>
    %1490 = vector.broadcast %1488 : vector<1x128xf32> to vector<2x128xf32>
    %1491 = arith.mulf %1489, %1490 : vector<2x128xf32>
    %1492 = vector.extract_strided_slice %1435 {offsets = [0, 11], sizes = [2, 1], strides = [1, 1]} : vector<2x16xf32> to vector<2x1xf32>
    %1493 = vector.extract_strided_slice %968 {offsets = [11, 0], sizes = [1, 128], strides = [1, 1]} : vector<16x128xf32> to vector<1x128xf32>
    %1494 = vector.broadcast %1492 : vector<2x1xf32> to vector<2x128xf32>
    %1495 = vector.broadcast %1493 : vector<1x128xf32> to vector<2x128xf32>
    %1496 = arith.mulf %1494, %1495 : vector<2x128xf32>
    %1497 = vector.extract_strided_slice %1435 {offsets = [0, 12], sizes = [2, 1], strides = [1, 1]} : vector<2x16xf32> to vector<2x1xf32>
    %1498 = vector.extract_strided_slice %968 {offsets = [12, 0], sizes = [1, 128], strides = [1, 1]} : vector<16x128xf32> to vector<1x128xf32>
    %1499 = vector.broadcast %1497 : vector<2x1xf32> to vector<2x128xf32>
    %1500 = vector.broadcast %1498 : vector<1x128xf32> to vector<2x128xf32>
    %1501 = arith.mulf %1499, %1500 : vector<2x128xf32>
    %1502 = vector.extract_strided_slice %1435 {offsets = [0, 13], sizes = [2, 1], strides = [1, 1]} : vector<2x16xf32> to vector<2x1xf32>
    %1503 = vector.extract_strided_slice %968 {offsets = [13, 0], sizes = [1, 128], strides = [1, 1]} : vector<16x128xf32> to vector<1x128xf32>
    %1504 = vector.broadcast %1502 : vector<2x1xf32> to vector<2x128xf32>
    %1505 = vector.broadcast %1503 : vector<1x128xf32> to vector<2x128xf32>
    %1506 = arith.mulf %1504, %1505 : vector<2x128xf32>
    %1507 = vector.extract_strided_slice %1435 {offsets = [0, 14], sizes = [2, 1], strides = [1, 1]} : vector<2x16xf32> to vector<2x1xf32>
    %1508 = vector.extract_strided_slice %968 {offsets = [14, 0], sizes = [1, 128], strides = [1, 1]} : vector<16x128xf32> to vector<1x128xf32>
    %1509 = vector.broadcast %1507 : vector<2x1xf32> to vector<2x128xf32>
    %1510 = vector.broadcast %1508 : vector<1x128xf32> to vector<2x128xf32>
    %1511 = arith.mulf %1509, %1510 : vector<2x128xf32>
    %1512 = vector.extract_strided_slice %1435 {offsets = [0, 15], sizes = [2, 1], strides = [1, 1]} : vector<2x16xf32> to vector<2x1xf32>
    %1513 = vector.extract_strided_slice %968 {offsets = [15, 0], sizes = [1, 128], strides = [1, 1]} : vector<16x128xf32> to vector<1x128xf32>
    %1514 = vector.broadcast %1512 : vector<2x1xf32> to vector<2x128xf32>
    %1515 = vector.broadcast %1513 : vector<1x128xf32> to vector<2x128xf32>
    %1516 = arith.mulf %1514, %1515 : vector<2x128xf32>
    %1517 = arith.addf %1441, %1446 : vector<2x128xf32>
    %1518 = arith.addf %1451, %1456 : vector<2x128xf32>
    %1519 = arith.addf %1461, %1466 : vector<2x128xf32>
    %1520 = arith.addf %1471, %1476 : vector<2x128xf32>
    %1521 = arith.addf %1481, %1486 : vector<2x128xf32>
    %1522 = arith.addf %1491, %1496 : vector<2x128xf32>
    %1523 = arith.addf %1501, %1506 : vector<2x128xf32>
    %1524 = arith.addf %1511, %1516 : vector<2x128xf32>
    %1525 = arith.addf %1517, %1518 : vector<2x128xf32>
    %1526 = arith.addf %1519, %1520 : vector<2x128xf32>
    %1527 = arith.addf %1521, %1522 : vector<2x128xf32>
    %1528 = arith.addf %1523, %1524 : vector<2x128xf32>
    %1529 = arith.addf %1525, %1526 : vector<2x128xf32>
    %1530 = arith.addf %1527, %1528 : vector<2x128xf32>
    %1531 = arith.addf %1529, %1530 : vector<2x128xf32>
    %1532 = arith.addf %1436, %1531 : vector<2x128xf32>
    %1533 = vector.extract_strided_slice %1532 {offsets = [0, 0], sizes = [2, 48], strides = [1, 1]} : vector<2x128xf32> to vector<2x48xf32>
    %cst_65 = arith.constant 5.000000e-01 : f32
    %1534 = vector.broadcast %cst_65 : f32 to vector<2x48xf32>
    %1535 = arith.mulf %1534, %1533 : vector<2x48xf32>
    %1536 = math.tanh %1535 : vector<2x48xf32>
    %cst_66 = arith.constant 5.000000e-01 : f32
    %1537 = vector.broadcast %cst_66 : f32 to vector<2x48xf32>
    %1538 = arith.mulf %1537, %1536 : vector<2x48xf32>
    %cst_67 = arith.constant 5.000000e-01 : f32
    %1539 = vector.broadcast %cst_67 : f32 to vector<2x48xf32>
    %1540 = arith.addf %1538, %1539 : vector<2x48xf32>
    %1541 = vector.extract_strided_slice %1532 {offsets = [0, 48], sizes = [2, 16], strides = [1, 1]} : vector<2x128xf32> to vector<2x16xf32>
    %1542 = math.tanh %1541 : vector<2x16xf32>
    %1543 = vector.extract_strided_slice %1540 {offsets = [0, 0], sizes = [2, 16], strides = [1, 1]} : vector<2x48xf32> to vector<2x16xf32>
    %1544 = vector.extract_strided_slice %1540 {offsets = [0, 16], sizes = [2, 16], strides = [1, 1]} : vector<2x48xf32> to vector<2x16xf32>
    %1545 = vector.extract_strided_slice %1540 {offsets = [0, 32], sizes = [2, 16], strides = [1, 1]} : vector<2x48xf32> to vector<2x16xf32>
    %1546 = arith.mulf %1544, %1433 : vector<2x16xf32>
    %1547 = arith.mulf %1543, %1542 : vector<2x16xf32>
    %1548 = arith.addf %1546, %1547 : vector<2x16xf32>
    %1549 = math.tanh %1548 : vector<2x16xf32>
    %1550 = arith.mulf %1545, %1549 : vector<2x16xf32>
    %1551 = vector.extract_strided_slice %973 {offsets = [10, 0], sizes = [2, 128], strides = [1, 1]} : vector<16x128xf32> to vector<2x128xf32>
    %1552 = vector.extract_strided_slice %1550 {offsets = [0, 0], sizes = [2, 1], strides = [1, 1]} : vector<2x16xf32> to vector<2x1xf32>
    %1553 = vector.extract_strided_slice %968 {offsets = [0, 0], sizes = [1, 128], strides = [1, 1]} : vector<16x128xf32> to vector<1x128xf32>
    %1554 = vector.broadcast %1552 : vector<2x1xf32> to vector<2x128xf32>
    %1555 = vector.broadcast %1553 : vector<1x128xf32> to vector<2x128xf32>
    %1556 = arith.mulf %1554, %1555 : vector<2x128xf32>
    %1557 = vector.extract_strided_slice %1550 {offsets = [0, 1], sizes = [2, 1], strides = [1, 1]} : vector<2x16xf32> to vector<2x1xf32>
    %1558 = vector.extract_strided_slice %968 {offsets = [1, 0], sizes = [1, 128], strides = [1, 1]} : vector<16x128xf32> to vector<1x128xf32>
    %1559 = vector.broadcast %1557 : vector<2x1xf32> to vector<2x128xf32>
    %1560 = vector.broadcast %1558 : vector<1x128xf32> to vector<2x128xf32>
    %1561 = arith.mulf %1559, %1560 : vector<2x128xf32>
    %1562 = vector.extract_strided_slice %1550 {offsets = [0, 2], sizes = [2, 1], strides = [1, 1]} : vector<2x16xf32> to vector<2x1xf32>
    %1563 = vector.extract_strided_slice %968 {offsets = [2, 0], sizes = [1, 128], strides = [1, 1]} : vector<16x128xf32> to vector<1x128xf32>
    %1564 = vector.broadcast %1562 : vector<2x1xf32> to vector<2x128xf32>
    %1565 = vector.broadcast %1563 : vector<1x128xf32> to vector<2x128xf32>
    %1566 = arith.mulf %1564, %1565 : vector<2x128xf32>
    %1567 = vector.extract_strided_slice %1550 {offsets = [0, 3], sizes = [2, 1], strides = [1, 1]} : vector<2x16xf32> to vector<2x1xf32>
    %1568 = vector.extract_strided_slice %968 {offsets = [3, 0], sizes = [1, 128], strides = [1, 1]} : vector<16x128xf32> to vector<1x128xf32>
    %1569 = vector.broadcast %1567 : vector<2x1xf32> to vector<2x128xf32>
    %1570 = vector.broadcast %1568 : vector<1x128xf32> to vector<2x128xf32>
    %1571 = arith.mulf %1569, %1570 : vector<2x128xf32>
    %1572 = vector.extract_strided_slice %1550 {offsets = [0, 4], sizes = [2, 1], strides = [1, 1]} : vector<2x16xf32> to vector<2x1xf32>
    %1573 = vector.extract_strided_slice %968 {offsets = [4, 0], sizes = [1, 128], strides = [1, 1]} : vector<16x128xf32> to vector<1x128xf32>
    %1574 = vector.broadcast %1572 : vector<2x1xf32> to vector<2x128xf32>
    %1575 = vector.broadcast %1573 : vector<1x128xf32> to vector<2x128xf32>
    %1576 = arith.mulf %1574, %1575 : vector<2x128xf32>
    %1577 = vector.extract_strided_slice %1550 {offsets = [0, 5], sizes = [2, 1], strides = [1, 1]} : vector<2x16xf32> to vector<2x1xf32>
    %1578 = vector.extract_strided_slice %968 {offsets = [5, 0], sizes = [1, 128], strides = [1, 1]} : vector<16x128xf32> to vector<1x128xf32>
    %1579 = vector.broadcast %1577 : vector<2x1xf32> to vector<2x128xf32>
    %1580 = vector.broadcast %1578 : vector<1x128xf32> to vector<2x128xf32>
    %1581 = arith.mulf %1579, %1580 : vector<2x128xf32>
    %1582 = vector.extract_strided_slice %1550 {offsets = [0, 6], sizes = [2, 1], strides = [1, 1]} : vector<2x16xf32> to vector<2x1xf32>
    %1583 = vector.extract_strided_slice %968 {offsets = [6, 0], sizes = [1, 128], strides = [1, 1]} : vector<16x128xf32> to vector<1x128xf32>
    %1584 = vector.broadcast %1582 : vector<2x1xf32> to vector<2x128xf32>
    %1585 = vector.broadcast %1583 : vector<1x128xf32> to vector<2x128xf32>
    %1586 = arith.mulf %1584, %1585 : vector<2x128xf32>
    %1587 = vector.extract_strided_slice %1550 {offsets = [0, 7], sizes = [2, 1], strides = [1, 1]} : vector<2x16xf32> to vector<2x1xf32>
    %1588 = vector.extract_strided_slice %968 {offsets = [7, 0], sizes = [1, 128], strides = [1, 1]} : vector<16x128xf32> to vector<1x128xf32>
    %1589 = vector.broadcast %1587 : vector<2x1xf32> to vector<2x128xf32>
    %1590 = vector.broadcast %1588 : vector<1x128xf32> to vector<2x128xf32>
    %1591 = arith.mulf %1589, %1590 : vector<2x128xf32>
    %1592 = vector.extract_strided_slice %1550 {offsets = [0, 8], sizes = [2, 1], strides = [1, 1]} : vector<2x16xf32> to vector<2x1xf32>
    %1593 = vector.extract_strided_slice %968 {offsets = [8, 0], sizes = [1, 128], strides = [1, 1]} : vector<16x128xf32> to vector<1x128xf32>
    %1594 = vector.broadcast %1592 : vector<2x1xf32> to vector<2x128xf32>
    %1595 = vector.broadcast %1593 : vector<1x128xf32> to vector<2x128xf32>
    %1596 = arith.mulf %1594, %1595 : vector<2x128xf32>
    %1597 = vector.extract_strided_slice %1550 {offsets = [0, 9], sizes = [2, 1], strides = [1, 1]} : vector<2x16xf32> to vector<2x1xf32>
    %1598 = vector.extract_strided_slice %968 {offsets = [9, 0], sizes = [1, 128], strides = [1, 1]} : vector<16x128xf32> to vector<1x128xf32>
    %1599 = vector.broadcast %1597 : vector<2x1xf32> to vector<2x128xf32>
    %1600 = vector.broadcast %1598 : vector<1x128xf32> to vector<2x128xf32>
    %1601 = arith.mulf %1599, %1600 : vector<2x128xf32>
    %1602 = vector.extract_strided_slice %1550 {offsets = [0, 10], sizes = [2, 1], strides = [1, 1]} : vector<2x16xf32> to vector<2x1xf32>
    %1603 = vector.extract_strided_slice %968 {offsets = [10, 0], sizes = [1, 128], strides = [1, 1]} : vector<16x128xf32> to vector<1x128xf32>
    %1604 = vector.broadcast %1602 : vector<2x1xf32> to vector<2x128xf32>
    %1605 = vector.broadcast %1603 : vector<1x128xf32> to vector<2x128xf32>
    %1606 = arith.mulf %1604, %1605 : vector<2x128xf32>
    %1607 = vector.extract_strided_slice %1550 {offsets = [0, 11], sizes = [2, 1], strides = [1, 1]} : vector<2x16xf32> to vector<2x1xf32>
    %1608 = vector.extract_strided_slice %968 {offsets = [11, 0], sizes = [1, 128], strides = [1, 1]} : vector<16x128xf32> to vector<1x128xf32>
    %1609 = vector.broadcast %1607 : vector<2x1xf32> to vector<2x128xf32>
    %1610 = vector.broadcast %1608 : vector<1x128xf32> to vector<2x128xf32>
    %1611 = arith.mulf %1609, %1610 : vector<2x128xf32>
    %1612 = vector.extract_strided_slice %1550 {offsets = [0, 12], sizes = [2, 1], strides = [1, 1]} : vector<2x16xf32> to vector<2x1xf32>
    %1613 = vector.extract_strided_slice %968 {offsets = [12, 0], sizes = [1, 128], strides = [1, 1]} : vector<16x128xf32> to vector<1x128xf32>
    %1614 = vector.broadcast %1612 : vector<2x1xf32> to vector<2x128xf32>
    %1615 = vector.broadcast %1613 : vector<1x128xf32> to vector<2x128xf32>
    %1616 = arith.mulf %1614, %1615 : vector<2x128xf32>
    %1617 = vector.extract_strided_slice %1550 {offsets = [0, 13], sizes = [2, 1], strides = [1, 1]} : vector<2x16xf32> to vector<2x1xf32>
    %1618 = vector.extract_strided_slice %968 {offsets = [13, 0], sizes = [1, 128], strides = [1, 1]} : vector<16x128xf32> to vector<1x128xf32>
    %1619 = vector.broadcast %1617 : vector<2x1xf32> to vector<2x128xf32>
    %1620 = vector.broadcast %1618 : vector<1x128xf32> to vector<2x128xf32>
    %1621 = arith.mulf %1619, %1620 : vector<2x128xf32>
    %1622 = vector.extract_strided_slice %1550 {offsets = [0, 14], sizes = [2, 1], strides = [1, 1]} : vector<2x16xf32> to vector<2x1xf32>
    %1623 = vector.extract_strided_slice %968 {offsets = [14, 0], sizes = [1, 128], strides = [1, 1]} : vector<16x128xf32> to vector<1x128xf32>
    %1624 = vector.broadcast %1622 : vector<2x1xf32> to vector<2x128xf32>
    %1625 = vector.broadcast %1623 : vector<1x128xf32> to vector<2x128xf32>
    %1626 = arith.mulf %1624, %1625 : vector<2x128xf32>
    %1627 = vector.extract_strided_slice %1550 {offsets = [0, 15], sizes = [2, 1], strides = [1, 1]} : vector<2x16xf32> to vector<2x1xf32>
    %1628 = vector.extract_strided_slice %968 {offsets = [15, 0], sizes = [1, 128], strides = [1, 1]} : vector<16x128xf32> to vector<1x128xf32>
    %1629 = vector.broadcast %1627 : vector<2x1xf32> to vector<2x128xf32>
    %1630 = vector.broadcast %1628 : vector<1x128xf32> to vector<2x128xf32>
    %1631 = arith.mulf %1629, %1630 : vector<2x128xf32>
    %1632 = arith.addf %1556, %1561 : vector<2x128xf32>
    %1633 = arith.addf %1566, %1571 : vector<2x128xf32>
    %1634 = arith.addf %1576, %1581 : vector<2x128xf32>
    %1635 = arith.addf %1586, %1591 : vector<2x128xf32>
    %1636 = arith.addf %1596, %1601 : vector<2x128xf32>
    %1637 = arith.addf %1606, %1611 : vector<2x128xf32>
    %1638 = arith.addf %1616, %1621 : vector<2x128xf32>
    %1639 = arith.addf %1626, %1631 : vector<2x128xf32>
    %1640 = arith.addf %1632, %1633 : vector<2x128xf32>
    %1641 = arith.addf %1634, %1635 : vector<2x128xf32>
    %1642 = arith.addf %1636, %1637 : vector<2x128xf32>
    %1643 = arith.addf %1638, %1639 : vector<2x128xf32>
    %1644 = arith.addf %1640, %1641 : vector<2x128xf32>
    %1645 = arith.addf %1642, %1643 : vector<2x128xf32>
    %1646 = arith.addf %1644, %1645 : vector<2x128xf32>
    %1647 = arith.addf %1551, %1646 : vector<2x128xf32>
    %1648 = vector.extract_strided_slice %1647 {offsets = [0, 0], sizes = [2, 48], strides = [1, 1]} : vector<2x128xf32> to vector<2x48xf32>
    %cst_68 = arith.constant 5.000000e-01 : f32
    %1649 = vector.broadcast %cst_68 : f32 to vector<2x48xf32>
    %1650 = arith.mulf %1649, %1648 : vector<2x48xf32>
    %1651 = math.tanh %1650 : vector<2x48xf32>
    %cst_69 = arith.constant 5.000000e-01 : f32
    %1652 = vector.broadcast %cst_69 : f32 to vector<2x48xf32>
    %1653 = arith.mulf %1652, %1651 : vector<2x48xf32>
    %cst_70 = arith.constant 5.000000e-01 : f32
    %1654 = vector.broadcast %cst_70 : f32 to vector<2x48xf32>
    %1655 = arith.addf %1653, %1654 : vector<2x48xf32>
    %1656 = vector.extract_strided_slice %1647 {offsets = [0, 48], sizes = [2, 16], strides = [1, 1]} : vector<2x128xf32> to vector<2x16xf32>
    %1657 = math.tanh %1656 : vector<2x16xf32>
    %1658 = vector.extract_strided_slice %1655 {offsets = [0, 0], sizes = [2, 16], strides = [1, 1]} : vector<2x48xf32> to vector<2x16xf32>
    %1659 = vector.extract_strided_slice %1655 {offsets = [0, 16], sizes = [2, 16], strides = [1, 1]} : vector<2x48xf32> to vector<2x16xf32>
    %1660 = vector.extract_strided_slice %1655 {offsets = [0, 32], sizes = [2, 16], strides = [1, 1]} : vector<2x48xf32> to vector<2x16xf32>
    %1661 = arith.mulf %1659, %1548 : vector<2x16xf32>
    %1662 = arith.mulf %1658, %1657 : vector<2x16xf32>
    %1663 = arith.addf %1661, %1662 : vector<2x16xf32>
    %1664 = math.tanh %1663 : vector<2x16xf32>
    %1665 = arith.mulf %1660, %1664 : vector<2x16xf32>
    %1666 = vector.extract_strided_slice %973 {offsets = [12, 0], sizes = [2, 128], strides = [1, 1]} : vector<16x128xf32> to vector<2x128xf32>
    %1667 = vector.extract_strided_slice %1665 {offsets = [0, 0], sizes = [2, 1], strides = [1, 1]} : vector<2x16xf32> to vector<2x1xf32>
    %1668 = vector.extract_strided_slice %968 {offsets = [0, 0], sizes = [1, 128], strides = [1, 1]} : vector<16x128xf32> to vector<1x128xf32>
    %1669 = vector.broadcast %1667 : vector<2x1xf32> to vector<2x128xf32>
    %1670 = vector.broadcast %1668 : vector<1x128xf32> to vector<2x128xf32>
    %1671 = arith.mulf %1669, %1670 : vector<2x128xf32>
    %1672 = vector.extract_strided_slice %1665 {offsets = [0, 1], sizes = [2, 1], strides = [1, 1]} : vector<2x16xf32> to vector<2x1xf32>
    %1673 = vector.extract_strided_slice %968 {offsets = [1, 0], sizes = [1, 128], strides = [1, 1]} : vector<16x128xf32> to vector<1x128xf32>
    %1674 = vector.broadcast %1672 : vector<2x1xf32> to vector<2x128xf32>
    %1675 = vector.broadcast %1673 : vector<1x128xf32> to vector<2x128xf32>
    %1676 = arith.mulf %1674, %1675 : vector<2x128xf32>
    %1677 = vector.extract_strided_slice %1665 {offsets = [0, 2], sizes = [2, 1], strides = [1, 1]} : vector<2x16xf32> to vector<2x1xf32>
    %1678 = vector.extract_strided_slice %968 {offsets = [2, 0], sizes = [1, 128], strides = [1, 1]} : vector<16x128xf32> to vector<1x128xf32>
    %1679 = vector.broadcast %1677 : vector<2x1xf32> to vector<2x128xf32>
    %1680 = vector.broadcast %1678 : vector<1x128xf32> to vector<2x128xf32>
    %1681 = arith.mulf %1679, %1680 : vector<2x128xf32>
    %1682 = vector.extract_strided_slice %1665 {offsets = [0, 3], sizes = [2, 1], strides = [1, 1]} : vector<2x16xf32> to vector<2x1xf32>
    %1683 = vector.extract_strided_slice %968 {offsets = [3, 0], sizes = [1, 128], strides = [1, 1]} : vector<16x128xf32> to vector<1x128xf32>
    %1684 = vector.broadcast %1682 : vector<2x1xf32> to vector<2x128xf32>
    %1685 = vector.broadcast %1683 : vector<1x128xf32> to vector<2x128xf32>
    %1686 = arith.mulf %1684, %1685 : vector<2x128xf32>
    %1687 = vector.extract_strided_slice %1665 {offsets = [0, 4], sizes = [2, 1], strides = [1, 1]} : vector<2x16xf32> to vector<2x1xf32>
    %1688 = vector.extract_strided_slice %968 {offsets = [4, 0], sizes = [1, 128], strides = [1, 1]} : vector<16x128xf32> to vector<1x128xf32>
    %1689 = vector.broadcast %1687 : vector<2x1xf32> to vector<2x128xf32>
    %1690 = vector.broadcast %1688 : vector<1x128xf32> to vector<2x128xf32>
    %1691 = arith.mulf %1689, %1690 : vector<2x128xf32>
    %1692 = vector.extract_strided_slice %1665 {offsets = [0, 5], sizes = [2, 1], strides = [1, 1]} : vector<2x16xf32> to vector<2x1xf32>
    %1693 = vector.extract_strided_slice %968 {offsets = [5, 0], sizes = [1, 128], strides = [1, 1]} : vector<16x128xf32> to vector<1x128xf32>
    %1694 = vector.broadcast %1692 : vector<2x1xf32> to vector<2x128xf32>
    %1695 = vector.broadcast %1693 : vector<1x128xf32> to vector<2x128xf32>
    %1696 = arith.mulf %1694, %1695 : vector<2x128xf32>
    %1697 = vector.extract_strided_slice %1665 {offsets = [0, 6], sizes = [2, 1], strides = [1, 1]} : vector<2x16xf32> to vector<2x1xf32>
    %1698 = vector.extract_strided_slice %968 {offsets = [6, 0], sizes = [1, 128], strides = [1, 1]} : vector<16x128xf32> to vector<1x128xf32>
    %1699 = vector.broadcast %1697 : vector<2x1xf32> to vector<2x128xf32>
    %1700 = vector.broadcast %1698 : vector<1x128xf32> to vector<2x128xf32>
    %1701 = arith.mulf %1699, %1700 : vector<2x128xf32>
    %1702 = vector.extract_strided_slice %1665 {offsets = [0, 7], sizes = [2, 1], strides = [1, 1]} : vector<2x16xf32> to vector<2x1xf32>
    %1703 = vector.extract_strided_slice %968 {offsets = [7, 0], sizes = [1, 128], strides = [1, 1]} : vector<16x128xf32> to vector<1x128xf32>
    %1704 = vector.broadcast %1702 : vector<2x1xf32> to vector<2x128xf32>
    %1705 = vector.broadcast %1703 : vector<1x128xf32> to vector<2x128xf32>
    %1706 = arith.mulf %1704, %1705 : vector<2x128xf32>
    %1707 = vector.extract_strided_slice %1665 {offsets = [0, 8], sizes = [2, 1], strides = [1, 1]} : vector<2x16xf32> to vector<2x1xf32>
    %1708 = vector.extract_strided_slice %968 {offsets = [8, 0], sizes = [1, 128], strides = [1, 1]} : vector<16x128xf32> to vector<1x128xf32>
    %1709 = vector.broadcast %1707 : vector<2x1xf32> to vector<2x128xf32>
    %1710 = vector.broadcast %1708 : vector<1x128xf32> to vector<2x128xf32>
    %1711 = arith.mulf %1709, %1710 : vector<2x128xf32>
    %1712 = vector.extract_strided_slice %1665 {offsets = [0, 9], sizes = [2, 1], strides = [1, 1]} : vector<2x16xf32> to vector<2x1xf32>
    %1713 = vector.extract_strided_slice %968 {offsets = [9, 0], sizes = [1, 128], strides = [1, 1]} : vector<16x128xf32> to vector<1x128xf32>
    %1714 = vector.broadcast %1712 : vector<2x1xf32> to vector<2x128xf32>
    %1715 = vector.broadcast %1713 : vector<1x128xf32> to vector<2x128xf32>
    %1716 = arith.mulf %1714, %1715 : vector<2x128xf32>
    %1717 = vector.extract_strided_slice %1665 {offsets = [0, 10], sizes = [2, 1], strides = [1, 1]} : vector<2x16xf32> to vector<2x1xf32>
    %1718 = vector.extract_strided_slice %968 {offsets = [10, 0], sizes = [1, 128], strides = [1, 1]} : vector<16x128xf32> to vector<1x128xf32>
    %1719 = vector.broadcast %1717 : vector<2x1xf32> to vector<2x128xf32>
    %1720 = vector.broadcast %1718 : vector<1x128xf32> to vector<2x128xf32>
    %1721 = arith.mulf %1719, %1720 : vector<2x128xf32>
    %1722 = vector.extract_strided_slice %1665 {offsets = [0, 11], sizes = [2, 1], strides = [1, 1]} : vector<2x16xf32> to vector<2x1xf32>
    %1723 = vector.extract_strided_slice %968 {offsets = [11, 0], sizes = [1, 128], strides = [1, 1]} : vector<16x128xf32> to vector<1x128xf32>
    %1724 = vector.broadcast %1722 : vector<2x1xf32> to vector<2x128xf32>
    %1725 = vector.broadcast %1723 : vector<1x128xf32> to vector<2x128xf32>
    %1726 = arith.mulf %1724, %1725 : vector<2x128xf32>
    %1727 = vector.extract_strided_slice %1665 {offsets = [0, 12], sizes = [2, 1], strides = [1, 1]} : vector<2x16xf32> to vector<2x1xf32>
    %1728 = vector.extract_strided_slice %968 {offsets = [12, 0], sizes = [1, 128], strides = [1, 1]} : vector<16x128xf32> to vector<1x128xf32>
    %1729 = vector.broadcast %1727 : vector<2x1xf32> to vector<2x128xf32>
    %1730 = vector.broadcast %1728 : vector<1x128xf32> to vector<2x128xf32>
    %1731 = arith.mulf %1729, %1730 : vector<2x128xf32>
    %1732 = vector.extract_strided_slice %1665 {offsets = [0, 13], sizes = [2, 1], strides = [1, 1]} : vector<2x16xf32> to vector<2x1xf32>
    %1733 = vector.extract_strided_slice %968 {offsets = [13, 0], sizes = [1, 128], strides = [1, 1]} : vector<16x128xf32> to vector<1x128xf32>
    %1734 = vector.broadcast %1732 : vector<2x1xf32> to vector<2x128xf32>
    %1735 = vector.broadcast %1733 : vector<1x128xf32> to vector<2x128xf32>
    %1736 = arith.mulf %1734, %1735 : vector<2x128xf32>
    %1737 = vector.extract_strided_slice %1665 {offsets = [0, 14], sizes = [2, 1], strides = [1, 1]} : vector<2x16xf32> to vector<2x1xf32>
    %1738 = vector.extract_strided_slice %968 {offsets = [14, 0], sizes = [1, 128], strides = [1, 1]} : vector<16x128xf32> to vector<1x128xf32>
    %1739 = vector.broadcast %1737 : vector<2x1xf32> to vector<2x128xf32>
    %1740 = vector.broadcast %1738 : vector<1x128xf32> to vector<2x128xf32>
    %1741 = arith.mulf %1739, %1740 : vector<2x128xf32>
    %1742 = vector.extract_strided_slice %1665 {offsets = [0, 15], sizes = [2, 1], strides = [1, 1]} : vector<2x16xf32> to vector<2x1xf32>
    %1743 = vector.extract_strided_slice %968 {offsets = [15, 0], sizes = [1, 128], strides = [1, 1]} : vector<16x128xf32> to vector<1x128xf32>
    %1744 = vector.broadcast %1742 : vector<2x1xf32> to vector<2x128xf32>
    %1745 = vector.broadcast %1743 : vector<1x128xf32> to vector<2x128xf32>
    %1746 = arith.mulf %1744, %1745 : vector<2x128xf32>
    %1747 = arith.addf %1671, %1676 : vector<2x128xf32>
    %1748 = arith.addf %1681, %1686 : vector<2x128xf32>
    %1749 = arith.addf %1691, %1696 : vector<2x128xf32>
    %1750 = arith.addf %1701, %1706 : vector<2x128xf32>
    %1751 = arith.addf %1711, %1716 : vector<2x128xf32>
    %1752 = arith.addf %1721, %1726 : vector<2x128xf32>
    %1753 = arith.addf %1731, %1736 : vector<2x128xf32>
    %1754 = arith.addf %1741, %1746 : vector<2x128xf32>
    %1755 = arith.addf %1747, %1748 : vector<2x128xf32>
    %1756 = arith.addf %1749, %1750 : vector<2x128xf32>
    %1757 = arith.addf %1751, %1752 : vector<2x128xf32>
    %1758 = arith.addf %1753, %1754 : vector<2x128xf32>
    %1759 = arith.addf %1755, %1756 : vector<2x128xf32>
    %1760 = arith.addf %1757, %1758 : vector<2x128xf32>
    %1761 = arith.addf %1759, %1760 : vector<2x128xf32>
    %1762 = arith.addf %1666, %1761 : vector<2x128xf32>
    %1763 = vector.extract_strided_slice %1762 {offsets = [0, 0], sizes = [2, 48], strides = [1, 1]} : vector<2x128xf32> to vector<2x48xf32>
    %cst_71 = arith.constant 5.000000e-01 : f32
    %1764 = vector.broadcast %cst_71 : f32 to vector<2x48xf32>
    %1765 = arith.mulf %1764, %1763 : vector<2x48xf32>
    %1766 = math.tanh %1765 : vector<2x48xf32>
    %cst_72 = arith.constant 5.000000e-01 : f32
    %1767 = vector.broadcast %cst_72 : f32 to vector<2x48xf32>
    %1768 = arith.mulf %1767, %1766 : vector<2x48xf32>
    %cst_73 = arith.constant 5.000000e-01 : f32
    %1769 = vector.broadcast %cst_73 : f32 to vector<2x48xf32>
    %1770 = arith.addf %1768, %1769 : vector<2x48xf32>
    %1771 = vector.extract_strided_slice %1762 {offsets = [0, 48], sizes = [2, 16], strides = [1, 1]} : vector<2x128xf32> to vector<2x16xf32>
    %1772 = math.tanh %1771 : vector<2x16xf32>
    %1773 = vector.extract_strided_slice %1770 {offsets = [0, 0], sizes = [2, 16], strides = [1, 1]} : vector<2x48xf32> to vector<2x16xf32>
    %1774 = vector.extract_strided_slice %1770 {offsets = [0, 16], sizes = [2, 16], strides = [1, 1]} : vector<2x48xf32> to vector<2x16xf32>
    %1775 = vector.extract_strided_slice %1770 {offsets = [0, 32], sizes = [2, 16], strides = [1, 1]} : vector<2x48xf32> to vector<2x16xf32>
    %1776 = arith.mulf %1774, %1663 : vector<2x16xf32>
    %1777 = arith.mulf %1773, %1772 : vector<2x16xf32>
    %1778 = arith.addf %1776, %1777 : vector<2x16xf32>
    %1779 = math.tanh %1778 : vector<2x16xf32>
    %1780 = arith.mulf %1775, %1779 : vector<2x16xf32>
    %1781 = vector.extract_strided_slice %973 {offsets = [14, 0], sizes = [2, 128], strides = [1, 1]} : vector<16x128xf32> to vector<2x128xf32>
    %1782 = vector.extract_strided_slice %1780 {offsets = [0, 0], sizes = [2, 1], strides = [1, 1]} : vector<2x16xf32> to vector<2x1xf32>
    %1783 = vector.extract_strided_slice %968 {offsets = [0, 0], sizes = [1, 128], strides = [1, 1]} : vector<16x128xf32> to vector<1x128xf32>
    %1784 = vector.broadcast %1782 : vector<2x1xf32> to vector<2x128xf32>
    %1785 = vector.broadcast %1783 : vector<1x128xf32> to vector<2x128xf32>
    %1786 = arith.mulf %1784, %1785 : vector<2x128xf32>
    %1787 = vector.extract_strided_slice %1780 {offsets = [0, 1], sizes = [2, 1], strides = [1, 1]} : vector<2x16xf32> to vector<2x1xf32>
    %1788 = vector.extract_strided_slice %968 {offsets = [1, 0], sizes = [1, 128], strides = [1, 1]} : vector<16x128xf32> to vector<1x128xf32>
    %1789 = vector.broadcast %1787 : vector<2x1xf32> to vector<2x128xf32>
    %1790 = vector.broadcast %1788 : vector<1x128xf32> to vector<2x128xf32>
    %1791 = arith.mulf %1789, %1790 : vector<2x128xf32>
    %1792 = vector.extract_strided_slice %1780 {offsets = [0, 2], sizes = [2, 1], strides = [1, 1]} : vector<2x16xf32> to vector<2x1xf32>
    %1793 = vector.extract_strided_slice %968 {offsets = [2, 0], sizes = [1, 128], strides = [1, 1]} : vector<16x128xf32> to vector<1x128xf32>
    %1794 = vector.broadcast %1792 : vector<2x1xf32> to vector<2x128xf32>
    %1795 = vector.broadcast %1793 : vector<1x128xf32> to vector<2x128xf32>
    %1796 = arith.mulf %1794, %1795 : vector<2x128xf32>
    %1797 = vector.extract_strided_slice %1780 {offsets = [0, 3], sizes = [2, 1], strides = [1, 1]} : vector<2x16xf32> to vector<2x1xf32>
    %1798 = vector.extract_strided_slice %968 {offsets = [3, 0], sizes = [1, 128], strides = [1, 1]} : vector<16x128xf32> to vector<1x128xf32>
    %1799 = vector.broadcast %1797 : vector<2x1xf32> to vector<2x128xf32>
    %1800 = vector.broadcast %1798 : vector<1x128xf32> to vector<2x128xf32>
    %1801 = arith.mulf %1799, %1800 : vector<2x128xf32>
    %1802 = vector.extract_strided_slice %1780 {offsets = [0, 4], sizes = [2, 1], strides = [1, 1]} : vector<2x16xf32> to vector<2x1xf32>
    %1803 = vector.extract_strided_slice %968 {offsets = [4, 0], sizes = [1, 128], strides = [1, 1]} : vector<16x128xf32> to vector<1x128xf32>
    %1804 = vector.broadcast %1802 : vector<2x1xf32> to vector<2x128xf32>
    %1805 = vector.broadcast %1803 : vector<1x128xf32> to vector<2x128xf32>
    %1806 = arith.mulf %1804, %1805 : vector<2x128xf32>
    %1807 = vector.extract_strided_slice %1780 {offsets = [0, 5], sizes = [2, 1], strides = [1, 1]} : vector<2x16xf32> to vector<2x1xf32>
    %1808 = vector.extract_strided_slice %968 {offsets = [5, 0], sizes = [1, 128], strides = [1, 1]} : vector<16x128xf32> to vector<1x128xf32>
    %1809 = vector.broadcast %1807 : vector<2x1xf32> to vector<2x128xf32>
    %1810 = vector.broadcast %1808 : vector<1x128xf32> to vector<2x128xf32>
    %1811 = arith.mulf %1809, %1810 : vector<2x128xf32>
    %1812 = vector.extract_strided_slice %1780 {offsets = [0, 6], sizes = [2, 1], strides = [1, 1]} : vector<2x16xf32> to vector<2x1xf32>
    %1813 = vector.extract_strided_slice %968 {offsets = [6, 0], sizes = [1, 128], strides = [1, 1]} : vector<16x128xf32> to vector<1x128xf32>
    %1814 = vector.broadcast %1812 : vector<2x1xf32> to vector<2x128xf32>
    %1815 = vector.broadcast %1813 : vector<1x128xf32> to vector<2x128xf32>
    %1816 = arith.mulf %1814, %1815 : vector<2x128xf32>
    %1817 = vector.extract_strided_slice %1780 {offsets = [0, 7], sizes = [2, 1], strides = [1, 1]} : vector<2x16xf32> to vector<2x1xf32>
    %1818 = vector.extract_strided_slice %968 {offsets = [7, 0], sizes = [1, 128], strides = [1, 1]} : vector<16x128xf32> to vector<1x128xf32>
    %1819 = vector.broadcast %1817 : vector<2x1xf32> to vector<2x128xf32>
    %1820 = vector.broadcast %1818 : vector<1x128xf32> to vector<2x128xf32>
    %1821 = arith.mulf %1819, %1820 : vector<2x128xf32>
    %1822 = vector.extract_strided_slice %1780 {offsets = [0, 8], sizes = [2, 1], strides = [1, 1]} : vector<2x16xf32> to vector<2x1xf32>
    %1823 = vector.extract_strided_slice %968 {offsets = [8, 0], sizes = [1, 128], strides = [1, 1]} : vector<16x128xf32> to vector<1x128xf32>
    %1824 = vector.broadcast %1822 : vector<2x1xf32> to vector<2x128xf32>
    %1825 = vector.broadcast %1823 : vector<1x128xf32> to vector<2x128xf32>
    %1826 = arith.mulf %1824, %1825 : vector<2x128xf32>
    %1827 = vector.extract_strided_slice %1780 {offsets = [0, 9], sizes = [2, 1], strides = [1, 1]} : vector<2x16xf32> to vector<2x1xf32>
    %1828 = vector.extract_strided_slice %968 {offsets = [9, 0], sizes = [1, 128], strides = [1, 1]} : vector<16x128xf32> to vector<1x128xf32>
    %1829 = vector.broadcast %1827 : vector<2x1xf32> to vector<2x128xf32>
    %1830 = vector.broadcast %1828 : vector<1x128xf32> to vector<2x128xf32>
    %1831 = arith.mulf %1829, %1830 : vector<2x128xf32>
    %1832 = vector.extract_strided_slice %1780 {offsets = [0, 10], sizes = [2, 1], strides = [1, 1]} : vector<2x16xf32> to vector<2x1xf32>
    %1833 = vector.extract_strided_slice %968 {offsets = [10, 0], sizes = [1, 128], strides = [1, 1]} : vector<16x128xf32> to vector<1x128xf32>
    %1834 = vector.broadcast %1832 : vector<2x1xf32> to vector<2x128xf32>
    %1835 = vector.broadcast %1833 : vector<1x128xf32> to vector<2x128xf32>
    %1836 = arith.mulf %1834, %1835 : vector<2x128xf32>
    %1837 = vector.extract_strided_slice %1780 {offsets = [0, 11], sizes = [2, 1], strides = [1, 1]} : vector<2x16xf32> to vector<2x1xf32>
    %1838 = vector.extract_strided_slice %968 {offsets = [11, 0], sizes = [1, 128], strides = [1, 1]} : vector<16x128xf32> to vector<1x128xf32>
    %1839 = vector.broadcast %1837 : vector<2x1xf32> to vector<2x128xf32>
    %1840 = vector.broadcast %1838 : vector<1x128xf32> to vector<2x128xf32>
    %1841 = arith.mulf %1839, %1840 : vector<2x128xf32>
    %1842 = vector.extract_strided_slice %1780 {offsets = [0, 12], sizes = [2, 1], strides = [1, 1]} : vector<2x16xf32> to vector<2x1xf32>
    %1843 = vector.extract_strided_slice %968 {offsets = [12, 0], sizes = [1, 128], strides = [1, 1]} : vector<16x128xf32> to vector<1x128xf32>
    %1844 = vector.broadcast %1842 : vector<2x1xf32> to vector<2x128xf32>
    %1845 = vector.broadcast %1843 : vector<1x128xf32> to vector<2x128xf32>
    %1846 = arith.mulf %1844, %1845 : vector<2x128xf32>
    %1847 = vector.extract_strided_slice %1780 {offsets = [0, 13], sizes = [2, 1], strides = [1, 1]} : vector<2x16xf32> to vector<2x1xf32>
    %1848 = vector.extract_strided_slice %968 {offsets = [13, 0], sizes = [1, 128], strides = [1, 1]} : vector<16x128xf32> to vector<1x128xf32>
    %1849 = vector.broadcast %1847 : vector<2x1xf32> to vector<2x128xf32>
    %1850 = vector.broadcast %1848 : vector<1x128xf32> to vector<2x128xf32>
    %1851 = arith.mulf %1849, %1850 : vector<2x128xf32>
    %1852 = vector.extract_strided_slice %1780 {offsets = [0, 14], sizes = [2, 1], strides = [1, 1]} : vector<2x16xf32> to vector<2x1xf32>
    %1853 = vector.extract_strided_slice %968 {offsets = [14, 0], sizes = [1, 128], strides = [1, 1]} : vector<16x128xf32> to vector<1x128xf32>
    %1854 = vector.broadcast %1852 : vector<2x1xf32> to vector<2x128xf32>
    %1855 = vector.broadcast %1853 : vector<1x128xf32> to vector<2x128xf32>
    %1856 = arith.mulf %1854, %1855 : vector<2x128xf32>
    %1857 = vector.extract_strided_slice %1780 {offsets = [0, 15], sizes = [2, 1], strides = [1, 1]} : vector<2x16xf32> to vector<2x1xf32>
    %1858 = vector.extract_strided_slice %968 {offsets = [15, 0], sizes = [1, 128], strides = [1, 1]} : vector<16x128xf32> to vector<1x128xf32>
    %1859 = vector.broadcast %1857 : vector<2x1xf32> to vector<2x128xf32>
    %1860 = vector.broadcast %1858 : vector<1x128xf32> to vector<2x128xf32>
    %1861 = arith.mulf %1859, %1860 : vector<2x128xf32>
    %1862 = arith.addf %1786, %1791 : vector<2x128xf32>
    %1863 = arith.addf %1796, %1801 : vector<2x128xf32>
    %1864 = arith.addf %1806, %1811 : vector<2x128xf32>
    %1865 = arith.addf %1816, %1821 : vector<2x128xf32>
    %1866 = arith.addf %1826, %1831 : vector<2x128xf32>
    %1867 = arith.addf %1836, %1841 : vector<2x128xf32>
    %1868 = arith.addf %1846, %1851 : vector<2x128xf32>
    %1869 = arith.addf %1856, %1861 : vector<2x128xf32>
    %1870 = arith.addf %1862, %1863 : vector<2x128xf32>
    %1871 = arith.addf %1864, %1865 : vector<2x128xf32>
    %1872 = arith.addf %1866, %1867 : vector<2x128xf32>
    %1873 = arith.addf %1868, %1869 : vector<2x128xf32>
    %1874 = arith.addf %1870, %1871 : vector<2x128xf32>
    %1875 = arith.addf %1872, %1873 : vector<2x128xf32>
    %1876 = arith.addf %1874, %1875 : vector<2x128xf32>
    %1877 = arith.addf %1781, %1876 : vector<2x128xf32>
    %1878 = vector.extract_strided_slice %1877 {offsets = [0, 0], sizes = [2, 48], strides = [1, 1]} : vector<2x128xf32> to vector<2x48xf32>
    %cst_74 = arith.constant 5.000000e-01 : f32
    %1879 = vector.broadcast %cst_74 : f32 to vector<2x48xf32>
    %1880 = arith.mulf %1879, %1878 : vector<2x48xf32>
    %1881 = math.tanh %1880 : vector<2x48xf32>
    %cst_75 = arith.constant 5.000000e-01 : f32
    %1882 = vector.broadcast %cst_75 : f32 to vector<2x48xf32>
    %1883 = arith.mulf %1882, %1881 : vector<2x48xf32>
    %cst_76 = arith.constant 5.000000e-01 : f32
    %1884 = vector.broadcast %cst_76 : f32 to vector<2x48xf32>
    %1885 = arith.addf %1883, %1884 : vector<2x48xf32>
    %1886 = vector.extract_strided_slice %1877 {offsets = [0, 48], sizes = [2, 16], strides = [1, 1]} : vector<2x128xf32> to vector<2x16xf32>
    %1887 = math.tanh %1886 : vector<2x16xf32>
    %1888 = vector.extract_strided_slice %1885 {offsets = [0, 0], sizes = [2, 16], strides = [1, 1]} : vector<2x48xf32> to vector<2x16xf32>
    %1889 = vector.extract_strided_slice %1885 {offsets = [0, 16], sizes = [2, 16], strides = [1, 1]} : vector<2x48xf32> to vector<2x16xf32>
    %1890 = vector.extract_strided_slice %1885 {offsets = [0, 32], sizes = [2, 16], strides = [1, 1]} : vector<2x48xf32> to vector<2x16xf32>
    %1891 = arith.mulf %1889, %1778 : vector<2x16xf32>
    %1892 = arith.mulf %1888, %1887 : vector<2x16xf32>
    %1893 = arith.addf %1891, %1892 : vector<2x16xf32>
    %1894 = math.tanh %1893 : vector<2x16xf32>
    %1895 = arith.mulf %1890, %1894 : vector<2x16xf32>
    %c80 = arith.constant 80 : index
    %c0_77 = arith.constant 0 : index
    %1896 = vector.load %arg1[%c80, %c0_77] : memref<104x128xf32, #tpu.memory_space<vmem>>, vector<16x128xf32>
    %c96 = arith.constant 96 : index
    %c0_78 = arith.constant 0 : index
    %1897 = vector.load %arg1[%c96, %c0_78] : memref<104x128xf32, #tpu.memory_space<vmem>>, vector<1x128xf32>
    %cst_79 = arith.constant dense<0.000000e+00> : vector<2x128xf32>
    %1898 = tpu.matmul %1895, %1896, %cst_79 {dimension_numbers = #tpu.dot_dimension_numbers<[1], [0], [0], [1], [0, 0, 1, 1], [], []>, precision = #tpu.contract_precision<fp32>} : vector<2x16xf32>, vector<16x128xf32>, vector<2x128xf32> -> vector<2x128xf32>
    %1899 = vector.broadcast %1897 : vector<1x128xf32> to vector<2x128xf32>
    %1900 = arith.addf %1898, %1899 : vector<2x128xf32>
    %cst_80 = arith.constant 0.000000e+00 : f32
    %1901 = vector.broadcast %cst_80 : f32 to vector<2x128xf32>
    %1902 = arith.maximumf %1900, %1901 : vector<2x128xf32>
    %1903 = vector.extract_strided_slice %1902 {offsets = [0, 0], sizes = [2, 32], strides = [1, 1]} : vector<2x128xf32> to vector<2x32xf32>
    %cst_81 = arith.constant 0.000000e+00 : f32
    %1904 = vector.broadcast %cst_81 : f32 to vector<2x64xf32>
    %1905 = tpu.concatenate %1903, %965, %1895, %1904 in 1 : vector<2x32xf32>, vector<2x16xf32>, vector<2x16xf32>, vector<2x64xf32> -> vector<2x128xf32>
    %c0_82 = arith.constant 0 : index
    %c0_83 = arith.constant 0 : index
    %1906 = vector.load %arg2[%c0_82, %c0_83] : memref<2x128xf32, #tpu.memory_space<vmem>>, vector<2x128xf32>
    tpu.vector_store %arg2[%c0_82, %c0_83], %1905 {strides = array<i32>} : memref<2x128xf32, #tpu.memory_space<vmem>>, vector<2x128xf32>,
    return
  }
}

</mosaic_0001>

<llo_original>
// kernel: forward.1
$region0: #{forward.1}
  #allocation0 [shape = 'u32[]', space=smem, size = 0x4, offset = 0x4, fixed_abs, tag = 'smem constant byte address 0x4 - core index']
  #allocation1 [shape = 'u32[144,128]{1,0:T(1,128)}', space=vmem, size = 0x12000, scoped, tag = 'internal scratch']
  #allocation2 [shape = 'f32[16,16]{1,0:T(8,128)}', space=vmem, size = 0x2000, scoped, tag = 'scratch operand']
  %s0 = inlined_call_operand.vmem [shape: f32[128,48], index: 0, kind: input, shape index: {}]
  %s1 = inlined_call_operand.vmem [shape: f32[104,128], index: 1, kind: input, shape index: {}]
  %s2 = inlined_call_operand.vmem [shape: f32[2,128], index: 2, kind: output, shape index: {}]
  %s3 = sld [smem:[#allocation0]]
  $region18: #{forward.1} parent=0
    _
  %s5 = ssub.s32 1, %s3
  %s6 = scalar_select 0, %s5, %s3
  // Predicated region
  $region2: #{forward.1} parent=0 // pred_check
    _
  $region3: #{forward.1} parent=0 // pred_check_branch
    %8 = sbr.rel (0) target = $region5
  $region4: #{forward.1} parent=0 // pred_region
    _
  $region5: #{forward.1} parent=0 // pred_fallthru
    _
  // Predicated region
  $region6: #{forward.1} parent=0 // pred_check
    _
  $region7: #{forward.1} parent=0 // pred_check_branch
    %10 = sbr.rel (0) target = $region9
  $region8: #{forward.1} parent=0 // pred_region
    _
  $region9: #{forward.1} parent=0 // pred_fallthru
    _
  %v11 = vld [vmem:[%s0] sm:$0xff]
  %v12 = vld [vmem:[%s0 + $0x8] sm:$0xff]
  %v13 = vld [vmem:[%s0 + $0x10] sm:$0xff]
  %v14 = vld [vmem:[%s0 + $0x18] sm:$0xff]
  %v15 = vld [vmem:[%s0 + $0x20] sm:$0xff]
  %v16 = vld [vmem:[%s0 + $0x28] sm:$0xff]
  %v17 = vld [vmem:[%s0 + $0x30] sm:$0xff]
  %v18 = vld [vmem:[%s0 + $0x38] sm:$0xff]
  %v19 = vld [vmem:[%s0 + $0x40] sm:$0xff]
  %v20 = vld [vmem:[%s0 + $0x48] sm:$0xff]
  %v21 = vld [vmem:[%s0 + $0x50] sm:$0xff]
  %v22 = vld [vmem:[%s0 + $0x58] sm:$0xff]
  %v23 = vld [vmem:[%s0 + $0x60] sm:$0xff]
  %v24 = vld [vmem:[%s0 + $0x68] sm:$0xff]
  %v25 = vld [vmem:[%s0 + $0x70] sm:$0xff]
  %v26 = vld [vmem:[%s0 + $0x78] sm:$0xff]
  %v27 = vld [vmem:[%s1] sm:$0xff]
  %28 = vmatprep.subr.mxu0 0.0
  %v29 = vand.u32 %v11, 4294901760
  %30 = vmatpush1.msra.mxu0 %v29
  %31 = vmatprep.subr.mxu0 0.0
  %v32 = vand.u32 %v12, 4294901760
  %33 = vmatpush1.msra.mxu0 %v32
  %34 = vmatprep.subr.mxu0 0.0
  %v35 = vand.u32 %v13, 4294901760
  %36 = vmatpush1.msra.mxu0 %v35
  %37 = vmatprep.subr.mxu0 0.0
  %v38 = vand.u32 %v14, 4294901760
  %39 = vmatpush1.msra.mxu0 %v38
  %40 = vmatprep.subr.mxu0 0.0
  %v41 = vand.u32 %v15, 4294901760
  %42 = vmatpush1.msra.mxu0 %v41
  %43 = vmatprep.subr.mxu0 0.0
  %v44 = vand.u32 %v16, 4294901760
  %45 = vmatpush1.msra.mxu0 %v44
  %46 = vmatprep.subr.mxu0 0.0
  %v47 = vand.u32 %v17, 4294901760
  %48 = vmatpush1.msra.mxu0 %v47
  %49 = vmatprep.subr.mxu0 0.0
  %v50 = vand.u32 %v18, 4294901760
  %51 = vmatpush1.msra.mxu0 %v50
  %52 = vmatprep.subr.mxu0 0.0
  %v53 = vand.u32 %v19, 4294901760
  %54 = vmatpush1.msra.mxu0 %v53
  %55 = vmatprep.subr.mxu0 0.0
  %v56 = vand.u32 %v20, 4294901760
  %57 = vmatpush1.msra.mxu0 %v56
  %58 = vmatprep.subr.mxu0 0.0
  %v59 = vand.u32 %v21, 4294901760
  %60 = vmatpush1.msra.mxu0 %v59
  %61 = vmatprep.subr.mxu0 0.0
  %v62 = vand.u32 %v22, 4294901760
  %63 = vmatpush1.msra.mxu0 %v62
  %64 = vmatprep.subr.mxu0 0.0
  %v65 = vand.u32 %v23, 4294901760
  %66 = vmatpush1.msra.mxu0 %v65
  %67 = vmatprep.subr.mxu0 0.0
  %v68 = vand.u32 %v24, 4294901760
  %69 = vmatpush1.msra.mxu0 %v68
  %70 = vmatprep.subr.mxu0 0.0
  %v71 = vand.u32 %v25, 4294901760
  %72 = vmatpush1.msra.mxu0 %v71
  %73 = vmatprep.subr.mxu0 0.0
  %v74 = vand.u32 %v26, 4294901760
  %75 = vmatpush1.msra.mxu0 %v74
  %76 = vmatprep.subr.mxu0 0.0
  %77 = vmatpush1.msra.mxu0 0.0
  %78 = vmatprep.subr.mxu0 0.0
  %79 = vmatpush1.msra.mxu0 0.0
  %80 = vmatprep.subr.mxu0 0.0
  %81 = vmatpush1.msra.mxu0 0.0
  %82 = vmatprep.subr.mxu0 0.0
  %83 = vmatpush1.msra.mxu0 0.0
  %84 = vmatprep.subr.mxu0 0.0
  %85 = vmatpush1.msra.mxu0 0.0
  %86 = vmatprep.subr.mxu0 0.0
  %87 = vmatpush1.msra.mxu0 0.0
  %88 = vmatprep.subr.mxu0 0.0
  %89 = vmatpush1.msra.mxu0 0.0
  %90 = vmatprep.subr.mxu0 0.0
  %91 = vmatpush1.msra.mxu0 0.0
  %92 = vmatprep.subr.mxu0 0.0
  %93 = vmatpush1.msra.mxu0 0.0
  %94 = vmatprep.subr.mxu0 0.0
  %95 = vmatpush1.msra.mxu0 0.0
  %96 = vmatprep.subr.mxu0 0.0
  %97 = vmatpush1.msra.mxu0 0.0
  %98 = vmatprep.subr.mxu0 0.0
  %99 = vmatpush1.msra.mxu0 0.0
  %100 = vmatprep.subr.mxu0 0.0
  %101 = vmatpush1.msra.mxu0 0.0
  %102 = vmatprep.subr.mxu0 0.0
  %103 = vmatpush1.msra.mxu0 0.0
  %104 = vmatprep.subr.mxu0 0.0
  %105 = vmatpush1.msra.mxu0 0.0
  %106 = vmatprep.subr.mxu0 0.0
  %107 = vmatpush1.msra.mxu0 0.0
  %108 = vmatprep.mubr.f32.mxu0 0.0
  %v109 = vand.u32 %v27, 4294901760
  %v110 = vsub.f32 %v27, %v109
  %v111 = vand.u32 %v110, 4294901760
  %v112 = vsub.f32 %v110, %v111
  %v113 = vand.u32 %v112, 4294901760
  %114 = vmatmul.mubr.f32.gmra.mrb[0].mxu0 %v113
  %v115 = vpop.f32.mrb[0].mxu0
  %v116 = vadd.f32 0.0, %v115
  %v117 = vpop.f32.mrb[0].mxu0
  %118 = vdwg.mxu0
  %119 = vmatprep.subr.mxu0 0.0
  %v120 = vand.u32 %v11, 4294901760
  %v121 = vsub.f32 %v11, %v120
  %v122 = vand.u32 %v121, 4294901760
  %v123 = vsub.f32 %v121, %v122
  %v124 = vand.u32 %v123, 4294901760
  %125 = vmatpush1.msra.mxu0 %v124
  %126 = vmatprep.subr.mxu0 0.0
  %v127 = vand.u32 %v12, 4294901760
  %v128 = vsub.f32 %v12, %v127
  %v129 = vand.u32 %v128, 4294901760
  %v130 = vsub.f32 %v128, %v129
  %v131 = vand.u32 %v130, 4294901760
  %132 = vmatpush1.msra.mxu0 %v131
  %133 = vmatprep.subr.mxu0 0.0
  %v134 = vand.u32 %v13, 4294901760
  %v135 = vsub.f32 %v13, %v134
  %v136 = vand.u32 %v135, 4294901760
  %v137 = vsub.f32 %v135, %v136
  %v138 = vand.u32 %v137, 4294901760
  %139 = vmatpush1.msra.mxu0 %v138
  %140 = vmatprep.subr.mxu0 0.0
  %v141 = vand.u32 %v14, 4294901760
  %v142 = vsub.f32 %v14, %v141
  %v143 = vand.u32 %v142, 4294901760
  %v144 = vsub.f32 %v142, %v143
  %v145 = vand.u32 %v144, 4294901760
  %146 = vmatpush1.msra.mxu0 %v145
  %147 = vmatprep.subr.mxu0 0.0
  %v148 = vand.u32 %v15, 4294901760
  %v149 = vsub.f32 %v15, %v148
  %v150 = vand.u32 %v149, 4294901760
  %v151 = vsub.f32 %v149, %v150
  %v152 = vand.u32 %v151, 4294901760
  %153 = vmatpush1.msra.mxu0 %v152
  %154 = vmatprep.subr.mxu0 0.0
  %v155 = vand.u32 %v16, 4294901760
  %v156 = vsub.f32 %v16, %v155
  %v157 = vand.u32 %v156, 4294901760
  %v158 = vsub.f32 %v156, %v157
  %v159 = vand.u32 %v158, 4294901760
  %160 = vmatpush1.msra.mxu0 %v159
  %161 = vmatprep.subr.mxu0 0.0
  %v162 = vand.u32 %v17, 4294901760
  %v163 = vsub.f32 %v17, %v162
  %v164 = vand.u32 %v163, 4294901760
  %v165 = vsub.f32 %v163, %v164
  %v166 = vand.u32 %v165, 4294901760
  %167 = vmatpush1.msra.mxu0 %v166
  %168 = vmatprep.subr.mxu0 0.0
  %v169 = vand.u32 %v18, 4294901760
  %v170 = vsub.f32 %v18, %v169
  %v171 = vand.u32 %v170, 4294901760
  %v172 = vsub.f32 %v170, %v171
  %v173 = vand.u32 %v172, 4294901760
  %174 = vmatpush1.msra.mxu0 %v173
  %175 = vmatprep.subr.mxu0 0.0
  %v176 = vand.u32 %v19, 4294901760
  %v177 = vsub.f32 %v19, %v176
  %v178 = vand.u32 %v177, 4294901760
  %v179 = vsub.f32 %v177, %v178
  %v180 = vand.u32 %v179, 4294901760
  %181 = vmatpush1.msra.mxu0 %v180
  %182 = vmatprep.subr.mxu0 0.0
  %v183 = vand.u32 %v20, 4294901760
  %v184 = vsub.f32 %v20, %v183
  %v185 = vand.u32 %v184, 4294901760
  %v186 = vsub.f32 %v184, %v185
  %v187 = vand.u32 %v186, 4294901760
  %188 = vmatpush1.msra.mxu0 %v187
  %189 = vmatprep.subr.mxu0 0.0
  %v190 = vand.u32 %v21, 4294901760
  %v191 = vsub.f32 %v21, %v190
  %v192 = vand.u32 %v191, 4294901760
  %v193 = vsub.f32 %v191, %v192
  %v194 = vand.u32 %v193, 4294901760
  %195 = vmatpush1.msra.mxu0 %v194
  %196 = vmatprep.subr.mxu0 0.0
  %v197 = vand.u32 %v22, 4294901760
  %v198 = vsub.f32 %v22, %v197
  %v199 = vand.u32 %v198, 4294901760
  %v200 = vsub.f32 %v198, %v199
  %v201 = vand.u32 %v200, 4294901760
  %202 = vmatpush1.msra.mxu0 %v201
  %203 = vmatprep.subr.mxu0 0.0
  %v204 = vand.u32 %v23, 4294901760
  %v205 = vsub.f32 %v23, %v204
  %v206 = vand.u32 %v205, 4294901760
  %v207 = vsub.f32 %v205, %v206
  %v208 = vand.u32 %v207, 4294901760
  %209 = vmatpush1.msra.mxu0 %v208
  %210 = vmatprep.subr.mxu0 0.0
  %v211 = vand.u32 %v24, 4294901760
  %v212 = vsub.f32 %v24, %v211
  %v213 = vand.u32 %v212, 4294901760
  %v214 = vsub.f32 %v212, %v213
  %v215 = vand.u32 %v214, 4294901760
  %216 = vmatpush1.msra.mxu0 %v215
  %217 = vmatprep.subr.mxu0 0.0
  %v218 = vand.u32 %v25, 4294901760
  %v219 = vsub.f32 %v25, %v218
  %v220 = vand.u32 %v219, 4294901760
  %v221 = vsub.f32 %v219, %v220
  %v222 = vand.u32 %v221, 4294901760
  %223 = vmatpush1.msra.mxu0 %v222
  %224 = vmatprep.subr.mxu0 0.0
  %v225 = vand.u32 %v26, 4294901760
  %v226 = vsub.f32 %v26, %v225
  %v227 = vand.u32 %v226, 4294901760
  %v228 = vsub.f32 %v226, %v227
  %v229 = vand.u32 %v228, 4294901760
  %230 = vmatpush1.msra.mxu0 %v229
  %231 = vmatprep.subr.mxu0 0.0
  %232 = vmatpush1.msra.mxu0 0.0
  %233 = vmatprep.subr.mxu0 0.0
  %234 = vmatpush1.msra.mxu0 0.0
  %235 = vmatprep.subr.mxu0 0.0
  %236 = vmatpush1.msra.mxu0 0.0
  %237 = vmatprep.subr.mxu0 0.0
  %238 = vmatpush1.msra.mxu0 0.0
  %239 = vmatprep.subr.mxu0 0.0
  %240 = vmatpush1.msra.mxu0 0.0
  %241 = vmatprep.subr.mxu0 0.0
  %242 = vmatpush1.msra.mxu0 0.0
  %243 = vmatprep.subr.mxu0 0.0
  %244 = vmatpush1.msra.mxu0 0.0
  %245 = vmatprep.subr.mxu0 0.0
  %246 = vmatpush1.msra.mxu0 0.0
  %247 = vmatprep.subr.mxu0 0.0
  %248 = vmatpush1.msra.mxu0 0.0
  %249 = vmatprep.subr.mxu0 0.0
  %250 = vmatpush1.msra.mxu0 0.0
  %251 = vmatprep.subr.mxu0 0.0
  %252 = vmatpush1.msra.mxu0 0.0
  %253 = vmatprep.subr.mxu0 0.0
  %254 = vmatpush1.msra.mxu0 0.0
  %255 = vmatprep.subr.mxu0 0.0
  %256 = vmatpush1.msra.mxu0 0.0
  %257 = vmatprep.subr.mxu0 0.0
  %258 = vmatpush1.msra.mxu0 0.0
  %259 = vmatprep.subr.mxu0 0.0
  %260 = vmatpush1.msra.mxu0 0.0
  %261 = vmatprep.subr.mxu0 0.0
  %262 = vmatpush1.msra.mxu0 0.0
  %263 = vmatprep.mubr.f32.mxu0 0.0
  %v264 = vand.u32 %v27, 4294901760
  %265 = vmatmul.mubr.f32.gmra.mrb[0].mxu0 %v264
  %v266 = vpop.f32.mrb[0].mxu0
  %v267 = vadd.f32 %v116, %v266
  %v268 = vpop.f32.mrb[0].mxu0
  %269 = vdwg.mxu0
  %270 = vmatprep.subr.mxu0 0.0
  %v271 = vand.u32 %v11, 4294901760
  %v272 = vsub.f32 %v11, %v271
  %273 = vmatpush1.msra.mxu0 %v272
  %274 = vmatprep.subr.mxu0 0.0
  %v275 = vand.u32 %v12, 4294901760
  %v276 = vsub.f32 %v12, %v275
  %277 = vmatpush1.msra.mxu0 %v276
  %278 = vmatprep.subr.mxu0 0.0
  %v279 = vand.u32 %v13, 4294901760
  %v280 = vsub.f32 %v13, %v279
  %281 = vmatpush1.msra.mxu0 %v280
  %282 = vmatprep.subr.mxu0 0.0
  %v283 = vand.u32 %v14, 4294901760
  %v284 = vsub.f32 %v14, %v283
  %285 = vmatpush1.msra.mxu0 %v284
  %286 = vmatprep.subr.mxu0 0.0
  %v287 = vand.u32 %v15, 4294901760
  %v288 = vsub.f32 %v15, %v287
  %289 = vmatpush1.msra.mxu0 %v288
  %290 = vmatprep.subr.mxu0 0.0
  %v291 = vand.u32 %v16, 4294901760
  %v292 = vsub.f32 %v16, %v291
  %293 = vmatpush1.msra.mxu0 %v292
  %294 = vmatprep.subr.mxu0 0.0
  %v295 = vand.u32 %v17, 4294901760
  %v296 = vsub.f32 %v17, %v295
  %297 = vmatpush1.msra.mxu0 %v296
  %298 = vmatprep.subr.mxu0 0.0
  %v299 = vand.u32 %v18, 4294901760
  %v300 = vsub.f32 %v18, %v299
  %301 = vmatpush1.msra.mxu0 %v300
  %302 = vmatprep.subr.mxu0 0.0
  %v303 = vand.u32 %v19, 4294901760
  %v304 = vsub.f32 %v19, %v303
  %305 = vmatpush1.msra.mxu0 %v304
  %306 = vmatprep.subr.mxu0 0.0
  %v307 = vand.u32 %v20, 4294901760
  %v308 = vsub.f32 %v20, %v307
  %309 = vmatpush1.msra.mxu0 %v308
  %310 = vmatprep.subr.mxu0 0.0
  %v311 = vand.u32 %v21, 4294901760
  %v312 = vsub.f32 %v21, %v311
  %313 = vmatpush1.msra.mxu0 %v312
  %314 = vmatprep.subr.mxu0 0.0
  %v315 = vand.u32 %v22, 4294901760
  %v316 = vsub.f32 %v22, %v315
  %317 = vmatpush1.msra.mxu0 %v316
  %318 = vmatprep.subr.mxu0 0.0
  %v319 = vand.u32 %v23, 4294901760
  %v320 = vsub.f32 %v23, %v319
  %321 = vmatpush1.msra.mxu0 %v320
  %322 = vmatprep.subr.mxu0 0.0
  %v323 = vand.u32 %v24, 4294901760
  %v324 = vsub.f32 %v24, %v323
  %325 = vmatpush1.msra.mxu0 %v324
  %326 = vmatprep.subr.mxu0 0.0
  %v327 = vand.u32 %v25, 4294901760
  %v328 = vsub.f32 %v25, %v327
  %329 = vmatpush1.msra.mxu0 %v328
  %330 = vmatprep.subr.mxu0 0.0
  %v331 = vand.u32 %v26, 4294901760
  %v332 = vsub.f32 %v26, %v331
  %333 = vmatpush1.msra.mxu0 %v332
  %334 = vmatprep.subr.mxu0 0.0
  %335 = vmatpush1.msra.mxu0 0.0
  %336 = vmatprep.subr.mxu0 0.0
  %337 = vmatpush1.msra.mxu0 0.0
  %338 = vmatprep.subr.mxu0 0.0
  %339 = vmatpush1.msra.mxu0 0.0
  %340 = vmatprep.subr.mxu0 0.0
  %341 = vmatpush1.msra.mxu0 0.0
  %342 = vmatprep.subr.mxu0 0.0
  %343 = vmatpush1.msra.mxu0 0.0
  %344 = vmatprep.subr.mxu0 0.0
  %345 = vmatpush1.msra.mxu0 0.0
  %346 = vmatprep.subr.mxu0 0.0
  %347 = vmatpush1.msra.mxu0 0.0
  %348 = vmatprep.subr.mxu0 0.0
  %349 = vmatpush1.msra.mxu0 0.0
  %350 = vmatprep.subr.mxu0 0.0
  %351 = vmatpush1.msra.mxu0 0.0
  %352 = vmatprep.subr.mxu0 0.0
  %353 = vmatpush1.msra.mxu0 0.0
  %354 = vmatprep.subr.mxu0 0.0
  %355 = vmatpush1.msra.mxu0 0.0
  %356 = vmatprep.subr.mxu0 0.0
  %357 = vmatpush1.msra.mxu0 0.0
  %358 = vmatprep.subr.mxu0 0.0
  %359 = vmatpush1.msra.mxu0 0.0
  %360 = vmatprep.subr.mxu0 0.0
  %361 = vmatpush1.msra.mxu0 0.0
  %362 = vmatprep.subr.mxu0 0.0
  %363 = vmatpush1.msra.mxu0 0.0
  %364 = vmatprep.subr.mxu0 0.0
  %365 = vmatpush1.msra.mxu0 0.0
  %366 = vmatprep.mubr.f32.mxu0 0.0
  %v367 = vand.u32 %v27, 4294901760
  %v368 = vsub.f32 %v27, %v367
  %369 = vmatmul.mubr.f32.gmra.mrb[0].mxu0 %v368
  %v370 = vpop.f32.mrb[0].mxu0
  %v371 = vadd.f32 %v267, %v370
  %v372 = vpop.f32.mrb[0].mxu0
  %373 = vdwg.mxu0
  %374 = vmatprep.subr.mxu0 0.0
  %v375 = vand.u32 %v11, 4294901760
  %376 = vmatpush1.msra.mxu0 %v375
  %377 = vmatprep.subr.mxu0 0.0
  %v378 = vand.u32 %v12, 4294901760
  %379 = vmatpush1.msra.mxu0 %v378
  %380 = vmatprep.subr.mxu0 0.0
  %v381 = vand.u32 %v13, 4294901760
  %382 = vmatpush1.msra.mxu0 %v381
  %383 = vmatprep.subr.mxu0 0.0
  %v384 = vand.u32 %v14, 4294901760
  %385 = vmatpush1.msra.mxu0 %v384
  %386 = vmatprep.subr.mxu0 0.0
  %v387 = vand.u32 %v15, 4294901760
  %388 = vmatpush1.msra.mxu0 %v387
  %389 = vmatprep.subr.mxu0 0.0
  %v390 = vand.u32 %v16, 4294901760
  %391 = vmatpush1.msra.mxu0 %v390
  %392 = vmatprep.subr.mxu0 0.0
  %v393 = vand.u32 %v17, 4294901760
  %394 = vmatpush1.msra.mxu0 %v393
  %395 = vmatprep.subr.mxu0 0.0
  %v396 = vand.u32 %v18, 4294901760
  %397 = vmatpush1.msra.mxu0 %v396
  %398 = vmatprep.subr.mxu0 0.0
  %v399 = vand.u32 %v19, 4294901760
  %400 = vmatpush1.msra.mxu0 %v399
  %401 = vmatprep.subr.mxu0 0.0
  %v402 = vand.u32 %v20, 4294901760
  %403 = vmatpush1.msra.mxu0 %v402
  %404 = vmatprep.subr.mxu0 0.0
  %v405 = vand.u32 %v21, 4294901760
  %406 = vmatpush1.msra.mxu0 %v405
  %407 = vmatprep.subr.mxu0 0.0
  %v408 = vand.u32 %v22, 4294901760
  %409 = vmatpush1.msra.mxu0 %v408
  %410 = vmatprep.subr.mxu0 0.0
  %v411 = vand.u32 %v23, 4294901760
  %412 = vmatpush1.msra.mxu0 %v411
  %413 = vmatprep.subr.mxu0 0.0
  %v414 = vand.u32 %v24, 4294901760
  %415 = vmatpush1.msra.mxu0 %v414
  %416 = vmatprep.subr.mxu0 0.0
  %v417 = vand.u32 %v25, 4294901760
  %418 = vmatpush1.msra.mxu0 %v417
  %419 = vmatprep.subr.mxu0 0.0
  %v420 = vand.u32 %v26, 4294901760
  %421 = vmatpush1.msra.mxu0 %v420
  %422 = vmatprep.subr.mxu0 0.0
  %423 = vmatpush1.msra.mxu0 0.0
  %424 = vmatprep.subr.mxu0 0.0
  %425 = vmatpush1.msra.mxu0 0.0
  %426 = vmatprep.subr.mxu0 0.0
  %427 = vmatpush1.msra.mxu0 0.0
  %428 = vmatprep.subr.mxu0 0.0
  %429 = vmatpush1.msra.mxu0 0.0
  %430 = vmatprep.subr.mxu0 0.0
  %431 = vmatpush1.msra.mxu0 0.0
  %432 = vmatprep.subr.mxu0 0.0
  %433 = vmatpush1.msra.mxu0 0.0
  %434 = vmatprep.subr.mxu0 0.0
  %435 = vmatpush1.msra.mxu0 0.0
  %436 = vmatprep.subr.mxu0 0.0
  %437 = vmatpush1.msra.mxu0 0.0
  %438 = vmatprep.subr.mxu0 0.0
  %439 = vmatpush1.msra.mxu0 0.0
  %440 = vmatprep.subr.mxu0 0.0
  %441 = vmatpush1.msra.mxu0 0.0
  %442 = vmatprep.subr.mxu0 0.0
  %443 = vmatpush1.msra.mxu0 0.0
  %444 = vmatprep.subr.mxu0 0.0
  %445 = vmatpush1.msra.mxu0 0.0
  %446 = vmatprep.subr.mxu0 0.0
  %447 = vmatpush1.msra.mxu0 0.0
  %448 = vmatprep.subr.mxu0 0.0
  %449 = vmatpush1.msra.mxu0 0.0
  %450 = vmatprep.subr.mxu0 0.0
  %451 = vmatpush1.msra.mxu0 0.0
  %452 = vmatprep.subr.mxu0 0.0
  %453 = vmatpush1.msra.mxu0 0.0
  %454 = vmatprep.mubr.f32.mxu0 0.0
  %v455 = vand.u32 %v27, 4294901760
  %v456 = vsub.f32 %v27, %v455
  %v457 = vand.u32 %v456, 4294901760
  %458 = vmatmul.mubr.f32.gmra.mrb[0].mxu0 %v457
  %v459 = vpop.f32.mrb[0].mxu0
  %v460 = vadd.f32 %v371, %v459
  %v461 = vpop.f32.mrb[0].mxu0
  %462 = vdwg.mxu0
  %463 = vmatprep.subr.mxu0 0.0
  %v464 = vand.u32 %v11, 4294901760
  %v465 = vsub.f32 %v11, %v464
  %v466 = vand.u32 %v465, 4294901760
  %467 = vmatpush1.msra.mxu0 %v466
  %468 = vmatprep.subr.mxu0 0.0
  %v469 = vand.u32 %v12, 4294901760
  %v470 = vsub.f32 %v12, %v469
  %v471 = vand.u32 %v470, 4294901760
  %472 = vmatpush1.msra.mxu0 %v471
  %473 = vmatprep.subr.mxu0 0.0
  %v474 = vand.u32 %v13, 4294901760
  %v475 = vsub.f32 %v13, %v474
  %v476 = vand.u32 %v475, 4294901760
  %477 = vmatpush1.msra.mxu0 %v476
  %478 = vmatprep.subr.mxu0 0.0
  %v479 = vand.u32 %v14, 4294901760
  %v480 = vsub.f32 %v14, %v479
  %v481 = vand.u32 %v480, 4294901760
  %482 = vmatpush1.msra.mxu0 %v481
  %483 = vmatprep.subr.mxu0 0.0
  %v484 = vand.u32 %v15, 4294901760
  %v485 = vsub.f32 %v15, %v484
  %v486 = vand.u32 %v485, 4294901760
  %487 = vmatpush1.msra.mxu0 %v486
  %488 = vmatprep.subr.mxu0 0.0
  %v489 = vand.u32 %v16, 4294901760
  %v490 = vsub.f32 %v16, %v489
  %v491 = vand.u32 %v490, 4294901760
  %492 = vmatpush1.msra.mxu0 %v491
  %493 = vmatprep.subr.mxu0 0.0
  %v494 = vand.u32 %v17, 4294901760
  %v495 = vsub.f32 %v17, %v494
  %v496 = vand.u32 %v495, 4294901760
  %497 = vmatpush1.msra.mxu0 %v496
  %498 = vmatprep.subr.mxu0 0.0
  %v499 = vand.u32 %v18, 4294901760
  %v500 = vsub.f32 %v18, %v499
  %v501 = vand.u32 %v500, 4294901760
  %502 = vmatpush1.msra.mxu0 %v501
  %503 = vmatprep.subr.mxu0 0.0
  %v504 = vand.u32 %v19, 4294901760
  %v505 = vsub.f32 %v19, %v504
  %v506 = vand.u32 %v505, 4294901760
  %507 = vmatpush1.msra.mxu0 %v506
  %508 = vmatprep.subr.mxu0 0.0
  %v509 = vand.u32 %v20, 4294901760
  %v510 = vsub.f32 %v20, %v509
  %v511 = vand.u32 %v510, 4294901760
  %512 = vmatpush1.msra.mxu0 %v511
  %513 = vmatprep.subr.mxu0 0.0
  %v514 = vand.u32 %v21, 4294901760
  %v515 = vsub.f32 %v21, %v514
  %v516 = vand.u32 %v515, 4294901760
  %517 = vmatpush1.msra.mxu0 %v516
  %518 = vmatprep.subr.mxu0 0.0
  %v519 = vand.u32 %v22, 4294901760
  %v520 = vsub.f32 %v22, %v519
  %v521 = vand.u32 %v520, 4294901760
  %522 = vmatpush1.msra.mxu0 %v521
  %523 = vmatprep.subr.mxu0 0.0
  %v524 = vand.u32 %v23, 4294901760
  %v525 = vsub.f32 %v23, %v524
  %v526 = vand.u32 %v525, 4294901760
  %527 = vmatpush1.msra.mxu0 %v526
  %528 = vmatprep.subr.mxu0 0.0
  %v529 = vand.u32 %v24, 4294901760
  %v530 = vsub.f32 %v24, %v529
  %v531 = vand.u32 %v530, 4294901760
  %532 = vmatpush1.msra.mxu0 %v531
  %533 = vmatprep.subr.mxu0 0.0
  %v534 = vand.u32 %v25, 4294901760
  %v535 = vsub.f32 %v25, %v534
  %v536 = vand.u32 %v535, 4294901760
  %537 = vmatpush1.msra.mxu0 %v536
  %538 = vmatprep.subr.mxu0 0.0
  %v539 = vand.u32 %v26, 4294901760
  %v540 = vsub.f32 %v26, %v539
  %v541 = vand.u32 %v540, 4294901760
  %542 = vmatpush1.msra.mxu0 %v541
  %543 = vmatprep.subr.mxu0 0.0
  %544 = vmatpush1.msra.mxu0 0.0
  %545 = vmatprep.subr.mxu0 0.0
  %546 = vmatpush1.msra.mxu0 0.0
  %547 = vmatprep.subr.mxu0 0.0
  %548 = vmatpush1.msra.mxu0 0.0
  %549 = vmatprep.subr.mxu0 0.0
  %550 = vmatpush1.msra.mxu0 0.0
  %551 = vmatprep.subr.mxu0 0.0
  %552 = vmatpush1.msra.mxu0 0.0
  %553 = vmatprep.subr.mxu0 0.0
  %554 = vmatpush1.msra.mxu0 0.0
  %555 = vmatprep.subr.mxu0 0.0
  %556 = vmatpush1.msra.mxu0 0.0
  %557 = vmatprep.subr.mxu0 0.0
  %558 = vmatpush1.msra.mxu0 0.0
  %559 = vmatprep.subr.mxu0 0.0
  %560 = vmatpush1.msra.mxu0 0.0
  %561 = vmatprep.subr.mxu0 0.0
  %562 = vmatpush1.msra.mxu0 0.0
  %563 = vmatprep.subr.mxu0 0.0
  %564 = vmatpush1.msra.mxu0 0.0
  %565 = vmatprep.subr.mxu0 0.0
  %566 = vmatpush1.msra.mxu0 0.0
  %567 = vmatprep.subr.mxu0 0.0
  %568 = vmatpush1.msra.mxu0 0.0
  %569 = vmatprep.subr.mxu0 0.0
  %570 = vmatpush1.msra.mxu0 0.0
  %571 = vmatprep.subr.mxu0 0.0
  %572 = vmatpush1.msra.mxu0 0.0
  %573 = vmatprep.subr.mxu0 0.0
  %574 = vmatpush1.msra.mxu0 0.0
  %575 = vmatprep.mubr.f32.mxu0 0.0
  %v576 = vand.u32 %v27, 4294901760
  %577 = vmatmul.mubr.f32.gmra.mrb[0].mxu0 %v576
  %v578 = vpop.f32.mrb[0].mxu0
  %v579 = vadd.f32 %v460, %v578
  %v580 = vpop.f32.mrb[0].mxu0
  %581 = vdwg.mxu0
  %582 = vmatprep.subr.mxu0 0.0
  %v583 = vand.u32 %v11, 4294901760
  %584 = vmatpush1.msra.mxu0 %v583
  %585 = vmatprep.subr.mxu0 0.0
  %v586 = vand.u32 %v12, 4294901760
  %587 = vmatpush1.msra.mxu0 %v586
  %588 = vmatprep.subr.mxu0 0.0
  %v589 = vand.u32 %v13, 4294901760
  %590 = vmatpush1.msra.mxu0 %v589
  %591 = vmatprep.subr.mxu0 0.0
  %v592 = vand.u32 %v14, 4294901760
  %593 = vmatpush1.msra.mxu0 %v592
  %594 = vmatprep.subr.mxu0 0.0
  %v595 = vand.u32 %v15, 4294901760
  %596 = vmatpush1.msra.mxu0 %v595
  %597 = vmatprep.subr.mxu0 0.0
  %v598 = vand.u32 %v16, 4294901760
  %599 = vmatpush1.msra.mxu0 %v598
  %600 = vmatprep.subr.mxu0 0.0
  %v601 = vand.u32 %v17, 4294901760
  %602 = vmatpush1.msra.mxu0 %v601
  %603 = vmatprep.subr.mxu0 0.0
  %v604 = vand.u32 %v18, 4294901760
  %605 = vmatpush1.msra.mxu0 %v604
  %606 = vmatprep.subr.mxu0 0.0
  %v607 = vand.u32 %v19, 4294901760
  %608 = vmatpush1.msra.mxu0 %v607
  %609 = vmatprep.subr.mxu0 0.0
  %v610 = vand.u32 %v20, 4294901760
  %611 = vmatpush1.msra.mxu0 %v610
  %612 = vmatprep.subr.mxu0 0.0
  %v613 = vand.u32 %v21, 4294901760
  %614 = vmatpush1.msra.mxu0 %v613
  %615 = vmatprep.subr.mxu0 0.0
  %v616 = vand.u32 %v22, 4294901760
  %617 = vmatpush1.msra.mxu0 %v616
  %618 = vmatprep.subr.mxu0 0.0
  %v619 = vand.u32 %v23, 4294901760
  %620 = vmatpush1.msra.mxu0 %v619
  %621 = vmatprep.subr.mxu0 0.0
  %v622 = vand.u32 %v24, 4294901760
  %623 = vmatpush1.msra.mxu0 %v622
  %624 = vmatprep.subr.mxu0 0.0
  %v625 = vand.u32 %v25, 4294901760
  %626 = vmatpush1.msra.mxu0 %v625
  %627 = vmatprep.subr.mxu0 0.0
  %v628 = vand.u32 %v26, 4294901760
  %629 = vmatpush1.msra.mxu0 %v628
  %630 = vmatprep.subr.mxu0 0.0
  %631 = vmatpush1.msra.mxu0 0.0
  %632 = vmatprep.subr.mxu0 0.0
  %633 = vmatpush1.msra.mxu0 0.0
  %634 = vmatprep.subr.mxu0 0.0
  %635 = vmatpush1.msra.mxu0 0.0
  %636 = vmatprep.subr.mxu0 0.0
  %637 = vmatpush1.msra.mxu0 0.0
  %638 = vmatprep.subr.mxu0 0.0
  %639 = vmatpush1.msra.mxu0 0.0
  %640 = vmatprep.subr.mxu0 0.0
  %641 = vmatpush1.msra.mxu0 0.0
  %642 = vmatprep.subr.mxu0 0.0
  %643 = vmatpush1.msra.mxu0 0.0
  %644 = vmatprep.subr.mxu0 0.0
  %645 = vmatpush1.msra.mxu0 0.0
  %646 = vmatprep.subr.mxu0 0.0
  %647 = vmatpush1.msra.mxu0 0.0
  %648 = vmatprep.subr.mxu0 0.0
  %649 = vmatpush1.msra.mxu0 0.0
  %650 = vmatprep.subr.mxu0 0.0
  %651 = vmatpush1.msra.mxu0 0.0
  %652 = vmatprep.subr.mxu0 0.0
  %653 = vmatpush1.msra.mxu0 0.0
  %654 = vmatprep.subr.mxu0 0.0
  %655 = vmatpush1.msra.mxu0 0.0
  %656 = vmatprep.subr.mxu0 0.0
  %657 = vmatpush1.msra.mxu0 0.0
  %658 = vmatprep.subr.mxu0 0.0
  %659 = vmatpush1.msra.mxu0 0.0
  %660 = vmatprep.subr.mxu0 0.0
  %661 = vmatpush1.msra.mxu0 0.0
  %662 = vmatprep.mubr.f32.mxu0 0.0
  %v663 = vand.u32 %v27, 4294901760
  %664 = vmatmul.mubr.f32.gmra.mrb[0].mxu0 %v663
  %v665 = vpop.f32.mrb[0].mxu0
  %v666 = vadd.f32 %v579, %v665
  %v667 = vpop.f32.mrb[0].mxu0
  %668 = vdwg.mxu0
  %v669 = vmax.f32 %v666, 0.0
  %671 = vrot.lane.b32.xlu0 %v669, 112
  %v672 = vpop.permute.xlu0 %671
  %v674 = vmax.f32 %v669, %v672
  %675 = vrot.lane.b32.xlu0 %v669, 96
  %v676 = vpop.permute.xlu0 %675
  %v678 = vmax.f32 %v674, %v676
  %v679 = vld [vmem:[%s1 + $0x8] sm:$0xff]
  %v680 = vld [vmem:[%s1 + $0x10] sm:$0xff]
  %v681 = vld [vmem:[%s1 + $0x18] sm:$0xff]
  %v682 = vld [vmem:[%s1 + $0x20] sm:$0x1]
  %v683 = vlaneseq
  %v684 = vshrl.u32 %v683, 7
  %v685 = vsub.s32 0, %v684
  %v686 = vrot.slane %v682, %v685
  %vm687 = vcmask 64512
  %v689 = vsel %vm687, %v678, 0
  %691 = vmatprep.subr.mxu0 0.0
  %v692 = vand.u32 %v679, 4294901760
  %693 = vmatpush1.msra.mxu0 %v692
  %694 = vmatprep.subr.mxu0 0.0
  %695 = vmatpush1.msra.mxu0 0.0
  %696 = vmatprep.subr.mxu0 0.0
  %697 = vmatpush1.msra.mxu0 0.0
  %698 = vmatprep.subr.mxu0 0.0
  %699 = vmatpush1.msra.mxu0 0.0
  %700 = vmatprep.subr.mxu0 0.0
  %701 = vmatpush1.msra.mxu0 0.0
  %702 = vmatprep.subr.mxu0 0.0
  %703 = vmatpush1.msra.mxu0 0.0
  %704 = vmatprep.subr.mxu0 0.0
  %705 = vmatpush1.msra.mxu0 0.0
  %706 = vmatprep.subr.mxu0 0.0
  %707 = vmatpush1.msra.mxu0 0.0
  %708 = vmatprep.subr.mxu0 0.0
  %709 = vmatpush1.msra.mxu0 0.0
  %710 = vmatprep.subr.mxu0 0.0
  %711 = vmatpush1.msra.mxu0 0.0
  %712 = vmatprep.subr.mxu0 0.0
  %713 = vmatpush1.msra.mxu0 0.0
  %714 = vmatprep.subr.mxu0 0.0
  %715 = vmatpush1.msra.mxu0 0.0
  %716 = vmatprep.subr.mxu0 0.0
  %717 = vmatpush1.msra.mxu0 0.0
  %718 = vmatprep.subr.mxu0 0.0
  %719 = vmatpush1.msra.mxu0 0.0
  %720 = vmatprep.subr.mxu0 0.0
  %721 = vmatpush1.msra.mxu0 0.0
  %722 = vmatprep.subr.mxu0 0.0
  %723 = vmatpush1.msra.mxu0 0.0
  %724 = vmatprep.subr.mxu0 0.0
  %725 = vmatpush1.msra.mxu0 0.0
  %726 = vmatprep.subr.mxu0 0.0
  %727 = vmatpush1.msra.mxu0 0.0
  %728 = vmatprep.subr.mxu0 0.0
  %729 = vmatpush1.msra.mxu0 0.0
  %730 = vmatprep.subr.mxu0 0.0
  %731 = vmatpush1.msra.mxu0 0.0
  %732 = vmatprep.subr.mxu0 0.0
  %733 = vmatpush1.msra.mxu0 0.0
  %734 = vmatprep.subr.mxu0 0.0
  %735 = vmatpush1.msra.mxu0 0.0
  %736 = vmatprep.subr.mxu0 0.0
  %737 = vmatpush1.msra.mxu0 0.0
  %738 = vmatprep.subr.mxu0 0.0
  %739 = vmatpush1.msra.mxu0 0.0
  %740 = vmatprep.subr.mxu0 0.0
  %741 = vmatpush1.msra.mxu0 0.0
  %742 = vmatprep.subr.mxu0 0.0
  %743 = vmatpush1.msra.mxu0 0.0
  %744 = vmatprep.subr.mxu0 0.0
  %745 = vmatpush1.msra.mxu0 0.0
  %746 = vmatprep.subr.mxu0 0.0
  %747 = vmatpush1.msra.mxu0 0.0
  %748 = vmatprep.subr.mxu0 0.0
  %749 = vmatpush1.msra.mxu0 0.0
  %750 = vmatprep.subr.mxu0 0.0
  %751 = vmatpush1.msra.mxu0 0.0
  %752 = vmatprep.subr.mxu0 0.0
  %753 = vmatpush1.msra.mxu0 0.0
  %754 = vmatprep.subr.mxu0 0.0
  %755 = vmatpush1.msra.mxu0 0.0
  %756 = vmatprep.mubr.f32.mxu0 0.0
  %v757 = vand.u32 %v689, 4294901760
  %v758 = vsub.f32 %v689, %v757
  %v759 = vand.u32 %v758, 4294901760
  %v760 = vsub.f32 %v758, %v759
  %v761 = vand.u32 %v760, 4294901760
  %762 = vmatmul.mubr.f32.gmra.mrb[0].mxu0 %v761
  %v763 = vpop.f32.mrb[0].mxu0
  %v764 = vadd.f32 %v686, %v763
  %v765 = vpop.f32.mrb[0].mxu0
  %766 = vdwg.mxu0
  %767 = vmatprep.subr.mxu0 0.0
  %v768 = vand.u32 %v679, 4294901760
  %v769 = vsub.f32 %v679, %v768
  %v770 = vand.u32 %v769, 4294901760
  %v771 = vsub.f32 %v769, %v770
  %v772 = vand.u32 %v771, 4294901760
  %773 = vmatpush1.msra.mxu0 %v772
  %774 = vmatprep.subr.mxu0 0.0
  %775 = vmatpush1.msra.mxu0 0.0
  %776 = vmatprep.subr.mxu0 0.0
  %777 = vmatpush1.msra.mxu0 0.0
  %778 = vmatprep.subr.mxu0 0.0
  %779 = vmatpush1.msra.mxu0 0.0
  %780 = vmatprep.subr.mxu0 0.0
  %781 = vmatpush1.msra.mxu0 0.0
  %782 = vmatprep.subr.mxu0 0.0
  %783 = vmatpush1.msra.mxu0 0.0
  %784 = vmatprep.subr.mxu0 0.0
  %785 = vmatpush1.msra.mxu0 0.0
  %786 = vmatprep.subr.mxu0 0.0
  %787 = vmatpush1.msra.mxu0 0.0
  %788 = vmatprep.subr.mxu0 0.0
  %789 = vmatpush1.msra.mxu0 0.0
  %790 = vmatprep.subr.mxu0 0.0
  %791 = vmatpush1.msra.mxu0 0.0
  %792 = vmatprep.subr.mxu0 0.0
  %793 = vmatpush1.msra.mxu0 0.0
  %794 = vmatprep.subr.mxu0 0.0
  %795 = vmatpush1.msra.mxu0 0.0
  %796 = vmatprep.subr.mxu0 0.0
  %797 = vmatpush1.msra.mxu0 0.0
  %798 = vmatprep.subr.mxu0 0.0
  %799 = vmatpush1.msra.mxu0 0.0
  %800 = vmatprep.subr.mxu0 0.0
  %801 = vmatpush1.msra.mxu0 0.0
  %802 = vmatprep.subr.mxu0 0.0
  %803 = vmatpush1.msra.mxu0 0.0
  %804 = vmatprep.subr.mxu0 0.0
  %805 = vmatpush1.msra.mxu0 0.0
  %806 = vmatprep.subr.mxu0 0.0
  %807 = vmatpush1.msra.mxu0 0.0
  %808 = vmatprep.subr.mxu0 0.0
  %809 = vmatpush1.msra.mxu0 0.0
  %810 = vmatprep.subr.mxu0 0.0
  %811 = vmatpush1.msra.mxu0 0.0
  %812 = vmatprep.subr.mxu0 0.0
  %813 = vmatpush1.msra.mxu0 0.0
  %814 = vmatprep.subr.mxu0 0.0
  %815 = vmatpush1.msra.mxu0 0.0
  %816 = vmatprep.subr.mxu0 0.0
  %817 = vmatpush1.msra.mxu0 0.0
  %818 = vmatprep.subr.mxu0 0.0
  %819 = vmatpush1.msra.mxu0 0.0
  %820 = vmatprep.subr.mxu0 0.0
  %821 = vmatpush1.msra.mxu0 0.0
  %822 = vmatprep.subr.mxu0 0.0
  %823 = vmatpush1.msra.mxu0 0.0
  %824 = vmatprep.subr.mxu0 0.0
  %825 = vmatpush1.msra.mxu0 0.0
  %826 = vmatprep.subr.mxu0 0.0
  %827 = vmatpush1.msra.mxu0 0.0
  %828 = vmatprep.subr.mxu0 0.0
  %829 = vmatpush1.msra.mxu0 0.0
  %830 = vmatprep.subr.mxu0 0.0
  %831 = vmatpush1.msra.mxu0 0.0
  %832 = vmatprep.subr.mxu0 0.0
  %833 = vmatpush1.msra.mxu0 0.0
  %834 = vmatprep.subr.mxu0 0.0
  %835 = vmatpush1.msra.mxu0 0.0
  %836 = vmatprep.mubr.f32.mxu0 0.0
  %v837 = vand.u32 %v689, 4294901760
  %838 = vmatmul.mubr.f32.gmra.mrb[0].mxu0 %v837
  %v839 = vpop.f32.mrb[0].mxu0
  %v840 = vadd.f32 %v764, %v839
  %v841 = vpop.f32.mrb[0].mxu0
  %842 = vdwg.mxu0
  %843 = vmatprep.subr.mxu0 0.0
  %v844 = vand.u32 %v679, 4294901760
  %v845 = vsub.f32 %v679, %v844
  %846 = vmatpush1.msra.mxu0 %v845
  %847 = vmatprep.subr.mxu0 0.0
  %848 = vmatpush1.msra.mxu0 0.0
  %849 = vmatprep.subr.mxu0 0.0
  %850 = vmatpush1.msra.mxu0 0.0
  %851 = vmatprep.subr.mxu0 0.0
  %852 = vmatpush1.msra.mxu0 0.0
  %853 = vmatprep.subr.mxu0 0.0
  %854 = vmatpush1.msra.mxu0 0.0
  %855 = vmatprep.subr.mxu0 0.0
  %856 = vmatpush1.msra.mxu0 0.0
  %857 = vmatprep.subr.mxu0 0.0
  %858 = vmatpush1.msra.mxu0 0.0
  %859 = vmatprep.subr.mxu0 0.0
  %860 = vmatpush1.msra.mxu0 0.0
  %861 = vmatprep.subr.mxu0 0.0
  %862 = vmatpush1.msra.mxu0 0.0
  %863 = vmatprep.subr.mxu0 0.0
  %864 = vmatpush1.msra.mxu0 0.0
  %865 = vmatprep.subr.mxu0 0.0
  %866 = vmatpush1.msra.mxu0 0.0
  %867 = vmatprep.subr.mxu0 0.0
  %868 = vmatpush1.msra.mxu0 0.0
  %869 = vmatprep.subr.mxu0 0.0
  %870 = vmatpush1.msra.mxu0 0.0
  %871 = vmatprep.subr.mxu0 0.0
  %872 = vmatpush1.msra.mxu0 0.0
  %873 = vmatprep.subr.mxu0 0.0
  %874 = vmatpush1.msra.mxu0 0.0
  %875 = vmatprep.subr.mxu0 0.0
  %876 = vmatpush1.msra.mxu0 0.0
  %877 = vmatprep.subr.mxu0 0.0
  %878 = vmatpush1.msra.mxu0 0.0
  %879 = vmatprep.subr.mxu0 0.0
  %880 = vmatpush1.msra.mxu0 0.0
  %881 = vmatprep.subr.mxu0 0.0
  %882 = vmatpush1.msra.mxu0 0.0
  %883 = vmatprep.subr.mxu0 0.0
  %884 = vmatpush1.msra.mxu0 0.0
  %885 = vmatprep.subr.mxu0 0.0
  %886 = vmatpush1.msra.mxu0 0.0
  %887 = vmatprep.subr.mxu0 0.0
  %888 = vmatpush1.msra.mxu0 0.0
  %889 = vmatprep.subr.mxu0 0.0
  %890 = vmatpush1.msra.mxu0 0.0
  %891 = vmatprep.subr.mxu0 0.0
  %892 = vmatpush1.msra.mxu0 0.0
  %893 = vmatprep.subr.mxu0 0.0
  %894 = vmatpush1.msra.mxu0 0.0
  %895 = vmatprep.subr.mxu0 0.0
  %896 = vmatpush1.msra.mxu0 0.0
  %897 = vmatprep.subr.mxu0 0.0
  %898 = vmatpush1.msra.mxu0 0.0
  %899 = vmatprep.subr.mxu0 0.0
  %900 = vmatpush1.msra.mxu0 0.0
  %901 = vmatprep.subr.mxu0 0.0
  %902 = vmatpush1.msra.mxu0 0.0
  %903 = vmatprep.subr.mxu0 0.0
  %904 = vmatpush1.msra.mxu0 0.0
  %905 = vmatprep.subr.mxu0 0.0
  %906 = vmatpush1.msra.mxu0 0.0
  %907 = vmatprep.subr.mxu0 0.0
  %908 = vmatpush1.msra.mxu0 0.0
  %909 = vmatprep.mubr.f32.mxu0 0.0
  %v910 = vand.u32 %v689, 4294901760
  %v911 = vsub.f32 %v689, %v910
  %912 = vmatmul.mubr.f32.gmra.mrb[0].mxu0 %v911
  %v913 = vpop.f32.mrb[0].mxu0
  %v914 = vadd.f32 %v840, %v913
  %v915 = vpop.f32.mrb[0].mxu0
  %916 = vdwg.mxu0
  %917 = vmatprep.subr.mxu0 0.0
  %v918 = vand.u32 %v679, 4294901760
  %919 = vmatpush1.msra.mxu0 %v918
  %920 = vmatprep.subr.mxu0 0.0
  %921 = vmatpush1.msra.mxu0 0.0
  %922 = vmatprep.subr.mxu0 0.0
  %923 = vmatpush1.msra.mxu0 0.0
  %924 = vmatprep.subr.mxu0 0.0
  %925 = vmatpush1.msra.mxu0 0.0
  %926 = vmatprep.subr.mxu0 0.0
  %927 = vmatpush1.msra.mxu0 0.0
  %928 = vmatprep.subr.mxu0 0.0
  %929 = vmatpush1.msra.mxu0 0.0
  %930 = vmatprep.subr.mxu0 0.0
  %931 = vmatpush1.msra.mxu0 0.0
  %932 = vmatprep.subr.mxu0 0.0
  %933 = vmatpush1.msra.mxu0 0.0
  %934 = vmatprep.subr.mxu0 0.0
  %935 = vmatpush1.msra.mxu0 0.0
  %936 = vmatprep.subr.mxu0 0.0
  %937 = vmatpush1.msra.mxu0 0.0
  %938 = vmatprep.subr.mxu0 0.0
  %939 = vmatpush1.msra.mxu0 0.0
  %940 = vmatprep.subr.mxu0 0.0
  %941 = vmatpush1.msra.mxu0 0.0
  %942 = vmatprep.subr.mxu0 0.0
  %943 = vmatpush1.msra.mxu0 0.0
  %944 = vmatprep.subr.mxu0 0.0
  %945 = vmatpush1.msra.mxu0 0.0
  %946 = vmatprep.subr.mxu0 0.0
  %947 = vmatpush1.msra.mxu0 0.0
  %948 = vmatprep.subr.mxu0 0.0
  %949 = vmatpush1.msra.mxu0 0.0
  %950 = vmatprep.subr.mxu0 0.0
  %951 = vmatpush1.msra.mxu0 0.0
  %952 = vmatprep.subr.mxu0 0.0
  %953 = vmatpush1.msra.mxu0 0.0
  %954 = vmatprep.subr.mxu0 0.0
  %955 = vmatpush1.msra.mxu0 0.0
  %956 = vmatprep.subr.mxu0 0.0
  %957 = vmatpush1.msra.mxu0 0.0
  %958 = vmatprep.subr.mxu0 0.0
  %959 = vmatpush1.msra.mxu0 0.0
  %960 = vmatprep.subr.mxu0 0.0
  %961 = vmatpush1.msra.mxu0 0.0
  %962 = vmatprep.subr.mxu0 0.0
  %963 = vmatpush1.msra.mxu0 0.0
  %964 = vmatprep.subr.mxu0 0.0
  %965 = vmatpush1.msra.mxu0 0.0
  %966 = vmatprep.subr.mxu0 0.0
  %967 = vmatpush1.msra.mxu0 0.0
  %968 = vmatprep.subr.mxu0 0.0
  %969 = vmatpush1.msra.mxu0 0.0
  %970 = vmatprep.subr.mxu0 0.0
  %971 = vmatpush1.msra.mxu0 0.0
  %972 = vmatprep.subr.mxu0 0.0
  %973 = vmatpush1.msra.mxu0 0.0
  %974 = vmatprep.subr.mxu0 0.0
  %975 = vmatpush1.msra.mxu0 0.0
  %976 = vmatprep.subr.mxu0 0.0
  %977 = vmatpush1.msra.mxu0 0.0
  %978 = vmatprep.subr.mxu0 0.0
  %979 = vmatpush1.msra.mxu0 0.0
  %980 = vmatprep.subr.mxu0 0.0
  %981 = vmatpush1.msra.mxu0 0.0
  %982 = vmatprep.mubr.f32.mxu0 0.0
  %v983 = vand.u32 %v689, 4294901760
  %v984 = vsub.f32 %v689, %v983
  %v985 = vand.u32 %v984, 4294901760
  %986 = vmatmul.mubr.f32.gmra.mrb[0].mxu0 %v985
  %v987 = vpop.f32.mrb[0].mxu0
  %v988 = vadd.f32 %v914, %v987
  %v989 = vpop.f32.mrb[0].mxu0
  %990 = vdwg.mxu0
  %991 = vmatprep.subr.mxu0 0.0
  %v992 = vand.u32 %v679, 4294901760
  %v993 = vsub.f32 %v679, %v992
  %v994 = vand.u32 %v993, 4294901760
  %995 = vmatpush1.msra.mxu0 %v994
  %996 = vmatprep.subr.mxu0 0.0
  %997 = vmatpush1.msra.mxu0 0.0
  %998 = vmatprep.subr.mxu0 0.0
  %999 = vmatpush1.msra.mxu0 0.0
  %1000 = vmatprep.subr.mxu0 0.0
  %1001 = vmatpush1.msra.mxu0 0.0
  %1002 = vmatprep.subr.mxu0 0.0
  %1003 = vmatpush1.msra.mxu0 0.0
  %1004 = vmatprep.subr.mxu0 0.0
  %1005 = vmatpush1.msra.mxu0 0.0
  %1006 = vmatprep.subr.mxu0 0.0
  %1007 = vmatpush1.msra.mxu0 0.0
  %1008 = vmatprep.subr.mxu0 0.0
  %1009 = vmatpush1.msra.mxu0 0.0
  %1010 = vmatprep.subr.mxu0 0.0
  %1011 = vmatpush1.msra.mxu0 0.0
  %1012 = vmatprep.subr.mxu0 0.0
  %1013 = vmatpush1.msra.mxu0 0.0
  %1014 = vmatprep.subr.mxu0 0.0
  %1015 = vmatpush1.msra.mxu0 0.0
  %1016 = vmatprep.subr.mxu0 0.0
  %1017 = vmatpush1.msra.mxu0 0.0
  %1018 = vmatprep.subr.mxu0 0.0
  %1019 = vmatpush1.msra.mxu0 0.0
  %1020 = vmatprep.subr.mxu0 0.0
  %1021 = vmatpush1.msra.mxu0 0.0
  %1022 = vmatprep.subr.mxu0 0.0
  %1023 = vmatpush1.msra.mxu0 0.0
  %1024 = vmatprep.subr.mxu0 0.0
  %1025 = vmatpush1.msra.mxu0 0.0
  %1026 = vmatprep.subr.mxu0 0.0
  %1027 = vmatpush1.msra.mxu0 0.0
  %1028 = vmatprep.subr.mxu0 0.0
  %1029 = vmatpush1.msra.mxu0 0.0
  %1030 = vmatprep.subr.mxu0 0.0
  %1031 = vmatpush1.msra.mxu0 0.0
  %1032 = vmatprep.subr.mxu0 0.0
  %1033 = vmatpush1.msra.mxu0 0.0
  %1034 = vmatprep.subr.mxu0 0.0
  %1035 = vmatpush1.msra.mxu0 0.0
  %1036 = vmatprep.subr.mxu0 0.0
  %1037 = vmatpush1.msra.mxu0 0.0
  %1038 = vmatprep.subr.mxu0 0.0
  %1039 = vmatpush1.msra.mxu0 0.0
  %1040 = vmatprep.subr.mxu0 0.0
  %1041 = vmatpush1.msra.mxu0 0.0
  %1042 = vmatprep.subr.mxu0 0.0
  %1043 = vmatpush1.msra.mxu0 0.0
  %1044 = vmatprep.subr.mxu0 0.0
  %1045 = vmatpush1.msra.mxu0 0.0
  %1046 = vmatprep.subr.mxu0 0.0
  %1047 = vmatpush1.msra.mxu0 0.0
  %1048 = vmatprep.subr.mxu0 0.0
  %1049 = vmatpush1.msra.mxu0 0.0
  %1050 = vmatprep.subr.mxu0 0.0
  %1051 = vmatpush1.msra.mxu0 0.0
  %1052 = vmatprep.subr.mxu0 0.0
  %1053 = vmatpush1.msra.mxu0 0.0
  %1054 = vmatprep.subr.mxu0 0.0
  %1055 = vmatpush1.msra.mxu0 0.0
  %1056 = vmatprep.subr.mxu0 0.0
  %1057 = vmatpush1.msra.mxu0 0.0
  %1058 = vmatprep.mubr.f32.mxu0 0.0
  %v1059 = vand.u32 %v689, 4294901760
  %1060 = vmatmul.mubr.f32.gmra.mrb[0].mxu0 %v1059
  %v1061 = vpop.f32.mrb[0].mxu0
  %v1062 = vadd.f32 %v988, %v1061
  %v1063 = vpop.f32.mrb[0].mxu0
  %1064 = vdwg.mxu0
  %1065 = vmatprep.subr.mxu0 0.0
  %v1066 = vand.u32 %v679, 4294901760
  %1067 = vmatpush1.msra.mxu0 %v1066
  %1068 = vmatprep.subr.mxu0 0.0
  %1069 = vmatpush1.msra.mxu0 0.0
  %1070 = vmatprep.subr.mxu0 0.0
  %1071 = vmatpush1.msra.mxu0 0.0
  %1072 = vmatprep.subr.mxu0 0.0
  %1073 = vmatpush1.msra.mxu0 0.0
  %1074 = vmatprep.subr.mxu0 0.0
  %1075 = vmatpush1.msra.mxu0 0.0
  %1076 = vmatprep.subr.mxu0 0.0
  %1077 = vmatpush1.msra.mxu0 0.0
  %1078 = vmatprep.subr.mxu0 0.0
  %1079 = vmatpush1.msra.mxu0 0.0
  %1080 = vmatprep.subr.mxu0 0.0
  %1081 = vmatpush1.msra.mxu0 0.0
  %1082 = vmatprep.subr.mxu0 0.0
  %1083 = vmatpush1.msra.mxu0 0.0
  %1084 = vmatprep.subr.mxu0 0.0
  %1085 = vmatpush1.msra.mxu0 0.0
  %1086 = vmatprep.subr.mxu0 0.0
  %1087 = vmatpush1.msra.mxu0 0.0
  %1088 = vmatprep.subr.mxu0 0.0
  %1089 = vmatpush1.msra.mxu0 0.0
  %1090 = vmatprep.subr.mxu0 0.0
  %1091 = vmatpush1.msra.mxu0 0.0
  %1092 = vmatprep.subr.mxu0 0.0
  %1093 = vmatpush1.msra.mxu0 0.0
  %1094 = vmatprep.subr.mxu0 0.0
  %1095 = vmatpush1.msra.mxu0 0.0
  %1096 = vmatprep.subr.mxu0 0.0
  %1097 = vmatpush1.msra.mxu0 0.0
  %1098 = vmatprep.subr.mxu0 0.0
  %1099 = vmatpush1.msra.mxu0 0.0
  %1100 = vmatprep.subr.mxu0 0.0
  %1101 = vmatpush1.msra.mxu0 0.0
  %1102 = vmatprep.subr.mxu0 0.0
  %1103 = vmatpush1.msra.mxu0 0.0
  %1104 = vmatprep.subr.mxu0 0.0
  %1105 = vmatpush1.msra.mxu0 0.0
  %1106 = vmatprep.subr.mxu0 0.0
  %1107 = vmatpush1.msra.mxu0 0.0
  %1108 = vmatprep.subr.mxu0 0.0
  %1109 = vmatpush1.msra.mxu0 0.0
  %1110 = vmatprep.subr.mxu0 0.0
  %1111 = vmatpush1.msra.mxu0 0.0
  %1112 = vmatprep.subr.mxu0 0.0
  %1113 = vmatpush1.msra.mxu0 0.0
  %1114 = vmatprep.subr.mxu0 0.0
  %1115 = vmatpush1.msra.mxu0 0.0
  %1116 = vmatprep.subr.mxu0 0.0
  %1117 = vmatpush1.msra.mxu0 0.0
  %1118 = vmatprep.subr.mxu0 0.0
  %1119 = vmatpush1.msra.mxu0 0.0
  %1120 = vmatprep.subr.mxu0 0.0
  %1121 = vmatpush1.msra.mxu0 0.0
  %1122 = vmatprep.subr.mxu0 0.0
  %1123 = vmatpush1.msra.mxu0 0.0
  %1124 = vmatprep.subr.mxu0 0.0
  %1125 = vmatpush1.msra.mxu0 0.0
  %1126 = vmatprep.subr.mxu0 0.0
  %1127 = vmatpush1.msra.mxu0 0.0
  %1128 = vmatprep.subr.mxu0 0.0
  %1129 = vmatpush1.msra.mxu0 0.0
  %1130 = vmatprep.mubr.f32.mxu0 0.0
  %v1131 = vand.u32 %v689, 4294901760
  %1132 = vmatmul.mubr.f32.gmra.mrb[0].mxu0 %v1131
  %v1133 = vpop.f32.mrb[0].mxu0
  %v1134 = vadd.f32 %v1062, %v1133
  %v1135 = vpop.f32.mrb[0].mxu0
  %1136 = vdwg.mxu0
  %1137 = vrot.lane.b32.xlu0 %v678, 120
  %v1138 = vpop.permute.xlu0 %1137
  %v1139 = vsel %vm687, %v1138, 0
  %1141 = vmatprep.subr.mxu0 0.0
  %v1142 = vand.u32 %v679, 4294901760
  %1143 = vmatpush1.msra.mxu0 %v1142
  %1144 = vmatprep.subr.mxu0 0.0
  %1145 = vmatpush1.msra.mxu0 0.0
  %1146 = vmatprep.subr.mxu0 0.0
  %1147 = vmatpush1.msra.mxu0 0.0
  %1148 = vmatprep.subr.mxu0 0.0
  %1149 = vmatpush1.msra.mxu0 0.0
  %1150 = vmatprep.subr.mxu0 0.0
  %1151 = vmatpush1.msra.mxu0 0.0
  %1152 = vmatprep.subr.mxu0 0.0
  %1153 = vmatpush1.msra.mxu0 0.0
  %1154 = vmatprep.subr.mxu0 0.0
  %1155 = vmatpush1.msra.mxu0 0.0
  %1156 = vmatprep.subr.mxu0 0.0
  %1157 = vmatpush1.msra.mxu0 0.0
  %1158 = vmatprep.subr.mxu0 0.0
  %1159 = vmatpush1.msra.mxu0 0.0
  %1160 = vmatprep.subr.mxu0 0.0
  %1161 = vmatpush1.msra.mxu0 0.0
  %1162 = vmatprep.subr.mxu0 0.0
  %1163 = vmatpush1.msra.mxu0 0.0
  %1164 = vmatprep.subr.mxu0 0.0
  %1165 = vmatpush1.msra.mxu0 0.0
  %1166 = vmatprep.subr.mxu0 0.0
  %1167 = vmatpush1.msra.mxu0 0.0
  %1168 = vmatprep.subr.mxu0 0.0
  %1169 = vmatpush1.msra.mxu0 0.0
  %1170 = vmatprep.subr.mxu0 0.0
  %1171 = vmatpush1.msra.mxu0 0.0
  %1172 = vmatprep.subr.mxu0 0.0
  %1173 = vmatpush1.msra.mxu0 0.0
  %1174 = vmatprep.subr.mxu0 0.0
  %1175 = vmatpush1.msra.mxu0 0.0
  %1176 = vmatprep.subr.mxu0 0.0
  %1177 = vmatpush1.msra.mxu0 0.0
  %1178 = vmatprep.subr.mxu0 0.0
  %1179 = vmatpush1.msra.mxu0 0.0
  %1180 = vmatprep.subr.mxu0 0.0
  %1181 = vmatpush1.msra.mxu0 0.0
  %1182 = vmatprep.subr.mxu0 0.0
  %1183 = vmatpush1.msra.mxu0 0.0
  %1184 = vmatprep.subr.mxu0 0.0
  %1185 = vmatpush1.msra.mxu0 0.0
  %1186 = vmatprep.subr.mxu0 0.0
  %1187 = vmatpush1.msra.mxu0 0.0
  %1188 = vmatprep.subr.mxu0 0.0
  %1189 = vmatpush1.msra.mxu0 0.0
  %1190 = vmatprep.subr.mxu0 0.0
  %1191 = vmatpush1.msra.mxu0 0.0
  %1192 = vmatprep.subr.mxu0 0.0
  %1193 = vmatpush1.msra.mxu0 0.0
  %1194 = vmatprep.subr.mxu0 0.0
  %1195 = vmatpush1.msra.mxu0 0.0
  %1196 = vmatprep.subr.mxu0 0.0
  %1197 = vmatpush1.msra.mxu0 0.0
  %1198 = vmatprep.subr.mxu0 0.0
  %1199 = vmatpush1.msra.mxu0 0.0
  %1200 = vmatprep.subr.mxu0 0.0
  %1201 = vmatpush1.msra.mxu0 0.0
  %1202 = vmatprep.subr.mxu0 0.0
  %1203 = vmatpush1.msra.mxu0 0.0
  %1204 = vmatprep.subr.mxu0 0.0
  %1205 = vmatpush1.msra.mxu0 0.0
  %1206 = vmatprep.mubr.f32.mxu0 0.0
  %v1207 = vand.u32 %v1139, 4294901760
  %v1208 = vsub.f32 %v1139, %v1207
  %v1209 = vand.u32 %v1208, 4294901760
  %v1210 = vsub.f32 %v1208, %v1209
  %v1211 = vand.u32 %v1210, 4294901760
  %1212 = vmatmul.mubr.f32.gmra.mrb[0].mxu0 %v1211
  %v1213 = vpop.f32.mrb[0].mxu0
  %v1214 = vadd.f32 %v686, %v1213
  %v1215 = vpop.f32.mrb[0].mxu0
  %1216 = vdwg.mxu0
  %1217 = vmatprep.subr.mxu0 0.0
  %v1218 = vand.u32 %v679, 4294901760
  %v1219 = vsub.f32 %v679, %v1218
  %v1220 = vand.u32 %v1219, 4294901760
  %v1221 = vsub.f32 %v1219, %v1220
  %v1222 = vand.u32 %v1221, 4294901760
  %1223 = vmatpush1.msra.mxu0 %v1222
  %1224 = vmatprep.subr.mxu0 0.0
  %1225 = vmatpush1.msra.mxu0 0.0
  %1226 = vmatprep.subr.mxu0 0.0
  %1227 = vmatpush1.msra.mxu0 0.0
  %1228 = vmatprep.subr.mxu0 0.0
  %1229 = vmatpush1.msra.mxu0 0.0
  %1230 = vmatprep.subr.mxu0 0.0
  %1231 = vmatpush1.msra.mxu0 0.0
  %1232 = vmatprep.subr.mxu0 0.0
  %1233 = vmatpush1.msra.mxu0 0.0
  %1234 = vmatprep.subr.mxu0 0.0
  %1235 = vmatpush1.msra.mxu0 0.0
  %1236 = vmatprep.subr.mxu0 0.0
  %1237 = vmatpush1.msra.mxu0 0.0
  %1238 = vmatprep.subr.mxu0 0.0
  %1239 = vmatpush1.msra.mxu0 0.0
  %1240 = vmatprep.subr.mxu0 0.0
  %1241 = vmatpush1.msra.mxu0 0.0
  %1242 = vmatprep.subr.mxu0 0.0
  %1243 = vmatpush1.msra.mxu0 0.0
  %1244 = vmatprep.subr.mxu0 0.0
  %1245 = vmatpush1.msra.mxu0 0.0
  %1246 = vmatprep.subr.mxu0 0.0
  %1247 = vmatpush1.msra.mxu0 0.0
  %1248 = vmatprep.subr.mxu0 0.0
  %1249 = vmatpush1.msra.mxu0 0.0
  %1250 = vmatprep.subr.mxu0 0.0
  %1251 = vmatpush1.msra.mxu0 0.0
  %1252 = vmatprep.subr.mxu0 0.0
  %1253 = vmatpush1.msra.mxu0 0.0
  %1254 = vmatprep.subr.mxu0 0.0
  %1255 = vmatpush1.msra.mxu0 0.0
  %1256 = vmatprep.subr.mxu0 0.0
  %1257 = vmatpush1.msra.mxu0 0.0
  %1258 = vmatprep.subr.mxu0 0.0
  %1259 = vmatpush1.msra.mxu0 0.0
  %1260 = vmatprep.subr.mxu0 0.0
  %1261 = vmatpush1.msra.mxu0 0.0
  %1262 = vmatprep.subr.mxu0 0.0
  %1263 = vmatpush1.msra.mxu0 0.0
  %1264 = vmatprep.subr.mxu0 0.0
  %1265 = vmatpush1.msra.mxu0 0.0
  %1266 = vmatprep.subr.mxu0 0.0
  %1267 = vmatpush1.msra.mxu0 0.0
  %1268 = vmatprep.subr.mxu0 0.0
  %1269 = vmatpush1.msra.mxu0 0.0
  %1270 = vmatprep.subr.mxu0 0.0
  %1271 = vmatpush1.msra.mxu0 0.0
  %1272 = vmatprep.subr.mxu0 0.0
  %1273 = vmatpush1.msra.mxu0 0.0
  %1274 = vmatprep.subr.mxu0 0.0
  %1275 = vmatpush1.msra.mxu0 0.0
  %1276 = vmatprep.subr.mxu0 0.0
  %1277 = vmatpush1.msra.mxu0 0.0
  %1278 = vmatprep.subr.mxu0 0.0
  %1279 = vmatpush1.msra.mxu0 0.0
  %1280 = vmatprep.subr.mxu0 0.0
  %1281 = vmatpush1.msra.mxu0 0.0
  %1282 = vmatprep.subr.mxu0 0.0
  %1283 = vmatpush1.msra.mxu0 0.0
  %1284 = vmatprep.subr.mxu0 0.0
  %1285 = vmatpush1.msra.mxu0 0.0
  %1286 = vmatprep.mubr.f32.mxu0 0.0
  %v1287 = vand.u32 %v1139, 4294901760
  %1288 = vmatmul.mubr.f32.gmra.mrb[0].mxu0 %v1287
  %v1289 = vpop.f32.mrb[0].mxu0
  %v1290 = vadd.f32 %v1214, %v1289
  %v1291 = vpop.f32.mrb[0].mxu0
  %1292 = vdwg.mxu0
  %1293 = vmatprep.subr.mxu0 0.0
  %v1294 = vand.u32 %v679, 4294901760
  %v1295 = vsub.f32 %v679, %v1294
  %1296 = vmatpush1.msra.mxu0 %v1295
  %1297 = vmatprep.subr.mxu0 0.0
  %1298 = vmatpush1.msra.mxu0 0.0
  %1299 = vmatprep.subr.mxu0 0.0
  %1300 = vmatpush1.msra.mxu0 0.0
  %1301 = vmatprep.subr.mxu0 0.0
  %1302 = vmatpush1.msra.mxu0 0.0
  %1303 = vmatprep.subr.mxu0 0.0
  %1304 = vmatpush1.msra.mxu0 0.0
  %1305 = vmatprep.subr.mxu0 0.0
  %1306 = vmatpush1.msra.mxu0 0.0
  %1307 = vmatprep.subr.mxu0 0.0
  %1308 = vmatpush1.msra.mxu0 0.0
  %1309 = vmatprep.subr.mxu0 0.0
  %1310 = vmatpush1.msra.mxu0 0.0
  %1311 = vmatprep.subr.mxu0 0.0
  %1312 = vmatpush1.msra.mxu0 0.0
  %1313 = vmatprep.subr.mxu0 0.0
  %1314 = vmatpush1.msra.mxu0 0.0
  %1315 = vmatprep.subr.mxu0 0.0
  %1316 = vmatpush1.msra.mxu0 0.0
  %1317 = vmatprep.subr.mxu0 0.0
  %1318 = vmatpush1.msra.mxu0 0.0
  %1319 = vmatprep.subr.mxu0 0.0
  %1320 = vmatpush1.msra.mxu0 0.0
  %1321 = vmatprep.subr.mxu0 0.0
  %1322 = vmatpush1.msra.mxu0 0.0
  %1323 = vmatprep.subr.mxu0 0.0
  %1324 = vmatpush1.msra.mxu0 0.0
  %1325 = vmatprep.subr.mxu0 0.0
  %1326 = vmatpush1.msra.mxu0 0.0
  %1327 = vmatprep.subr.mxu0 0.0
  %1328 = vmatpush1.msra.mxu0 0.0
  %1329 = vmatprep.subr.mxu0 0.0
  %1330 = vmatpush1.msra.mxu0 0.0
  %1331 = vmatprep.subr.mxu0 0.0
  %1332 = vmatpush1.msra.mxu0 0.0
  %1333 = vmatprep.subr.mxu0 0.0
  %1334 = vmatpush1.msra.mxu0 0.0
  %1335 = vmatprep.subr.mxu0 0.0
  %1336 = vmatpush1.msra.mxu0 0.0
  %1337 = vmatprep.subr.mxu0 0.0
  %1338 = vmatpush1.msra.mxu0 0.0
  %1339 = vmatprep.subr.mxu0 0.0
  %1340 = vmatpush1.msra.mxu0 0.0
  %1341 = vmatprep.subr.mxu0 0.0
  %1342 = vmatpush1.msra.mxu0 0.0
  %1343 = vmatprep.subr.mxu0 0.0
  %1344 = vmatpush1.msra.mxu0 0.0
  %1345 = vmatprep.subr.mxu0 0.0
  %1346 = vmatpush1.msra.mxu0 0.0
  %1347 = vmatprep.subr.mxu0 0.0
  %1348 = vmatpush1.msra.mxu0 0.0
  %1349 = vmatprep.subr.mxu0 0.0
  %1350 = vmatpush1.msra.mxu0 0.0
  %1351 = vmatprep.subr.mxu0 0.0
  %1352 = vmatpush1.msra.mxu0 0.0
  %1353 = vmatprep.subr.mxu0 0.0
  %1354 = vmatpush1.msra.mxu0 0.0
  %1355 = vmatprep.subr.mxu0 0.0
  %1356 = vmatpush1.msra.mxu0 0.0
  %1357 = vmatprep.subr.mxu0 0.0
  %1358 = vmatpush1.msra.mxu0 0.0
  %1359 = vmatprep.mubr.f32.mxu0 0.0
  %v1360 = vand.u32 %v1139, 4294901760
  %v1361 = vsub.f32 %v1139, %v1360
  %1362 = vmatmul.mubr.f32.gmra.mrb[0].mxu0 %v1361
  %v1363 = vpop.f32.mrb[0].mxu0
  %v1364 = vadd.f32 %v1290, %v1363
  %v1365 = vpop.f32.mrb[0].mxu0
  %1366 = vdwg.mxu0
  %1367 = vmatprep.subr.mxu0 0.0
  %v1368 = vand.u32 %v679, 4294901760
  %1369 = vmatpush1.msra.mxu0 %v1368
  %1370 = vmatprep.subr.mxu0 0.0
  %1371 = vmatpush1.msra.mxu0 0.0
  %1372 = vmatprep.subr.mxu0 0.0
  %1373 = vmatpush1.msra.mxu0 0.0
  %1374 = vmatprep.subr.mxu0 0.0
  %1375 = vmatpush1.msra.mxu0 0.0
  %1376 = vmatprep.subr.mxu0 0.0
  %1377 = vmatpush1.msra.mxu0 0.0
  %1378 = vmatprep.subr.mxu0 0.0
  %1379 = vmatpush1.msra.mxu0 0.0
  %1380 = vmatprep.subr.mxu0 0.0
  %1381 = vmatpush1.msra.mxu0 0.0
  %1382 = vmatprep.subr.mxu0 0.0
  %1383 = vmatpush1.msra.mxu0 0.0
  %1384 = vmatprep.subr.mxu0 0.0
  %1385 = vmatpush1.msra.mxu0 0.0
  %1386 = vmatprep.subr.mxu0 0.0
  %1387 = vmatpush1.msra.mxu0 0.0
  %1388 = vmatprep.subr.mxu0 0.0
  %1389 = vmatpush1.msra.mxu0 0.0
  %1390 = vmatprep.subr.mxu0 0.0
  %1391 = vmatpush1.msra.mxu0 0.0
  %1392 = vmatprep.subr.mxu0 0.0
  %1393 = vmatpush1.msra.mxu0 0.0
  %1394 = vmatprep.subr.mxu0 0.0
  %1395 = vmatpush1.msra.mxu0 0.0
  %1396 = vmatprep.subr.mxu0 0.0
  %1397 = vmatpush1.msra.mxu0 0.0
  %1398 = vmatprep.subr.mxu0 0.0
  %1399 = vmatpush1.msra.mxu0 0.0
  %1400 = vmatprep.subr.mxu0 0.0
  %1401 = vmatpush1.msra.mxu0 0.0
  %1402 = vmatprep.subr.mxu0 0.0
  %1403 = vmatpush1.msra.mxu0 0.0
  %1404 = vmatprep.subr.mxu0 0.0
  %1405 = vmatpush1.msra.mxu0 0.0
  %1406 = vmatprep.subr.mxu0 0.0
  %1407 = vmatpush1.msra.mxu0 0.0
  %1408 = vmatprep.subr.mxu0 0.0
  %1409 = vmatpush1.msra.mxu0 0.0
  %1410 = vmatprep.subr.mxu0 0.0
  %1411 = vmatpush1.msra.mxu0 0.0
  %1412 = vmatprep.subr.mxu0 0.0
  %1413 = vmatpush1.msra.mxu0 0.0
  %1414 = vmatprep.subr.mxu0 0.0
  %1415 = vmatpush1.msra.mxu0 0.0
  %1416 = vmatprep.subr.mxu0 0.0
  %1417 = vmatpush1.msra.mxu0 0.0
  %1418 = vmatprep.subr.mxu0 0.0
  %1419 = vmatpush1.msra.mxu0 0.0
  %1420 = vmatprep.subr.mxu0 0.0
  %1421 = vmatpush1.msra.mxu0 0.0
  %1422 = vmatprep.subr.mxu0 0.0
  %1423 = vmatpush1.msra.mxu0 0.0
  %1424 = vmatprep.subr.mxu0 0.0
  %1425 = vmatpush1.msra.mxu0 0.0
  %1426 = vmatprep.subr.mxu0 0.0
  %1427 = vmatpush1.msra.mxu0 0.0
  %1428 = vmatprep.subr.mxu0 0.0
  %1429 = vmatpush1.msra.mxu0 0.0
  %1430 = vmatprep.subr.mxu0 0.0
  %1431 = vmatpush1.msra.mxu0 0.0
  %1432 = vmatprep.mubr.f32.mxu0 0.0
  %v1433 = vand.u32 %v1139, 4294901760
  %v1434 = vsub.f32 %v1139, %v1433
  %v1435 = vand.u32 %v1434, 4294901760
  %1436 = vmatmul.mubr.f32.gmra.mrb[0].mxu0 %v1435
  %v1437 = vpop.f32.mrb[0].mxu0
  %v1438 = vadd.f32 %v1364, %v1437
  %v1439 = vpop.f32.mrb[0].mxu0
  %1440 = vdwg.mxu0
  %1441 = vmatprep.subr.mxu0 0.0
  %v1442 = vand.u32 %v679, 4294901760
  %v1443 = vsub.f32 %v679, %v1442
  %v1444 = vand.u32 %v1443, 4294901760
  %1445 = vmatpush1.msra.mxu0 %v1444
  %1446 = vmatprep.subr.mxu0 0.0
  %1447 = vmatpush1.msra.mxu0 0.0
  %1448 = vmatprep.subr.mxu0 0.0
  %1449 = vmatpush1.msra.mxu0 0.0
  %1450 = vmatprep.subr.mxu0 0.0
  %1451 = vmatpush1.msra.mxu0 0.0
  %1452 = vmatprep.subr.mxu0 0.0
  %1453 = vmatpush1.msra.mxu0 0.0
  %1454 = vmatprep.subr.mxu0 0.0
  %1455 = vmatpush1.msra.mxu0 0.0
  %1456 = vmatprep.subr.mxu0 0.0
  %1457 = vmatpush1.msra.mxu0 0.0
  %1458 = vmatprep.subr.mxu0 0.0
  %1459 = vmatpush1.msra.mxu0 0.0
  %1460 = vmatprep.subr.mxu0 0.0
  %1461 = vmatpush1.msra.mxu0 0.0
  %1462 = vmatprep.subr.mxu0 0.0
  %1463 = vmatpush1.msra.mxu0 0.0
  %1464 = vmatprep.subr.mxu0 0.0
  %1465 = vmatpush1.msra.mxu0 0.0
  %1466 = vmatprep.subr.mxu0 0.0
  %1467 = vmatpush1.msra.mxu0 0.0
  %1468 = vmatprep.subr.mxu0 0.0
  %1469 = vmatpush1.msra.mxu0 0.0
  %1470 = vmatprep.subr.mxu0 0.0
  %1471 = vmatpush1.msra.mxu0 0.0
  %1472 = vmatprep.subr.mxu0 0.0
  %1473 = vmatpush1.msra.mxu0 0.0
  %1474 = vmatprep.subr.mxu0 0.0
  %1475 = vmatpush1.msra.mxu0 0.0
  %1476 = vmatprep.subr.mxu0 0.0
  %1477 = vmatpush1.msra.mxu0 0.0
  %1478 = vmatprep.subr.mxu0 0.0
  %1479 = vmatpush1.msra.mxu0 0.0
  %1480 = vmatprep.subr.mxu0 0.0
  %1481 = vmatpush1.msra.mxu0 0.0
  %1482 = vmatprep.subr.mxu0 0.0
  %1483 = vmatpush1.msra.mxu0 0.0
  %1484 = vmatprep.subr.mxu0 0.0
  %1485 = vmatpush1.msra.mxu0 0.0
  %1486 = vmatprep.subr.mxu0 0.0
  %1487 = vmatpush1.msra.mxu0 0.0
  %1488 = vmatprep.subr.mxu0 0.0
  %1489 = vmatpush1.msra.mxu0 0.0
  %1490 = vmatprep.subr.mxu0 0.0
  %1491 = vmatpush1.msra.mxu0 0.0
  %1492 = vmatprep.subr.mxu0 0.0
  %1493 = vmatpush1.msra.mxu0 0.0
  %1494 = vmatprep.subr.mxu0 0.0
  %1495 = vmatpush1.msra.mxu0 0.0
  %1496 = vmatprep.subr.mxu0 0.0
  %1497 = vmatpush1.msra.mxu0 0.0
  %1498 = vmatprep.subr.mxu0 0.0
  %1499 = vmatpush1.msra.mxu0 0.0
  %1500 = vmatprep.subr.mxu0 0.0
  %1501 = vmatpush1.msra.mxu0 0.0
  %1502 = vmatprep.subr.mxu0 0.0
  %1503 = vmatpush1.msra.mxu0 0.0
  %1504 = vmatprep.subr.mxu0 0.0
  %1505 = vmatpush1.msra.mxu0 0.0
  %1506 = vmatprep.subr.mxu0 0.0
  %1507 = vmatpush1.msra.mxu0 0.0
  %1508 = vmatprep.mubr.f32.mxu0 0.0
  %v1509 = vand.u32 %v1139, 4294901760
  %1510 = vmatmul.mubr.f32.gmra.mrb[0].mxu0 %v1509
  %v1511 = vpop.f32.mrb[0].mxu0
  %v1512 = vadd.f32 %v1438, %v1511
  %v1513 = vpop.f32.mrb[0].mxu0
  %1514 = vdwg.mxu0
  %1515 = vmatprep.subr.mxu0 0.0
  %v1516 = vand.u32 %v679, 4294901760
  %1517 = vmatpush1.msra.mxu0 %v1516
  %1518 = vmatprep.subr.mxu0 0.0
  %1519 = vmatpush1.msra.mxu0 0.0
  %1520 = vmatprep.subr.mxu0 0.0
  %1521 = vmatpush1.msra.mxu0 0.0
  %1522 = vmatprep.subr.mxu0 0.0
  %1523 = vmatpush1.msra.mxu0 0.0
  %1524 = vmatprep.subr.mxu0 0.0
  %1525 = vmatpush1.msra.mxu0 0.0
  %1526 = vmatprep.subr.mxu0 0.0
  %1527 = vmatpush1.msra.mxu0 0.0
  %1528 = vmatprep.subr.mxu0 0.0
  %1529 = vmatpush1.msra.mxu0 0.0
  %1530 = vmatprep.subr.mxu0 0.0
  %1531 = vmatpush1.msra.mxu0 0.0
  %1532 = vmatprep.subr.mxu0 0.0
  %1533 = vmatpush1.msra.mxu0 0.0
  %1534 = vmatprep.subr.mxu0 0.0
  %1535 = vmatpush1.msra.mxu0 0.0
  %1536 = vmatprep.subr.mxu0 0.0
  %1537 = vmatpush1.msra.mxu0 0.0
  %1538 = vmatprep.subr.mxu0 0.0
  %1539 = vmatpush1.msra.mxu0 0.0
  %1540 = vmatprep.subr.mxu0 0.0
  %1541 = vmatpush1.msra.mxu0 0.0
  %1542 = vmatprep.subr.mxu0 0.0
  %1543 = vmatpush1.msra.mxu0 0.0
  %1544 = vmatprep.subr.mxu0 0.0
  %1545 = vmatpush1.msra.mxu0 0.0
  %1546 = vmatprep.subr.mxu0 0.0
  %1547 = vmatpush1.msra.mxu0 0.0
  %1548 = vmatprep.subr.mxu0 0.0
  %1549 = vmatpush1.msra.mxu0 0.0
  %1550 = vmatprep.subr.mxu0 0.0
  %1551 = vmatpush1.msra.mxu0 0.0
  %1552 = vmatprep.subr.mxu0 0.0
  %1553 = vmatpush1.msra.mxu0 0.0
  %1554 = vmatprep.subr.mxu0 0.0
  %1555 = vmatpush1.msra.mxu0 0.0
  %1556 = vmatprep.subr.mxu0 0.0
  %1557 = vmatpush1.msra.mxu0 0.0
  %1558 = vmatprep.subr.mxu0 0.0
  %1559 = vmatpush1.msra.mxu0 0.0
  %1560 = vmatprep.subr.mxu0 0.0
  %1561 = vmatpush1.msra.mxu0 0.0
  %1562 = vmatprep.subr.mxu0 0.0
  %1563 = vmatpush1.msra.mxu0 0.0
  %1564 = vmatprep.subr.mxu0 0.0
  %1565 = vmatpush1.msra.mxu0 0.0
  %1566 = vmatprep.subr.mxu0 0.0
  %1567 = vmatpush1.msra.mxu0 0.0
  %1568 = vmatprep.subr.mxu0 0.0
  %1569 = vmatpush1.msra.mxu0 0.0
  %1570 = vmatprep.subr.mxu0 0.0
  %1571 = vmatpush1.msra.mxu0 0.0
  %1572 = vmatprep.subr.mxu0 0.0
  %1573 = vmatpush1.msra.mxu0 0.0
  %1574 = vmatprep.subr.mxu0 0.0
  %1575 = vmatpush1.msra.mxu0 0.0
  %1576 = vmatprep.subr.mxu0 0.0
  %1577 = vmatpush1.msra.mxu0 0.0
  %1578 = vmatprep.subr.mxu0 0.0
  %1579 = vmatpush1.msra.mxu0 0.0
  %1580 = vmatprep.mubr.f32.mxu0 0.0
  %v1581 = vand.u32 %v1139, 4294901760
  %1582 = vmatmul.mubr.f32.gmra.mrb[0].mxu0 %v1581
  %v1583 = vpop.f32.mrb[0].mxu0
  %v1584 = vadd.f32 %v1512, %v1583
  %v1585 = vpop.f32.mrb[0].mxu0
  %1586 = vdwg.mxu0
  %v1588 = vrot.slane %v1584, 7
  %vm1590 = vcmask 1040384
  %v1591 = vsel %vm1590, %v1134, %v1588
  %v1592 = vlaneseq
  %v1593 = vshrl.u32 %v1592, 7
  %v1594 = vsub.s32 0, %v1593
  %v1595 = vrot.slane %v680, %v1594
  %v1596 = vmul.f32 %v1595, 0.0
  %v1597 = vlaneseq
  %v1598 = vshrl.u32 %v1597, 7
  %v1599 = vsub.s32 1, %v1598
  %v1600 = vrot.slane %v680, %v1599
  %v1601 = vmul.f32 %v1600, 0.0
  %v1602 = vlaneseq
  %v1603 = vshrl.u32 %v1602, 7
  %v1604 = vsub.s32 2, %v1603
  %v1605 = vrot.slane %v680, %v1604
  %v1606 = vmul.f32 %v1605, 0.0
  %v1607 = vlaneseq
  %v1608 = vshrl.u32 %v1607, 7
  %v1609 = vsub.s32 3, %v1608
  %v1610 = vrot.slane %v680, %v1609
  %v1611 = vmul.f32 %v1610, 0.0
  %v1612 = vlaneseq
  %v1613 = vshrl.u32 %v1612, 7
  %v1614 = vsub.s32 4, %v1613
  %v1615 = vrot.slane %v680, %v1614
  %v1616 = vmul.f32 %v1615, 0.0
  %v1617 = vlaneseq
  %v1618 = vshrl.u32 %v1617, 7
  %v1619 = vsub.s32 5, %v1618
  %v1620 = vrot.slane %v680, %v1619
  %v1621 = vmul.f32 %v1620, 0.0
  %v1622 = vlaneseq
  %v1623 = vshrl.u32 %v1622, 7
  %v1624 = vsub.s32 6, %v1623
  %v1625 = vrot.slane %v680, %v1624
  %v1626 = vmul.f32 %v1625, 0.0
  %v1627 = vlaneseq
  %v1628 = vshrl.u32 %v1627, 7
  %v1629 = vsub.s32 7, %v1628
  %v1630 = vrot.slane %v680, %v1629
  %v1631 = vmul.f32 %v1630, 0.0
  %v1632 = vlaneseq
  %v1633 = vshrl.u32 %v1632, 7
  %v1634 = vsub.s32 0, %v1633
  %v1635 = vrot.slane %v681, %v1634
  %v1636 = vmul.f32 %v1635, 0.0
  %v1637 = vlaneseq
  %v1638 = vshrl.u32 %v1637, 7
  %v1639 = vsub.s32 1, %v1638
  %v1640 = vrot.slane %v681, %v1639
  %v1641 = vmul.f32 %v1640, 0.0
  %v1642 = vlaneseq
  %v1643 = vshrl.u32 %v1642, 7
  %v1644 = vsub.s32 2, %v1643
  %v1645 = vrot.slane %v681, %v1644
  %v1646 = vmul.f32 %v1645, 0.0
  %v1647 = vlaneseq
  %v1648 = vshrl.u32 %v1647, 7
  %v1649 = vsub.s32 3, %v1648
  %v1650 = vrot.slane %v681, %v1649
  %v1651 = vmul.f32 %v1650, 0.0
  %v1652 = vlaneseq
  %v1653 = vshrl.u32 %v1652, 7
  %v1654 = vsub.s32 4, %v1653
  %v1655 = vrot.slane %v681, %v1654
  %v1656 = vmul.f32 %v1655, 0.0
  %v1657 = vlaneseq
  %v1658 = vshrl.u32 %v1657, 7
  %v1659 = vsub.s32 5, %v1658
  %v1660 = vrot.slane %v681, %v1659
  %v1661 = vmul.f32 %v1660, 0.0
  %v1662 = vlaneseq
  %v1663 = vshrl.u32 %v1662, 7
  %v1664 = vsub.s32 6, %v1663
  %v1665 = vrot.slane %v681, %v1664
  %v1666 = vmul.f32 %v1665, 0.0
  %v1667 = vlaneseq
  %v1668 = vshrl.u32 %v1667, 7
  %v1669 = vsub.s32 7, %v1668
  %v1670 = vrot.slane %v681, %v1669
  %v1671 = vmul.f32 %v1670, 0.0
  %v1672 = vadd.f32 %v1596, %v1601
  %v1673 = vadd.f32 %v1606, %v1611
  %v1674 = vadd.f32 %v1616, %v1621
  %v1675 = vadd.f32 %v1626, %v1631
  %v1676 = vadd.f32 %v1636, %v1641
  %v1677 = vadd.f32 %v1646, %v1651
  %v1678 = vadd.f32 %v1656, %v1661
  %v1679 = vadd.f32 %v1666, %v1671
  %v1680 = vadd.f32 %v1672, %v1673
  %v1681 = vadd.f32 %v1674, %v1675
  %v1682 = vadd.f32 %v1676, %v1677
  %v1683 = vadd.f32 %v1678, %v1679
  %v1684 = vadd.f32 %v1680, %v1681
  %v1685 = vadd.f32 %v1682, %v1683
  %v1686 = vadd.f32 %v1684, %v1685
  %v1687 = vadd.f32 %v1591, %v1686
  %v1688 = vmul.f32 %v1687, 0.5
  %v1689 = vtanh.pop %v1688
  %v1690 = vmul.f32 %v1689, 0.5
  %v1691 = vadd.f32 %v1690, 0.5
  %v1692 = vtanh.pop %v1687
  %v1693 = vmul.f32 %v1691, 0.0
  %1695 = vrot.lane.b32.xlu0 %v1692, 80
  %v1696 = vpop.permute.xlu0 %1695
  %v1698 = vmul.f32 %v1691, %v1696
  %1700 = vrot.lane.b32.xlu0 %v1698, 16
  %v1701 = vpop.permute.xlu0 %1700
  %v1703 = vadd.f32 %v1693, %v1701
  %v1704 = vtanh.pop %v1703
  %1706 = vrot.lane.b32.xlu0 %v1704, 16
  %v1707 = vpop.permute.xlu0 %1706
  %v1709 = vmul.f32 %v1691, %v1707
  %1711 = vrot.lane.b32.xlu0 %v1709, 96
  %v1712 = vpop.permute.xlu0 %1711
  %vm1714 = vcmask 123904
  %1715 = vst.msk [vmem:[#allocation2] sm:$0x3] %vm1714, %v1712
  %v1717 = vrot.slane %v1134, 1
  %v1719 = vsel %vm1590, %v1717, %v1584
  %1720 = vset.pattern.permute.xlu0 32
  %1721 = vperm.xlu0 %1720, %v1709
  %v1722 = vpop.permute.xlu0 %1721
  %v1724 = vmul.f32 %v1722, %v1595
  %1725 = vset.pattern.permute.xlu0 33
  %1726 = vperm.xlu0 %1725, %v1709
  %v1727 = vpop.permute.xlu0 %1726
  %v1729 = vmul.f32 %v1727, %v1600
  %1730 = vset.pattern.permute.xlu0 34
  %1731 = vperm.xlu0 %1730, %v1709
  %v1732 = vpop.permute.xlu0 %1731
  %v1734 = vmul.f32 %v1732, %v1605
  %1735 = vset.pattern.permute.xlu0 35
  %1736 = vperm.xlu0 %1735, %v1709
  %v1737 = vpop.permute.xlu0 %1736
  %v1739 = vmul.f32 %v1737, %v1610
  %1740 = vset.pattern.permute.xlu0 36
  %1741 = vperm.xlu0 %1740, %v1709
  %v1742 = vpop.permute.xlu0 %1741
  %v1744 = vmul.f32 %v1742, %v1615
  %1745 = vset.pattern.permute.xlu0 37
  %1746 = vperm.xlu0 %1745, %v1709
  %v1747 = vpop.permute.xlu0 %1746
  %v1749 = vmul.f32 %v1747, %v1620
  %1750 = vset.pattern.permute.xlu0 38
  %1751 = vperm.xlu0 %1750, %v1709
  %v1752 = vpop.permute.xlu0 %1751
  %v1754 = vmul.f32 %v1752, %v1625
  %1755 = vset.pattern.permute.xlu0 39
  %1756 = vperm.xlu0 %1755, %v1709
  %v1757 = vpop.permute.xlu0 %1756
  %v1759 = vmul.f32 %v1757, %v1630
  %1760 = vset.pattern.permute.xlu0 40
  %1761 = vperm.xlu0 %1760, %v1709
  %v1762 = vpop.permute.xlu0 %1761
  %v1764 = vmul.f32 %v1762, %v1635
  %1765 = vset.pattern.permute.xlu0 41
  %1766 = vperm.xlu0 %1765, %v1709
  %v1767 = vpop.permute.xlu0 %1766
  %v1769 = vmul.f32 %v1767, %v1640
  %1770 = vset.pattern.permute.xlu0 42
  %1771 = vperm.xlu0 %1770, %v1709
  %v1772 = vpop.permute.xlu0 %1771
  %v1774 = vmul.f32 %v1772, %v1645
  %1775 = vset.pattern.permute.xlu0 43
  %1776 = vperm.xlu0 %1775, %v1709
  %v1777 = vpop.permute.xlu0 %1776
  %v1779 = vmul.f32 %v1777, %v1650
  %1780 = vset.pattern.permute.xlu0 44
  %1781 = vperm.xlu0 %1780, %v1709
  %v1782 = vpop.permute.xlu0 %1781
  %v1784 = vmul.f32 %v1782, %v1655
  %1785 = vset.pattern.permute.xlu0 45
  %1786 = vperm.xlu0 %1785, %v1709
  %v1787 = vpop.permute.xlu0 %1786
  %v1789 = vmul.f32 %v1787, %v1660
  %1790 = vset.pattern.permute.xlu0 46
  %1791 = vperm.xlu0 %1790, %v1709
  %v1792 = vpop.permute.xlu0 %1791
  %v1794 = vmul.f32 %v1792, %v1665
  %1795 = vset.pattern.permute.xlu0 47
  %1796 = vperm.xlu0 %1795, %v1709
  %v1797 = vpop.permute.xlu0 %1796
  %v1799 = vmul.f32 %v1797, %v1670
  %v1800 = vadd.f32 %v1724, %v1729
  %v1801 = vadd.f32 %v1734, %v1739
  %v1802 = vadd.f32 %v1744, %v1749
  %v1803 = vadd.f32 %v1754, %v1759
  %v1804 = vadd.f32 %v1764, %v1769
  %v1805 = vadd.f32 %v1774, %v1779
  %v1806 = vadd.f32 %v1784, %v1789
  %v1807 = vadd.f32 %v1794, %v1799
  %v1808 = vadd.f32 %v1800, %v1801
  %v1809 = vadd.f32 %v1802, %v1803
  %v1810 = vadd.f32 %v1804, %v1805
  %v1811 = vadd.f32 %v1806, %v1807
  %v1812 = vadd.f32 %v1808, %v1809
  %v1813 = vadd.f32 %v1810, %v1811
  %v1814 = vadd.f32 %v1812, %v1813
  %v1815 = vadd.f32 %v1719, %v1814
  %v1816 = vmul.f32 %v1815, 0.5
  %v1817 = vtanh.pop %v1816
  %v1818 = vmul.f32 %v1817, 0.5
  %v1819 = vadd.f32 %v1818, 0.5
  %v1820 = vtanh.pop %v1815
  %v1821 = vmul.f32 %v1819, %v1703
  %1823 = vrot.lane.b32.xlu0 %v1820, 80
  %v1824 = vpop.permute.xlu0 %1823
  %v1826 = vmul.f32 %v1819, %v1824
  %1828 = vrot.lane.b32.xlu0 %v1826, 16
  %v1829 = vpop.permute.xlu0 %1828
  %v1831 = vadd.f32 %v1821, %v1829
  %v1832 = vtanh.pop %v1831
  %1834 = vrot.lane.b32.xlu0 %v1832, 16
  %v1835 = vpop.permute.xlu0 %1834
  %v1837 = vmul.f32 %v1819, %v1835
  %1839 = vrot.lane.b32.xlu0 %v1837, 96
  %v1840 = vpop.permute.xlu0 %1839
  %1842 = vst.msk [vmem:[#allocation2 + $0x2] sm:$0x3] %vm1714, %v1840
  %v1843 = vrot.slane %v1134, 2
  %v1845 = vrot.slane %v1584, 1
  %v1847 = vsel %vm1590, %v1843, %v1845
  %1848 = vset.pattern.permute.xlu0 32
  %1849 = vperm.xlu0 %1848, %v1837
  %v1850 = vpop.permute.xlu0 %1849
  %v1852 = vmul.f32 %v1850, %v1595
  %1853 = vset.pattern.permute.xlu0 33
  %1854 = vperm.xlu0 %1853, %v1837
  %v1855 = vpop.permute.xlu0 %1854
  %v1857 = vmul.f32 %v1855, %v1600
  %1858 = vset.pattern.permute.xlu0 34
  %1859 = vperm.xlu0 %1858, %v1837
  %v1860 = vpop.permute.xlu0 %1859
  %v1862 = vmul.f32 %v1860, %v1605
  %1863 = vset.pattern.permute.xlu0 35
  %1864 = vperm.xlu0 %1863, %v1837
  %v1865 = vpop.permute.xlu0 %1864
  %v1867 = vmul.f32 %v1865, %v1610
  %1868 = vset.pattern.permute.xlu0 36
  %1869 = vperm.xlu0 %1868, %v1837
  %v1870 = vpop.permute.xlu0 %1869
  %v1872 = vmul.f32 %v1870, %v1615
  %1873 = vset.pattern.permute.xlu0 37
  %1874 = vperm.xlu0 %1873, %v1837
  %v1875 = vpop.permute.xlu0 %1874
  %v1877 = vmul.f32 %v1875, %v1620
  %1878 = vset.pattern.permute.xlu0 38
  %1879 = vperm.xlu0 %1878, %v1837
  %v1880 = vpop.permute.xlu0 %1879
  %v1882 = vmul.f32 %v1880, %v1625
  %1883 = vset.pattern.permute.xlu0 39
  %1884 = vperm.xlu0 %1883, %v1837
  %v1885 = vpop.permute.xlu0 %1884
  %v1887 = vmul.f32 %v1885, %v1630
  %1888 = vset.pattern.permute.xlu0 40
  %1889 = vperm.xlu0 %1888, %v1837
  %v1890 = vpop.permute.xlu0 %1889
  %v1892 = vmul.f32 %v1890, %v1635
  %1893 = vset.pattern.permute.xlu0 41
  %1894 = vperm.xlu0 %1893, %v1837
  %v1895 = vpop.permute.xlu0 %1894
  %v1897 = vmul.f32 %v1895, %v1640
  %1898 = vset.pattern.permute.xlu0 42
  %1899 = vperm.xlu0 %1898, %v1837
  %v1900 = vpop.permute.xlu0 %1899
  %v1902 = vmul.f32 %v1900, %v1645
  %1903 = vset.pattern.permute.xlu0 43
  %1904 = vperm.xlu0 %1903, %v1837
  %v1905 = vpop.permute.xlu0 %1904
  %v1907 = vmul.f32 %v1905, %v1650
  %1908 = vset.pattern.permute.xlu0 44
  %1909 = vperm.xlu0 %1908, %v1837
  %v1910 = vpop.permute.xlu0 %1909
  %v1912 = vmul.f32 %v1910, %v1655
  %1913 = vset.pattern.permute.xlu0 45
  %1914 = vperm.xlu0 %1913, %v1837
  %v1915 = vpop.permute.xlu0 %1914
  %v1917 = vmul.f32 %v1915, %v1660
  %1918 = vset.pattern.permute.xlu0 46
  %1919 = vperm.xlu0 %1918, %v1837
  %v1920 = vpop.permute.xlu0 %1919
  %v1922 = vmul.f32 %v1920, %v1665
  %1923 = vset.pattern.permute.xlu0 47
  %1924 = vperm.xlu0 %1923, %v1837
  %v1925 = vpop.permute.xlu0 %1924
  %v1927 = vmul.f32 %v1925, %v1670
  %v1928 = vadd.f32 %v1852, %v1857
  %v1929 = vadd.f32 %v1862, %v1867
  %v1930 = vadd.f32 %v1872, %v1877
  %v1931 = vadd.f32 %v1882, %v1887
  %v1932 = vadd.f32 %v1892, %v1897
  %v1933 = vadd.f32 %v1902, %v1907
  %v1934 = vadd.f32 %v1912, %v1917
  %v1935 = vadd.f32 %v1922, %v1927
  %v1936 = vadd.f32 %v1928, %v1929
  %v1937 = vadd.f32 %v1930, %v1931
  %v1938 = vadd.f32 %v1932, %v1933
  %v1939 = vadd.f32 %v1934, %v1935
  %v1940 = vadd.f32 %v1936, %v1937
  %v1941 = vadd.f32 %v1938, %v1939
  %v1942 = vadd.f32 %v1940, %v1941
  %v1943 = vadd.f32 %v1847, %v1942
  %v1944 = vmul.f32 %v1943, 0.5
  %v1945 = vtanh.pop %v1944
  %v1946 = vmul.f32 %v1945, 0.5
  %v1947 = vadd.f32 %v1946, 0.5
  %v1948 = vtanh.pop %v1943
  %v1949 = vmul.f32 %v1947, %v1831
  %1951 = vrot.lane.b32.xlu0 %v1948, 80
  %v1952 = vpop.permute.xlu0 %1951
  %v1954 = vmul.f32 %v1947, %v1952
  %1956 = vrot.lane.b32.xlu0 %v1954, 16
  %v1957 = vpop.permute.xlu0 %1956
  %v1959 = vadd.f32 %v1949, %v1957
  %v1960 = vtanh.pop %v1959
  %1962 = vrot.lane.b32.xlu0 %v1960, 16
  %v1963 = vpop.permute.xlu0 %1962
  %v1965 = vmul.f32 %v1947, %v1963
  %1967 = vrot.lane.b32.xlu0 %v1965, 96
  %v1968 = vpop.permute.xlu0 %1967
  %1970 = vst.msk [vmem:[#allocation2 + $0x4] sm:$0x3] %vm1714, %v1968
  %v1971 = vrot.slane %v1134, 3
  %v1973 = vrot.slane %v1584, 2
  %v1975 = vsel %vm1590, %v1971, %v1973
  %1976 = vset.pattern.permute.xlu0 32
  %1977 = vperm.xlu0 %1976, %v1965
  %v1978 = vpop.permute.xlu0 %1977
  %v1980 = vmul.f32 %v1978, %v1595
  %1981 = vset.pattern.permute.xlu0 33
  %1982 = vperm.xlu0 %1981, %v1965
  %v1983 = vpop.permute.xlu0 %1982
  %v1985 = vmul.f32 %v1983, %v1600
  %1986 = vset.pattern.permute.xlu0 34
  %1987 = vperm.xlu0 %1986, %v1965
  %v1988 = vpop.permute.xlu0 %1987
  %v1990 = vmul.f32 %v1988, %v1605
  %1991 = vset.pattern.permute.xlu0 35
  %1992 = vperm.xlu0 %1991, %v1965
  %v1993 = vpop.permute.xlu0 %1992
  %v1995 = vmul.f32 %v1993, %v1610
  %1996 = vset.pattern.permute.xlu0 36
  %1997 = vperm.xlu0 %1996, %v1965
  %v1998 = vpop.permute.xlu0 %1997
  %v2000 = vmul.f32 %v1998, %v1615
  %2001 = vset.pattern.permute.xlu0 37
  %2002 = vperm.xlu0 %2001, %v1965
  %v2003 = vpop.permute.xlu0 %2002
  %v2005 = vmul.f32 %v2003, %v1620
  %2006 = vset.pattern.permute.xlu0 38
  %2007 = vperm.xlu0 %2006, %v1965
  %v2008 = vpop.permute.xlu0 %2007
  %v2010 = vmul.f32 %v2008, %v1625
  %2011 = vset.pattern.permute.xlu0 39
  %2012 = vperm.xlu0 %2011, %v1965
  %v2013 = vpop.permute.xlu0 %2012
  %v2015 = vmul.f32 %v2013, %v1630
  %2016 = vset.pattern.permute.xlu0 40
  %2017 = vperm.xlu0 %2016, %v1965
  %v2018 = vpop.permute.xlu0 %2017
  %v2020 = vmul.f32 %v2018, %v1635
  %2021 = vset.pattern.permute.xlu0 41
  %2022 = vperm.xlu0 %2021, %v1965
  %v2023 = vpop.permute.xlu0 %2022
  %v2025 = vmul.f32 %v2023, %v1640
  %2026 = vset.pattern.permute.xlu0 42
  %2027 = vperm.xlu0 %2026, %v1965
  %v2028 = vpop.permute.xlu0 %2027
  %v2030 = vmul.f32 %v2028, %v1645
  %2031 = vset.pattern.permute.xlu0 43
  %2032 = vperm.xlu0 %2031, %v1965
  %v2033 = vpop.permute.xlu0 %2032
  %v2035 = vmul.f32 %v2033, %v1650
  %2036 = vset.pattern.permute.xlu0 44
  %2037 = vperm.xlu0 %2036, %v1965
  %v2038 = vpop.permute.xlu0 %2037
  %v2040 = vmul.f32 %v2038, %v1655
  %2041 = vset.pattern.permute.xlu0 45
  %2042 = vperm.xlu0 %2041, %v1965
  %v2043 = vpop.permute.xlu0 %2042
  %v2045 = vmul.f32 %v2043, %v1660
  %2046 = vset.pattern.permute.xlu0 46
  %2047 = vperm.xlu0 %2046, %v1965
  %v2048 = vpop.permute.xlu0 %2047
  %v2050 = vmul.f32 %v2048, %v1665
  %2051 = vset.pattern.permute.xlu0 47
  %2052 = vperm.xlu0 %2051, %v1965
  %v2053 = vpop.permute.xlu0 %2052
  %v2055 = vmul.f32 %v2053, %v1670
  %v2056 = vadd.f32 %v1980, %v1985
  %v2057 = vadd.f32 %v1990, %v1995
  %v2058 = vadd.f32 %v2000, %v2005
  %v2059 = vadd.f32 %v2010, %v2015
  %v2060 = vadd.f32 %v2020, %v2025
  %v2061 = vadd.f32 %v2030, %v2035
  %v2062 = vadd.f32 %v2040, %v2045
  %v2063 = vadd.f32 %v2050, %v2055
  %v2064 = vadd.f32 %v2056, %v2057
  %v2065 = vadd.f32 %v2058, %v2059
  %v2066 = vadd.f32 %v2060, %v2061
  %v2067 = vadd.f32 %v2062, %v2063
  %v2068 = vadd.f32 %v2064, %v2065
  %v2069 = vadd.f32 %v2066, %v2067
  %v2070 = vadd.f32 %v2068, %v2069
  %v2071 = vadd.f32 %v1975, %v2070
  %v2072 = vmul.f32 %v2071, 0.5
  %v2073 = vtanh.pop %v2072
  %v2074 = vmul.f32 %v2073, 0.5
  %v2075 = vadd.f32 %v2074, 0.5
  %v2076 = vtanh.pop %v2071
  %v2077 = vmul.f32 %v2075, %v1959
  %2079 = vrot.lane.b32.xlu0 %v2076, 80
  %v2080 = vpop.permute.xlu0 %2079
  %v2082 = vmul.f32 %v2075, %v2080
  %2084 = vrot.lane.b32.xlu0 %v2082, 16
  %v2085 = vpop.permute.xlu0 %2084
  %v2087 = vadd.f32 %v2077, %v2085
  %v2088 = vtanh.pop %v2087
  %2090 = vrot.lane.b32.xlu0 %v2088, 16
  %v2091 = vpop.permute.xlu0 %2090
  %v2093 = vmul.f32 %v2075, %v2091
  %2095 = vrot.lane.b32.xlu0 %v2093, 96
  %v2096 = vpop.permute.xlu0 %2095
  %2098 = vst.msk [vmem:[#allocation2 + $0x6] sm:$0x3] %vm1714, %v2096
  %v2099 = vrot.slane %v1134, 4
  %v2101 = vrot.slane %v1584, 3
  %v2103 = vsel %vm1590, %v2099, %v2101
  %2104 = vset.pattern.permute.xlu0 32
  %2105 = vperm.xlu0 %2104, %v2093
  %v2106 = vpop.permute.xlu0 %2105
  %v2108 = vmul.f32 %v2106, %v1595
  %2109 = vset.pattern.permute.xlu0 33
  %2110 = vperm.xlu0 %2109, %v2093
  %v2111 = vpop.permute.xlu0 %2110
  %v2113 = vmul.f32 %v2111, %v1600
  %2114 = vset.pattern.permute.xlu0 34
  %2115 = vperm.xlu0 %2114, %v2093
  %v2116 = vpop.permute.xlu0 %2115
  %v2118 = vmul.f32 %v2116, %v1605
  %2119 = vset.pattern.permute.xlu0 35
  %2120 = vperm.xlu0 %2119, %v2093
  %v2121 = vpop.permute.xlu0 %2120
  %v2123 = vmul.f32 %v2121, %v1610
  %2124 = vset.pattern.permute.xlu0 36
  %2125 = vperm.xlu0 %2124, %v2093
  %v2126 = vpop.permute.xlu0 %2125
  %v2128 = vmul.f32 %v2126, %v1615
  %2129 = vset.pattern.permute.xlu0 37
  %2130 = vperm.xlu0 %2129, %v2093
  %v2131 = vpop.permute.xlu0 %2130
  %v2133 = vmul.f32 %v2131, %v1620
  %2134 = vset.pattern.permute.xlu0 38
  %2135 = vperm.xlu0 %2134, %v2093
  %v2136 = vpop.permute.xlu0 %2135
  %v2138 = vmul.f32 %v2136, %v1625
  %2139 = vset.pattern.permute.xlu0 39
  %2140 = vperm.xlu0 %2139, %v2093
  %v2141 = vpop.permute.xlu0 %2140
  %v2143 = vmul.f32 %v2141, %v1630
  %2144 = vset.pattern.permute.xlu0 40
  %2145 = vperm.xlu0 %2144, %v2093
  %v2146 = vpop.permute.xlu0 %2145
  %v2148 = vmul.f32 %v2146, %v1635
  %2149 = vset.pattern.permute.xlu0 41
  %2150 = vperm.xlu0 %2149, %v2093
  %v2151 = vpop.permute.xlu0 %2150
  %v2153 = vmul.f32 %v2151, %v1640
  %2154 = vset.pattern.permute.xlu0 42
  %2155 = vperm.xlu0 %2154, %v2093
  %v2156 = vpop.permute.xlu0 %2155
  %v2158 = vmul.f32 %v2156, %v1645
  %2159 = vset.pattern.permute.xlu0 43
  %2160 = vperm.xlu0 %2159, %v2093
  %v2161 = vpop.permute.xlu0 %2160
  %v2163 = vmul.f32 %v2161, %v1650
  %2164 = vset.pattern.permute.xlu0 44
  %2165 = vperm.xlu0 %2164, %v2093
  %v2166 = vpop.permute.xlu0 %2165
  %v2168 = vmul.f32 %v2166, %v1655
  %2169 = vset.pattern.permute.xlu0 45
  %2170 = vperm.xlu0 %2169, %v2093
  %v2171 = vpop.permute.xlu0 %2170
  %v2173 = vmul.f32 %v2171, %v1660
  %2174 = vset.pattern.permute.xlu0 46
  %2175 = vperm.xlu0 %2174, %v2093
  %v2176 = vpop.permute.xlu0 %2175
  %v2178 = vmul.f32 %v2176, %v1665
  %2179 = vset.pattern.permute.xlu0 47
  %2180 = vperm.xlu0 %2179, %v2093
  %v2181 = vpop.permute.xlu0 %2180
  %v2183 = vmul.f32 %v2181, %v1670
  %v2184 = vadd.f32 %v2108, %v2113
  %v2185 = vadd.f32 %v2118, %v2123
  %v2186 = vadd.f32 %v2128, %v2133
  %v2187 = vadd.f32 %v2138, %v2143
  %v2188 = vadd.f32 %v2148, %v2153
  %v2189 = vadd.f32 %v2158, %v2163
  %v2190 = vadd.f32 %v2168, %v2173
  %v2191 = vadd.f32 %v2178, %v2183
  %v2192 = vadd.f32 %v2184, %v2185
  %v2193 = vadd.f32 %v2186, %v2187
  %v2194 = vadd.f32 %v2188, %v2189
  %v2195 = vadd.f32 %v2190, %v2191
  %v2196 = vadd.f32 %v2192, %v2193
  %v2197 = vadd.f32 %v2194, %v2195
  %v2198 = vadd.f32 %v2196, %v2197
  %v2199 = vadd.f32 %v2103, %v2198
  %v2200 = vmul.f32 %v2199, 0.5
  %v2201 = vtanh.pop %v2200
  %v2202 = vmul.f32 %v2201, 0.5
  %v2203 = vadd.f32 %v2202, 0.5
  %v2204 = vtanh.pop %v2199
  %v2205 = vmul.f32 %v2203, %v2087
  %2207 = vrot.lane.b32.xlu0 %v2204, 80
  %v2208 = vpop.permute.xlu0 %2207
  %v2210 = vmul.f32 %v2203, %v2208
  %2212 = vrot.lane.b32.xlu0 %v2210, 16
  %v2213 = vpop.permute.xlu0 %2212
  %v2215 = vadd.f32 %v2205, %v2213
  %v2216 = vtanh.pop %v2215
  %2218 = vrot.lane.b32.xlu0 %v2216, 16
  %v2219 = vpop.permute.xlu0 %2218
  %v2221 = vmul.f32 %v2203, %v2219
  %2223 = vrot.lane.b32.xlu0 %v2221, 96
  %v2224 = vpop.permute.xlu0 %2223
  %2226 = vst.msk [vmem:[#allocation2 + $0x8] sm:$0x3] %vm1714, %v2224
  %v2227 = vrot.slane %v1134, 5
  %v2229 = vrot.slane %v1584, 4
  %v2231 = vsel %vm1590, %v2227, %v2229
  %2232 = vset.pattern.permute.xlu0 32
  %2233 = vperm.xlu0 %2232, %v2221
  %v2234 = vpop.permute.xlu0 %2233
  %v2236 = vmul.f32 %v2234, %v1595
  %2237 = vset.pattern.permute.xlu0 33
  %2238 = vperm.xlu0 %2237, %v2221
  %v2239 = vpop.permute.xlu0 %2238
  %v2241 = vmul.f32 %v2239, %v1600
  %2242 = vset.pattern.permute.xlu0 34
  %2243 = vperm.xlu0 %2242, %v2221
  %v2244 = vpop.permute.xlu0 %2243
  %v2246 = vmul.f32 %v2244, %v1605
  %2247 = vset.pattern.permute.xlu0 35
  %2248 = vperm.xlu0 %2247, %v2221
  %v2249 = vpop.permute.xlu0 %2248
  %v2251 = vmul.f32 %v2249, %v1610
  %2252 = vset.pattern.permute.xlu0 36
  %2253 = vperm.xlu0 %2252, %v2221
  %v2254 = vpop.permute.xlu0 %2253
  %v2256 = vmul.f32 %v2254, %v1615
  %2257 = vset.pattern.permute.xlu0 37
  %2258 = vperm.xlu0 %2257, %v2221
  %v2259 = vpop.permute.xlu0 %2258
  %v2261 = vmul.f32 %v2259, %v1620
  %2262 = vset.pattern.permute.xlu0 38
  %2263 = vperm.xlu0 %2262, %v2221
  %v2264 = vpop.permute.xlu0 %2263
  %v2266 = vmul.f32 %v2264, %v1625
  %2267 = vset.pattern.permute.xlu0 39
  %2268 = vperm.xlu0 %2267, %v2221
  %v2269 = vpop.permute.xlu0 %2268
  %v2271 = vmul.f32 %v2269, %v1630
  %2272 = vset.pattern.permute.xlu0 40
  %2273 = vperm.xlu0 %2272, %v2221
  %v2274 = vpop.permute.xlu0 %2273
  %v2276 = vmul.f32 %v2274, %v1635
  %2277 = vset.pattern.permute.xlu0 41
  %2278 = vperm.xlu0 %2277, %v2221
  %v2279 = vpop.permute.xlu0 %2278
  %v2281 = vmul.f32 %v2279, %v1640
  %2282 = vset.pattern.permute.xlu0 42
  %2283 = vperm.xlu0 %2282, %v2221
  %v2284 = vpop.permute.xlu0 %2283
  %v2286 = vmul.f32 %v2284, %v1645
  %2287 = vset.pattern.permute.xlu0 43
  %2288 = vperm.xlu0 %2287, %v2221
  %v2289 = vpop.permute.xlu0 %2288
  %v2291 = vmul.f32 %v2289, %v1650
  %2292 = vset.pattern.permute.xlu0 44
  %2293 = vperm.xlu0 %2292, %v2221
  %v2294 = vpop.permute.xlu0 %2293
  %v2296 = vmul.f32 %v2294, %v1655
  %2297 = vset.pattern.permute.xlu0 45
  %2298 = vperm.xlu0 %2297, %v2221
  %v2299 = vpop.permute.xlu0 %2298
  %v2301 = vmul.f32 %v2299, %v1660
  %2302 = vset.pattern.permute.xlu0 46
  %2303 = vperm.xlu0 %2302, %v2221
  %v2304 = vpop.permute.xlu0 %2303
  %v2306 = vmul.f32 %v2304, %v1665
  %2307 = vset.pattern.permute.xlu0 47
  %2308 = vperm.xlu0 %2307, %v2221
  %v2309 = vpop.permute.xlu0 %2308
  %v2311 = vmul.f32 %v2309, %v1670
  %v2312 = vadd.f32 %v2236, %v2241
  %v2313 = vadd.f32 %v2246, %v2251
  %v2314 = vadd.f32 %v2256, %v2261
  %v2315 = vadd.f32 %v2266, %v2271
  %v2316 = vadd.f32 %v2276, %v2281
  %v2317 = vadd.f32 %v2286, %v2291
  %v2318 = vadd.f32 %v2296, %v2301
  %v2319 = vadd.f32 %v2306, %v2311
  %v2320 = vadd.f32 %v2312, %v2313
  %v2321 = vadd.f32 %v2314, %v2315
  %v2322 = vadd.f32 %v2316, %v2317
  %v2323 = vadd.f32 %v2318, %v2319
  %v2324 = vadd.f32 %v2320, %v2321
  %v2325 = vadd.f32 %v2322, %v2323
  %v2326 = vadd.f32 %v2324, %v2325
  %v2327 = vadd.f32 %v2231, %v2326
  %v2328 = vmul.f32 %v2327, 0.5
  %v2329 = vtanh.pop %v2328
  %v2330 = vmul.f32 %v2329, 0.5
  %v2331 = vadd.f32 %v2330, 0.5
  %v2332 = vtanh.pop %v2327
  %v2333 = vmul.f32 %v2331, %v2215
  %2335 = vrot.lane.b32.xlu0 %v2332, 80
  %v2336 = vpop.permute.xlu0 %2335
  %v2338 = vmul.f32 %v2331, %v2336
  %2340 = vrot.lane.b32.xlu0 %v2338, 16
  %v2341 = vpop.permute.xlu0 %2340
  %v2343 = vadd.f32 %v2333, %v2341
  %v2344 = vtanh.pop %v2343
  %2346 = vrot.lane.b32.xlu0 %v2344, 16
  %v2347 = vpop.permute.xlu0 %2346
  %v2349 = vmul.f32 %v2331, %v2347
  %2351 = vrot.lane.b32.xlu0 %v2349, 96
  %v2352 = vpop.permute.xlu0 %2351
  %2354 = vst.msk [vmem:[#allocation2 + $0xa] sm:$0x3] %vm1714, %v2352
  %v2355 = vrot.slane %v1134, 6
  %v2357 = vrot.slane %v1584, 5
  %v2359 = vsel %vm1590, %v2355, %v2357
  %2360 = vset.pattern.permute.xlu0 32
  %2361 = vperm.xlu0 %2360, %v2349
  %v2362 = vpop.permute.xlu0 %2361
  %v2364 = vmul.f32 %v2362, %v1595
  %2365 = vset.pattern.permute.xlu0 33
  %2366 = vperm.xlu0 %2365, %v2349
  %v2367 = vpop.permute.xlu0 %2366
  %v2369 = vmul.f32 %v2367, %v1600
  %2370 = vset.pattern.permute.xlu0 34
  %2371 = vperm.xlu0 %2370, %v2349
  %v2372 = vpop.permute.xlu0 %2371
  %v2374 = vmul.f32 %v2372, %v1605
  %2375 = vset.pattern.permute.xlu0 35
  %2376 = vperm.xlu0 %2375, %v2349
  %v2377 = vpop.permute.xlu0 %2376
  %v2379 = vmul.f32 %v2377, %v1610
  %2380 = vset.pattern.permute.xlu0 36
  %2381 = vperm.xlu0 %2380, %v2349
  %v2382 = vpop.permute.xlu0 %2381
  %v2384 = vmul.f32 %v2382, %v1615
  %2385 = vset.pattern.permute.xlu0 37
  %2386 = vperm.xlu0 %2385, %v2349
  %v2387 = vpop.permute.xlu0 %2386
  %v2389 = vmul.f32 %v2387, %v1620
  %2390 = vset.pattern.permute.xlu0 38
  %2391 = vperm.xlu0 %2390, %v2349
  %v2392 = vpop.permute.xlu0 %2391
  %v2394 = vmul.f32 %v2392, %v1625
  %2395 = vset.pattern.permute.xlu0 39
  %2396 = vperm.xlu0 %2395, %v2349
  %v2397 = vpop.permute.xlu0 %2396
  %v2399 = vmul.f32 %v2397, %v1630
  %2400 = vset.pattern.permute.xlu0 40
  %2401 = vperm.xlu0 %2400, %v2349
  %v2402 = vpop.permute.xlu0 %2401
  %v2404 = vmul.f32 %v2402, %v1635
  %2405 = vset.pattern.permute.xlu0 41
  %2406 = vperm.xlu0 %2405, %v2349
  %v2407 = vpop.permute.xlu0 %2406
  %v2409 = vmul.f32 %v2407, %v1640
  %2410 = vset.pattern.permute.xlu0 42
  %2411 = vperm.xlu0 %2410, %v2349
  %v2412 = vpop.permute.xlu0 %2411
  %v2414 = vmul.f32 %v2412, %v1645
  %2415 = vset.pattern.permute.xlu0 43
  %2416 = vperm.xlu0 %2415, %v2349
  %v2417 = vpop.permute.xlu0 %2416
  %v2419 = vmul.f32 %v2417, %v1650
  %2420 = vset.pattern.permute.xlu0 44
  %2421 = vperm.xlu0 %2420, %v2349
  %v2422 = vpop.permute.xlu0 %2421
  %v2424 = vmul.f32 %v2422, %v1655
  %2425 = vset.pattern.permute.xlu0 45
  %2426 = vperm.xlu0 %2425, %v2349
  %v2427 = vpop.permute.xlu0 %2426
  %v2429 = vmul.f32 %v2427, %v1660
  %2430 = vset.pattern.permute.xlu0 46
  %2431 = vperm.xlu0 %2430, %v2349
  %v2432 = vpop.permute.xlu0 %2431
  %v2434 = vmul.f32 %v2432, %v1665
  %2435 = vset.pattern.permute.xlu0 47
  %2436 = vperm.xlu0 %2435, %v2349
  %v2437 = vpop.permute.xlu0 %2436
  %v2439 = vmul.f32 %v2437, %v1670
  %v2440 = vadd.f32 %v2364, %v2369
  %v2441 = vadd.f32 %v2374, %v2379
  %v2442 = vadd.f32 %v2384, %v2389
  %v2443 = vadd.f32 %v2394, %v2399
  %v2444 = vadd.f32 %v2404, %v2409
  %v2445 = vadd.f32 %v2414, %v2419
  %v2446 = vadd.f32 %v2424, %v2429
  %v2447 = vadd.f32 %v2434, %v2439
  %v2448 = vadd.f32 %v2440, %v2441
  %v2449 = vadd.f32 %v2442, %v2443
  %v2450 = vadd.f32 %v2444, %v2445
  %v2451 = vadd.f32 %v2446, %v2447
  %v2452 = vadd.f32 %v2448, %v2449
  %v2453 = vadd.f32 %v2450, %v2451
  %v2454 = vadd.f32 %v2452, %v2453
  %v2455 = vadd.f32 %v2359, %v2454
  %v2456 = vmul.f32 %v2455, 0.5
  %v2457 = vtanh.pop %v2456
  %v2458 = vmul.f32 %v2457, 0.5
  %v2459 = vadd.f32 %v2458, 0.5
  %v2460 = vtanh.pop %v2455
  %v2461 = vmul.f32 %v2459, %v2343
  %2463 = vrot.lane.b32.xlu0 %v2460, 80
  %v2464 = vpop.permute.xlu0 %2463
  %v2466 = vmul.f32 %v2459, %v2464
  %2468 = vrot.lane.b32.xlu0 %v2466, 16
  %v2469 = vpop.permute.xlu0 %2468
  %v2471 = vadd.f32 %v2461, %v2469
  %v2472 = vtanh.pop %v2471
  %2474 = vrot.lane.b32.xlu0 %v2472, 16
  %v2475 = vpop.permute.xlu0 %2474
  %v2477 = vmul.f32 %v2459, %v2475
  %2479 = vrot.lane.b32.xlu0 %v2477, 96
  %v2480 = vpop.permute.xlu0 %2479
  %2482 = vst.msk [vmem:[#allocation2 + $0xc] sm:$0x3] %vm1714, %v2480
  %v2483 = vrot.slane %v1134, 7
  %v2485 = vrot.slane %v1584, 6
  %v2487 = vsel %vm1590, %v2483, %v2485
  %2488 = vset.pattern.permute.xlu0 32
  %2489 = vperm.xlu0 %2488, %v2477
  %v2490 = vpop.permute.xlu0 %2489
  %v2492 = vmul.f32 %v2490, %v1595
  %2493 = vset.pattern.permute.xlu0 33
  %2494 = vperm.xlu0 %2493, %v2477
  %v2495 = vpop.permute.xlu0 %2494
  %v2497 = vmul.f32 %v2495, %v1600
  %2498 = vset.pattern.permute.xlu0 34
  %2499 = vperm.xlu0 %2498, %v2477
  %v2500 = vpop.permute.xlu0 %2499
  %v2502 = vmul.f32 %v2500, %v1605
  %2503 = vset.pattern.permute.xlu0 35
  %2504 = vperm.xlu0 %2503, %v2477
  %v2505 = vpop.permute.xlu0 %2504
  %v2507 = vmul.f32 %v2505, %v1610
  %2508 = vset.pattern.permute.xlu0 36
  %2509 = vperm.xlu0 %2508, %v2477
  %v2510 = vpop.permute.xlu0 %2509
  %v2512 = vmul.f32 %v2510, %v1615
  %2513 = vset.pattern.permute.xlu0 37
  %2514 = vperm.xlu0 %2513, %v2477
  %v2515 = vpop.permute.xlu0 %2514
  %v2517 = vmul.f32 %v2515, %v1620
  %2518 = vset.pattern.permute.xlu0 38
  %2519 = vperm.xlu0 %2518, %v2477
  %v2520 = vpop.permute.xlu0 %2519
  %v2522 = vmul.f32 %v2520, %v1625
  %2523 = vset.pattern.permute.xlu0 39
  %2524 = vperm.xlu0 %2523, %v2477
  %v2525 = vpop.permute.xlu0 %2524
  %v2527 = vmul.f32 %v2525, %v1630
  %2528 = vset.pattern.permute.xlu0 40
  %2529 = vperm.xlu0 %2528, %v2477
  %v2530 = vpop.permute.xlu0 %2529
  %v2532 = vmul.f32 %v2530, %v1635
  %2533 = vset.pattern.permute.xlu0 41
  %2534 = vperm.xlu0 %2533, %v2477
  %v2535 = vpop.permute.xlu0 %2534
  %v2537 = vmul.f32 %v2535, %v1640
  %2538 = vset.pattern.permute.xlu0 42
  %2539 = vperm.xlu0 %2538, %v2477
  %v2540 = vpop.permute.xlu0 %2539
  %v2542 = vmul.f32 %v2540, %v1645
  %2543 = vset.pattern.permute.xlu0 43
  %2544 = vperm.xlu0 %2543, %v2477
  %v2545 = vpop.permute.xlu0 %2544
  %v2547 = vmul.f32 %v2545, %v1650
  %2548 = vset.pattern.permute.xlu0 44
  %2549 = vperm.xlu0 %2548, %v2477
  %v2550 = vpop.permute.xlu0 %2549
  %v2552 = vmul.f32 %v2550, %v1655
  %2553 = vset.pattern.permute.xlu0 45
  %2554 = vperm.xlu0 %2553, %v2477
  %v2555 = vpop.permute.xlu0 %2554
  %v2557 = vmul.f32 %v2555, %v1660
  %2558 = vset.pattern.permute.xlu0 46
  %2559 = vperm.xlu0 %2558, %v2477
  %v2560 = vpop.permute.xlu0 %2559
  %v2562 = vmul.f32 %v2560, %v1665
  %2563 = vset.pattern.permute.xlu0 47
  %2564 = vperm.xlu0 %2563, %v2477
  %v2565 = vpop.permute.xlu0 %2564
  %v2567 = vmul.f32 %v2565, %v1670
  %v2568 = vadd.f32 %v2492, %v2497
  %v2569 = vadd.f32 %v2502, %v2507
  %v2570 = vadd.f32 %v2512, %v2517
  %v2571 = vadd.f32 %v2522, %v2527
  %v2572 = vadd.f32 %v2532, %v2537
  %v2573 = vadd.f32 %v2542, %v2547
  %v2574 = vadd.f32 %v2552, %v2557
  %v2575 = vadd.f32 %v2562, %v2567
  %v2576 = vadd.f32 %v2568, %v2569
  %v2577 = vadd.f32 %v2570, %v2571
  %v2578 = vadd.f32 %v2572, %v2573
  %v2579 = vadd.f32 %v2574, %v2575
  %v2580 = vadd.f32 %v2576, %v2577
  %v2581 = vadd.f32 %v2578, %v2579
  %v2582 = vadd.f32 %v2580, %v2581
  %v2583 = vadd.f32 %v2487, %v2582
  %v2584 = vmul.f32 %v2583, 0.5
  %v2585 = vtanh.pop %v2584
  %v2586 = vmul.f32 %v2585, 0.5
  %v2587 = vadd.f32 %v2586, 0.5
  %v2588 = vtanh.pop %v2583
  %v2589 = vmul.f32 %v2587, %v2471
  %2591 = vrot.lane.b32.xlu0 %v2588, 80
  %v2592 = vpop.permute.xlu0 %2591
  %v2594 = vmul.f32 %v2587, %v2592
  %2596 = vrot.lane.b32.xlu0 %v2594, 16
  %v2597 = vpop.permute.xlu0 %2596
  %v2599 = vadd.f32 %v2589, %v2597
  %v2600 = vtanh.pop %v2599
  %2602 = vrot.lane.b32.xlu0 %v2600, 16
  %v2603 = vpop.permute.xlu0 %2602
  %v2605 = vmul.f32 %v2587, %v2603
  %2607 = vrot.lane.b32.xlu0 %v2605, 96
  %v2608 = vpop.permute.xlu0 %2607
  %2610 = vst.msk [vmem:[#allocation2 + $0xe] sm:$0x3] %vm1714, %v2608
  %v2611 = vld [vmem:[%s1 + $0x28] sm:$0xff]
  %v2612 = vld [vmem:[%s1 + $0x30] sm:$0xff]
  %v2613 = vld [vmem:[%s1 + $0x38] sm:$0xff]
  %v2614 = vld [vmem:[%s1 + $0x40] sm:$0xff]
  %v2615 = vld [vmem:[%s1 + $0x48] sm:$0x1]
  %v2616 = vld [vmem:[#allocation2] sm:$0xff]
  %v2617 = vld [vmem:[#allocation2 + $0x8] sm:$0xff]
  %v2618 = vlaneseq
  %v2619 = vshrl.u32 %v2618, 7
  %v2620 = vsub.s32 0, %v2619
  %v2621 = vrot.slane %v2615, %v2620
  %vm2622 = vcmask 130048
  %v2624 = vsel %vm2622, %v2616, 0
  %v2627 = vsel %vm2622, %v2617, 0
  %2629 = vmatprep.subr.mxu0 0.0
  %v2630 = vand.u32 %v2611, 4294901760
  %2631 = vmatpush1.msra.mxu0 %v2630
  %2632 = vmatprep.subr.mxu0 0.0
  %v2633 = vand.u32 %v2612, 4294901760
  %2634 = vmatpush1.msra.mxu0 %v2633
  %2635 = vmatprep.subr.mxu0 0.0
  %2636 = vmatpush1.msra.mxu0 0.0
  %2637 = vmatprep.subr.mxu0 0.0
  %2638 = vmatpush1.msra.mxu0 0.0
  %2639 = vmatprep.subr.mxu0 0.0
  %2640 = vmatpush1.msra.mxu0 0.0
  %2641 = vmatprep.subr.mxu0 0.0
  %2642 = vmatpush1.msra.mxu0 0.0
  %2643 = vmatprep.subr.mxu0 0.0
  %2644 = vmatpush1.msra.mxu0 0.0
  %2645 = vmatprep.subr.mxu0 0.0
  %2646 = vmatpush1.msra.mxu0 0.0
  %2647 = vmatprep.subr.mxu0 0.0
  %2648 = vmatpush1.msra.mxu0 0.0
  %2649 = vmatprep.subr.mxu0 0.0
  %2650 = vmatpush1.msra.mxu0 0.0
  %2651 = vmatprep.subr.mxu0 0.0
  %2652 = vmatpush1.msra.mxu0 0.0
  %2653 = vmatprep.subr.mxu0 0.0
  %2654 = vmatpush1.msra.mxu0 0.0
  %2655 = vmatprep.subr.mxu0 0.0
  %2656 = vmatpush1.msra.mxu0 0.0
  %2657 = vmatprep.subr.mxu0 0.0
  %2658 = vmatpush1.msra.mxu0 0.0
  %2659 = vmatprep.subr.mxu0 0.0
  %2660 = vmatpush1.msra.mxu0 0.0
  %2661 = vmatprep.subr.mxu0 0.0
  %2662 = vmatpush1.msra.mxu0 0.0
  %2663 = vmatprep.subr.mxu0 0.0
  %2664 = vmatpush1.msra.mxu0 0.0
  %2665 = vmatprep.subr.mxu0 0.0
  %2666 = vmatpush1.msra.mxu0 0.0
  %2667 = vmatprep.subr.mxu0 0.0
  %2668 = vmatpush1.msra.mxu0 0.0
  %2669 = vmatprep.subr.mxu0 0.0
  %2670 = vmatpush1.msra.mxu0 0.0
  %2671 = vmatprep.subr.mxu0 0.0
  %2672 = vmatpush1.msra.mxu0 0.0
  %2673 = vmatprep.subr.mxu0 0.0
  %2674 = vmatpush1.msra.mxu0 0.0
  %2675 = vmatprep.subr.mxu0 0.0
  %2676 = vmatpush1.msra.mxu0 0.0
  %2677 = vmatprep.subr.mxu0 0.0
  %2678 = vmatpush1.msra.mxu0 0.0
  %2679 = vmatprep.subr.mxu0 0.0
  %2680 = vmatpush1.msra.mxu0 0.0
  %2681 = vmatprep.subr.mxu0 0.0
  %2682 = vmatpush1.msra.mxu0 0.0
  %2683 = vmatprep.subr.mxu0 0.0
  %2684 = vmatpush1.msra.mxu0 0.0
  %2685 = vmatprep.subr.mxu0 0.0
  %2686 = vmatpush1.msra.mxu0 0.0
  %2687 = vmatprep.subr.mxu0 0.0
  %2688 = vmatpush1.msra.mxu0 0.0
  %2689 = vmatprep.subr.mxu0 0.0
  %2690 = vmatpush1.msra.mxu0 0.0
  %2691 = vmatprep.subr.mxu0 0.0
  %2692 = vmatpush1.msra.mxu0 0.0
  %2693 = vmatprep.subr.mxu0 0.0
  %2694 = vmatpush1.msra.mxu0 0.0
  %2695 = vmatprep.mubr.f32.mxu0 0.0
  %v2696 = vand.u32 %v2624, 4294901760
  %v2697 = vsub.f32 %v2624, %v2696
  %v2698 = vand.u32 %v2697, 4294901760
  %v2699 = vsub.f32 %v2697, %v2698
  %v2700 = vand.u32 %v2699, 4294901760
  %2701 = vmatmul.mubr.f32.gmra.mrb[0].mxu0 %v2700
  %v2702 = vpop.f32.mrb[0].mxu0
  %v2703 = vadd.f32 %v2621, %v2702
  %v2704 = vpop.f32.mrb[0].mxu0
  %2705 = vmatprep.mubr.f32.mxu0 0.0
  %v2706 = vand.u32 %v2627, 4294901760
  %v2707 = vsub.f32 %v2627, %v2706
  %v2708 = vand.u32 %v2707, 4294901760
  %v2709 = vsub.f32 %v2707, %v2708
  %v2710 = vand.u32 %v2709, 4294901760
  %2711 = vmatmul.mubr.f32.gmra.mrb[0].mxu0 %v2710
  %v2712 = vpop.f32.mrb[0].mxu0
  %v2713 = vadd.f32 %v2621, %v2712
  %v2714 = vpop.f32.mrb[0].mxu0
  %2715 = vdwg.mxu0
  %2716 = vmatprep.subr.mxu0 0.0
  %v2717 = vand.u32 %v2611, 4294901760
  %v2718 = vsub.f32 %v2611, %v2717
  %v2719 = vand.u32 %v2718, 4294901760
  %v2720 = vsub.f32 %v2718, %v2719
  %v2721 = vand.u32 %v2720, 4294901760
  %2722 = vmatpush1.msra.mxu0 %v2721
  %2723 = vmatprep.subr.mxu0 0.0
  %v2724 = vand.u32 %v2612, 4294901760
  %v2725 = vsub.f32 %v2612, %v2724
  %v2726 = vand.u32 %v2725, 4294901760
  %v2727 = vsub.f32 %v2725, %v2726
  %v2728 = vand.u32 %v2727, 4294901760
  %2729 = vmatpush1.msra.mxu0 %v2728
  %2730 = vmatprep.subr.mxu0 0.0
  %2731 = vmatpush1.msra.mxu0 0.0
  %2732 = vmatprep.subr.mxu0 0.0
  %2733 = vmatpush1.msra.mxu0 0.0
  %2734 = vmatprep.subr.mxu0 0.0
  %2735 = vmatpush1.msra.mxu0 0.0
  %2736 = vmatprep.subr.mxu0 0.0
  %2737 = vmatpush1.msra.mxu0 0.0
  %2738 = vmatprep.subr.mxu0 0.0
  %2739 = vmatpush1.msra.mxu0 0.0
  %2740 = vmatprep.subr.mxu0 0.0
  %2741 = vmatpush1.msra.mxu0 0.0
  %2742 = vmatprep.subr.mxu0 0.0
  %2743 = vmatpush1.msra.mxu0 0.0
  %2744 = vmatprep.subr.mxu0 0.0
  %2745 = vmatpush1.msra.mxu0 0.0
  %2746 = vmatprep.subr.mxu0 0.0
  %2747 = vmatpush1.msra.mxu0 0.0
  %2748 = vmatprep.subr.mxu0 0.0
  %2749 = vmatpush1.msra.mxu0 0.0
  %2750 = vmatprep.subr.mxu0 0.0
  %2751 = vmatpush1.msra.mxu0 0.0
  %2752 = vmatprep.subr.mxu0 0.0
  %2753 = vmatpush1.msra.mxu0 0.0
  %2754 = vmatprep.subr.mxu0 0.0
  %2755 = vmatpush1.msra.mxu0 0.0
  %2756 = vmatprep.subr.mxu0 0.0
  %2757 = vmatpush1.msra.mxu0 0.0
  %2758 = vmatprep.subr.mxu0 0.0
  %2759 = vmatpush1.msra.mxu0 0.0
  %2760 = vmatprep.subr.mxu0 0.0
  %2761 = vmatpush1.msra.mxu0 0.0
  %2762 = vmatprep.subr.mxu0 0.0
  %2763 = vmatpush1.msra.mxu0 0.0
  %2764 = vmatprep.subr.mxu0 0.0
  %2765 = vmatpush1.msra.mxu0 0.0
  %2766 = vmatprep.subr.mxu0 0.0
  %2767 = vmatpush1.msra.mxu0 0.0
  %2768 = vmatprep.subr.mxu0 0.0
  %2769 = vmatpush1.msra.mxu0 0.0
  %2770 = vmatprep.subr.mxu0 0.0
  %2771 = vmatpush1.msra.mxu0 0.0
  %2772 = vmatprep.subr.mxu0 0.0
  %2773 = vmatpush1.msra.mxu0 0.0
  %2774 = vmatprep.subr.mxu0 0.0
  %2775 = vmatpush1.msra.mxu0 0.0
  %2776 = vmatprep.subr.mxu0 0.0
  %2777 = vmatpush1.msra.mxu0 0.0
  %2778 = vmatprep.subr.mxu0 0.0
  %2779 = vmatpush1.msra.mxu0 0.0
  %2780 = vmatprep.subr.mxu0 0.0
  %2781 = vmatpush1.msra.mxu0 0.0
  %2782 = vmatprep.subr.mxu0 0.0
  %2783 = vmatpush1.msra.mxu0 0.0
  %2784 = vmatprep.subr.mxu0 0.0
  %2785 = vmatpush1.msra.mxu0 0.0
  %2786 = vmatprep.subr.mxu0 0.0
  %2787 = vmatpush1.msra.mxu0 0.0
  %2788 = vmatprep.subr.mxu0 0.0
  %2789 = vmatpush1.msra.mxu0 0.0
  %2790 = vmatprep.mubr.f32.mxu0 0.0
  %v2791 = vand.u32 %v2624, 4294901760
  %2792 = vmatmul.mubr.f32.gmra.mrb[0].mxu0 %v2791
  %v2793 = vpop.f32.mrb[0].mxu0
  %v2794 = vadd.f32 %v2703, %v2793
  %v2795 = vpop.f32.mrb[0].mxu0
  %2796 = vmatprep.mubr.f32.mxu0 0.0
  %v2797 = vand.u32 %v2627, 4294901760
  %2798 = vmatmul.mubr.f32.gmra.mrb[0].mxu0 %v2797
  %v2799 = vpop.f32.mrb[0].mxu0
  %v2800 = vadd.f32 %v2713, %v2799
  %v2801 = vpop.f32.mrb[0].mxu0
  %2802 = vdwg.mxu0
  %2803 = vmatprep.subr.mxu0 0.0
  %v2804 = vand.u32 %v2611, 4294901760
  %v2805 = vsub.f32 %v2611, %v2804
  %2806 = vmatpush1.msra.mxu0 %v2805
  %2807 = vmatprep.subr.mxu0 0.0
  %v2808 = vand.u32 %v2612, 4294901760
  %v2809 = vsub.f32 %v2612, %v2808
  %2810 = vmatpush1.msra.mxu0 %v2809
  %2811 = vmatprep.subr.mxu0 0.0
  %2812 = vmatpush1.msra.mxu0 0.0
  %2813 = vmatprep.subr.mxu0 0.0
  %2814 = vmatpush1.msra.mxu0 0.0
  %2815 = vmatprep.subr.mxu0 0.0
  %2816 = vmatpush1.msra.mxu0 0.0
  %2817 = vmatprep.subr.mxu0 0.0
  %2818 = vmatpush1.msra.mxu0 0.0
  %2819 = vmatprep.subr.mxu0 0.0
  %2820 = vmatpush1.msra.mxu0 0.0
  %2821 = vmatprep.subr.mxu0 0.0
  %2822 = vmatpush1.msra.mxu0 0.0
  %2823 = vmatprep.subr.mxu0 0.0
  %2824 = vmatpush1.msra.mxu0 0.0
  %2825 = vmatprep.subr.mxu0 0.0
  %2826 = vmatpush1.msra.mxu0 0.0
  %2827 = vmatprep.subr.mxu0 0.0
  %2828 = vmatpush1.msra.mxu0 0.0
  %2829 = vmatprep.subr.mxu0 0.0
  %2830 = vmatpush1.msra.mxu0 0.0
  %2831 = vmatprep.subr.mxu0 0.0
  %2832 = vmatpush1.msra.mxu0 0.0
  %2833 = vmatprep.subr.mxu0 0.0
  %2834 = vmatpush1.msra.mxu0 0.0
  %2835 = vmatprep.subr.mxu0 0.0
  %2836 = vmatpush1.msra.mxu0 0.0
  %2837 = vmatprep.subr.mxu0 0.0
  %2838 = vmatpush1.msra.mxu0 0.0
  %2839 = vmatprep.subr.mxu0 0.0
  %2840 = vmatpush1.msra.mxu0 0.0
  %2841 = vmatprep.subr.mxu0 0.0
  %2842 = vmatpush1.msra.mxu0 0.0
  %2843 = vmatprep.subr.mxu0 0.0
  %2844 = vmatpush1.msra.mxu0 0.0
  %2845 = vmatprep.subr.mxu0 0.0
  %2846 = vmatpush1.msra.mxu0 0.0
  %2847 = vmatprep.subr.mxu0 0.0
  %2848 = vmatpush1.msra.mxu0 0.0
  %2849 = vmatprep.subr.mxu0 0.0
  %2850 = vmatpush1.msra.mxu0 0.0
  %2851 = vmatprep.subr.mxu0 0.0
  %2852 = vmatpush1.msra.mxu0 0.0
  %2853 = vmatprep.subr.mxu0 0.0
  %2854 = vmatpush1.msra.mxu0 0.0
  %2855 = vmatprep.subr.mxu0 0.0
  %2856 = vmatpush1.msra.mxu0 0.0
  %2857 = vmatprep.subr.mxu0 0.0
  %2858 = vmatpush1.msra.mxu0 0.0
  %2859 = vmatprep.subr.mxu0 0.0
  %2860 = vmatpush1.msra.mxu0 0.0
  %2861 = vmatprep.subr.mxu0 0.0
  %2862 = vmatpush1.msra.mxu0 0.0
  %2863 = vmatprep.subr.mxu0 0.0
  %2864 = vmatpush1.msra.mxu0 0.0
  %2865 = vmatprep.subr.mxu0 0.0
  %2866 = vmatpush1.msra.mxu0 0.0
  %2867 = vmatprep.subr.mxu0 0.0
  %2868 = vmatpush1.msra.mxu0 0.0
  %2869 = vmatprep.subr.mxu0 0.0
  %2870 = vmatpush1.msra.mxu0 0.0
  %2871 = vmatprep.mubr.f32.mxu0 0.0
  %v2872 = vand.u32 %v2624, 4294901760
  %v2873 = vsub.f32 %v2624, %v2872
  %2874 = vmatmul.mubr.f32.gmra.mrb[0].mxu0 %v2873
  %v2875 = vpop.f32.mrb[0].mxu0
  %v2876 = vadd.f32 %v2794, %v2875
  %v2877 = vpop.f32.mrb[0].mxu0
  %2878 = vmatprep.mubr.f32.mxu0 0.0
  %v2879 = vand.u32 %v2627, 4294901760
  %v2880 = vsub.f32 %v2627, %v2879
  %2881 = vmatmul.mubr.f32.gmra.mrb[0].mxu0 %v2880
  %v2882 = vpop.f32.mrb[0].mxu0
  %v2883 = vadd.f32 %v2800, %v2882
  %v2884 = vpop.f32.mrb[0].mxu0
  %2885 = vdwg.mxu0
  %2886 = vmatprep.subr.mxu0 0.0
  %v2887 = vand.u32 %v2611, 4294901760
  %2888 = vmatpush1.msra.mxu0 %v2887
  %2889 = vmatprep.subr.mxu0 0.0
  %v2890 = vand.u32 %v2612, 4294901760
  %2891 = vmatpush1.msra.mxu0 %v2890
  %2892 = vmatprep.subr.mxu0 0.0
  %2893 = vmatpush1.msra.mxu0 0.0
  %2894 = vmatprep.subr.mxu0 0.0
  %2895 = vmatpush1.msra.mxu0 0.0
  %2896 = vmatprep.subr.mxu0 0.0
  %2897 = vmatpush1.msra.mxu0 0.0
  %2898 = vmatprep.subr.mxu0 0.0
  %2899 = vmatpush1.msra.mxu0 0.0
  %2900 = vmatprep.subr.mxu0 0.0
  %2901 = vmatpush1.msra.mxu0 0.0
  %2902 = vmatprep.subr.mxu0 0.0
  %2903 = vmatpush1.msra.mxu0 0.0
  %2904 = vmatprep.subr.mxu0 0.0
  %2905 = vmatpush1.msra.mxu0 0.0
  %2906 = vmatprep.subr.mxu0 0.0
  %2907 = vmatpush1.msra.mxu0 0.0
  %2908 = vmatprep.subr.mxu0 0.0
  %2909 = vmatpush1.msra.mxu0 0.0
  %2910 = vmatprep.subr.mxu0 0.0
  %2911 = vmatpush1.msra.mxu0 0.0
  %2912 = vmatprep.subr.mxu0 0.0
  %2913 = vmatpush1.msra.mxu0 0.0
  %2914 = vmatprep.subr.mxu0 0.0
  %2915 = vmatpush1.msra.mxu0 0.0
  %2916 = vmatprep.subr.mxu0 0.0
  %2917 = vmatpush1.msra.mxu0 0.0
  %2918 = vmatprep.subr.mxu0 0.0
  %2919 = vmatpush1.msra.mxu0 0.0
  %2920 = vmatprep.subr.mxu0 0.0
  %2921 = vmatpush1.msra.mxu0 0.0
  %2922 = vmatprep.subr.mxu0 0.0
  %2923 = vmatpush1.msra.mxu0 0.0
  %2924 = vmatprep.subr.mxu0 0.0
  %2925 = vmatpush1.msra.mxu0 0.0
  %2926 = vmatprep.subr.mxu0 0.0
  %2927 = vmatpush1.msra.mxu0 0.0
  %2928 = vmatprep.subr.mxu0 0.0
  %2929 = vmatpush1.msra.mxu0 0.0
  %2930 = vmatprep.subr.mxu0 0.0
  %2931 = vmatpush1.msra.mxu0 0.0
  %2932 = vmatprep.subr.mxu0 0.0
  %2933 = vmatpush1.msra.mxu0 0.0
  %2934 = vmatprep.subr.mxu0 0.0
  %2935 = vmatpush1.msra.mxu0 0.0
  %2936 = vmatprep.subr.mxu0 0.0
  %2937 = vmatpush1.msra.mxu0 0.0
  %2938 = vmatprep.subr.mxu0 0.0
  %2939 = vmatpush1.msra.mxu0 0.0
  %2940 = vmatprep.subr.mxu0 0.0
  %2941 = vmatpush1.msra.mxu0 0.0
  %2942 = vmatprep.subr.mxu0 0.0
  %2943 = vmatpush1.msra.mxu0 0.0
  %2944 = vmatprep.subr.mxu0 0.0
  %2945 = vmatpush1.msra.mxu0 0.0
  %2946 = vmatprep.subr.mxu0 0.0
  %2947 = vmatpush1.msra.mxu0 0.0
  %2948 = vmatprep.subr.mxu0 0.0
  %2949 = vmatpush1.msra.mxu0 0.0
  %2950 = vmatprep.subr.mxu0 0.0
  %2951 = vmatpush1.msra.mxu0 0.0
  %2952 = vmatprep.mubr.f32.mxu0 0.0
  %v2953 = vand.u32 %v2624, 4294901760
  %v2954 = vsub.f32 %v2624, %v2953
  %v2955 = vand.u32 %v2954, 4294901760
  %2956 = vmatmul.mubr.f32.gmra.mrb[0].mxu0 %v2955
  %v2957 = vpop.f32.mrb[0].mxu0
  %v2958 = vadd.f32 %v2876, %v2957
  %v2959 = vpop.f32.mrb[0].mxu0
  %2960 = vmatprep.mubr.f32.mxu0 0.0
  %v2961 = vand.u32 %v2627, 4294901760
  %v2962 = vsub.f32 %v2627, %v2961
  %v2963 = vand.u32 %v2962, 4294901760
  %2964 = vmatmul.mubr.f32.gmra.mrb[0].mxu0 %v2963
  %v2965 = vpop.f32.mrb[0].mxu0
  %v2966 = vadd.f32 %v2883, %v2965
  %v2967 = vpop.f32.mrb[0].mxu0
  %2968 = vdwg.mxu0
  %2969 = vmatprep.subr.mxu0 0.0
  %v2970 = vand.u32 %v2611, 4294901760
  %v2971 = vsub.f32 %v2611, %v2970
  %v2972 = vand.u32 %v2971, 4294901760
  %2973 = vmatpush1.msra.mxu0 %v2972
  %2974 = vmatprep.subr.mxu0 0.0
  %v2975 = vand.u32 %v2612, 4294901760
  %v2976 = vsub.f32 %v2612, %v2975
  %v2977 = vand.u32 %v2976, 4294901760
  %2978 = vmatpush1.msra.mxu0 %v2977
  %2979 = vmatprep.subr.mxu0 0.0
  %2980 = vmatpush1.msra.mxu0 0.0
  %2981 = vmatprep.subr.mxu0 0.0
  %2982 = vmatpush1.msra.mxu0 0.0
  %2983 = vmatprep.subr.mxu0 0.0
  %2984 = vmatpush1.msra.mxu0 0.0
  %2985 = vmatprep.subr.mxu0 0.0
  %2986 = vmatpush1.msra.mxu0 0.0
  %2987 = vmatprep.subr.mxu0 0.0
  %2988 = vmatpush1.msra.mxu0 0.0
  %2989 = vmatprep.subr.mxu0 0.0
  %2990 = vmatpush1.msra.mxu0 0.0
  %2991 = vmatprep.subr.mxu0 0.0
  %2992 = vmatpush1.msra.mxu0 0.0
  %2993 = vmatprep.subr.mxu0 0.0
  %2994 = vmatpush1.msra.mxu0 0.0
  %2995 = vmatprep.subr.mxu0 0.0
  %2996 = vmatpush1.msra.mxu0 0.0
  %2997 = vmatprep.subr.mxu0 0.0
  %2998 = vmatpush1.msra.mxu0 0.0
  %2999 = vmatprep.subr.mxu0 0.0
  %3000 = vmatpush1.msra.mxu0 0.0
  %3001 = vmatprep.subr.mxu0 0.0
  %3002 = vmatpush1.msra.mxu0 0.0
  %3003 = vmatprep.subr.mxu0 0.0
  %3004 = vmatpush1.msra.mxu0 0.0
  %3005 = vmatprep.subr.mxu0 0.0
  %3006 = vmatpush1.msra.mxu0 0.0
  %3007 = vmatprep.subr.mxu0 0.0
  %3008 = vmatpush1.msra.mxu0 0.0
  %3009 = vmatprep.subr.mxu0 0.0
  %3010 = vmatpush1.msra.mxu0 0.0
  %3011 = vmatprep.subr.mxu0 0.0
  %3012 = vmatpush1.msra.mxu0 0.0
  %3013 = vmatprep.subr.mxu0 0.0
  %3014 = vmatpush1.msra.mxu0 0.0
  %3015 = vmatprep.subr.mxu0 0.0
  %3016 = vmatpush1.msra.mxu0 0.0
  %3017 = vmatprep.subr.mxu0 0.0
  %3018 = vmatpush1.msra.mxu0 0.0
  %3019 = vmatprep.subr.mxu0 0.0
  %3020 = vmatpush1.msra.mxu0 0.0
  %3021 = vmatprep.subr.mxu0 0.0
  %3022 = vmatpush1.msra.mxu0 0.0
  %3023 = vmatprep.subr.mxu0 0.0
  %3024 = vmatpush1.msra.mxu0 0.0
  %3025 = vmatprep.subr.mxu0 0.0
  %3026 = vmatpush1.msra.mxu0 0.0
  %3027 = vmatprep.subr.mxu0 0.0
  %3028 = vmatpush1.msra.mxu0 0.0
  %3029 = vmatprep.subr.mxu0 0.0
  %3030 = vmatpush1.msra.mxu0 0.0
  %3031 = vmatprep.subr.mxu0 0.0
  %3032 = vmatpush1.msra.mxu0 0.0
  %3033 = vmatprep.subr.mxu0 0.0
  %3034 = vmatpush1.msra.mxu0 0.0
  %3035 = vmatprep.subr.mxu0 0.0
  %3036 = vmatpush1.msra.mxu0 0.0
  %3037 = vmatprep.subr.mxu0 0.0
  %3038 = vmatpush1.msra.mxu0 0.0
  %3039 = vmatprep.mubr.f32.mxu0 0.0
  %v3040 = vand.u32 %v2624, 4294901760
  %3041 = vmatmul.mubr.f32.gmra.mrb[0].mxu0 %v3040
  %v3042 = vpop.f32.mrb[0].mxu0
  %v3043 = vadd.f32 %v2958, %v3042
  %v3044 = vpop.f32.mrb[0].mxu0
  %3045 = vmatprep.mubr.f32.mxu0 0.0
  %v3046 = vand.u32 %v2627, 4294901760
  %3047 = vmatmul.mubr.f32.gmra.mrb[0].mxu0 %v3046
  %v3048 = vpop.f32.mrb[0].mxu0
  %v3049 = vadd.f32 %v2966, %v3048
  %v3050 = vpop.f32.mrb[0].mxu0
  %3051 = vdwg.mxu0
  %3052 = vmatprep.subr.mxu0 0.0
  %v3053 = vand.u32 %v2611, 4294901760
  %3054 = vmatpush1.msra.mxu0 %v3053
  %3055 = vmatprep.subr.mxu0 0.0
  %v3056 = vand.u32 %v2612, 4294901760
  %3057 = vmatpush1.msra.mxu0 %v3056
  %3058 = vmatprep.subr.mxu0 0.0
  %3059 = vmatpush1.msra.mxu0 0.0
  %3060 = vmatprep.subr.mxu0 0.0
  %3061 = vmatpush1.msra.mxu0 0.0
  %3062 = vmatprep.subr.mxu0 0.0
  %3063 = vmatpush1.msra.mxu0 0.0
  %3064 = vmatprep.subr.mxu0 0.0
  %3065 = vmatpush1.msra.mxu0 0.0
  %3066 = vmatprep.subr.mxu0 0.0
  %3067 = vmatpush1.msra.mxu0 0.0
  %3068 = vmatprep.subr.mxu0 0.0
  %3069 = vmatpush1.msra.mxu0 0.0
  %3070 = vmatprep.subr.mxu0 0.0
  %3071 = vmatpush1.msra.mxu0 0.0
  %3072 = vmatprep.subr.mxu0 0.0
  %3073 = vmatpush1.msra.mxu0 0.0
  %3074 = vmatprep.subr.mxu0 0.0
  %3075 = vmatpush1.msra.mxu0 0.0
  %3076 = vmatprep.subr.mxu0 0.0
  %3077 = vmatpush1.msra.mxu0 0.0
  %3078 = vmatprep.subr.mxu0 0.0
  %3079 = vmatpush1.msra.mxu0 0.0
  %3080 = vmatprep.subr.mxu0 0.0
  %3081 = vmatpush1.msra.mxu0 0.0
  %3082 = vmatprep.subr.mxu0 0.0
  %3083 = vmatpush1.msra.mxu0 0.0
  %3084 = vmatprep.subr.mxu0 0.0
  %3085 = vmatpush1.msra.mxu0 0.0
  %3086 = vmatprep.subr.mxu0 0.0
  %3087 = vmatpush1.msra.mxu0 0.0
  %3088 = vmatprep.subr.mxu0 0.0
  %3089 = vmatpush1.msra.mxu0 0.0
  %3090 = vmatprep.subr.mxu0 0.0
  %3091 = vmatpush1.msra.mxu0 0.0
  %3092 = vmatprep.subr.mxu0 0.0
  %3093 = vmatpush1.msra.mxu0 0.0
  %3094 = vmatprep.subr.mxu0 0.0
  %3095 = vmatpush1.msra.mxu0 0.0
  %3096 = vmatprep.subr.mxu0 0.0
  %3097 = vmatpush1.msra.mxu0 0.0
  %3098 = vmatprep.subr.mxu0 0.0
  %3099 = vmatpush1.msra.mxu0 0.0
  %3100 = vmatprep.subr.mxu0 0.0
  %3101 = vmatpush1.msra.mxu0 0.0
  %3102 = vmatprep.subr.mxu0 0.0
  %3103 = vmatpush1.msra.mxu0 0.0
  %3104 = vmatprep.subr.mxu0 0.0
  %3105 = vmatpush1.msra.mxu0 0.0
  %3106 = vmatprep.subr.mxu0 0.0
  %3107 = vmatpush1.msra.mxu0 0.0
  %3108 = vmatprep.subr.mxu0 0.0
  %3109 = vmatpush1.msra.mxu0 0.0
  %3110 = vmatprep.subr.mxu0 0.0
  %3111 = vmatpush1.msra.mxu0 0.0
  %3112 = vmatprep.subr.mxu0 0.0
  %3113 = vmatpush1.msra.mxu0 0.0
  %3114 = vmatprep.subr.mxu0 0.0
  %3115 = vmatpush1.msra.mxu0 0.0
  %3116 = vmatprep.subr.mxu0 0.0
  %3117 = vmatpush1.msra.mxu0 0.0
  %3118 = vmatprep.mubr.f32.mxu0 0.0
  %v3119 = vand.u32 %v2624, 4294901760
  %3120 = vmatmul.mubr.f32.gmra.mrb[0].mxu0 %v3119
  %v3121 = vpop.f32.mrb[0].mxu0
  %v3122 = vadd.f32 %v3043, %v3121
  %v3123 = vpop.f32.mrb[0].mxu0
  %3124 = vmatprep.mubr.f32.mxu0 0.0
  %v3125 = vand.u32 %v2627, 4294901760
  %3126 = vmatmul.mubr.f32.gmra.mrb[0].mxu0 %v3125
  %v3127 = vpop.f32.mrb[0].mxu0
  %v3128 = vadd.f32 %v3049, %v3127
  %v3129 = vpop.f32.mrb[0].mxu0
  %3130 = vdwg.mxu0
  %v3131 = vlaneseq
  %v3132 = vshrl.u32 %v3131, 7
  %v3133 = vsub.s32 0, %v3132
  %v3134 = vrot.slane %v2613, %v3133
  %v3135 = vmul.f32 %v3134, 0.0
  %v3136 = vlaneseq
  %v3137 = vshrl.u32 %v3136, 7
  %v3138 = vsub.s32 1, %v3137
  %v3139 = vrot.slane %v2613, %v3138
  %v3140 = vmul.f32 %v3139, 0.0
  %v3141 = vlaneseq
  %v3142 = vshrl.u32 %v3141, 7
  %v3143 = vsub.s32 2, %v3142
  %v3144 = vrot.slane %v2613, %v3143
  %v3145 = vmul.f32 %v3144, 0.0
  %v3146 = vlaneseq
  %v3147 = vshrl.u32 %v3146, 7
  %v3148 = vsub.s32 3, %v3147
  %v3149 = vrot.slane %v2613, %v3148
  %v3150 = vmul.f32 %v3149, 0.0
  %v3151 = vlaneseq
  %v3152 = vshrl.u32 %v3151, 7
  %v3153 = vsub.s32 4, %v3152
  %v3154 = vrot.slane %v2613, %v3153
  %v3155 = vmul.f32 %v3154, 0.0
  %v3156 = vlaneseq
  %v3157 = vshrl.u32 %v3156, 7
  %v3158 = vsub.s32 5, %v3157
  %v3159 = vrot.slane %v2613, %v3158
  %v3160 = vmul.f32 %v3159, 0.0
  %v3161 = vlaneseq
  %v3162 = vshrl.u32 %v3161, 7
  %v3163 = vsub.s32 6, %v3162
  %v3164 = vrot.slane %v2613, %v3163
  %v3165 = vmul.f32 %v3164, 0.0
  %v3166 = vlaneseq
  %v3167 = vshrl.u32 %v3166, 7
  %v3168 = vsub.s32 7, %v3167
  %v3169 = vrot.slane %v2613, %v3168
  %v3170 = vmul.f32 %v3169, 0.0
  %v3171 = vlaneseq
  %v3172 = vshrl.u32 %v3171, 7
  %v3173 = vsub.s32 0, %v3172
  %v3174 = vrot.slane %v2614, %v3173
  %v3175 = vmul.f32 %v3174, 0.0
  %v3176 = vlaneseq
  %v3177 = vshrl.u32 %v3176, 7
  %v3178 = vsub.s32 1, %v3177
  %v3179 = vrot.slane %v2614, %v3178
  %v3180 = vmul.f32 %v3179, 0.0
  %v3181 = vlaneseq
  %v3182 = vshrl.u32 %v3181, 7
  %v3183 = vsub.s32 2, %v3182
  %v3184 = vrot.slane %v2614, %v3183
  %v3185 = vmul.f32 %v3184, 0.0
  %v3186 = vlaneseq
  %v3187 = vshrl.u32 %v3186, 7
  %v3188 = vsub.s32 3, %v3187
  %v3189 = vrot.slane %v2614, %v3188
  %v3190 = vmul.f32 %v3189, 0.0
  %v3191 = vlaneseq
  %v3192 = vshrl.u32 %v3191, 7
  %v3193 = vsub.s32 4, %v3192
  %v3194 = vrot.slane %v2614, %v3193
  %v3195 = vmul.f32 %v3194, 0.0
  %v3196 = vlaneseq
  %v3197 = vshrl.u32 %v3196, 7
  %v3198 = vsub.s32 5, %v3197
  %v3199 = vrot.slane %v2614, %v3198
  %v3200 = vmul.f32 %v3199, 0.0
  %v3201 = vlaneseq
  %v3202 = vshrl.u32 %v3201, 7
  %v3203 = vsub.s32 6, %v3202
  %v3204 = vrot.slane %v2614, %v3203
  %v3205 = vmul.f32 %v3204, 0.0
  %v3206 = vlaneseq
  %v3207 = vshrl.u32 %v3206, 7
  %v3208 = vsub.s32 7, %v3207
  %v3209 = vrot.slane %v2614, %v3208
  %v3210 = vmul.f32 %v3209, 0.0
  %v3211 = vadd.f32 %v3135, %v3140
  %v3212 = vadd.f32 %v3145, %v3150
  %v3213 = vadd.f32 %v3155, %v3160
  %v3214 = vadd.f32 %v3165, %v3170
  %v3215 = vadd.f32 %v3175, %v3180
  %v3216 = vadd.f32 %v3185, %v3190
  %v3217 = vadd.f32 %v3195, %v3200
  %v3218 = vadd.f32 %v3205, %v3210
  %v3219 = vadd.f32 %v3211, %v3212
  %v3220 = vadd.f32 %v3213, %v3214
  %v3221 = vadd.f32 %v3215, %v3216
  %v3222 = vadd.f32 %v3217, %v3218
  %v3223 = vadd.f32 %v3219, %v3220
  %v3224 = vadd.f32 %v3221, %v3222
  %v3225 = vadd.f32 %v3223, %v3224
  %v3226 = vadd.f32 %v3122, %v3225
  %v3227 = vmul.f32 %v3226, 0.5
  %v3228 = vtanh.pop %v3227
  %v3229 = vmul.f32 %v3228, 0.5
  %v3230 = vadd.f32 %v3229, 0.5
  %v3231 = vtanh.pop %v3226
  %v3232 = vmul.f32 %v3230, 0.0
  %3234 = vrot.lane.b32.xlu0 %v3231, 80
  %v3235 = vpop.permute.xlu0 %3234
  %v3237 = vmul.f32 %v3230, %v3235
  %3239 = vrot.lane.b32.xlu0 %v3237, 16
  %v3240 = vpop.permute.xlu0 %3239
  %v3242 = vadd.f32 %v3232, %v3240
  %v3243 = vtanh.pop %v3242
  %3245 = vrot.lane.b32.xlu0 %v3243, 16
  %v3246 = vpop.permute.xlu0 %3245
  %v3248 = vmul.f32 %v3230, %v3246
  %3250 = vset.pattern.permute.xlu0 32
  %3251 = vperm.xlu0 %3250, %v3248
  %v3252 = vpop.permute.xlu0 %3251
  %v3254 = vmul.f32 %v3252, %v3134
  %3255 = vset.pattern.permute.xlu0 33
  %3256 = vperm.xlu0 %3255, %v3248
  %v3257 = vpop.permute.xlu0 %3256
  %v3259 = vmul.f32 %v3257, %v3139
  %3260 = vset.pattern.permute.xlu0 34
  %3261 = vperm.xlu0 %3260, %v3248
  %v3262 = vpop.permute.xlu0 %3261
  %v3264 = vmul.f32 %v3262, %v3144
  %3265 = vset.pattern.permute.xlu0 35
  %3266 = vperm.xlu0 %3265, %v3248
  %v3267 = vpop.permute.xlu0 %3266
  %v3269 = vmul.f32 %v3267, %v3149
  %3270 = vset.pattern.permute.xlu0 36
  %3271 = vperm.xlu0 %3270, %v3248
  %v3272 = vpop.permute.xlu0 %3271
  %v3274 = vmul.f32 %v3272, %v3154
  %3275 = vset.pattern.permute.xlu0 37
  %3276 = vperm.xlu0 %3275, %v3248
  %v3277 = vpop.permute.xlu0 %3276
  %v3279 = vmul.f32 %v3277, %v3159
  %3280 = vset.pattern.permute.xlu0 38
  %3281 = vperm.xlu0 %3280, %v3248
  %v3282 = vpop.permute.xlu0 %3281
  %v3284 = vmul.f32 %v3282, %v3164
  %3285 = vset.pattern.permute.xlu0 39
  %3286 = vperm.xlu0 %3285, %v3248
  %v3287 = vpop.permute.xlu0 %3286
  %v3289 = vmul.f32 %v3287, %v3169
  %3290 = vset.pattern.permute.xlu0 40
  %3291 = vperm.xlu0 %3290, %v3248
  %v3292 = vpop.permute.xlu0 %3291
  %v3294 = vmul.f32 %v3292, %v3174
  %3295 = vset.pattern.permute.xlu0 41
  %3296 = vperm.xlu0 %3295, %v3248
  %v3297 = vpop.permute.xlu0 %3296
  %v3299 = vmul.f32 %v3297, %v3179
  %3300 = vset.pattern.permute.xlu0 42
  %3301 = vperm.xlu0 %3300, %v3248
  %v3302 = vpop.permute.xlu0 %3301
  %v3304 = vmul.f32 %v3302, %v3184
  %3305 = vset.pattern.permute.xlu0 43
  %3306 = vperm.xlu0 %3305, %v3248
  %v3307 = vpop.permute.xlu0 %3306
  %v3309 = vmul.f32 %v3307, %v3189
  %3310 = vset.pattern.permute.xlu0 44
  %3311 = vperm.xlu0 %3310, %v3248
  %v3312 = vpop.permute.xlu0 %3311
  %v3314 = vmul.f32 %v3312, %v3194
  %3315 = vset.pattern.permute.xlu0 45
  %3316 = vperm.xlu0 %3315, %v3248
  %v3317 = vpop.permute.xlu0 %3316
  %v3319 = vmul.f32 %v3317, %v3199
  %3320 = vset.pattern.permute.xlu0 46
  %3321 = vperm.xlu0 %3320, %v3248
  %v3322 = vpop.permute.xlu0 %3321
  %v3324 = vmul.f32 %v3322, %v3204
  %3325 = vset.pattern.permute.xlu0 47
  %3326 = vperm.xlu0 %3325, %v3248
  %v3327 = vpop.permute.xlu0 %3326
  %v3329 = vmul.f32 %v3327, %v3209
  %v3330 = vadd.f32 %v3254, %v3259
  %v3331 = vadd.f32 %v3264, %v3269
  %v3332 = vadd.f32 %v3274, %v3279
  %v3333 = vadd.f32 %v3284, %v3289
  %v3334 = vadd.f32 %v3294, %v3299
  %v3335 = vadd.f32 %v3304, %v3309
  %v3336 = vadd.f32 %v3314, %v3319
  %v3337 = vadd.f32 %v3324, %v3329
  %v3338 = vadd.f32 %v3330, %v3331
  %v3339 = vadd.f32 %v3332, %v3333
  %v3340 = vadd.f32 %v3334, %v3335
  %v3341 = vadd.f32 %v3336, %v3337
  %v3342 = vadd.f32 %v3338, %v3339
  %v3343 = vadd.f32 %v3340, %v3341
  %v3344 = vadd.f32 %v3342, %v3343
  %v3346 = vrot.slane %v3344, 6
  %v3348 = vadd.f32 %v3122, %v3346
  %v3349 = vmul.f32 %v3348, 0.5
  %v3350 = vtanh.pop %v3349
  %v3351 = vmul.f32 %v3350, 0.5
  %v3352 = vadd.f32 %v3351, 0.5
  %v3353 = vtanh.pop %v3348
  %v3355 = vrot.slane %v3242, 6
  %v3357 = vmul.f32 %v3352, %v3355
  %3359 = vrot.lane.b32.xlu0 %v3353, 80
  %v3360 = vpop.permute.xlu0 %3359
  %v3362 = vmul.f32 %v3352, %v3360
  %3364 = vrot.lane.b32.xlu0 %v3362, 16
  %v3365 = vpop.permute.xlu0 %3364
  %v3367 = vadd.f32 %v3357, %v3365
  %v3368 = vtanh.pop %v3367
  %3370 = vrot.lane.b32.xlu0 %v3368, 16
  %v3371 = vpop.permute.xlu0 %3370
  %v3373 = vmul.f32 %v3352, %v3371
  %3375 = vset.pattern.permute.xlu0 32
  %3376 = vperm.xlu0 %3375, %v3373
  %v3377 = vpop.permute.xlu0 %3376
  %v3379 = vmul.f32 %v3377, %v3134
  %3380 = vset.pattern.permute.xlu0 33
  %3381 = vperm.xlu0 %3380, %v3373
  %v3382 = vpop.permute.xlu0 %3381
  %v3384 = vmul.f32 %v3382, %v3139
  %3385 = vset.pattern.permute.xlu0 34
  %3386 = vperm.xlu0 %3385, %v3373
  %v3387 = vpop.permute.xlu0 %3386
  %v3389 = vmul.f32 %v3387, %v3144
  %3390 = vset.pattern.permute.xlu0 35
  %3391 = vperm.xlu0 %3390, %v3373
  %v3392 = vpop.permute.xlu0 %3391
  %v3394 = vmul.f32 %v3392, %v3149
  %3395 = vset.pattern.permute.xlu0 36
  %3396 = vperm.xlu0 %3395, %v3373
  %v3397 = vpop.permute.xlu0 %3396
  %v3399 = vmul.f32 %v3397, %v3154
  %3400 = vset.pattern.permute.xlu0 37
  %3401 = vperm.xlu0 %3400, %v3373
  %v3402 = vpop.permute.xlu0 %3401
  %v3404 = vmul.f32 %v3402, %v3159
  %3405 = vset.pattern.permute.xlu0 38
  %3406 = vperm.xlu0 %3405, %v3373
  %v3407 = vpop.permute.xlu0 %3406
  %v3409 = vmul.f32 %v3407, %v3164
  %3410 = vset.pattern.permute.xlu0 39
  %3411 = vperm.xlu0 %3410, %v3373
  %v3412 = vpop.permute.xlu0 %3411
  %v3414 = vmul.f32 %v3412, %v3169
  %3415 = vset.pattern.permute.xlu0 40
  %3416 = vperm.xlu0 %3415, %v3373
  %v3417 = vpop.permute.xlu0 %3416
  %v3419 = vmul.f32 %v3417, %v3174
  %3420 = vset.pattern.permute.xlu0 41
  %3421 = vperm.xlu0 %3420, %v3373
  %v3422 = vpop.permute.xlu0 %3421
  %v3424 = vmul.f32 %v3422, %v3179
  %3425 = vset.pattern.permute.xlu0 42
  %3426 = vperm.xlu0 %3425, %v3373
  %v3427 = vpop.permute.xlu0 %3426
  %v3429 = vmul.f32 %v3427, %v3184
  %3430 = vset.pattern.permute.xlu0 43
  %3431 = vperm.xlu0 %3430, %v3373
  %v3432 = vpop.permute.xlu0 %3431
  %v3434 = vmul.f32 %v3432, %v3189
  %3435 = vset.pattern.permute.xlu0 44
  %3436 = vperm.xlu0 %3435, %v3373
  %v3437 = vpop.permute.xlu0 %3436
  %v3439 = vmul.f32 %v3437, %v3194
  %3440 = vset.pattern.permute.xlu0 45
  %3441 = vperm.xlu0 %3440, %v3373
  %v3442 = vpop.permute.xlu0 %3441
  %v3444 = vmul.f32 %v3442, %v3199
  %3445 = vset.pattern.permute.xlu0 46
  %3446 = vperm.xlu0 %3445, %v3373
  %v3447 = vpop.permute.xlu0 %3446
  %v3449 = vmul.f32 %v3447, %v3204
  %3450 = vset.pattern.permute.xlu0 47
  %3451 = vperm.xlu0 %3450, %v3373
  %v3452 = vpop.permute.xlu0 %3451
  %v3454 = vmul.f32 %v3452, %v3209
  %v3455 = vadd.f32 %v3379, %v3384
  %v3456 = vadd.f32 %v3389, %v3394
  %v3457 = vadd.f32 %v3399, %v3404
  %v3458 = vadd.f32 %v3409, %v3414
  %v3459 = vadd.f32 %v3419, %v3424
  %v3460 = vadd.f32 %v3429, %v3434
  %v3461 = vadd.f32 %v3439, %v3444
  %v3462 = vadd.f32 %v3449, %v3454
  %v3463 = vadd.f32 %v3455, %v3456
  %v3464 = vadd.f32 %v3457, %v3458
  %v3465 = vadd.f32 %v3459, %v3460
  %v3466 = vadd.f32 %v3461, %v3462
  %v3467 = vadd.f32 %v3463, %v3464
  %v3468 = vadd.f32 %v3465, %v3466
  %v3469 = vadd.f32 %v3467, %v3468
  %v3471 = vrot.slane %v3469, 6
  %v3473 = vadd.f32 %v3122, %v3471
  %v3474 = vmul.f32 %v3473, 0.5
  %v3475 = vtanh.pop %v3474
  %v3476 = vmul.f32 %v3475, 0.5
  %v3477 = vadd.f32 %v3476, 0.5
  %v3478 = vtanh.pop %v3473
  %v3480 = vrot.slane %v3367, 6
  %v3482 = vmul.f32 %v3477, %v3480
  %3484 = vrot.lane.b32.xlu0 %v3478, 80
  %v3485 = vpop.permute.xlu0 %3484
  %v3487 = vmul.f32 %v3477, %v3485
  %3489 = vrot.lane.b32.xlu0 %v3487, 16
  %v3490 = vpop.permute.xlu0 %3489
  %v3492 = vadd.f32 %v3482, %v3490
  %v3493 = vtanh.pop %v3492
  %3495 = vrot.lane.b32.xlu0 %v3493, 16
  %v3496 = vpop.permute.xlu0 %3495
  %v3498 = vmul.f32 %v3477, %v3496
  %3500 = vset.pattern.permute.xlu0 32
  %3501 = vperm.xlu0 %3500, %v3498
  %v3502 = vpop.permute.xlu0 %3501
  %v3504 = vmul.f32 %v3502, %v3134
  %3505 = vset.pattern.permute.xlu0 33
  %3506 = vperm.xlu0 %3505, %v3498
  %v3507 = vpop.permute.xlu0 %3506
  %v3509 = vmul.f32 %v3507, %v3139
  %3510 = vset.pattern.permute.xlu0 34
  %3511 = vperm.xlu0 %3510, %v3498
  %v3512 = vpop.permute.xlu0 %3511
  %v3514 = vmul.f32 %v3512, %v3144
  %3515 = vset.pattern.permute.xlu0 35
  %3516 = vperm.xlu0 %3515, %v3498
  %v3517 = vpop.permute.xlu0 %3516
  %v3519 = vmul.f32 %v3517, %v3149
  %3520 = vset.pattern.permute.xlu0 36
  %3521 = vperm.xlu0 %3520, %v3498
  %v3522 = vpop.permute.xlu0 %3521
  %v3524 = vmul.f32 %v3522, %v3154
  %3525 = vset.pattern.permute.xlu0 37
  %3526 = vperm.xlu0 %3525, %v3498
  %v3527 = vpop.permute.xlu0 %3526
  %v3529 = vmul.f32 %v3527, %v3159
  %3530 = vset.pattern.permute.xlu0 38
  %3531 = vperm.xlu0 %3530, %v3498
  %v3532 = vpop.permute.xlu0 %3531
  %v3534 = vmul.f32 %v3532, %v3164
  %3535 = vset.pattern.permute.xlu0 39
  %3536 = vperm.xlu0 %3535, %v3498
  %v3537 = vpop.permute.xlu0 %3536
  %v3539 = vmul.f32 %v3537, %v3169
  %3540 = vset.pattern.permute.xlu0 40
  %3541 = vperm.xlu0 %3540, %v3498
  %v3542 = vpop.permute.xlu0 %3541
  %v3544 = vmul.f32 %v3542, %v3174
  %3545 = vset.pattern.permute.xlu0 41
  %3546 = vperm.xlu0 %3545, %v3498
  %v3547 = vpop.permute.xlu0 %3546
  %v3549 = vmul.f32 %v3547, %v3179
  %3550 = vset.pattern.permute.xlu0 42
  %3551 = vperm.xlu0 %3550, %v3498
  %v3552 = vpop.permute.xlu0 %3551
  %v3554 = vmul.f32 %v3552, %v3184
  %3555 = vset.pattern.permute.xlu0 43
  %3556 = vperm.xlu0 %3555, %v3498
  %v3557 = vpop.permute.xlu0 %3556
  %v3559 = vmul.f32 %v3557, %v3189
  %3560 = vset.pattern.permute.xlu0 44
  %3561 = vperm.xlu0 %3560, %v3498
  %v3562 = vpop.permute.xlu0 %3561
  %v3564 = vmul.f32 %v3562, %v3194
  %3565 = vset.pattern.permute.xlu0 45
  %3566 = vperm.xlu0 %3565, %v3498
  %v3567 = vpop.permute.xlu0 %3566
  %v3569 = vmul.f32 %v3567, %v3199
  %3570 = vset.pattern.permute.xlu0 46
  %3571 = vperm.xlu0 %3570, %v3498
  %v3572 = vpop.permute.xlu0 %3571
  %v3574 = vmul.f32 %v3572, %v3204
  %3575 = vset.pattern.permute.xlu0 47
  %3576 = vperm.xlu0 %3575, %v3498
  %v3577 = vpop.permute.xlu0 %3576
  %v3579 = vmul.f32 %v3577, %v3209
  %v3580 = vadd.f32 %v3504, %v3509
  %v3581 = vadd.f32 %v3514, %v3519
  %v3582 = vadd.f32 %v3524, %v3529
  %v3583 = vadd.f32 %v3534, %v3539
  %v3584 = vadd.f32 %v3544, %v3549
  %v3585 = vadd.f32 %v3554, %v3559
  %v3586 = vadd.f32 %v3564, %v3569
  %v3587 = vadd.f32 %v3574, %v3579
  %v3588 = vadd.f32 %v3580, %v3581
  %v3589 = vadd.f32 %v3582, %v3583
  %v3590 = vadd.f32 %v3584, %v3585
  %v3591 = vadd.f32 %v3586, %v3587
  %v3592 = vadd.f32 %v3588, %v3589
  %v3593 = vadd.f32 %v3590, %v3591
  %v3594 = vadd.f32 %v3592, %v3593
  %v3596 = vrot.slane %v3594, 6
  %v3598 = vadd.f32 %v3122, %v3596
  %v3599 = vmul.f32 %v3598, 0.5
  %v3600 = vtanh.pop %v3599
  %v3601 = vmul.f32 %v3600, 0.5
  %v3602 = vadd.f32 %v3601, 0.5
  %v3603 = vtanh.pop %v3598
  %v3605 = vrot.slane %v3492, 6
  %v3607 = vmul.f32 %v3602, %v3605
  %3609 = vrot.lane.b32.xlu0 %v3603, 80
  %v3610 = vpop.permute.xlu0 %3609
  %v3612 = vmul.f32 %v3602, %v3610
  %3614 = vrot.lane.b32.xlu0 %v3612, 16
  %v3615 = vpop.permute.xlu0 %3614
  %v3617 = vadd.f32 %v3607, %v3615
  %v3618 = vtanh.pop %v3617
  %3620 = vrot.lane.b32.xlu0 %v3618, 16
  %v3621 = vpop.permute.xlu0 %3620
  %v3623 = vmul.f32 %v3602, %v3621
  %3625 = vset.pattern.permute.xlu0 32
  %3626 = vperm.xlu0 %3625, %v3623
  %v3627 = vpop.permute.xlu0 %3626
  %v3629 = vmul.f32 %v3627, %v3134
  %3630 = vset.pattern.permute.xlu0 33
  %3631 = vperm.xlu0 %3630, %v3623
  %v3632 = vpop.permute.xlu0 %3631
  %v3634 = vmul.f32 %v3632, %v3139
  %3635 = vset.pattern.permute.xlu0 34
  %3636 = vperm.xlu0 %3635, %v3623
  %v3637 = vpop.permute.xlu0 %3636
  %v3639 = vmul.f32 %v3637, %v3144
  %3640 = vset.pattern.permute.xlu0 35
  %3641 = vperm.xlu0 %3640, %v3623
  %v3642 = vpop.permute.xlu0 %3641
  %v3644 = vmul.f32 %v3642, %v3149
  %3645 = vset.pattern.permute.xlu0 36
  %3646 = vperm.xlu0 %3645, %v3623
  %v3647 = vpop.permute.xlu0 %3646
  %v3649 = vmul.f32 %v3647, %v3154
  %3650 = vset.pattern.permute.xlu0 37
  %3651 = vperm.xlu0 %3650, %v3623
  %v3652 = vpop.permute.xlu0 %3651
  %v3654 = vmul.f32 %v3652, %v3159
  %3655 = vset.pattern.permute.xlu0 38
  %3656 = vperm.xlu0 %3655, %v3623
  %v3657 = vpop.permute.xlu0 %3656
  %v3659 = vmul.f32 %v3657, %v3164
  %3660 = vset.pattern.permute.xlu0 39
  %3661 = vperm.xlu0 %3660, %v3623
  %v3662 = vpop.permute.xlu0 %3661
  %v3664 = vmul.f32 %v3662, %v3169
  %3665 = vset.pattern.permute.xlu0 40
  %3666 = vperm.xlu0 %3665, %v3623
  %v3667 = vpop.permute.xlu0 %3666
  %v3669 = vmul.f32 %v3667, %v3174
  %3670 = vset.pattern.permute.xlu0 41
  %3671 = vperm.xlu0 %3670, %v3623
  %v3672 = vpop.permute.xlu0 %3671
  %v3674 = vmul.f32 %v3672, %v3179
  %3675 = vset.pattern.permute.xlu0 42
  %3676 = vperm.xlu0 %3675, %v3623
  %v3677 = vpop.permute.xlu0 %3676
  %v3679 = vmul.f32 %v3677, %v3184
  %3680 = vset.pattern.permute.xlu0 43
  %3681 = vperm.xlu0 %3680, %v3623
  %v3682 = vpop.permute.xlu0 %3681
  %v3684 = vmul.f32 %v3682, %v3189
  %3685 = vset.pattern.permute.xlu0 44
  %3686 = vperm.xlu0 %3685, %v3623
  %v3687 = vpop.permute.xlu0 %3686
  %v3689 = vmul.f32 %v3687, %v3194
  %3690 = vset.pattern.permute.xlu0 45
  %3691 = vperm.xlu0 %3690, %v3623
  %v3692 = vpop.permute.xlu0 %3691
  %v3694 = vmul.f32 %v3692, %v3199
  %3695 = vset.pattern.permute.xlu0 46
  %3696 = vperm.xlu0 %3695, %v3623
  %v3697 = vpop.permute.xlu0 %3696
  %v3699 = vmul.f32 %v3697, %v3204
  %3700 = vset.pattern.permute.xlu0 47
  %3701 = vperm.xlu0 %3700, %v3623
  %v3702 = vpop.permute.xlu0 %3701
  %v3704 = vmul.f32 %v3702, %v3209
  %v3705 = vadd.f32 %v3629, %v3634
  %v3706 = vadd.f32 %v3639, %v3644
  %v3707 = vadd.f32 %v3649, %v3654
  %v3708 = vadd.f32 %v3659, %v3664
  %v3709 = vadd.f32 %v3669, %v3674
  %v3710 = vadd.f32 %v3679, %v3684
  %v3711 = vadd.f32 %v3689, %v3694
  %v3712 = vadd.f32 %v3699, %v3704
  %v3713 = vadd.f32 %v3705, %v3706
  %v3714 = vadd.f32 %v3707, %v3708
  %v3715 = vadd.f32 %v3709, %v3710
  %v3716 = vadd.f32 %v3711, %v3712
  %v3717 = vadd.f32 %v3713, %v3714
  %v3718 = vadd.f32 %v3715, %v3716
  %v3719 = vadd.f32 %v3717, %v3718
  %v3721 = vrot.slane %v3719, 6
  %v3723 = vadd.f32 %v3128, %v3721
  %v3724 = vmul.f32 %v3723, 0.5
  %v3725 = vtanh.pop %v3724
  %v3726 = vmul.f32 %v3725, 0.5
  %v3727 = vadd.f32 %v3726, 0.5
  %v3728 = vtanh.pop %v3723
  %v3730 = vrot.slane %v3617, 6
  %v3732 = vmul.f32 %v3727, %v3730
  %3734 = vrot.lane.b32.xlu0 %v3728, 80
  %v3735 = vpop.permute.xlu0 %3734
  %v3737 = vmul.f32 %v3727, %v3735
  %3739 = vrot.lane.b32.xlu0 %v3737, 16
  %v3740 = vpop.permute.xlu0 %3739
  %v3742 = vadd.f32 %v3732, %v3740
  %v3743 = vtanh.pop %v3742
  %3745 = vrot.lane.b32.xlu0 %v3743, 16
  %v3746 = vpop.permute.xlu0 %3745
  %v3748 = vmul.f32 %v3727, %v3746
  %3750 = vset.pattern.permute.xlu0 32
  %3751 = vperm.xlu0 %3750, %v3748
  %v3752 = vpop.permute.xlu0 %3751
  %v3754 = vmul.f32 %v3752, %v3134
  %3755 = vset.pattern.permute.xlu0 33
  %3756 = vperm.xlu0 %3755, %v3748
  %v3757 = vpop.permute.xlu0 %3756
  %v3759 = vmul.f32 %v3757, %v3139
  %3760 = vset.pattern.permute.xlu0 34
  %3761 = vperm.xlu0 %3760, %v3748
  %v3762 = vpop.permute.xlu0 %3761
  %v3764 = vmul.f32 %v3762, %v3144
  %3765 = vset.pattern.permute.xlu0 35
  %3766 = vperm.xlu0 %3765, %v3748
  %v3767 = vpop.permute.xlu0 %3766
  %v3769 = vmul.f32 %v3767, %v3149
  %3770 = vset.pattern.permute.xlu0 36
  %3771 = vperm.xlu0 %3770, %v3748
  %v3772 = vpop.permute.xlu0 %3771
  %v3774 = vmul.f32 %v3772, %v3154
  %3775 = vset.pattern.permute.xlu0 37
  %3776 = vperm.xlu0 %3775, %v3748
  %v3777 = vpop.permute.xlu0 %3776
  %v3779 = vmul.f32 %v3777, %v3159
  %3780 = vset.pattern.permute.xlu0 38
  %3781 = vperm.xlu0 %3780, %v3748
  %v3782 = vpop.permute.xlu0 %3781
  %v3784 = vmul.f32 %v3782, %v3164
  %3785 = vset.pattern.permute.xlu0 39
  %3786 = vperm.xlu0 %3785, %v3748
  %v3787 = vpop.permute.xlu0 %3786
  %v3789 = vmul.f32 %v3787, %v3169
  %3790 = vset.pattern.permute.xlu0 40
  %3791 = vperm.xlu0 %3790, %v3748
  %v3792 = vpop.permute.xlu0 %3791
  %v3794 = vmul.f32 %v3792, %v3174
  %3795 = vset.pattern.permute.xlu0 41
  %3796 = vperm.xlu0 %3795, %v3748
  %v3797 = vpop.permute.xlu0 %3796
  %v3799 = vmul.f32 %v3797, %v3179
  %3800 = vset.pattern.permute.xlu0 42
  %3801 = vperm.xlu0 %3800, %v3748
  %v3802 = vpop.permute.xlu0 %3801
  %v3804 = vmul.f32 %v3802, %v3184
  %3805 = vset.pattern.permute.xlu0 43
  %3806 = vperm.xlu0 %3805, %v3748
  %v3807 = vpop.permute.xlu0 %3806
  %v3809 = vmul.f32 %v3807, %v3189
  %3810 = vset.pattern.permute.xlu0 44
  %3811 = vperm.xlu0 %3810, %v3748
  %v3812 = vpop.permute.xlu0 %3811
  %v3814 = vmul.f32 %v3812, %v3194
  %3815 = vset.pattern.permute.xlu0 45
  %3816 = vperm.xlu0 %3815, %v3748
  %v3817 = vpop.permute.xlu0 %3816
  %v3819 = vmul.f32 %v3817, %v3199
  %3820 = vset.pattern.permute.xlu0 46
  %3821 = vperm.xlu0 %3820, %v3748
  %v3822 = vpop.permute.xlu0 %3821
  %v3824 = vmul.f32 %v3822, %v3204
  %3825 = vset.pattern.permute.xlu0 47
  %3826 = vperm.xlu0 %3825, %v3748
  %v3827 = vpop.permute.xlu0 %3826
  %v3829 = vmul.f32 %v3827, %v3209
  %v3830 = vadd.f32 %v3754, %v3759
  %v3831 = vadd.f32 %v3764, %v3769
  %v3832 = vadd.f32 %v3774, %v3779
  %v3833 = vadd.f32 %v3784, %v3789
  %v3834 = vadd.f32 %v3794, %v3799
  %v3835 = vadd.f32 %v3804, %v3809
  %v3836 = vadd.f32 %v3814, %v3819
  %v3837 = vadd.f32 %v3824, %v3829
  %v3838 = vadd.f32 %v3830, %v3831
  %v3839 = vadd.f32 %v3832, %v3833
  %v3840 = vadd.f32 %v3834, %v3835
  %v3841 = vadd.f32 %v3836, %v3837
  %v3842 = vadd.f32 %v3838, %v3839
  %v3843 = vadd.f32 %v3840, %v3841
  %v3844 = vadd.f32 %v3842, %v3843
  %v3846 = vrot.slane %v3844, 6
  %v3848 = vadd.f32 %v3128, %v3846
  %v3849 = vmul.f32 %v3848, 0.5
  %v3850 = vtanh.pop %v3849
  %v3851 = vmul.f32 %v3850, 0.5
  %v3852 = vadd.f32 %v3851, 0.5
  %v3853 = vtanh.pop %v3848
  %v3855 = vrot.slane %v3742, 6
  %v3857 = vmul.f32 %v3852, %v3855
  %3859 = vrot.lane.b32.xlu0 %v3853, 80
  %v3860 = vpop.permute.xlu0 %3859
  %v3862 = vmul.f32 %v3852, %v3860
  %3864 = vrot.lane.b32.xlu0 %v3862, 16
  %v3865 = vpop.permute.xlu0 %3864
  %v3867 = vadd.f32 %v3857, %v3865
  %v3868 = vtanh.pop %v3867
  %3870 = vrot.lane.b32.xlu0 %v3868, 16
  %v3871 = vpop.permute.xlu0 %3870
  %v3873 = vmul.f32 %v3852, %v3871
  %3875 = vset.pattern.permute.xlu0 32
  %3876 = vperm.xlu0 %3875, %v3873
  %v3877 = vpop.permute.xlu0 %3876
  %v3879 = vmul.f32 %v3877, %v3134
  %3880 = vset.pattern.permute.xlu0 33
  %3881 = vperm.xlu0 %3880, %v3873
  %v3882 = vpop.permute.xlu0 %3881
  %v3884 = vmul.f32 %v3882, %v3139
  %3885 = vset.pattern.permute.xlu0 34
  %3886 = vperm.xlu0 %3885, %v3873
  %v3887 = vpop.permute.xlu0 %3886
  %v3889 = vmul.f32 %v3887, %v3144
  %3890 = vset.pattern.permute.xlu0 35
  %3891 = vperm.xlu0 %3890, %v3873
  %v3892 = vpop.permute.xlu0 %3891
  %v3894 = vmul.f32 %v3892, %v3149
  %3895 = vset.pattern.permute.xlu0 36
  %3896 = vperm.xlu0 %3895, %v3873
  %v3897 = vpop.permute.xlu0 %3896
  %v3899 = vmul.f32 %v3897, %v3154
  %3900 = vset.pattern.permute.xlu0 37
  %3901 = vperm.xlu0 %3900, %v3873
  %v3902 = vpop.permute.xlu0 %3901
  %v3904 = vmul.f32 %v3902, %v3159
  %3905 = vset.pattern.permute.xlu0 38
  %3906 = vperm.xlu0 %3905, %v3873
  %v3907 = vpop.permute.xlu0 %3906
  %v3909 = vmul.f32 %v3907, %v3164
  %3910 = vset.pattern.permute.xlu0 39
  %3911 = vperm.xlu0 %3910, %v3873
  %v3912 = vpop.permute.xlu0 %3911
  %v3914 = vmul.f32 %v3912, %v3169
  %3915 = vset.pattern.permute.xlu0 40
  %3916 = vperm.xlu0 %3915, %v3873
  %v3917 = vpop.permute.xlu0 %3916
  %v3919 = vmul.f32 %v3917, %v3174
  %3920 = vset.pattern.permute.xlu0 41
  %3921 = vperm.xlu0 %3920, %v3873
  %v3922 = vpop.permute.xlu0 %3921
  %v3924 = vmul.f32 %v3922, %v3179
  %3925 = vset.pattern.permute.xlu0 42
  %3926 = vperm.xlu0 %3925, %v3873
  %v3927 = vpop.permute.xlu0 %3926
  %v3929 = vmul.f32 %v3927, %v3184
  %3930 = vset.pattern.permute.xlu0 43
  %3931 = vperm.xlu0 %3930, %v3873
  %v3932 = vpop.permute.xlu0 %3931
  %v3934 = vmul.f32 %v3932, %v3189
  %3935 = vset.pattern.permute.xlu0 44
  %3936 = vperm.xlu0 %3935, %v3873
  %v3937 = vpop.permute.xlu0 %3936
  %v3939 = vmul.f32 %v3937, %v3194
  %3940 = vset.pattern.permute.xlu0 45
  %3941 = vperm.xlu0 %3940, %v3873
  %v3942 = vpop.permute.xlu0 %3941
  %v3944 = vmul.f32 %v3942, %v3199
  %3945 = vset.pattern.permute.xlu0 46
  %3946 = vperm.xlu0 %3945, %v3873
  %v3947 = vpop.permute.xlu0 %3946
  %v3949 = vmul.f32 %v3947, %v3204
  %3950 = vset.pattern.permute.xlu0 47
  %3951 = vperm.xlu0 %3950, %v3873
  %v3952 = vpop.permute.xlu0 %3951
  %v3954 = vmul.f32 %v3952, %v3209
  %v3955 = vadd.f32 %v3879, %v3884
  %v3956 = vadd.f32 %v3889, %v3894
  %v3957 = vadd.f32 %v3899, %v3904
  %v3958 = vadd.f32 %v3909, %v3914
  %v3959 = vadd.f32 %v3919, %v3924
  %v3960 = vadd.f32 %v3929, %v3934
  %v3961 = vadd.f32 %v3939, %v3944
  %v3962 = vadd.f32 %v3949, %v3954
  %v3963 = vadd.f32 %v3955, %v3956
  %v3964 = vadd.f32 %v3957, %v3958
  %v3965 = vadd.f32 %v3959, %v3960
  %v3966 = vadd.f32 %v3961, %v3962
  %v3967 = vadd.f32 %v3963, %v3964
  %v3968 = vadd.f32 %v3965, %v3966
  %v3969 = vadd.f32 %v3967, %v3968
  %v3971 = vrot.slane %v3969, 6
  %v3973 = vadd.f32 %v3128, %v3971
  %v3974 = vmul.f32 %v3973, 0.5
  %v3975 = vtanh.pop %v3974
  %v3976 = vmul.f32 %v3975, 0.5
  %v3977 = vadd.f32 %v3976, 0.5
  %v3978 = vtanh.pop %v3973
  %v3980 = vrot.slane %v3867, 6
  %v3982 = vmul.f32 %v3977, %v3980
  %3984 = vrot.lane.b32.xlu0 %v3978, 80
  %v3985 = vpop.permute.xlu0 %3984
  %v3987 = vmul.f32 %v3977, %v3985
  %3989 = vrot.lane.b32.xlu0 %v3987, 16
  %v3990 = vpop.permute.xlu0 %3989
  %v3992 = vadd.f32 %v3982, %v3990
  %v3993 = vtanh.pop %v3992
  %3995 = vrot.lane.b32.xlu0 %v3993, 16
  %v3996 = vpop.permute.xlu0 %3995
  %v3998 = vmul.f32 %v3977, %v3996
  %4000 = vset.pattern.permute.xlu0 32
  %4001 = vperm.xlu0 %4000, %v3998
  %v4002 = vpop.permute.xlu0 %4001
  %v4004 = vmul.f32 %v4002, %v3134
  %4005 = vset.pattern.permute.xlu0 33
  %4006 = vperm.xlu0 %4005, %v3998
  %v4007 = vpop.permute.xlu0 %4006
  %v4009 = vmul.f32 %v4007, %v3139
  %4010 = vset.pattern.permute.xlu0 34
  %4011 = vperm.xlu0 %4010, %v3998
  %v4012 = vpop.permute.xlu0 %4011
  %v4014 = vmul.f32 %v4012, %v3144
  %4015 = vset.pattern.permute.xlu0 35
  %4016 = vperm.xlu0 %4015, %v3998
  %v4017 = vpop.permute.xlu0 %4016
  %v4019 = vmul.f32 %v4017, %v3149
  %4020 = vset.pattern.permute.xlu0 36
  %4021 = vperm.xlu0 %4020, %v3998
  %v4022 = vpop.permute.xlu0 %4021
  %v4024 = vmul.f32 %v4022, %v3154
  %4025 = vset.pattern.permute.xlu0 37
  %4026 = vperm.xlu0 %4025, %v3998
  %v4027 = vpop.permute.xlu0 %4026
  %v4029 = vmul.f32 %v4027, %v3159
  %4030 = vset.pattern.permute.xlu0 38
  %4031 = vperm.xlu0 %4030, %v3998
  %v4032 = vpop.permute.xlu0 %4031
  %v4034 = vmul.f32 %v4032, %v3164
  %4035 = vset.pattern.permute.xlu0 39
  %4036 = vperm.xlu0 %4035, %v3998
  %v4037 = vpop.permute.xlu0 %4036
  %v4039 = vmul.f32 %v4037, %v3169
  %4040 = vset.pattern.permute.xlu0 40
  %4041 = vperm.xlu0 %4040, %v3998
  %v4042 = vpop.permute.xlu0 %4041
  %v4044 = vmul.f32 %v4042, %v3174
  %4045 = vset.pattern.permute.xlu0 41
  %4046 = vperm.xlu0 %4045, %v3998
  %v4047 = vpop.permute.xlu0 %4046
  %v4049 = vmul.f32 %v4047, %v3179
  %4050 = vset.pattern.permute.xlu0 42
  %4051 = vperm.xlu0 %4050, %v3998
  %v4052 = vpop.permute.xlu0 %4051
  %v4054 = vmul.f32 %v4052, %v3184
  %4055 = vset.pattern.permute.xlu0 43
  %4056 = vperm.xlu0 %4055, %v3998
  %v4057 = vpop.permute.xlu0 %4056
  %v4059 = vmul.f32 %v4057, %v3189
  %4060 = vset.pattern.permute.xlu0 44
  %4061 = vperm.xlu0 %4060, %v3998
  %v4062 = vpop.permute.xlu0 %4061
  %v4064 = vmul.f32 %v4062, %v3194
  %4065 = vset.pattern.permute.xlu0 45
  %4066 = vperm.xlu0 %4065, %v3998
  %v4067 = vpop.permute.xlu0 %4066
  %v4069 = vmul.f32 %v4067, %v3199
  %4070 = vset.pattern.permute.xlu0 46
  %4071 = vperm.xlu0 %4070, %v3998
  %v4072 = vpop.permute.xlu0 %4071
  %v4074 = vmul.f32 %v4072, %v3204
  %4075 = vset.pattern.permute.xlu0 47
  %4076 = vperm.xlu0 %4075, %v3998
  %v4077 = vpop.permute.xlu0 %4076
  %v4079 = vmul.f32 %v4077, %v3209
  %v4080 = vadd.f32 %v4004, %v4009
  %v4081 = vadd.f32 %v4014, %v4019
  %v4082 = vadd.f32 %v4024, %v4029
  %v4083 = vadd.f32 %v4034, %v4039
  %v4084 = vadd.f32 %v4044, %v4049
  %v4085 = vadd.f32 %v4054, %v4059
  %v4086 = vadd.f32 %v4064, %v4069
  %v4087 = vadd.f32 %v4074, %v4079
  %v4088 = vadd.f32 %v4080, %v4081
  %v4089 = vadd.f32 %v4082, %v4083
  %v4090 = vadd.f32 %v4084, %v4085
  %v4091 = vadd.f32 %v4086, %v4087
  %v4092 = vadd.f32 %v4088, %v4089
  %v4093 = vadd.f32 %v4090, %v4091
  %v4094 = vadd.f32 %v4092, %v4093
  %v4096 = vrot.slane %v4094, 6
  %v4098 = vadd.f32 %v3128, %v4096
  %v4099 = vmul.f32 %v4098, 0.5
  %v4100 = vtanh.pop %v4099
  %v4101 = vmul.f32 %v4100, 0.5
  %v4102 = vadd.f32 %v4101, 0.5
  %v4103 = vtanh.pop %v4098
  %v4105 = vrot.slane %v3992, 6
  %v4107 = vmul.f32 %v4102, %v4105
  %4109 = vrot.lane.b32.xlu0 %v4103, 80
  %v4110 = vpop.permute.xlu0 %4109
  %v4112 = vmul.f32 %v4102, %v4110
  %4114 = vrot.lane.b32.xlu0 %v4112, 16
  %v4115 = vpop.permute.xlu0 %4114
  %v4117 = vadd.f32 %v4107, %v4115
  %v4118 = vtanh.pop %v4117
  %4120 = vrot.lane.b32.xlu0 %v4118, 16
  %v4121 = vpop.permute.xlu0 %4120
  %v4123 = vmul.f32 %v4102, %v4121
  %v4124 = vld [vmem:[%s1 + $0x50] sm:$0xff]
  %v4125 = vld [vmem:[%s1 + $0x58] sm:$0xff]
  %v4126 = vld [vmem:[%s1 + $0x60] sm:$0x1]
  %v4127 = vlaneseq
  %v4128 = vshrl.u32 %v4127, 7
  %v4129 = vsub.s32 0, %v4128
  %v4130 = vrot.slane %v4126, %v4129
  %v4132 = vrot.slane %v4123, 6
  %4133 = vrot.lane.b32.xlu0 %v4132, 96
  %v4134 = vpop.permute.xlu0 %4133
  %v4135 = vsel %vm2622, %v4134, 0
  %4137 = vmatprep.subr.mxu0 0.0
  %v4138 = vand.u32 %v4124, 4294901760
  %4139 = vmatpush1.msra.mxu0 %v4138
  %4140 = vmatprep.subr.mxu0 0.0
  %v4141 = vand.u32 %v4125, 4294901760
  %4142 = vmatpush1.msra.mxu0 %v4141
  %4143 = vmatprep.subr.mxu0 0.0
  %4144 = vmatpush1.msra.mxu0 0.0
  %4145 = vmatprep.subr.mxu0 0.0
  %4146 = vmatpush1.msra.mxu0 0.0
  %4147 = vmatprep.subr.mxu0 0.0
  %4148 = vmatpush1.msra.mxu0 0.0
  %4149 = vmatprep.subr.mxu0 0.0
  %4150 = vmatpush1.msra.mxu0 0.0
  %4151 = vmatprep.subr.mxu0 0.0
  %4152 = vmatpush1.msra.mxu0 0.0
  %4153 = vmatprep.subr.mxu0 0.0
  %4154 = vmatpush1.msra.mxu0 0.0
  %4155 = vmatprep.subr.mxu0 0.0
  %4156 = vmatpush1.msra.mxu0 0.0
  %4157 = vmatprep.subr.mxu0 0.0
  %4158 = vmatpush1.msra.mxu0 0.0
  %4159 = vmatprep.subr.mxu0 0.0
  %4160 = vmatpush1.msra.mxu0 0.0
  %4161 = vmatprep.subr.mxu0 0.0
  %4162 = vmatpush1.msra.mxu0 0.0
  %4163 = vmatprep.subr.mxu0 0.0
  %4164 = vmatpush1.msra.mxu0 0.0
  %4165 = vmatprep.subr.mxu0 0.0
  %4166 = vmatpush1.msra.mxu0 0.0
  %4167 = vmatprep.subr.mxu0 0.0
  %4168 = vmatpush1.msra.mxu0 0.0
  %4169 = vmatprep.subr.mxu0 0.0
  %4170 = vmatpush1.msra.mxu0 0.0
  %4171 = vmatprep.subr.mxu0 0.0
  %4172 = vmatpush1.msra.mxu0 0.0
  %4173 = vmatprep.subr.mxu0 0.0
  %4174 = vmatpush1.msra.mxu0 0.0
  %4175 = vmatprep.subr.mxu0 0.0
  %4176 = vmatpush1.msra.mxu0 0.0
  %4177 = vmatprep.subr.mxu0 0.0
  %4178 = vmatpush1.msra.mxu0 0.0
  %4179 = vmatprep.subr.mxu0 0.0
  %4180 = vmatpush1.msra.mxu0 0.0
  %4181 = vmatprep.subr.mxu0 0.0
  %4182 = vmatpush1.msra.mxu0 0.0
  %4183 = vmatprep.subr.mxu0 0.0
  %4184 = vmatpush1.msra.mxu0 0.0
  %4185 = vmatprep.subr.mxu0 0.0
  %4186 = vmatpush1.msra.mxu0 0.0
  %4187 = vmatprep.subr.mxu0 0.0
  %4188 = vmatpush1.msra.mxu0 0.0
  %4189 = vmatprep.subr.mxu0 0.0
  %4190 = vmatpush1.msra.mxu0 0.0
  %4191 = vmatprep.subr.mxu0 0.0
  %4192 = vmatpush1.msra.mxu0 0.0
  %4193 = vmatprep.subr.mxu0 0.0
  %4194 = vmatpush1.msra.mxu0 0.0
  %4195 = vmatprep.subr.mxu0 0.0
  %4196 = vmatpush1.msra.mxu0 0.0
  %4197 = vmatprep.subr.mxu0 0.0
  %4198 = vmatpush1.msra.mxu0 0.0
  %4199 = vmatprep.subr.mxu0 0.0
  %4200 = vmatpush1.msra.mxu0 0.0
  %4201 = vmatprep.subr.mxu0 0.0
  %4202 = vmatpush1.msra.mxu0 0.0
  %4203 = vmatprep.mubr.f32.mxu0 0.0
  %v4204 = vand.u32 %v4135, 4294901760
  %v4205 = vsub.f32 %v4135, %v4204
  %v4206 = vand.u32 %v4205, 4294901760
  %v4207 = vsub.f32 %v4205, %v4206
  %v4208 = vand.u32 %v4207, 4294901760
  %4209 = vmatmul.mubr.f32.gmra.mrb[0].mxu0 %v4208
  %v4210 = vpop.f32.mrb[0].mxu0
  %v4211 = vadd.f32 %v4130, %v4210
  %v4212 = vpop.f32.mrb[0].mxu0
  %4213 = vdwg.mxu0
  %4214 = vmatprep.subr.mxu0 0.0
  %v4215 = vand.u32 %v4124, 4294901760
  %v4216 = vsub.f32 %v4124, %v4215
  %v4217 = vand.u32 %v4216, 4294901760
  %v4218 = vsub.f32 %v4216, %v4217
  %v4219 = vand.u32 %v4218, 4294901760
  %4220 = vmatpush1.msra.mxu0 %v4219
  %4221 = vmatprep.subr.mxu0 0.0
  %v4222 = vand.u32 %v4125, 4294901760
  %v4223 = vsub.f32 %v4125, %v4222
  %v4224 = vand.u32 %v4223, 4294901760
  %v4225 = vsub.f32 %v4223, %v4224
  %v4226 = vand.u32 %v4225, 4294901760
  %4227 = vmatpush1.msra.mxu0 %v4226
  %4228 = vmatprep.subr.mxu0 0.0
  %4229 = vmatpush1.msra.mxu0 0.0
  %4230 = vmatprep.subr.mxu0 0.0
  %4231 = vmatpush1.msra.mxu0 0.0
  %4232 = vmatprep.subr.mxu0 0.0
  %4233 = vmatpush1.msra.mxu0 0.0
  %4234 = vmatprep.subr.mxu0 0.0
  %4235 = vmatpush1.msra.mxu0 0.0
  %4236 = vmatprep.subr.mxu0 0.0
  %4237 = vmatpush1.msra.mxu0 0.0
  %4238 = vmatprep.subr.mxu0 0.0
  %4239 = vmatpush1.msra.mxu0 0.0
  %4240 = vmatprep.subr.mxu0 0.0
  %4241 = vmatpush1.msra.mxu0 0.0
  %4242 = vmatprep.subr.mxu0 0.0
  %4243 = vmatpush1.msra.mxu0 0.0
  %4244 = vmatprep.subr.mxu0 0.0
  %4245 = vmatpush1.msra.mxu0 0.0
  %4246 = vmatprep.subr.mxu0 0.0
  %4247 = vmatpush1.msra.mxu0 0.0
  %4248 = vmatprep.subr.mxu0 0.0
  %4249 = vmatpush1.msra.mxu0 0.0
  %4250 = vmatprep.subr.mxu0 0.0
  %4251 = vmatpush1.msra.mxu0 0.0
  %4252 = vmatprep.subr.mxu0 0.0
  %4253 = vmatpush1.msra.mxu0 0.0
  %4254 = vmatprep.subr.mxu0 0.0
  %4255 = vmatpush1.msra.mxu0 0.0
  %4256 = vmatprep.subr.mxu0 0.0
  %4257 = vmatpush1.msra.mxu0 0.0
  %4258 = vmatprep.subr.mxu0 0.0
  %4259 = vmatpush1.msra.mxu0 0.0
  %4260 = vmatprep.subr.mxu0 0.0
  %4261 = vmatpush1.msra.mxu0 0.0
  %4262 = vmatprep.subr.mxu0 0.0
  %4263 = vmatpush1.msra.mxu0 0.0
  %4264 = vmatprep.subr.mxu0 0.0
  %4265 = vmatpush1.msra.mxu0 0.0
  %4266 = vmatprep.subr.mxu0 0.0
  %4267 = vmatpush1.msra.mxu0 0.0
  %4268 = vmatprep.subr.mxu0 0.0
  %4269 = vmatpush1.msra.mxu0 0.0
  %4270 = vmatprep.subr.mxu0 0.0
  %4271 = vmatpush1.msra.mxu0 0.0
  %4272 = vmatprep.subr.mxu0 0.0
  %4273 = vmatpush1.msra.mxu0 0.0
  %4274 = vmatprep.subr.mxu0 0.0
  %4275 = vmatpush1.msra.mxu0 0.0
  %4276 = vmatprep.subr.mxu0 0.0
  %4277 = vmatpush1.msra.mxu0 0.0
  %4278 = vmatprep.subr.mxu0 0.0
  %4279 = vmatpush1.msra.mxu0 0.0
  %4280 = vmatprep.subr.mxu0 0.0
  %4281 = vmatpush1.msra.mxu0 0.0
  %4282 = vmatprep.subr.mxu0 0.0
  %4283 = vmatpush1.msra.mxu0 0.0
  %4284 = vmatprep.subr.mxu0 0.0
  %4285 = vmatpush1.msra.mxu0 0.0
  %4286 = vmatprep.subr.mxu0 0.0
  %4287 = vmatpush1.msra.mxu0 0.0
  %4288 = vmatprep.mubr.f32.mxu0 0.0
  %v4289 = vand.u32 %v4135, 4294901760
  %4290 = vmatmul.mubr.f32.gmra.mrb[0].mxu0 %v4289
  %v4291 = vpop.f32.mrb[0].mxu0
  %v4292 = vadd.f32 %v4211, %v4291
  %v4293 = vpop.f32.mrb[0].mxu0
  %4294 = vdwg.mxu0
  %4295 = vmatprep.subr.mxu0 0.0
  %v4296 = vand.u32 %v4124, 4294901760
  %v4297 = vsub.f32 %v4124, %v4296
  %4298 = vmatpush1.msra.mxu0 %v4297
  %4299 = vmatprep.subr.mxu0 0.0
  %v4300 = vand.u32 %v4125, 4294901760
  %v4301 = vsub.f32 %v4125, %v4300
  %4302 = vmatpush1.msra.mxu0 %v4301
  %4303 = vmatprep.subr.mxu0 0.0
  %4304 = vmatpush1.msra.mxu0 0.0
  %4305 = vmatprep.subr.mxu0 0.0
  %4306 = vmatpush1.msra.mxu0 0.0
  %4307 = vmatprep.subr.mxu0 0.0
  %4308 = vmatpush1.msra.mxu0 0.0
  %4309 = vmatprep.subr.mxu0 0.0
  %4310 = vmatpush1.msra.mxu0 0.0
  %4311 = vmatprep.subr.mxu0 0.0
  %4312 = vmatpush1.msra.mxu0 0.0
  %4313 = vmatprep.subr.mxu0 0.0
  %4314 = vmatpush1.msra.mxu0 0.0
  %4315 = vmatprep.subr.mxu0 0.0
  %4316 = vmatpush1.msra.mxu0 0.0
  %4317 = vmatprep.subr.mxu0 0.0
  %4318 = vmatpush1.msra.mxu0 0.0
  %4319 = vmatprep.subr.mxu0 0.0
  %4320 = vmatpush1.msra.mxu0 0.0
  %4321 = vmatprep.subr.mxu0 0.0
  %4322 = vmatpush1.msra.mxu0 0.0
  %4323 = vmatprep.subr.mxu0 0.0
  %4324 = vmatpush1.msra.mxu0 0.0
  %4325 = vmatprep.subr.mxu0 0.0
  %4326 = vmatpush1.msra.mxu0 0.0
  %4327 = vmatprep.subr.mxu0 0.0
  %4328 = vmatpush1.msra.mxu0 0.0
  %4329 = vmatprep.subr.mxu0 0.0
  %4330 = vmatpush1.msra.mxu0 0.0
  %4331 = vmatprep.subr.mxu0 0.0
  %4332 = vmatpush1.msra.mxu0 0.0
  %4333 = vmatprep.subr.mxu0 0.0
  %4334 = vmatpush1.msra.mxu0 0.0
  %4335 = vmatprep.subr.mxu0 0.0
  %4336 = vmatpush1.msra.mxu0 0.0
  %4337 = vmatprep.subr.mxu0 0.0
  %4338 = vmatpush1.msra.mxu0 0.0
  %4339 = vmatprep.subr.mxu0 0.0
  %4340 = vmatpush1.msra.mxu0 0.0
  %4341 = vmatprep.subr.mxu0 0.0
  %4342 = vmatpush1.msra.mxu0 0.0
  %4343 = vmatprep.subr.mxu0 0.0
  %4344 = vmatpush1.msra.mxu0 0.0
  %4345 = vmatprep.subr.mxu0 0.0
  %4346 = vmatpush1.msra.mxu0 0.0
  %4347 = vmatprep.subr.mxu0 0.0
  %4348 = vmatpush1.msra.mxu0 0.0
  %4349 = vmatprep.subr.mxu0 0.0
  %4350 = vmatpush1.msra.mxu0 0.0
  %4351 = vmatprep.subr.mxu0 0.0
  %4352 = vmatpush1.msra.mxu0 0.0
  %4353 = vmatprep.subr.mxu0 0.0
  %4354 = vmatpush1.msra.mxu0 0.0
  %4355 = vmatprep.subr.mxu0 0.0
  %4356 = vmatpush1.msra.mxu0 0.0
  %4357 = vmatprep.subr.mxu0 0.0
  %4358 = vmatpush1.msra.mxu0 0.0
  %4359 = vmatprep.subr.mxu0 0.0
  %4360 = vmatpush1.msra.mxu0 0.0
  %4361 = vmatprep.subr.mxu0 0.0
  %4362 = vmatpush1.msra.mxu0 0.0
  %4363 = vmatprep.mubr.f32.mxu0 0.0
  %v4364 = vand.u32 %v4135, 4294901760
  %v4365 = vsub.f32 %v4135, %v4364
  %4366 = vmatmul.mubr.f32.gmra.mrb[0].mxu0 %v4365
  %v4367 = vpop.f32.mrb[0].mxu0
  %v4368 = vadd.f32 %v4292, %v4367
  %v4369 = vpop.f32.mrb[0].mxu0
  %4370 = vdwg.mxu0
  %4371 = vmatprep.subr.mxu0 0.0
  %v4372 = vand.u32 %v4124, 4294901760
  %4373 = vmatpush1.msra.mxu0 %v4372
  %4374 = vmatprep.subr.mxu0 0.0
  %v4375 = vand.u32 %v4125, 4294901760
  %4376 = vmatpush1.msra.mxu0 %v4375
  %4377 = vmatprep.subr.mxu0 0.0
  %4378 = vmatpush1.msra.mxu0 0.0
  %4379 = vmatprep.subr.mxu0 0.0
  %4380 = vmatpush1.msra.mxu0 0.0
  %4381 = vmatprep.subr.mxu0 0.0
  %4382 = vmatpush1.msra.mxu0 0.0
  %4383 = vmatprep.subr.mxu0 0.0
  %4384 = vmatpush1.msra.mxu0 0.0
  %4385 = vmatprep.subr.mxu0 0.0
  %4386 = vmatpush1.msra.mxu0 0.0
  %4387 = vmatprep.subr.mxu0 0.0
  %4388 = vmatpush1.msra.mxu0 0.0
  %4389 = vmatprep.subr.mxu0 0.0
  %4390 = vmatpush1.msra.mxu0 0.0
  %4391 = vmatprep.subr.mxu0 0.0
  %4392 = vmatpush1.msra.mxu0 0.0
  %4393 = vmatprep.subr.mxu0 0.0
  %4394 = vmatpush1.msra.mxu0 0.0
  %4395 = vmatprep.subr.mxu0 0.0
  %4396 = vmatpush1.msra.mxu0 0.0
  %4397 = vmatprep.subr.mxu0 0.0
  %4398 = vmatpush1.msra.mxu0 0.0
  %4399 = vmatprep.subr.mxu0 0.0
  %4400 = vmatpush1.msra.mxu0 0.0
  %4401 = vmatprep.subr.mxu0 0.0
  %4402 = vmatpush1.msra.mxu0 0.0
  %4403 = vmatprep.subr.mxu0 0.0
  %4404 = vmatpush1.msra.mxu0 0.0
  %4405 = vmatprep.subr.mxu0 0.0
  %4406 = vmatpush1.msra.mxu0 0.0
  %4407 = vmatprep.subr.mxu0 0.0
  %4408 = vmatpush1.msra.mxu0 0.0
  %4409 = vmatprep.subr.mxu0 0.0
  %4410 = vmatpush1.msra.mxu0 0.0
  %4411 = vmatprep.subr.mxu0 0.0
  %4412 = vmatpush1.msra.mxu0 0.0
  %4413 = vmatprep.subr.mxu0 0.0
  %4414 = vmatpush1.msra.mxu0 0.0
  %4415 = vmatprep.subr.mxu0 0.0
  %4416 = vmatpush1.msra.mxu0 0.0
  %4417 = vmatprep.subr.mxu0 0.0
  %4418 = vmatpush1.msra.mxu0 0.0
  %4419 = vmatprep.subr.mxu0 0.0
  %4420 = vmatpush1.msra.mxu0 0.0
  %4421 = vmatprep.subr.mxu0 0.0
  %4422 = vmatpush1.msra.mxu0 0.0
  %4423 = vmatprep.subr.mxu0 0.0
  %4424 = vmatpush1.msra.mxu0 0.0
  %4425 = vmatprep.subr.mxu0 0.0
  %4426 = vmatpush1.msra.mxu0 0.0
  %4427 = vmatprep.subr.mxu0 0.0
  %4428 = vmatpush1.msra.mxu0 0.0
  %4429 = vmatprep.subr.mxu0 0.0
  %4430 = vmatpush1.msra.mxu0 0.0
  %4431 = vmatprep.subr.mxu0 0.0
  %4432 = vmatpush1.msra.mxu0 0.0
  %4433 = vmatprep.subr.mxu0 0.0
  %4434 = vmatpush1.msra.mxu0 0.0
  %4435 = vmatprep.subr.mxu0 0.0
  %4436 = vmatpush1.msra.mxu0 0.0
  %4437 = vmatprep.mubr.f32.mxu0 0.0
  %v4438 = vand.u32 %v4135, 4294901760
  %v4439 = vsub.f32 %v4135, %v4438
  %v4440 = vand.u32 %v4439, 4294901760
  %4441 = vmatmul.mubr.f32.gmra.mrb[0].mxu0 %v4440
  %v4442 = vpop.f32.mrb[0].mxu0
  %v4443 = vadd.f32 %v4368, %v4442
  %v4444 = vpop.f32.mrb[0].mxu0
  %4445 = vdwg.mxu0
  %4446 = vmatprep.subr.mxu0 0.0
  %v4447 = vand.u32 %v4124, 4294901760
  %v4448 = vsub.f32 %v4124, %v4447
  %v4449 = vand.u32 %v4448, 4294901760
  %4450 = vmatpush1.msra.mxu0 %v4449
  %4451 = vmatprep.subr.mxu0 0.0
  %v4452 = vand.u32 %v4125, 4294901760
  %v4453 = vsub.f32 %v4125, %v4452
  %v4454 = vand.u32 %v4453, 4294901760
  %4455 = vmatpush1.msra.mxu0 %v4454
  %4456 = vmatprep.subr.mxu0 0.0
  %4457 = vmatpush1.msra.mxu0 0.0
  %4458 = vmatprep.subr.mxu0 0.0
  %4459 = vmatpush1.msra.mxu0 0.0
  %4460 = vmatprep.subr.mxu0 0.0
  %4461 = vmatpush1.msra.mxu0 0.0
  %4462 = vmatprep.subr.mxu0 0.0
  %4463 = vmatpush1.msra.mxu0 0.0
  %4464 = vmatprep.subr.mxu0 0.0
  %4465 = vmatpush1.msra.mxu0 0.0
  %4466 = vmatprep.subr.mxu0 0.0
  %4467 = vmatpush1.msra.mxu0 0.0
  %4468 = vmatprep.subr.mxu0 0.0
  %4469 = vmatpush1.msra.mxu0 0.0
  %4470 = vmatprep.subr.mxu0 0.0
  %4471 = vmatpush1.msra.mxu0 0.0
  %4472 = vmatprep.subr.mxu0 0.0
  %4473 = vmatpush1.msra.mxu0 0.0
  %4474 = vmatprep.subr.mxu0 0.0
  %4475 = vmatpush1.msra.mxu0 0.0
  %4476 = vmatprep.subr.mxu0 0.0
  %4477 = vmatpush1.msra.mxu0 0.0
  %4478 = vmatprep.subr.mxu0 0.0
  %4479 = vmatpush1.msra.mxu0 0.0
  %4480 = vmatprep.subr.mxu0 0.0
  %4481 = vmatpush1.msra.mxu0 0.0
  %4482 = vmatprep.subr.mxu0 0.0
  %4483 = vmatpush1.msra.mxu0 0.0
  %4484 = vmatprep.subr.mxu0 0.0
  %4485 = vmatpush1.msra.mxu0 0.0
  %4486 = vmatprep.subr.mxu0 0.0
  %4487 = vmatpush1.msra.mxu0 0.0
  %4488 = vmatprep.subr.mxu0 0.0
  %4489 = vmatpush1.msra.mxu0 0.0
  %4490 = vmatprep.subr.mxu0 0.0
  %4491 = vmatpush1.msra.mxu0 0.0
  %4492 = vmatprep.subr.mxu0 0.0
  %4493 = vmatpush1.msra.mxu0 0.0
  %4494 = vmatprep.subr.mxu0 0.0
  %4495 = vmatpush1.msra.mxu0 0.0
  %4496 = vmatprep.subr.mxu0 0.0
  %4497 = vmatpush1.msra.mxu0 0.0
  %4498 = vmatprep.subr.mxu0 0.0
  %4499 = vmatpush1.msra.mxu0 0.0
  %4500 = vmatprep.subr.mxu0 0.0
  %4501 = vmatpush1.msra.mxu0 0.0
  %4502 = vmatprep.subr.mxu0 0.0
  %4503 = vmatpush1.msra.mxu0 0.0
  %4504 = vmatprep.subr.mxu0 0.0
  %4505 = vmatpush1.msra.mxu0 0.0
  %4506 = vmatprep.subr.mxu0 0.0
  %4507 = vmatpush1.msra.mxu0 0.0
  %4508 = vmatprep.subr.mxu0 0.0
  %4509 = vmatpush1.msra.mxu0 0.0
  %4510 = vmatprep.subr.mxu0 0.0
  %4511 = vmatpush1.msra.mxu0 0.0
  %4512 = vmatprep.subr.mxu0 0.0
  %4513 = vmatpush1.msra.mxu0 0.0
  %4514 = vmatprep.subr.mxu0 0.0
  %4515 = vmatpush1.msra.mxu0 0.0
  %4516 = vmatprep.mubr.f32.mxu0 0.0
  %v4517 = vand.u32 %v4135, 4294901760
  %4518 = vmatmul.mubr.f32.gmra.mrb[0].mxu0 %v4517
  %v4519 = vpop.f32.mrb[0].mxu0
  %v4520 = vadd.f32 %v4443, %v4519
  %v4521 = vpop.f32.mrb[0].mxu0
  %4522 = vdwg.mxu0
  %4523 = vmatprep.subr.mxu0 0.0
  %v4524 = vand.u32 %v4124, 4294901760
  %4525 = vmatpush1.msra.mxu0 %v4524
  %4526 = vmatprep.subr.mxu0 0.0
  %v4527 = vand.u32 %v4125, 4294901760
  %4528 = vmatpush1.msra.mxu0 %v4527
  %4529 = vmatprep.subr.mxu0 0.0
  %4530 = vmatpush1.msra.mxu0 0.0
  %4531 = vmatprep.subr.mxu0 0.0
  %4532 = vmatpush1.msra.mxu0 0.0
  %4533 = vmatprep.subr.mxu0 0.0
  %4534 = vmatpush1.msra.mxu0 0.0
  %4535 = vmatprep.subr.mxu0 0.0
  %4536 = vmatpush1.msra.mxu0 0.0
  %4537 = vmatprep.subr.mxu0 0.0
  %4538 = vmatpush1.msra.mxu0 0.0
  %4539 = vmatprep.subr.mxu0 0.0
  %4540 = vmatpush1.msra.mxu0 0.0
  %4541 = vmatprep.subr.mxu0 0.0
  %4542 = vmatpush1.msra.mxu0 0.0
  %4543 = vmatprep.subr.mxu0 0.0
  %4544 = vmatpush1.msra.mxu0 0.0
  %4545 = vmatprep.subr.mxu0 0.0
  %4546 = vmatpush1.msra.mxu0 0.0
  %4547 = vmatprep.subr.mxu0 0.0
  %4548 = vmatpush1.msra.mxu0 0.0
  %4549 = vmatprep.subr.mxu0 0.0
  %4550 = vmatpush1.msra.mxu0 0.0
  %4551 = vmatprep.subr.mxu0 0.0
  %4552 = vmatpush1.msra.mxu0 0.0
  %4553 = vmatprep.subr.mxu0 0.0
  %4554 = vmatpush1.msra.mxu0 0.0
  %4555 = vmatprep.subr.mxu0 0.0
  %4556 = vmatpush1.msra.mxu0 0.0
  %4557 = vmatprep.subr.mxu0 0.0
  %4558 = vmatpush1.msra.mxu0 0.0
  %4559 = vmatprep.subr.mxu0 0.0
  %4560 = vmatpush1.msra.mxu0 0.0
  %4561 = vmatprep.subr.mxu0 0.0
  %4562 = vmatpush1.msra.mxu0 0.0
  %4563 = vmatprep.subr.mxu0 0.0
  %4564 = vmatpush1.msra.mxu0 0.0
  %4565 = vmatprep.subr.mxu0 0.0
  %4566 = vmatpush1.msra.mxu0 0.0
  %4567 = vmatprep.subr.mxu0 0.0
  %4568 = vmatpush1.msra.mxu0 0.0
  %4569 = vmatprep.subr.mxu0 0.0
  %4570 = vmatpush1.msra.mxu0 0.0
  %4571 = vmatprep.subr.mxu0 0.0
  %4572 = vmatpush1.msra.mxu0 0.0
  %4573 = vmatprep.subr.mxu0 0.0
  %4574 = vmatpush1.msra.mxu0 0.0
  %4575 = vmatprep.subr.mxu0 0.0
  %4576 = vmatpush1.msra.mxu0 0.0
  %4577 = vmatprep.subr.mxu0 0.0
  %4578 = vmatpush1.msra.mxu0 0.0
  %4579 = vmatprep.subr.mxu0 0.0
  %4580 = vmatpush1.msra.mxu0 0.0
  %4581 = vmatprep.subr.mxu0 0.0
  %4582 = vmatpush1.msra.mxu0 0.0
  %4583 = vmatprep.subr.mxu0 0.0
  %4584 = vmatpush1.msra.mxu0 0.0
  %4585 = vmatprep.subr.mxu0 0.0
  %4586 = vmatpush1.msra.mxu0 0.0
  %4587 = vmatprep.subr.mxu0 0.0
  %4588 = vmatpush1.msra.mxu0 0.0
  %4589 = vmatprep.mubr.f32.mxu0 0.0
  %v4590 = vand.u32 %v4135, 4294901760
  %4591 = vmatmul.mubr.f32.gmra.mrb[0].mxu0 %v4590
  %v4592 = vpop.f32.mrb[0].mxu0
  %v4593 = vadd.f32 %v4520, %v4592
  %v4594 = vpop.f32.mrb[0].mxu0
  %4595 = vdwg.mxu0
  %v4596 = vmax.f32 %v4593, 0.0
  %4597 = vrot.lane.b32.xlu0 %v4132, 16
  %v4598 = vpop.permute.xlu0 %4597
  %vm4600 = vcmask 261120
  %v4601 = vsel %vm4600, %v4596, %v2605
  %vm4602 = vcmask 392192
  %v4603 = vsel %vm4602, %v4601, %v4598
  %vm4604 = vcmask 523264
  %v4605 = vsel %vm4604, %v4603, 0.0
  %4606 = vst [vmem:[%s2] sm:$0x3] %v4605
  // Predicated region
  $region10: #{forward.1} parent=0 // pred_check
    _
  $region11: #{forward.1} parent=0 // pred_check_branch
    %4608 = sbr.rel (0) target = $region13
  $region12: #{forward.1} parent=0 // pred_region
    _
  $region13: #{forward.1} parent=0 // pred_fallthru
    _
  // Predicated region
  $region14: #{forward.1} parent=0 // pred_check
    _
  $region15: #{forward.1} parent=0 // pred_check_branch
    %4610 = sbr.rel (0) target = $region17
  $region16: #{forward.1} parent=0 // pred_region
    _
  $region17: #{forward.1} parent=0 // pred_fallthru
    _

</llo_original>
